<compile_context>
chip_gen: v5e
topology: v5e:2x2
jax: 0.10.0
libtpu: 0.0.40
codegen_flags: <defaults>
</compile_context>

<pallas_src>
import functools
import math

import jax
import jax.numpy as jnp
from jax import lax
from jax.experimental import pallas as pl
from jax.experimental.pallas import tpu as pltpu

FEATS = ['lowerback_acc', 'l_midlatthigh_acc', 'l_latshank_acc',
         'r_latshank_acc', 'l_latshank_gyr', 'r_latshank_gyr', 'l_ankle_acc']
INPUT_DIM = 7 * 3          # 21
IN_PAD = 32                # input dim padded (zero cols)
FEAT_DIM = 250             # real model dim
D_PAD = 256                # padded model dim (full lane tiles)
NHEADS = 10
HEAD_DIM = FEAT_DIM // NHEADS     # 25 (real)
HD_PAD = 32                       # padded per-head dim
QKV_PAD = NHEADS * HD_PAD         # 320
FFN_DIM = 2048             # nn.TransformerEncoderLayer default dim_feedforward
CLIP_DIM = 512
LN_EPS = 1e-5


# ----------------------------- kernel helpers -----------------------------

def _layernorm(x, gamma, beta):
    # Statistics over the REAL 250 features.  Pad lanes of x are guaranteed zero,
    # so full-width lane sums equal sums over the 250 real features; gamma/beta
    # pads are zero so pad lanes stay zero on the output.
    inv_n = 1.0 / FEAT_DIM
    mu = jnp.sum(x, axis=-1, keepdims=True) * inv_n
    ms = jnp.sum(x * x, axis=-1, keepdims=True) * inv_n
    var = ms - mu * mu
    return (x - mu) * lax.rsqrt(var + LN_EPS) * gamma + beta


def _gelu_erf(x):
    # PyTorch F.gelu default (erf form); the module passes activation='gelu'.
    return 0.5 * x * (1.0 + lax.erf(x * (1.0 / math.sqrt(2.0))))


# ----------------------------- fused kernel -----------------------------

def _fused_forward_kernel(s_real, bt,
                          imu_ref, add_ref,
                          w_body_ref, wqkv_ref, bqkv_ref, wo_ref, bo_ref,
                          g1_ref, be1_ref, w1_ref, b1_ref, w2_ref, b2_ref,
                          g2_ref, be2_ref, w_dec_ref, b_dec_ref,
                          o_ref):
    S = imu_ref.shape[1]          # padded sequence length (multiple of 8)
    M = bt * S                    # stacked rows for all matmuls

    # ---- body linear over all Bt*S stacked rows.  PE, body bias and the text
    #      token are folded into `add` on the host (row 0 = relu(clip@Wt+bt)+pe0,
    #      rows 1..W = pe[r] + b_body, padded rows = 0). ----
    imu = imu_ref[...].reshape(M, IN_PAD).astype(jnp.bfloat16)
    x = (jnp.dot(imu, w_body_ref[...], preferred_element_type=jnp.float32)
         + add_ref[...].reshape(M, D_PAD))                       # (M, 256) f32

    # ---- fused QKV projection: one (M,256)@(256,960) matmul ----
    xb = x.astype(jnp.bfloat16)
    qkv = (jnp.dot(xb, wqkv_ref[...], preferred_element_type=jnp.float32)
           + bqkv_ref[...])                                      # (M, 960) f32

    # static key mask for padded sequence rows
    col = lax.broadcasted_iota(jnp.int32, (1, S), 1)
    neg = jnp.where(col < s_real, 0.0, -1e30).astype(jnp.float32)

    scale = 1.0 / math.sqrt(HEAD_DIM)                            # real head dim
    per_b = []
    for b in range(bt):                                          # tiny SxS work only
        qkv_b = qkv[b * S:(b + 1) * S]                           # (S, 960)
        heads = []
        for h in range(NHEADS):
            q = qkv_b[:, h * HD_PAD:(h + 1) * HD_PAD]
            k = qkv_b[:, QKV_PAD + h * HD_PAD:QKV_PAD + (h + 1) * HD_PAD]
            v = qkv_b[:, 2 * QKV_PAD + h * HD_PAD:2 * QKV_PAD + (h + 1) * HD_PAD]
            s = lax.dot_general(q, k, (((1,), (1,)), ((), ())),
                                preferred_element_type=jnp.float32) * scale + neg
            s = s - jnp.max(s, axis=-1, keepdims=True)
            e = jnp.exp(s)
            p = e * pl.reciprocal(jnp.sum(e, axis=-1, keepdims=True), approx=True)
            heads.append(jnp.dot(p.astype(jnp.bfloat16), v.astype(jnp.bfloat16),
                                 preferred_element_type=jnp.float32))   # (S, 32)
        per_b.append(jnp.concatenate(heads, axis=1))             # (S, 320)
    oh_all = jnp.concatenate(per_b, axis=0) if bt > 1 else per_b[0]     # (M, 320)

    # ---- single attention out-projection for all rows ----
    attn = (jnp.dot(oh_all.astype(jnp.bfloat16), wo_ref[...],
                    preferred_element_type=jnp.float32) + bo_ref[...])  # (M, 256)

    x1 = _layernorm(x + attn, g1_ref[...], be1_ref[...])

    # ---- feed-forward ----
    ff = (jnp.dot(x1.astype(jnp.bfloat16), w1_ref[...],
                  preferred_element_type=jnp.float32) + b1_ref[...])
    ff = _gelu_erf(ff)
    ff = (jnp.dot(ff.astype(jnp.bfloat16), w2_ref[...],
                  preferred_element_type=jnp.float32) + b2_ref[...])
    x2 = _layernorm(x1 + ff, g2_ref[...], be2_ref[...])

    # ---- decoder (N=1) as VPU multiply + cross-lane reduce, + sigmoid ----
    logits = jnp.sum(x2 * w_dec_ref[...], axis=-1, keepdims=True) + b_dec_ref[...]
    o_ref[...] = jax.nn.sigmoid(logits).reshape(bt, S, 1)


# ----------------------------- pallas_call wrapper -----------------------------

def pallas_transformer(prepared, imu_p, add, bt, s_real):
    """imu_p: (B_pad, S_pad, IN_PAD) f32, add: (B_pad, S_pad, D_PAD) f32."""
    b_pad, s_pad, _ = imu_p.shape
    nb = b_pad // bt

    const_names = ('w_body', 'wqkv', 'bqkv', 'wo', 'bo', 'g1', 'be1',
                   'w1', 'b1', 'w2', 'b2', 'g2', 'be2', 'w_dec', 'b_dec')
    consts = [prepared[name] for name in const_names]

    def const_spec(a):          # grid-invariant full block
        return pl.BlockSpec(a.shape, lambda i, _nd=a.ndim: (0,) * _nd)

    kernel = functools.partial(_fused_forward_kernel, s_real, bt)

    return pl.pallas_call(
        kernel,
        out_shape=jax.ShapeDtypeStruct((b_pad, s_pad, 1), jnp.float32),
        grid=(nb,),
        in_specs=([pl.BlockSpec((bt, s_pad, IN_PAD), lambda i: (i, 0, 0)),
                   pl.BlockSpec((bt, s_pad, D_PAD), lambda i: (i, 0, 0))]
                  + [const_spec(a) for a in consts]),
        out_specs=pl.BlockSpec((bt, s_pad, 1), lambda i: (i, 0, 0)),
        compiler_params=pltpu.CompilerParams(
            dimension_semantics=("parallel",),
            vmem_limit_bytes=32 * 1024 * 1024),
    )(imu_p, add, *consts)


# ----------------------------- parameters -----------------------------

def make_pe(max_len, d):
    position = jnp.arange(max_len, dtype=jnp.float32)[:, None]
    div_term = jnp.exp(jnp.arange(0, d, 2, dtype=jnp.float32)
                       * (-math.log(10000.0) / d))
    pe = jnp.zeros((max_len, d), jnp.float32)
    pe = pe.at[:, 0::2].set(jnp.sin(position * div_term))
    pe = pe.at[:, 1::2].set(jnp.cos(position * div_term))
    return pe


def init_params(key, max_len=64):
    """Raw parameters in (in_features, out_features) layout (PyTorch-equivalent)."""
    keys = jax.random.split(key, 8)

    def w(k, shape, scale=0.02):
        return (scale * jax.random.normal(k, shape)).astype(jnp.float32)

    return {
        'w_body': w(keys[0], (INPUT_DIM, FEAT_DIM)),
        'b_body': jnp.zeros((FEAT_DIM,), jnp.float32),
        'w_txt': w(keys[1], (CLIP_DIM, FEAT_DIM)),
        'b_txt': jnp.zeros((FEAT_DIM,), jnp.float32),
        'wqkv': w(keys[2], (FEAT_DIM, 3 * FEAT_DIM)),
        'bqkv': jnp.zeros((3 * FEAT_DIM,), jnp.float32),
        'wo': w(keys[3], (FEAT_DIM, FEAT_DIM)),
        'bo': jnp.zeros((FEAT_DIM,), jnp.float32),
        'g1': jnp.ones((FEAT_DIM,), jnp.float32),
        'beta1': jnp.zeros((FEAT_DIM,), jnp.float32),
        'w1': w(keys[4], (FEAT_DIM, FFN_DIM)),
        'b1': jnp.zeros((FFN_DIM,), jnp.float32),
        'w2': w(keys[5], (FFN_DIM, FEAT_DIM)),
        'b2': jnp.zeros((FEAT_DIM,), jnp.float32),
        'g2': jnp.ones((FEAT_DIM,), jnp.float32),
        'beta2': jnp.zeros((FEAT_DIM,), jnp.float32),
        # decoder: weight ~ U(-0.1, 0.1), bias = 0 (matches _init_weights)
        'w_dec': jax.random.uniform(keys[6], (FEAT_DIM, 1), jnp.float32, -0.1, 0.1),
        'b_dec': jnp.zeros((1,), jnp.float32),
        'pe': make_pe(max_len, FEAT_DIM),
    }


def prepare_params(p):
    """Kernel-friendly layout: feature dim padded 250->256, per-head dims 25->32
    (zero-padded so pad lanes stay zero), fused QKV matrix, bf16 matmul weights."""
    D, Dp, H, hd, hp = FEAT_DIM, D_PAD, NHEADS, HEAD_DIM, HD_PAD

    def pad2(w, r, c):
        return jnp.zeros((r, c), jnp.float32).at[:w.shape[0], :w.shape[1]].set(w)

    def padv(v, n):
        return jnp.zeros((1, n), jnp.float32).at[0, :v.shape[0]].set(v)

    def pad_head_cols(w):        # (D, D) -> (Dp, H*hp); head h cols at h*hp..h*hp+hd
        out = jnp.zeros((Dp, H * hp), jnp.float32)
        for h in range(H):
            out = out.at[:D, h * hp:h * hp + hd].set(w[:, h * hd:(h + 1) * hd])
        return out

    def pad_head_rows(w):        # (D, D) -> (H*hp, Dp); head h rows at h*hp..h*hp+hd
        out = jnp.zeros((H * hp, Dp), jnp.float32)
        for h in range(H):
            out = out.at[h * hp:h * hp + hd, :D].set(w[h * hd:(h + 1) * hd, :])
        return out

    def pad_head_vec(b):         # (D,) -> (1, H*hp)
        out = jnp.zeros((1, H * hp), jnp.float32)
        for h in range(H):
            out = out.at[0, h * hp:h * hp + hd].set(b[h * hd:(h + 1) * hd])
        return out

    wq, wk, wv = p['wqkv'][:, :D], p['wqkv'][:, D:2 * D], p['wqkv'][:, 2 * D:]
    bq, bk, bv = p['bqkv'][:D], p['bqkv'][D:2 * D], p['bqkv'][2 * D:]

    return {
        # kernel-side weights (padded; matmul weights stored bf16)
        'w_body': pad2(p['w_body'], IN_PAD, Dp).astype(jnp.bfloat16),
        'wqkv': jnp.concatenate([pad_head_cols(wq), pad_head_cols(wk),
                                 pad_head_cols(wv)], axis=1).astype(jnp.bfloat16),
        'bqkv': jnp.concatenate([pad_head_vec(bq), pad_head_vec(bk),
                                 pad_head_vec(bv)], axis=1),
        'wo': pad_head_rows(p['wo']).astype(jnp.bfloat16),
        'bo': padv(p['bo'], Dp),
        'g1': padv(p['g1'], Dp), 'be1': padv(p['beta1'], Dp),
        'w1': pad2(p['w1'], Dp, FFN_DIM).astype(jnp.bfloat16),
        'b1': p['b1'].reshape(1, FFN_DIM),
        'w2': pad2(p['w2'], FFN_DIM, Dp).astype(jnp.bfloat16),
        'b2': padv(p['b2'], Dp),
        'g2': padv(p['g2'], Dp), 'be2': padv(p['beta2'], Dp),
        'w_dec': padv(p['w_dec'][:, 0], Dp),
        'b_dec': p['b_dec'].reshape(1, 1),
        # host-side (wrapper) params
        'w_txt': p['w_txt'], 'b_txt': p['b_txt'],
        'b_body': padv(p['b_body'], Dp),                 # (1, 256)
        'pe': pad2(p['pe'], p['pe'].shape[0], Dp),       # (max_len, 256)
    }


# ----------------------------- forward -----------------------------

@jax.jit
def transformer_forward(prepared, src, clip_text_emb):
    # src[body_name]: (B, W, 3).  unsqueeze(-1).permute(0,1,3,2) -> (B, W, 1, 3)
    xs = [src[name][:, :, None, :] for name in FEATS]
    x = jnp.concatenate(xs, axis=2)                      # (B, W, 7, 3)
    B, W = x.shape[0], x.shape[1]
    imu = x.reshape(B, W, INPUT_DIM)                     # (B, W, 21)

    s_real = W + 1                                       # text token + window
    s_pad = max(8, ((s_real + 7) // 8) * 8)              # multiple of 8 sublanes

    # pad sequence (row 0 = text-token slot, rows >= s_real = padding) and input dim
    imu_p = jnp.zeros((B, s_pad, IN_PAD), jnp.float32)
    imu_p = imu_p.at[:, 1:s_real, :INPUT_DIM].set(imu)

    # TODO(synk): frozen CLIP ViT-B/32 text encoder is not reimplemented; a
    # precomputed (B, 512) CLIP text embedding is taken as input instead.
    # Text projection hoisted out of the kernel (one batched XLA matmul).
    tok = jnp.maximum(clip_text_emb @ prepared['w_txt'] + prepared['b_txt'], 0.0)
    tok = jnp.pad(tok, ((0, 0), (0, D_PAD - FEAT_DIM)))  # (B, 256), pad lanes zero

    # additive per-row embedding: row 0 = text token + pe[0]; rows r>=1 = pe[r]+b_body
    pe = prepared['pe'][:s_real]                         # (s_real, 256)
    add = jnp.zeros((B, s_pad, D_PAD), jnp.float32)
    add = add.at[:, 0, :].set(tok + pe[0])
    add = add.at[:, 1:s_real, :].set(pe[1:] + prepared['b_body'])

    # batch tiling: stack Bt batch elements into the matmul M dimension
    rows_target = 128
    bt = max(1, min(B, rows_target // s_pad))
    # v7x has 2 TensorCores; when batches allow, keep >= 2 parallel grid steps.
    if B >= 2 and -(-B // bt) < 2:
        bt = max(1, B // 2)
    b_pad = -(-B // bt) * bt
    if b_pad != B:
        imu_p = jnp.pad(imu_p, ((0, b_pad - B), (0, 0), (0, 0)))
        add = jnp.pad(add, ((0, b_pad - B), (0, 0), (0, 0)))

    out = pallas_transformer(prepared, imu_p, add, bt, s_real)   # (b_pad, s_pad, 1)
    return out[:B, 1:s_real, :]                                  # (B, W, 1)


if __name__ == "__main__":
    key = jax.random.PRNGKey(0)
    pkey, dkey = jax.random.split(key)
    params = init_params(pkey)
    prepared = prepare_params(params)

    B, W = 2, 8
    feat_keys = jax.random.split(dkey, len(FEATS) + 1)
    src = {name: jax.random.normal(feat_keys[i], (B, W, 3), dtype=jnp.float32)
           for i, name in enumerate(FEATS)}
    clip_text_emb = jax.random.normal(feat_keys[-1], (B, CLIP_DIM), dtype=jnp.float32)

    out = transformer_forward(prepared, src, clip_text_emb)
    out = jax.block_until_ready(out)
    assert out.shape == (B, W, 1)
    assert bool(jnp.all(jnp.isfinite(out)))
    print("KERNEL_OK")
</pallas_src>

<mosaic_0001>
module attributes {stable_mosaic.version = 11 : i64} {
  func.func @_fused_forward_kernel(%arg0: i32, %arg1: memref<1x16x32xf32, #tpu.memory_space<vmem>>, %arg2: memref<1x16x256xf32, #tpu.memory_space<vmem>>, %arg3: memref<32x256xbf16, #tpu.memory_space<vmem>>, %arg4: memref<256x960xbf16, #tpu.memory_space<vmem>>, %arg5: memref<1x960xf32, #tpu.memory_space<vmem>>, %arg6: memref<320x256xbf16, #tpu.memory_space<vmem>>, %arg7: memref<1x256xf32, #tpu.memory_space<vmem>>, %arg8: memref<1x256xf32, #tpu.memory_space<vmem>>, %arg9: memref<1x256xf32, #tpu.memory_space<vmem>>, %arg10: memref<256x2048xbf16, #tpu.memory_space<vmem>>, %arg11: memref<1x2048xf32, #tpu.memory_space<vmem>>, %arg12: memref<2048x256xbf16, #tpu.memory_space<vmem>>, %arg13: memref<1x256xf32, #tpu.memory_space<vmem>>, %arg14: memref<1x256xf32, #tpu.memory_space<vmem>>, %arg15: memref<1x256xf32, #tpu.memory_space<vmem>>, %arg16: memref<1x256xf32, #tpu.memory_space<vmem>>, %arg17: memref<1x1xf32, #tpu.memory_space<vmem>>, %arg18: memref<1x16x1xf32, #tpu.memory_space<vmem>>) attributes {dimension_semantics = [#tpu.dimension_semantics<parallel>], iteration_bounds = array<i64: 2>, scalar_prefetch = 0 : i64, scratch_operands = 0 : i64, tpu.core_type = #tpu.core_type<tc>, window_params = [{transform_indices = @transform_0, window_bounds = array<i64: 1, 16, 32>}, {transform_indices = @transform_1, window_bounds = array<i64: 1, 16, 256>}, {pipeline_mode = #tpu.pipeline_mode<synchronous>, transform_indices = @transform_2, window_bounds = array<i64: 32, 256>}, {pipeline_mode = #tpu.pipeline_mode<synchronous>, transform_indices = @transform_3, window_bounds = array<i64: 256, 960>}, {pipeline_mode = #tpu.pipeline_mode<synchronous>, transform_indices = @transform_4, window_bounds = array<i64: 1, 960>}, {pipeline_mode = #tpu.pipeline_mode<synchronous>, transform_indices = @transform_5, window_bounds = array<i64: 320, 256>}, {pipeline_mode = #tpu.pipeline_mode<synchronous>, transform_indices = @transform_6, window_bounds = array<i64: 1, 256>}, {pipeline_mode = #tpu.pipeline_mode<synchronous>, transform_indices = @transform_7, window_bounds = array<i64: 1, 256>}, {pipeline_mode = #tpu.pipeline_mode<synchronous>, transform_indices = @transform_8, window_bounds = array<i64: 1, 256>}, {pipeline_mode = #tpu.pipeline_mode<synchronous>, transform_indices = @transform_9, window_bounds = array<i64: 256, 2048>}, {pipeline_mode = #tpu.pipeline_mode<synchronous>, transform_indices = @transform_10, window_bounds = array<i64: 1, 2048>}, {pipeline_mode = #tpu.pipeline_mode<synchronous>, transform_indices = @transform_11, window_bounds = array<i64: 2048, 256>}, {pipeline_mode = #tpu.pipeline_mode<synchronous>, transform_indices = @transform_12, window_bounds = array<i64: 1, 256>}, {pipeline_mode = #tpu.pipeline_mode<synchronous>, transform_indices = @transform_13, window_bounds = array<i64: 1, 256>}, {pipeline_mode = #tpu.pipeline_mode<synchronous>, transform_indices = @transform_14, window_bounds = array<i64: 1, 256>}, {pipeline_mode = #tpu.pipeline_mode<synchronous>, transform_indices = @transform_15, window_bounds = array<i64: 1, 256>}, {pipeline_mode = #tpu.pipeline_mode<synchronous>, transform_indices = @transform_16, window_bounds = array<i64: 1, 1>}, {transform_indices = @transform_17, window_bounds = array<i64: 1, 16, 1>}]} {
    %c0 = arith.constant 0 : index
    %c0_0 = arith.constant 0 : index
    %c0_1 = arith.constant 0 : index
    %0 = vector.load %arg1[%c0, %c0_0, %c0_1] : memref<1x16x32xf32, #tpu.memory_space<vmem>>, vector<1x16x32xf32>
    %1 = vector.shape_cast %0 : vector<1x16x32xf32> to vector<16x32xf32>
    %2 = arith.truncf %1 : vector<16x32xf32> to vector<16x32xbf16>
    %c0_2 = arith.constant 0 : index
    %c0_3 = arith.constant 0 : index
    %3 = vector.load %arg3[%c0_2, %c0_3] : memref<32x256xbf16, #tpu.memory_space<vmem>>, vector<32x256xbf16>
    %cst = arith.constant dense<0.000000e+00> : vector<16x256xf32>
    %4 = tpu.matmul %2, %3, %cst {dimension_numbers = #tpu.dot_dimension_numbers<[1], [0], [0], [1], [0, 0, 1, 1], [], []>} : vector<16x32xbf16>, vector<32x256xbf16>, vector<16x256xf32> -> vector<16x256xf32>
    %c0_4 = arith.constant 0 : index
    %c0_5 = arith.constant 0 : index
    %c0_6 = arith.constant 0 : index
    %5 = vector.load %arg2[%c0_4, %c0_5, %c0_6] : memref<1x16x256xf32, #tpu.memory_space<vmem>>, vector<1x16x256xf32>
    %6 = vector.shape_cast %5 : vector<1x16x256xf32> to vector<16x256xf32>
    %7 = arith.addf %4, %6 : vector<16x256xf32>
    %8 = arith.truncf %7 : vector<16x256xf32> to vector<16x256xbf16>
    %c0_7 = arith.constant 0 : index
    %c0_8 = arith.constant 0 : index
    %9 = vector.load %arg4[%c0_7, %c0_8] : memref<256x960xbf16, #tpu.memory_space<vmem>>, vector<256x960xbf16>
    %cst_9 = arith.constant dense<0.000000e+00> : vector<16x960xf32>
    %10 = tpu.matmul %8, %9, %cst_9 {dimension_numbers = #tpu.dot_dimension_numbers<[1], [0], [0], [1], [0, 0, 1, 1], [], []>} : vector<16x256xbf16>, vector<256x960xbf16>, vector<16x960xf32> -> vector<16x960xf32>
    %c0_10 = arith.constant 0 : index
    %c0_11 = arith.constant 0 : index
    %11 = vector.load %arg5[%c0_10, %c0_11] : memref<1x960xf32, #tpu.memory_space<vmem>>, vector<1x960xf32>
    %12 = vector.broadcast %11 : vector<1x960xf32> to vector<16x960xf32>
    %13 = arith.addf %10, %12 : vector<16x960xf32>
    %14 = tpu.iota {dimensions = array<i32: 1>} : vector<1x16xi32>
    %c9_i32 = arith.constant 9 : i32
    %15 = vector.broadcast %c9_i32 : i32 to vector<1x16xi32>
    %16 = arith.cmpi slt, %14, %15 : vector<1x16xi32>
    %cst_12 = arith.constant 0.000000e+00 : f32
    %cst_13 = arith.constant -1.000000e+30 : f32
    %17 = vector.broadcast %cst_12 : f32 to vector<1x16xf32>
    %18 = vector.broadcast %cst_13 : f32 to vector<1x16xf32>
    %19 = arith.select %16, %17, %18 : vector<1x16xi1>, vector<1x16xf32>
    %20 = vector.extract_strided_slice %13 {offsets = [0, 0], sizes = [16, 32], strides = [1, 1]} : vector<16x960xf32> to vector<16x32xf32>
    %21 = vector.extract_strided_slice %13 {offsets = [0, 320], sizes = [16, 32], strides = [1, 1]} : vector<16x960xf32> to vector<16x32xf32>
    %22 = vector.extract_strided_slice %13 {offsets = [0, 640], sizes = [16, 32], strides = [1, 1]} : vector<16x960xf32> to vector<16x32xf32>
    %cst_14 = arith.constant dense<0.000000e+00> : vector<16x16xf32>
    %23 = tpu.matmul %20, %21, %cst_14 {dimension_numbers = #tpu.dot_dimension_numbers<[1], [1], [0], [0], [0, 0, 1, 0], [], []>} : vector<16x32xf32>, vector<16x32xf32>, vector<16x16xf32> -> vector<16x16xf32>
    %cst_15 = arith.constant 2.000000e-01 : f32
    %24 = vector.broadcast %cst_15 : f32 to vector<16x16xf32>
    %25 = arith.mulf %23, %24 : vector<16x16xf32>
    %26 = vector.broadcast %19 : vector<1x16xf32> to vector<16x16xf32>
    %27 = arith.addf %25, %26 : vector<16x16xf32>
    %cst_16 = arith.constant dense<0xFF800000> : vector<16xf32>
    %28 = vector.multi_reduction <maximumf>, %27, %cst_16 [1] : vector<16x16xf32> to vector<16xf32>
    %29 = vector.shape_cast %28 : vector<16xf32> to vector<16x1xf32>
    %30 = vector.broadcast %29 : vector<16x1xf32> to vector<16x16xf32>
    %31 = arith.subf %27, %30 : vector<16x16xf32>
    %32 = math.exp %31 : vector<16x16xf32>
    %cst_17 = arith.constant dense<0.000000e+00> : vector<16xf32>
    %33 = vector.multi_reduction <add>, %32, %cst_17 [1] : vector<16x16xf32> to vector<16xf32>
    %34 = vector.shape_cast %33 : vector<16xf32> to vector<16x1xf32>
    %35 = tpu.reciprocal %34 {approx = true} : vector<16x1xf32> -> vector<16x1xf32>
    %36 = vector.broadcast %35 : vector<16x1xf32> to vector<16x16xf32>
    %37 = arith.mulf %32, %36 : vector<16x16xf32>
    %38 = arith.truncf %37 : vector<16x16xf32> to vector<16x16xbf16>
    %39 = arith.truncf %22 : vector<16x32xf32> to vector<16x32xbf16>
    %cst_18 = arith.constant dense<0.000000e+00> : vector<16x32xf32>
    %40 = tpu.matmul %38, %39, %cst_18 {dimension_numbers = #tpu.dot_dimension_numbers<[1], [0], [0], [1], [0, 0, 1, 1], [], []>} : vector<16x16xbf16>, vector<16x32xbf16>, vector<16x32xf32> -> vector<16x32xf32>
    %41 = vector.extract_strided_slice %13 {offsets = [0, 32], sizes = [16, 32], strides = [1, 1]} : vector<16x960xf32> to vector<16x32xf32>
    %42 = vector.extract_strided_slice %13 {offsets = [0, 352], sizes = [16, 32], strides = [1, 1]} : vector<16x960xf32> to vector<16x32xf32>
    %43 = vector.extract_strided_slice %13 {offsets = [0, 672], sizes = [16, 32], strides = [1, 1]} : vector<16x960xf32> to vector<16x32xf32>
    %cst_19 = arith.constant dense<0.000000e+00> : vector<16x16xf32>
    %44 = tpu.matmul %41, %42, %cst_19 {dimension_numbers = #tpu.dot_dimension_numbers<[1], [1], [0], [0], [0, 0, 1, 0], [], []>} : vector<16x32xf32>, vector<16x32xf32>, vector<16x16xf32> -> vector<16x16xf32>
    %cst_20 = arith.constant 2.000000e-01 : f32
    %45 = vector.broadcast %cst_20 : f32 to vector<16x16xf32>
    %46 = arith.mulf %44, %45 : vector<16x16xf32>
    %47 = vector.broadcast %19 : vector<1x16xf32> to vector<16x16xf32>
    %48 = arith.addf %46, %47 : vector<16x16xf32>
    %cst_21 = arith.constant dense<0xFF800000> : vector<16xf32>
    %49 = vector.multi_reduction <maximumf>, %48, %cst_21 [1] : vector<16x16xf32> to vector<16xf32>
    %50 = vector.shape_cast %49 : vector<16xf32> to vector<16x1xf32>
    %51 = vector.broadcast %50 : vector<16x1xf32> to vector<16x16xf32>
    %52 = arith.subf %48, %51 : vector<16x16xf32>
    %53 = math.exp %52 : vector<16x16xf32>
    %cst_22 = arith.constant dense<0.000000e+00> : vector<16xf32>
    %54 = vector.multi_reduction <add>, %53, %cst_22 [1] : vector<16x16xf32> to vector<16xf32>
    %55 = vector.shape_cast %54 : vector<16xf32> to vector<16x1xf32>
    %56 = tpu.reciprocal %55 {approx = true} : vector<16x1xf32> -> vector<16x1xf32>
    %57 = vector.broadcast %56 : vector<16x1xf32> to vector<16x16xf32>
    %58 = arith.mulf %53, %57 : vector<16x16xf32>
    %59 = arith.truncf %58 : vector<16x16xf32> to vector<16x16xbf16>
    %60 = arith.truncf %43 : vector<16x32xf32> to vector<16x32xbf16>
    %cst_23 = arith.constant dense<0.000000e+00> : vector<16x32xf32>
    %61 = tpu.matmul %59, %60, %cst_23 {dimension_numbers = #tpu.dot_dimension_numbers<[1], [0], [0], [1], [0, 0, 1, 1], [], []>} : vector<16x16xbf16>, vector<16x32xbf16>, vector<16x32xf32> -> vector<16x32xf32>
    %62 = vector.extract_strided_slice %13 {offsets = [0, 64], sizes = [16, 32], strides = [1, 1]} : vector<16x960xf32> to vector<16x32xf32>
    %63 = vector.extract_strided_slice %13 {offsets = [0, 384], sizes = [16, 32], strides = [1, 1]} : vector<16x960xf32> to vector<16x32xf32>
    %64 = vector.extract_strided_slice %13 {offsets = [0, 704], sizes = [16, 32], strides = [1, 1]} : vector<16x960xf32> to vector<16x32xf32>
    %cst_24 = arith.constant dense<0.000000e+00> : vector<16x16xf32>
    %65 = tpu.matmul %62, %63, %cst_24 {dimension_numbers = #tpu.dot_dimension_numbers<[1], [1], [0], [0], [0, 0, 1, 0], [], []>} : vector<16x32xf32>, vector<16x32xf32>, vector<16x16xf32> -> vector<16x16xf32>
    %cst_25 = arith.constant 2.000000e-01 : f32
    %66 = vector.broadcast %cst_25 : f32 to vector<16x16xf32>
    %67 = arith.mulf %65, %66 : vector<16x16xf32>
    %68 = vector.broadcast %19 : vector<1x16xf32> to vector<16x16xf32>
    %69 = arith.addf %67, %68 : vector<16x16xf32>
    %cst_26 = arith.constant dense<0xFF800000> : vector<16xf32>
    %70 = vector.multi_reduction <maximumf>, %69, %cst_26 [1] : vector<16x16xf32> to vector<16xf32>
    %71 = vector.shape_cast %70 : vector<16xf32> to vector<16x1xf32>
    %72 = vector.broadcast %71 : vector<16x1xf32> to vector<16x16xf32>
    %73 = arith.subf %69, %72 : vector<16x16xf32>
    %74 = math.exp %73 : vector<16x16xf32>
    %cst_27 = arith.constant dense<0.000000e+00> : vector<16xf32>
    %75 = vector.multi_reduction <add>, %74, %cst_27 [1] : vector<16x16xf32> to vector<16xf32>
    %76 = vector.shape_cast %75 : vector<16xf32> to vector<16x1xf32>
    %77 = tpu.reciprocal %76 {approx = true} : vector<16x1xf32> -> vector<16x1xf32>
    %78 = vector.broadcast %77 : vector<16x1xf32> to vector<16x16xf32>
    %79 = arith.mulf %74, %78 : vector<16x16xf32>
    %80 = arith.truncf %79 : vector<16x16xf32> to vector<16x16xbf16>
    %81 = arith.truncf %64 : vector<16x32xf32> to vector<16x32xbf16>
    %cst_28 = arith.constant dense<0.000000e+00> : vector<16x32xf32>
    %82 = tpu.matmul %80, %81, %cst_28 {dimension_numbers = #tpu.dot_dimension_numbers<[1], [0], [0], [1], [0, 0, 1, 1], [], []>} : vector<16x16xbf16>, vector<16x32xbf16>, vector<16x32xf32> -> vector<16x32xf32>
    %83 = vector.extract_strided_slice %13 {offsets = [0, 96], sizes = [16, 32], strides = [1, 1]} : vector<16x960xf32> to vector<16x32xf32>
    %84 = vector.extract_strided_slice %13 {offsets = [0, 416], sizes = [16, 32], strides = [1, 1]} : vector<16x960xf32> to vector<16x32xf32>
    %85 = vector.extract_strided_slice %13 {offsets = [0, 736], sizes = [16, 32], strides = [1, 1]} : vector<16x960xf32> to vector<16x32xf32>
    %cst_29 = arith.constant dense<0.000000e+00> : vector<16x16xf32>
    %86 = tpu.matmul %83, %84, %cst_29 {dimension_numbers = #tpu.dot_dimension_numbers<[1], [1], [0], [0], [0, 0, 1, 0], [], []>} : vector<16x32xf32>, vector<16x32xf32>, vector<16x16xf32> -> vector<16x16xf32>
    %cst_30 = arith.constant 2.000000e-01 : f32
    %87 = vector.broadcast %cst_30 : f32 to vector<16x16xf32>
    %88 = arith.mulf %86, %87 : vector<16x16xf32>
    %89 = vector.broadcast %19 : vector<1x16xf32> to vector<16x16xf32>
    %90 = arith.addf %88, %89 : vector<16x16xf32>
    %cst_31 = arith.constant dense<0xFF800000> : vector<16xf32>
    %91 = vector.multi_reduction <maximumf>, %90, %cst_31 [1] : vector<16x16xf32> to vector<16xf32>
    %92 = vector.shape_cast %91 : vector<16xf32> to vector<16x1xf32>
    %93 = vector.broadcast %92 : vector<16x1xf32> to vector<16x16xf32>
    %94 = arith.subf %90, %93 : vector<16x16xf32>
    %95 = math.exp %94 : vector<16x16xf32>
    %cst_32 = arith.constant dense<0.000000e+00> : vector<16xf32>
    %96 = vector.multi_reduction <add>, %95, %cst_32 [1] : vector<16x16xf32> to vector<16xf32>
    %97 = vector.shape_cast %96 : vector<16xf32> to vector<16x1xf32>
    %98 = tpu.reciprocal %97 {approx = true} : vector<16x1xf32> -> vector<16x1xf32>
    %99 = vector.broadcast %98 : vector<16x1xf32> to vector<16x16xf32>
    %100 = arith.mulf %95, %99 : vector<16x16xf32>
    %101 = arith.truncf %100 : vector<16x16xf32> to vector<16x16xbf16>
    %102 = arith.truncf %85 : vector<16x32xf32> to vector<16x32xbf16>
    %cst_33 = arith.constant dense<0.000000e+00> : vector<16x32xf32>
    %103 = tpu.matmul %101, %102, %cst_33 {dimension_numbers = #tpu.dot_dimension_numbers<[1], [0], [0], [1], [0, 0, 1, 1], [], []>} : vector<16x16xbf16>, vector<16x32xbf16>, vector<16x32xf32> -> vector<16x32xf32>
    %104 = vector.extract_strided_slice %13 {offsets = [0, 128], sizes = [16, 32], strides = [1, 1]} : vector<16x960xf32> to vector<16x32xf32>
    %105 = vector.extract_strided_slice %13 {offsets = [0, 448], sizes = [16, 32], strides = [1, 1]} : vector<16x960xf32> to vector<16x32xf32>
    %106 = vector.extract_strided_slice %13 {offsets = [0, 768], sizes = [16, 32], strides = [1, 1]} : vector<16x960xf32> to vector<16x32xf32>
    %cst_34 = arith.constant dense<0.000000e+00> : vector<16x16xf32>
    %107 = tpu.matmul %104, %105, %cst_34 {dimension_numbers = #tpu.dot_dimension_numbers<[1], [1], [0], [0], [0, 0, 1, 0], [], []>} : vector<16x32xf32>, vector<16x32xf32>, vector<16x16xf32> -> vector<16x16xf32>
    %cst_35 = arith.constant 2.000000e-01 : f32
    %108 = vector.broadcast %cst_35 : f32 to vector<16x16xf32>
    %109 = arith.mulf %107, %108 : vector<16x16xf32>
    %110 = vector.broadcast %19 : vector<1x16xf32> to vector<16x16xf32>
    %111 = arith.addf %109, %110 : vector<16x16xf32>
    %cst_36 = arith.constant dense<0xFF800000> : vector<16xf32>
    %112 = vector.multi_reduction <maximumf>, %111, %cst_36 [1] : vector<16x16xf32> to vector<16xf32>
    %113 = vector.shape_cast %112 : vector<16xf32> to vector<16x1xf32>
    %114 = vector.broadcast %113 : vector<16x1xf32> to vector<16x16xf32>
    %115 = arith.subf %111, %114 : vector<16x16xf32>
    %116 = math.exp %115 : vector<16x16xf32>
    %cst_37 = arith.constant dense<0.000000e+00> : vector<16xf32>
    %117 = vector.multi_reduction <add>, %116, %cst_37 [1] : vector<16x16xf32> to vector<16xf32>
    %118 = vector.shape_cast %117 : vector<16xf32> to vector<16x1xf32>
    %119 = tpu.reciprocal %118 {approx = true} : vector<16x1xf32> -> vector<16x1xf32>
    %120 = vector.broadcast %119 : vector<16x1xf32> to vector<16x16xf32>
    %121 = arith.mulf %116, %120 : vector<16x16xf32>
    %122 = arith.truncf %121 : vector<16x16xf32> to vector<16x16xbf16>
    %123 = arith.truncf %106 : vector<16x32xf32> to vector<16x32xbf16>
    %cst_38 = arith.constant dense<0.000000e+00> : vector<16x32xf32>
    %124 = tpu.matmul %122, %123, %cst_38 {dimension_numbers = #tpu.dot_dimension_numbers<[1], [0], [0], [1], [0, 0, 1, 1], [], []>} : vector<16x16xbf16>, vector<16x32xbf16>, vector<16x32xf32> -> vector<16x32xf32>
    %125 = vector.extract_strided_slice %13 {offsets = [0, 160], sizes = [16, 32], strides = [1, 1]} : vector<16x960xf32> to vector<16x32xf32>
    %126 = vector.extract_strided_slice %13 {offsets = [0, 480], sizes = [16, 32], strides = [1, 1]} : vector<16x960xf32> to vector<16x32xf32>
    %127 = vector.extract_strided_slice %13 {offsets = [0, 800], sizes = [16, 32], strides = [1, 1]} : vector<16x960xf32> to vector<16x32xf32>
    %cst_39 = arith.constant dense<0.000000e+00> : vector<16x16xf32>
    %128 = tpu.matmul %125, %126, %cst_39 {dimension_numbers = #tpu.dot_dimension_numbers<[1], [1], [0], [0], [0, 0, 1, 0], [], []>} : vector<16x32xf32>, vector<16x32xf32>, vector<16x16xf32> -> vector<16x16xf32>
    %cst_40 = arith.constant 2.000000e-01 : f32
    %129 = vector.broadcast %cst_40 : f32 to vector<16x16xf32>
    %130 = arith.mulf %128, %129 : vector<16x16xf32>
    %131 = vector.broadcast %19 : vector<1x16xf32> to vector<16x16xf32>
    %132 = arith.addf %130, %131 : vector<16x16xf32>
    %cst_41 = arith.constant dense<0xFF800000> : vector<16xf32>
    %133 = vector.multi_reduction <maximumf>, %132, %cst_41 [1] : vector<16x16xf32> to vector<16xf32>
    %134 = vector.shape_cast %133 : vector<16xf32> to vector<16x1xf32>
    %135 = vector.broadcast %134 : vector<16x1xf32> to vector<16x16xf32>
    %136 = arith.subf %132, %135 : vector<16x16xf32>
    %137 = math.exp %136 : vector<16x16xf32>
    %cst_42 = arith.constant dense<0.000000e+00> : vector<16xf32>
    %138 = vector.multi_reduction <add>, %137, %cst_42 [1] : vector<16x16xf32> to vector<16xf32>
    %139 = vector.shape_cast %138 : vector<16xf32> to vector<16x1xf32>
    %140 = tpu.reciprocal %139 {approx = true} : vector<16x1xf32> -> vector<16x1xf32>
    %141 = vector.broadcast %140 : vector<16x1xf32> to vector<16x16xf32>
    %142 = arith.mulf %137, %141 : vector<16x16xf32>
    %143 = arith.truncf %142 : vector<16x16xf32> to vector<16x16xbf16>
    %144 = arith.truncf %127 : vector<16x32xf32> to vector<16x32xbf16>
    %cst_43 = arith.constant dense<0.000000e+00> : vector<16x32xf32>
    %145 = tpu.matmul %143, %144, %cst_43 {dimension_numbers = #tpu.dot_dimension_numbers<[1], [0], [0], [1], [0, 0, 1, 1], [], []>} : vector<16x16xbf16>, vector<16x32xbf16>, vector<16x32xf32> -> vector<16x32xf32>
    %146 = vector.extract_strided_slice %13 {offsets = [0, 192], sizes = [16, 32], strides = [1, 1]} : vector<16x960xf32> to vector<16x32xf32>
    %147 = vector.extract_strided_slice %13 {offsets = [0, 512], sizes = [16, 32], strides = [1, 1]} : vector<16x960xf32> to vector<16x32xf32>
    %148 = vector.extract_strided_slice %13 {offsets = [0, 832], sizes = [16, 32], strides = [1, 1]} : vector<16x960xf32> to vector<16x32xf32>
    %cst_44 = arith.constant dense<0.000000e+00> : vector<16x16xf32>
    %149 = tpu.matmul %146, %147, %cst_44 {dimension_numbers = #tpu.dot_dimension_numbers<[1], [1], [0], [0], [0, 0, 1, 0], [], []>} : vector<16x32xf32>, vector<16x32xf32>, vector<16x16xf32> -> vector<16x16xf32>
    %cst_45 = arith.constant 2.000000e-01 : f32
    %150 = vector.broadcast %cst_45 : f32 to vector<16x16xf32>
    %151 = arith.mulf %149, %150 : vector<16x16xf32>
    %152 = vector.broadcast %19 : vector<1x16xf32> to vector<16x16xf32>
    %153 = arith.addf %151, %152 : vector<16x16xf32>
    %cst_46 = arith.constant dense<0xFF800000> : vector<16xf32>
    %154 = vector.multi_reduction <maximumf>, %153, %cst_46 [1] : vector<16x16xf32> to vector<16xf32>
    %155 = vector.shape_cast %154 : vector<16xf32> to vector<16x1xf32>
    %156 = vector.broadcast %155 : vector<16x1xf32> to vector<16x16xf32>
    %157 = arith.subf %153, %156 : vector<16x16xf32>
    %158 = math.exp %157 : vector<16x16xf32>
    %cst_47 = arith.constant dense<0.000000e+00> : vector<16xf32>
    %159 = vector.multi_reduction <add>, %158, %cst_47 [1] : vector<16x16xf32> to vector<16xf32>
    %160 = vector.shape_cast %159 : vector<16xf32> to vector<16x1xf32>
    %161 = tpu.reciprocal %160 {approx = true} : vector<16x1xf32> -> vector<16x1xf32>
    %162 = vector.broadcast %161 : vector<16x1xf32> to vector<16x16xf32>
    %163 = arith.mulf %158, %162 : vector<16x16xf32>
    %164 = arith.truncf %163 : vector<16x16xf32> to vector<16x16xbf16>
    %165 = arith.truncf %148 : vector<16x32xf32> to vector<16x32xbf16>
    %cst_48 = arith.constant dense<0.000000e+00> : vector<16x32xf32>
    %166 = tpu.matmul %164, %165, %cst_48 {dimension_numbers = #tpu.dot_dimension_numbers<[1], [0], [0], [1], [0, 0, 1, 1], [], []>} : vector<16x16xbf16>, vector<16x32xbf16>, vector<16x32xf32> -> vector<16x32xf32>
    %167 = vector.extract_strided_slice %13 {offsets = [0, 224], sizes = [16, 32], strides = [1, 1]} : vector<16x960xf32> to vector<16x32xf32>
    %168 = vector.extract_strided_slice %13 {offsets = [0, 544], sizes = [16, 32], strides = [1, 1]} : vector<16x960xf32> to vector<16x32xf32>
    %169 = vector.extract_strided_slice %13 {offsets = [0, 864], sizes = [16, 32], strides = [1, 1]} : vector<16x960xf32> to vector<16x32xf32>
    %cst_49 = arith.constant dense<0.000000e+00> : vector<16x16xf32>
    %170 = tpu.matmul %167, %168, %cst_49 {dimension_numbers = #tpu.dot_dimension_numbers<[1], [1], [0], [0], [0, 0, 1, 0], [], []>} : vector<16x32xf32>, vector<16x32xf32>, vector<16x16xf32> -> vector<16x16xf32>
    %cst_50 = arith.constant 2.000000e-01 : f32
    %171 = vector.broadcast %cst_50 : f32 to vector<16x16xf32>
    %172 = arith.mulf %170, %171 : vector<16x16xf32>
    %173 = vector.broadcast %19 : vector<1x16xf32> to vector<16x16xf32>
    %174 = arith.addf %172, %173 : vector<16x16xf32>
    %cst_51 = arith.constant dense<0xFF800000> : vector<16xf32>
    %175 = vector.multi_reduction <maximumf>, %174, %cst_51 [1] : vector<16x16xf32> to vector<16xf32>
    %176 = vector.shape_cast %175 : vector<16xf32> to vector<16x1xf32>
    %177 = vector.broadcast %176 : vector<16x1xf32> to vector<16x16xf32>
    %178 = arith.subf %174, %177 : vector<16x16xf32>
    %179 = math.exp %178 : vector<16x16xf32>
    %cst_52 = arith.constant dense<0.000000e+00> : vector<16xf32>
    %180 = vector.multi_reduction <add>, %179, %cst_52 [1] : vector<16x16xf32> to vector<16xf32>
    %181 = vector.shape_cast %180 : vector<16xf32> to vector<16x1xf32>
    %182 = tpu.reciprocal %181 {approx = true} : vector<16x1xf32> -> vector<16x1xf32>
    %183 = vector.broadcast %182 : vector<16x1xf32> to vector<16x16xf32>
    %184 = arith.mulf %179, %183 : vector<16x16xf32>
    %185 = arith.truncf %184 : vector<16x16xf32> to vector<16x16xbf16>
    %186 = arith.truncf %169 : vector<16x32xf32> to vector<16x32xbf16>
    %cst_53 = arith.constant dense<0.000000e+00> : vector<16x32xf32>
    %187 = tpu.matmul %185, %186, %cst_53 {dimension_numbers = #tpu.dot_dimension_numbers<[1], [0], [0], [1], [0, 0, 1, 1], [], []>} : vector<16x16xbf16>, vector<16x32xbf16>, vector<16x32xf32> -> vector<16x32xf32>
    %188 = vector.extract_strided_slice %13 {offsets = [0, 256], sizes = [16, 32], strides = [1, 1]} : vector<16x960xf32> to vector<16x32xf32>
    %189 = vector.extract_strided_slice %13 {offsets = [0, 576], sizes = [16, 32], strides = [1, 1]} : vector<16x960xf32> to vector<16x32xf32>
    %190 = vector.extract_strided_slice %13 {offsets = [0, 896], sizes = [16, 32], strides = [1, 1]} : vector<16x960xf32> to vector<16x32xf32>
    %cst_54 = arith.constant dense<0.000000e+00> : vector<16x16xf32>
    %191 = tpu.matmul %188, %189, %cst_54 {dimension_numbers = #tpu.dot_dimension_numbers<[1], [1], [0], [0], [0, 0, 1, 0], [], []>} : vector<16x32xf32>, vector<16x32xf32>, vector<16x16xf32> -> vector<16x16xf32>
    %cst_55 = arith.constant 2.000000e-01 : f32
    %192 = vector.broadcast %cst_55 : f32 to vector<16x16xf32>
    %193 = arith.mulf %191, %192 : vector<16x16xf32>
    %194 = vector.broadcast %19 : vector<1x16xf32> to vector<16x16xf32>
    %195 = arith.addf %193, %194 : vector<16x16xf32>
    %cst_56 = arith.constant dense<0xFF800000> : vector<16xf32>
    %196 = vector.multi_reduction <maximumf>, %195, %cst_56 [1] : vector<16x16xf32> to vector<16xf32>
    %197 = vector.shape_cast %196 : vector<16xf32> to vector<16x1xf32>
    %198 = vector.broadcast %197 : vector<16x1xf32> to vector<16x16xf32>
    %199 = arith.subf %195, %198 : vector<16x16xf32>
    %200 = math.exp %199 : vector<16x16xf32>
    %cst_57 = arith.constant dense<0.000000e+00> : vector<16xf32>
    %201 = vector.multi_reduction <add>, %200, %cst_57 [1] : vector<16x16xf32> to vector<16xf32>
    %202 = vector.shape_cast %201 : vector<16xf32> to vector<16x1xf32>
    %203 = tpu.reciprocal %202 {approx = true} : vector<16x1xf32> -> vector<16x1xf32>
    %204 = vector.broadcast %203 : vector<16x1xf32> to vector<16x16xf32>
    %205 = arith.mulf %200, %204 : vector<16x16xf32>
    %206 = arith.truncf %205 : vector<16x16xf32> to vector<16x16xbf16>
    %207 = arith.truncf %190 : vector<16x32xf32> to vector<16x32xbf16>
    %cst_58 = arith.constant dense<0.000000e+00> : vector<16x32xf32>
    %208 = tpu.matmul %206, %207, %cst_58 {dimension_numbers = #tpu.dot_dimension_numbers<[1], [0], [0], [1], [0, 0, 1, 1], [], []>} : vector<16x16xbf16>, vector<16x32xbf16>, vector<16x32xf32> -> vector<16x32xf32>
    %209 = vector.extract_strided_slice %13 {offsets = [0, 288], sizes = [16, 32], strides = [1, 1]} : vector<16x960xf32> to vector<16x32xf32>
    %210 = vector.extract_strided_slice %13 {offsets = [0, 608], sizes = [16, 32], strides = [1, 1]} : vector<16x960xf32> to vector<16x32xf32>
    %211 = vector.extract_strided_slice %13 {offsets = [0, 928], sizes = [16, 32], strides = [1, 1]} : vector<16x960xf32> to vector<16x32xf32>
    %cst_59 = arith.constant dense<0.000000e+00> : vector<16x16xf32>
    %212 = tpu.matmul %209, %210, %cst_59 {dimension_numbers = #tpu.dot_dimension_numbers<[1], [1], [0], [0], [0, 0, 1, 0], [], []>} : vector<16x32xf32>, vector<16x32xf32>, vector<16x16xf32> -> vector<16x16xf32>
    %cst_60 = arith.constant 2.000000e-01 : f32
    %213 = vector.broadcast %cst_60 : f32 to vector<16x16xf32>
    %214 = arith.mulf %212, %213 : vector<16x16xf32>
    %215 = vector.broadcast %19 : vector<1x16xf32> to vector<16x16xf32>
    %216 = arith.addf %214, %215 : vector<16x16xf32>
    %cst_61 = arith.constant dense<0xFF800000> : vector<16xf32>
    %217 = vector.multi_reduction <maximumf>, %216, %cst_61 [1] : vector<16x16xf32> to vector<16xf32>
    %218 = vector.shape_cast %217 : vector<16xf32> to vector<16x1xf32>
    %219 = vector.broadcast %218 : vector<16x1xf32> to vector<16x16xf32>
    %220 = arith.subf %216, %219 : vector<16x16xf32>
    %221 = math.exp %220 : vector<16x16xf32>
    %cst_62 = arith.constant dense<0.000000e+00> : vector<16xf32>
    %222 = vector.multi_reduction <add>, %221, %cst_62 [1] : vector<16x16xf32> to vector<16xf32>
    %223 = vector.shape_cast %222 : vector<16xf32> to vector<16x1xf32>
    %224 = tpu.reciprocal %223 {approx = true} : vector<16x1xf32> -> vector<16x1xf32>
    %225 = vector.broadcast %224 : vector<16x1xf32> to vector<16x16xf32>
    %226 = arith.mulf %221, %225 : vector<16x16xf32>
    %227 = arith.truncf %226 : vector<16x16xf32> to vector<16x16xbf16>
    %228 = arith.truncf %211 : vector<16x32xf32> to vector<16x32xbf16>
    %cst_63 = arith.constant dense<0.000000e+00> : vector<16x32xf32>
    %229 = tpu.matmul %227, %228, %cst_63 {dimension_numbers = #tpu.dot_dimension_numbers<[1], [0], [0], [1], [0, 0, 1, 1], [], []>} : vector<16x16xbf16>, vector<16x32xbf16>, vector<16x32xf32> -> vector<16x32xf32>
    %230 = tpu.concatenate %40, %61, %82, %103, %124, %145, %166, %187, %208, %229 in 1 : vector<16x32xf32>, vector<16x32xf32>, vector<16x32xf32>, vector<16x32xf32>, vector<16x32xf32>, vector<16x32xf32>, vector<16x32xf32>, vector<16x32xf32>, vector<16x32xf32>, vector<16x32xf32> -> vector<16x320xf32>
    %231 = arith.truncf %230 : vector<16x320xf32> to vector<16x320xbf16>
    %c0_64 = arith.constant 0 : index
    %c0_65 = arith.constant 0 : index
    %232 = vector.load %arg6[%c0_64, %c0_65] : memref<320x256xbf16, #tpu.memory_space<vmem>>, vector<320x256xbf16>
    %cst_66 = arith.constant dense<0.000000e+00> : vector<16x256xf32>
    %233 = tpu.matmul %231, %232, %cst_66 {dimension_numbers = #tpu.dot_dimension_numbers<[1], [0], [0], [1], [0, 0, 1, 1], [], []>} : vector<16x320xbf16>, vector<320x256xbf16>, vector<16x256xf32> -> vector<16x256xf32>
    %c0_67 = arith.constant 0 : index
    %c0_68 = arith.constant 0 : index
    %234 = vector.load %arg7[%c0_67, %c0_68] : memref<1x256xf32, #tpu.memory_space<vmem>>, vector<1x256xf32>
    %235 = vector.broadcast %234 : vector<1x256xf32> to vector<16x256xf32>
    %236 = arith.addf %233, %235 : vector<16x256xf32>
    %237 = arith.addf %7, %236 : vector<16x256xf32>
    %c0_69 = arith.constant 0 : index
    %c0_70 = arith.constant 0 : index
    %238 = vector.load %arg8[%c0_69, %c0_70] : memref<1x256xf32, #tpu.memory_space<vmem>>, vector<1x256xf32>
    %c0_71 = arith.constant 0 : index
    %c0_72 = arith.constant 0 : index
    %239 = vector.load %arg9[%c0_71, %c0_72] : memref<1x256xf32, #tpu.memory_space<vmem>>, vector<1x256xf32>
    %cst_73 = arith.constant dense<0.000000e+00> : vector<16xf32>
    %240 = vector.multi_reduction <add>, %237, %cst_73 [1] : vector<16x256xf32> to vector<16xf32>
    %241 = vector.shape_cast %240 : vector<16xf32> to vector<16x1xf32>
    %cst_74 = arith.constant 4.000000e-03 : f32
    %242 = vector.broadcast %cst_74 : f32 to vector<16x1xf32>
    %243 = arith.mulf %241, %242 : vector<16x1xf32>
    %244 = arith.mulf %237, %237 : vector<16x256xf32>
    %cst_75 = arith.constant dense<0.000000e+00> : vector<16xf32>
    %245 = vector.multi_reduction <add>, %244, %cst_75 [1] : vector<16x256xf32> to vector<16xf32>
    %246 = vector.shape_cast %245 : vector<16xf32> to vector<16x1xf32>
    %cst_76 = arith.constant 4.000000e-03 : f32
    %247 = vector.broadcast %cst_76 : f32 to vector<16x1xf32>
    %248 = arith.mulf %246, %247 : vector<16x1xf32>
    %249 = arith.mulf %243, %243 : vector<16x1xf32>
    %250 = arith.subf %248, %249 : vector<16x1xf32>
    %251 = vector.broadcast %243 : vector<16x1xf32> to vector<16x256xf32>
    %252 = arith.subf %237, %251 : vector<16x256xf32>
    %cst_77 = arith.constant 9.99999974E-6 : f32
    %253 = vector.broadcast %cst_77 : f32 to vector<16x1xf32>
    %254 = arith.addf %250, %253 : vector<16x1xf32>
    %255 = math.rsqrt %254 : vector<16x1xf32>
    %256 = vector.broadcast %255 : vector<16x1xf32> to vector<16x256xf32>
    %257 = arith.mulf %252, %256 : vector<16x256xf32>
    %258 = vector.broadcast %238 : vector<1x256xf32> to vector<16x256xf32>
    %259 = arith.mulf %257, %258 : vector<16x256xf32>
    %260 = vector.broadcast %239 : vector<1x256xf32> to vector<16x256xf32>
    %261 = arith.addf %259, %260 : vector<16x256xf32>
    %262 = arith.truncf %261 : vector<16x256xf32> to vector<16x256xbf16>
    %c0_78 = arith.constant 0 : index
    %c0_79 = arith.constant 0 : index
    %263 = vector.load %arg10[%c0_78, %c0_79] : memref<256x2048xbf16, #tpu.memory_space<vmem>>, vector<256x2048xbf16>
    %cst_80 = arith.constant dense<0.000000e+00> : vector<16x2048xf32>
    %264 = tpu.matmul %262, %263, %cst_80 {dimension_numbers = #tpu.dot_dimension_numbers<[1], [0], [0], [1], [0, 0, 1, 1], [], []>} : vector<16x256xbf16>, vector<256x2048xbf16>, vector<16x2048xf32> -> vector<16x2048xf32>
    %c0_81 = arith.constant 0 : index
    %c0_82 = arith.constant 0 : index
    %265 = vector.load %arg11[%c0_81, %c0_82] : memref<1x2048xf32, #tpu.memory_space<vmem>>, vector<1x2048xf32>
    %266 = vector.broadcast %265 : vector<1x2048xf32> to vector<16x2048xf32>
    %267 = arith.addf %264, %266 : vector<16x2048xf32>
    %cst_83 = arith.constant 5.000000e-01 : f32
    %268 = vector.broadcast %cst_83 : f32 to vector<16x2048xf32>
    %269 = arith.mulf %268, %267 : vector<16x2048xf32>
    %cst_84 = arith.constant 0.707106769 : f32
    %270 = vector.broadcast %cst_84 : f32 to vector<16x2048xf32>
    %271 = arith.mulf %267, %270 : vector<16x2048xf32>
    %272 = math.erf %271 : vector<16x2048xf32>
    %cst_85 = arith.constant 1.000000e+00 : f32
    %273 = vector.broadcast %cst_85 : f32 to vector<16x2048xf32>
    %274 = arith.addf %273, %272 : vector<16x2048xf32>
    %275 = arith.mulf %269, %274 : vector<16x2048xf32>
    %276 = arith.truncf %275 : vector<16x2048xf32> to vector<16x2048xbf16>
    %c0_86 = arith.constant 0 : index
    %c0_87 = arith.constant 0 : index
    %277 = vector.load %arg12[%c0_86, %c0_87] : memref<2048x256xbf16, #tpu.memory_space<vmem>>, vector<2048x256xbf16>
    %cst_88 = arith.constant dense<0.000000e+00> : vector<16x256xf32>
    %278 = tpu.matmul %276, %277, %cst_88 {dimension_numbers = #tpu.dot_dimension_numbers<[1], [0], [0], [1], [0, 0, 1, 1], [], []>} : vector<16x2048xbf16>, vector<2048x256xbf16>, vector<16x256xf32> -> vector<16x256xf32>
    %c0_89 = arith.constant 0 : index
    %c0_90 = arith.constant 0 : index
    %279 = vector.load %arg13[%c0_89, %c0_90] : memref<1x256xf32, #tpu.memory_space<vmem>>, vector<1x256xf32>
    %280 = vector.broadcast %279 : vector<1x256xf32> to vector<16x256xf32>
    %281 = arith.addf %278, %280 : vector<16x256xf32>
    %282 = arith.addf %261, %281 : vector<16x256xf32>
    %c0_91 = arith.constant 0 : index
    %c0_92 = arith.constant 0 : index
    %283 = vector.load %arg14[%c0_91, %c0_92] : memref<1x256xf32, #tpu.memory_space<vmem>>, vector<1x256xf32>
    %c0_93 = arith.constant 0 : index
    %c0_94 = arith.constant 0 : index
    %284 = vector.load %arg15[%c0_93, %c0_94] : memref<1x256xf32, #tpu.memory_space<vmem>>, vector<1x256xf32>
    %cst_95 = arith.constant dense<0.000000e+00> : vector<16xf32>
    %285 = vector.multi_reduction <add>, %282, %cst_95 [1] : vector<16x256xf32> to vector<16xf32>
    %286 = vector.shape_cast %285 : vector<16xf32> to vector<16x1xf32>
    %cst_96 = arith.constant 4.000000e-03 : f32
    %287 = vector.broadcast %cst_96 : f32 to vector<16x1xf32>
    %288 = arith.mulf %286, %287 : vector<16x1xf32>
    %289 = arith.mulf %282, %282 : vector<16x256xf32>
    %cst_97 = arith.constant dense<0.000000e+00> : vector<16xf32>
    %290 = vector.multi_reduction <add>, %289, %cst_97 [1] : vector<16x256xf32> to vector<16xf32>
    %291 = vector.shape_cast %290 : vector<16xf32> to vector<16x1xf32>
    %cst_98 = arith.constant 4.000000e-03 : f32
    %292 = vector.broadcast %cst_98 : f32 to vector<16x1xf32>
    %293 = arith.mulf %291, %292 : vector<16x1xf32>
    %294 = arith.mulf %288, %288 : vector<16x1xf32>
    %295 = arith.subf %293, %294 : vector<16x1xf32>
    %296 = vector.broadcast %288 : vector<16x1xf32> to vector<16x256xf32>
    %297 = arith.subf %282, %296 : vector<16x256xf32>
    %cst_99 = arith.constant 9.99999974E-6 : f32
    %298 = vector.broadcast %cst_99 : f32 to vector<16x1xf32>
    %299 = arith.addf %295, %298 : vector<16x1xf32>
    %300 = math.rsqrt %299 : vector<16x1xf32>
    %301 = vector.broadcast %300 : vector<16x1xf32> to vector<16x256xf32>
    %302 = arith.mulf %297, %301 : vector<16x256xf32>
    %303 = vector.broadcast %283 : vector<1x256xf32> to vector<16x256xf32>
    %304 = arith.mulf %302, %303 : vector<16x256xf32>
    %305 = vector.broadcast %284 : vector<1x256xf32> to vector<16x256xf32>
    %306 = arith.addf %304, %305 : vector<16x256xf32>
    %c0_100 = arith.constant 0 : index
    %c0_101 = arith.constant 0 : index
    %307 = vector.load %arg16[%c0_100, %c0_101] : memref<1x256xf32, #tpu.memory_space<vmem>>, vector<1x256xf32>
    %308 = vector.broadcast %307 : vector<1x256xf32> to vector<16x256xf32>
    %309 = arith.mulf %306, %308 : vector<16x256xf32>
    %cst_102 = arith.constant dense<0.000000e+00> : vector<16xf32>
    %310 = vector.multi_reduction <add>, %309, %cst_102 [1] : vector<16x256xf32> to vector<16xf32>
    %311 = vector.shape_cast %310 : vector<16xf32> to vector<16x1xf32>
    %c0_103 = arith.constant 0 : index
    %c0_104 = arith.constant 0 : index
    %312 = vector.load %arg17[%c0_103, %c0_104] : memref<1x1xf32, #tpu.memory_space<vmem>>, vector<1x1xf32>
    %313 = vector.broadcast %312 : vector<1x1xf32> to vector<16x1xf32>
    %314 = arith.addf %311, %313 : vector<16x1xf32>
    %315 = arith.negf %314 : vector<16x1xf32>
    %316 = math.exp %315 : vector<16x1xf32>
    %cst_105 = arith.constant 1.000000e+00 : f32
    %317 = vector.broadcast %cst_105 : f32 to vector<16x1xf32>
    %318 = arith.addf %317, %316 : vector<16x1xf32>
    %319 = arith.divf %317, %318 : vector<16x1xf32>
    %320 = vector.shape_cast %319 : vector<16x1xf32> to vector<1x16x1xf32>
    %c0_106 = arith.constant 0 : index
    %c0_107 = arith.constant 0 : index
    %c0_108 = arith.constant 0 : index
    %321 = vector.load %arg18[%c0_106, %c0_107, %c0_108] : memref<1x16x1xf32, #tpu.memory_space<vmem>>, vector<1x16x1xf32>
    tpu.vector_store %arg18[%c0_106, %c0_107, %c0_108], %320 {strides = array<i32>} : memref<1x16x1xf32, #tpu.memory_space<vmem>>, vector<1x16x1xf32>,
    return
  }
  func.func @transform_0(%arg0: i32) -> (i32, i32, i32) {
    %c0_i32 = arith.constant 0 : i32
    %c0_i32_0 = arith.constant 0 : i32
    %c0_i32_1 = arith.constant 0 : i32
    return %arg0, %c0_i32, %c0_i32_0 : i32, i32, i32
  }
  func.func @transform_1(%arg0: i32) -> (i32, i32, i32) {
    %c0_i32 = arith.constant 0 : i32
    %c0_i32_0 = arith.constant 0 : i32
    %c0_i32_1 = arith.constant 0 : i32
    return %arg0, %c0_i32, %c0_i32_0 : i32, i32, i32
  }
  func.func @transform_2(%arg0: i32) -> (i32, i32) {
    %c0_i32 = arith.constant 0 : i32
    %c0_i32_0 = arith.constant 0 : i32
    %c0_i32_1 = arith.constant 0 : i32
    return %c0_i32, %c0_i32_0 : i32, i32
  }
  func.func @transform_3(%arg0: i32) -> (i32, i32) {
    %c0_i32 = arith.constant 0 : i32
    %c0_i32_0 = arith.constant 0 : i32
    %c0_i32_1 = arith.constant 0 : i32
    return %c0_i32, %c0_i32_0 : i32, i32
  }
  func.func @transform_4(%arg0: i32) -> (i32, i32) {
    %c0_i32 = arith.constant 0 : i32
    %c0_i32_0 = arith.constant 0 : i32
    %c0_i32_1 = arith.constant 0 : i32
    return %c0_i32, %c0_i32_0 : i32, i32
  }
  func.func @transform_5(%arg0: i32) -> (i32, i32) {
    %c0_i32 = arith.constant 0 : i32
    %c0_i32_0 = arith.constant 0 : i32
    %c0_i32_1 = arith.constant 0 : i32
    return %c0_i32, %c0_i32_0 : i32, i32
  }
  func.func @transform_6(%arg0: i32) -> (i32, i32) {
    %c0_i32 = arith.constant 0 : i32
    %c0_i32_0 = arith.constant 0 : i32
    %c0_i32_1 = arith.constant 0 : i32
    return %c0_i32, %c0_i32_0 : i32, i32
  }
  func.func @transform_7(%arg0: i32) -> (i32, i32) {
    %c0_i32 = arith.constant 0 : i32
    %c0_i32_0 = arith.constant 0 : i32
    %c0_i32_1 = arith.constant 0 : i32
    return %c0_i32, %c0_i32_0 : i32, i32
  }
  func.func @transform_8(%arg0: i32) -> (i32, i32) {
    %c0_i32 = arith.constant 0 : i32
    %c0_i32_0 = arith.constant 0 : i32
    %c0_i32_1 = arith.constant 0 : i32
    return %c0_i32, %c0_i32_0 : i32, i32
  }
  func.func @transform_9(%arg0: i32) -> (i32, i32) {
    %c0_i32 = arith.constant 0 : i32
    %c0_i32_0 = arith.constant 0 : i32
    %c0_i32_1 = arith.constant 0 : i32
    return %c0_i32, %c0_i32_0 : i32, i32
  }
  func.func @transform_10(%arg0: i32) -> (i32, i32) {
    %c0_i32 = arith.constant 0 : i32
    %c0_i32_0 = arith.constant 0 : i32
    %c0_i32_1 = arith.constant 0 : i32
    return %c0_i32, %c0_i32_0 : i32, i32
  }
  func.func @transform_11(%arg0: i32) -> (i32, i32) {
    %c0_i32 = arith.constant 0 : i32
    %c0_i32_0 = arith.constant 0 : i32
    %c0_i32_1 = arith.constant 0 : i32
    return %c0_i32, %c0_i32_0 : i32, i32
  }
  func.func @transform_12(%arg0: i32) -> (i32, i32) {
    %c0_i32 = arith.constant 0 : i32
    %c0_i32_0 = arith.constant 0 : i32
    %c0_i32_1 = arith.constant 0 : i32
    return %c0_i32, %c0_i32_0 : i32, i32
  }
  func.func @transform_13(%arg0: i32) -> (i32, i32) {
    %c0_i32 = arith.constant 0 : i32
    %c0_i32_0 = arith.constant 0 : i32
    %c0_i32_1 = arith.constant 0 : i32
    return %c0_i32, %c0_i32_0 : i32, i32
  }
  func.func @transform_14(%arg0: i32) -> (i32, i32) {
    %c0_i32 = arith.constant 0 : i32
    %c0_i32_0 = arith.constant 0 : i32
    %c0_i32_1 = arith.constant 0 : i32
    return %c0_i32, %c0_i32_0 : i32, i32
  }
  func.func @transform_15(%arg0: i32) -> (i32, i32) {
    %c0_i32 = arith.constant 0 : i32
    %c0_i32_0 = arith.constant 0 : i32
    %c0_i32_1 = arith.constant 0 : i32
    return %c0_i32, %c0_i32_0 : i32, i32
  }
  func.func @transform_16(%arg0: i32) -> (i32, i32) {
    %c0_i32 = arith.constant 0 : i32
    %c0_i32_0 = arith.constant 0 : i32
    %c0_i32_1 = arith.constant 0 : i32
    return %c0_i32, %c0_i32_0 : i32, i32
  }
  func.func @transform_17(%arg0: i32) -> (i32, i32, i32) {
    %c0_i32 = arith.constant 0 : i32
    %c0_i32_0 = arith.constant 0 : i32
    %c0_i32_1 = arith.constant 0 : i32
    return %arg0, %c0_i32, %c0_i32_0 : i32, i32, i32
  }
}

</mosaic_0001>

<llo_original>
// kernel: transformer_forward.1
$region0: #{transformer_forward.1}
  #allocation0 [shape = 'u32[]', space=smem, size = 0x4, offset = 0x4, fixed_abs, tag = 'smem constant byte address 0x4 - core index']
  #allocation1 [shape = 'u32[72,128]{1,0:T(1,128)}', space=vmem, size = 0x9000, scoped, tag = 'internal scratch']
  #allocation2 [shape = 'f32[1,1]{1,0:T(1,128)S(1)}', space=vmem, size = 0x200, scoped, tag = 'scoped memory for transformer_forward.1']
  %s0 = inlined_call_operand.vmem [shape: f32[2,16,32], index: 0, kind: input, shape index: {}]
  %s1 = inlined_call_operand.vmem [shape: f32[2,16,256], index: 1, kind: input, shape index: {}]
  %s2 = inlined_call_operand.vmem [shape: bf16[32,256], index: 2, kind: input, shape index: {}]
  %s3 = inlined_call_operand.vmem [shape: bf16[256,960], index: 3, kind: input, shape index: {}]
  %s4 = inlined_call_operand.vmem [shape: f32[1,960], index: 4, kind: input, shape index: {}]
  %s5 = inlined_call_operand.hbm [shape: bf16[320,256], index: 5, kind: input, shape index: {}]
  %s6 = inlined_call_operand.vmem [shape: f32[1,256], index: 6, kind: input, shape index: {}]
  %s7 = inlined_call_operand.vmem [shape: f32[1,256], index: 7, kind: input, shape index: {}]
  %s8 = inlined_call_operand.vmem [shape: f32[1,256], index: 8, kind: input, shape index: {}]
  %s9 = inlined_call_operand.vmem [shape: bf16[256,2048], index: 9, kind: input, shape index: {}]
  %s10 = inlined_call_operand.vmem [shape: f32[1,2048], index: 10, kind: input, shape index: {}]
  %s11 = inlined_call_operand.hbm [shape: bf16[2048,256], index: 11, kind: input, shape index: {}]
  %s12 = inlined_call_operand.vmem [shape: f32[1,256], index: 12, kind: input, shape index: {}]
  %s13 = inlined_call_operand.vmem [shape: f32[1,256], index: 13, kind: input, shape index: {}]
  %s14 = inlined_call_operand.vmem [shape: f32[1,256], index: 14, kind: input, shape index: {}]
  %s15 = inlined_call_operand.vmem [shape: f32[1,256], index: 15, kind: input, shape index: {}]
  %s16 = inlined_call_operand.<no memory space> [shape: f32[1,1], index: 16, kind: input, shape index: {}]
  %s17 = inlined_call_operand.vmem [shape: f32[2,16,1], index: 17, kind: output, shape index: {}]
  %s18 = sld [smem:[#allocation0]]
  $region109: #{transformer_forward.1} parent=0
    _
  %s20 = ssub.s32 1, %s18
  %s21 = scalar_select 0, %s20, %s18
  %v22 = vstv %s16
  %23 = vst [vmem:[#allocation2] sm:$0x1] %v22
  $region1: #{transformer_forward.1} parent=0
    #allocation3 [shape = 'u8[163840]{0}', space=vmem, size = 0x28000, scoped, tag = 'input window, operand 5, single buffered']
    #allocation4 [shape = 's32[2]{0}', space=sflag, size = 0x8, scoped, tag = 'scoped memory for transformer_forward.1']
    #allocation5 [shape = 'u8[1048576]{0}', space=vmem, size = 0x100000, scoped, tag = 'input window, operand 11, single buffered']
    #allocation6 [shape = 's32[1]{0}', space=sflag, size = 0x4, scoped, tag = 'scoped memory for transformer_forward.1']
    %24 = vsyncpa [#allocation4], 0
    %25 = vsyncpa [#allocation6], 0
    loop: start=0, step=1, limit=4
    $region2: #{transformer_forward.1} parent=1 // loop_pre_header
      _
    $region3: #{transformer_forward.1} parent=1 // loop_header
      %s27 = sphi 0, %s31
      %p28 = scmp.ge.s32.totalorder %s27, 4
      %s37 = sphi 0, %s39
      %s40 = sphi 0, %s37
      %s41 = sphi 0, %s40
      %s57 = sphi 0, %s41
      %s63 = sphi 0, %s65
      %s66 = sphi 0, %s63
      %s67 = sphi 0, %s66
      %s83 = sphi 0, %s67
      %s87 = sphi 0, %s87
      %s89 = sphi 0, %s87
      %s90 = sphi 0, %s89
      %s104 = sphi 0, %s90
      %s108 = sphi 0, %s108
      %s110 = sphi 0, %s108
      %s111 = sphi 0, %s110
      %s125 = sphi 0, %s111
      %s129 = sphi 0, %s129
      %s131 = sphi 0, %s129
      %s132 = sphi 0, %s131
      %s146 = sphi 0, %s132
      %s150 = sphi 0, %s150
      %s152 = sphi 0, %s150
      %s153 = sphi 0, %s152
      %s167 = sphi 0, %s153
      %s171 = sphi 0, %s171
      %s173 = sphi 0, %s171
      %s174 = sphi 0, %s173
      %s188 = sphi 0, %s174
      %s192 = sphi 0, %s192
      %s194 = sphi 0, %s192
      %s195 = sphi 0, %s194
      %s209 = sphi 0, %s195
      %s213 = sphi 0, %s213
      %s215 = sphi 0, %s213
      %s216 = sphi 0, %s215
      %s230 = sphi 0, %s216
      %s234 = sphi 0, %s234
      %s236 = sphi 0, %s234
      %s237 = sphi 0, %s236
      %s251 = sphi 0, %s237
      %s255 = sphi 0, %s255
      %s257 = sphi 0, %s255
      %s258 = sphi 0, %s257
      %s272 = sphi 0, %s258
      %s276 = sphi 0, %s276
      %s278 = sphi 0, %s276
      %s279 = sphi 0, %s278
      %s293 = sphi 0, %s279
      %s297 = sphi 0, %s297
      %s299 = sphi 0, %s297
      %s300 = sphi 0, %s299
      %s314 = sphi 0, %s300
      %s318 = sphi 0, %s318
      %s320 = sphi 0, %s318
      %s321 = sphi 0, %s320
      %s335 = sphi 0, %s321
      %s339 = sphi 0, %s339
      %s341 = sphi 0, %s339
      %s342 = sphi 0, %s341
      %s356 = sphi 0, %s342
      %s360 = sphi 0, %s360
      %s362 = sphi 0, %s360
      %s363 = sphi 0, %s362
      %s377 = sphi 0, %s363
      %s381 = sphi 0, %s381
      %s383 = sphi 0, %s381
      %s384 = sphi 0, %s383
      %s398 = sphi 0, %s384
      %s404 = sphi 0, %s406
      %s407 = sphi 0, %s404
      %s408 = sphi 0, %s407
      %s424 = sphi 0, %s408
    $region4: #{transformer_forward.1} parent=1 // loop_header_branch
      %30 = sbr.rel (%p28) target = $region8
    $region5: #{transformer_forward.1} parent=1 // loop_body
      %s32 = ssub.s32 %s27, 1
      %s33 = ssub.s32 %s27, 2
      %s34 = sadd.s32 %s27, 1
      %s35 = ssub.s32 %s27, %s34
      %p36 = scmp.eq.s32.totalorder %s35, 0
      %s38 = sadd.s32 %s37, 1
      %s39 = scalar_select %p36, %s37, %s38
      %p42 = pneg %p36
      %p43 = scmp.eq.s32.totalorder %s27, 1
      %p44 = por %p42, %p43
      %p45 = scmp.ne.s32.totalorder %s37, %s40
      %p46 = scmp.eq.s32.totalorder %s27, 0
      %p47 = por %p45, %p46
      %p48 = scmp.ne.s32.totalorder %s37, %s40
      %p49 = scmp.eq.s32.totalorder %s32, 1
      %p50 = por %p48, %p49
      %p51 = scmp.ne.s32.totalorder %s40, %s41
      %p52 = scmp.eq.s32.totalorder %s32, 0
      %p53 = por %p51, %p52
      %p54 = scmp.ne.s32.totalorder %s40, %s41
      %p55 = scmp.eq.s32.totalorder %s33, 1
      %p56 = por %p54, %p55
      %p58 = scmp.ne.s32.totalorder %s41, %s57
      %p59 = scmp.eq.s32.totalorder %s33, 0
      %p60 = por %p58, %p59
      %s61 = ssub.s32 %s27, %s34
      %p62 = scmp.eq.s32.totalorder %s61, 0
      %s64 = sadd.s32 %s63, 1
      %s65 = scalar_select %p62, %s63, %s64
      %p68 = pneg %p62
      %p69 = scmp.eq.s32.totalorder %s27, 1
      %p70 = por %p68, %p69
      %p71 = scmp.ne.s32.totalorder %s63, %s66
      %p72 = scmp.eq.s32.totalorder %s27, 0
      %p73 = por %p71, %p72
      %p74 = scmp.ne.s32.totalorder %s63, %s66
      %p75 = scmp.eq.s32.totalorder %s32, 1
      %p76 = por %p74, %p75
      %p77 = scmp.ne.s32.totalorder %s66, %s67
      %p78 = scmp.eq.s32.totalorder %s32, 0
      %p79 = por %p77, %p78
      %p80 = scmp.ne.s32.totalorder %s66, %s67
      %p81 = scmp.eq.s32.totalorder %s33, 1
      %p82 = por %p80, %p81
      %p84 = scmp.ne.s32.totalorder %s67, %s83
      %p85 = scmp.eq.s32.totalorder %s33, 0
      %p86 = por %p84, %p85
      %s88 = sadd.s32 %s87, 1
      %p91 = scmp.eq.s32.totalorder %s27, 1
      %p92 = scmp.ne.s32.totalorder %s87, %s89
      %p93 = scmp.eq.s32.totalorder %s27, 0
      %p94 = por %p92, %p93
      %p95 = scmp.ne.s32.totalorder %s87, %s89
      %p96 = scmp.eq.s32.totalorder %s32, 1
      %p97 = por %p95, %p96
      %p98 = scmp.ne.s32.totalorder %s89, %s90
      %p99 = scmp.eq.s32.totalorder %s32, 0
      %p100 = por %p98, %p99
      %p101 = scmp.ne.s32.totalorder %s89, %s90
      %p102 = scmp.eq.s32.totalorder %s33, 1
      %p103 = por %p101, %p102
      %p105 = scmp.ne.s32.totalorder %s90, %s104
      %p106 = scmp.eq.s32.totalorder %s33, 0
      %p107 = por %p105, %p106
      %s109 = sadd.s32 %s108, 1
      %p112 = scmp.eq.s32.totalorder %s27, 1
      %p113 = scmp.ne.s32.totalorder %s108, %s110
      %p114 = scmp.eq.s32.totalorder %s27, 0
      %p115 = por %p113, %p114
      %p116 = scmp.ne.s32.totalorder %s108, %s110
      %p117 = scmp.eq.s32.totalorder %s32, 1
      %p118 = por %p116, %p117
      %p119 = scmp.ne.s32.totalorder %s110, %s111
      %p120 = scmp.eq.s32.totalorder %s32, 0
      %p121 = por %p119, %p120
      %p122 = scmp.ne.s32.totalorder %s110, %s111
      %p123 = scmp.eq.s32.totalorder %s33, 1
      %p124 = por %p122, %p123
      %p126 = scmp.ne.s32.totalorder %s111, %s125
      %p127 = scmp.eq.s32.totalorder %s33, 0
      %p128 = por %p126, %p127
      %s130 = sadd.s32 %s129, 1
      %p133 = scmp.eq.s32.totalorder %s27, 1
      %p134 = scmp.ne.s32.totalorder %s129, %s131
      %p135 = scmp.eq.s32.totalorder %s27, 0
      %p136 = por %p134, %p135
      %p137 = scmp.ne.s32.totalorder %s129, %s131
      %p138 = scmp.eq.s32.totalorder %s32, 1
      %p139 = por %p137, %p138
      %p140 = scmp.ne.s32.totalorder %s131, %s132
      %p141 = scmp.eq.s32.totalorder %s32, 0
      %p142 = por %p140, %p141
      %p143 = scmp.ne.s32.totalorder %s131, %s132
      %p144 = scmp.eq.s32.totalorder %s33, 1
      %p145 = por %p143, %p144
      %p147 = scmp.ne.s32.totalorder %s132, %s146
      %p148 = scmp.eq.s32.totalorder %s33, 0
      %p149 = por %p147, %p148
      %s151 = sadd.s32 %s150, 1
      %p154 = scmp.eq.s32.totalorder %s27, 1
      %p155 = scmp.ne.s32.totalorder %s150, %s152
      %p156 = scmp.eq.s32.totalorder %s27, 0
      %p157 = por %p155, %p156
      %p158 = scmp.ne.s32.totalorder %s150, %s152
      %p159 = scmp.eq.s32.totalorder %s32, 1
      %p160 = por %p158, %p159
      %p161 = scmp.ne.s32.totalorder %s152, %s153
      %p162 = scmp.eq.s32.totalorder %s32, 0
      %p163 = por %p161, %p162
      %p164 = scmp.ne.s32.totalorder %s152, %s153
      %p165 = scmp.eq.s32.totalorder %s33, 1
      %p166 = por %p164, %p165
      %p168 = scmp.ne.s32.totalorder %s153, %s167
      %p169 = scmp.eq.s32.totalorder %s33, 0
      %p170 = por %p168, %p169
      %s172 = sadd.s32 %s171, 1
      %p175 = scmp.eq.s32.totalorder %s27, 1
      %p176 = scmp.ne.s32.totalorder %s171, %s173
      %p177 = scmp.eq.s32.totalorder %s27, 0
      %p178 = por %p176, %p177
      %p179 = scmp.ne.s32.totalorder %s171, %s173
      %p180 = scmp.eq.s32.totalorder %s32, 1
      %p181 = por %p179, %p180
      %p182 = scmp.ne.s32.totalorder %s173, %s174
      %p183 = scmp.eq.s32.totalorder %s32, 0
      %p184 = por %p182, %p183
      %p185 = scmp.ne.s32.totalorder %s173, %s174
      %p186 = scmp.eq.s32.totalorder %s33, 1
      %p187 = por %p185, %p186
      %p189 = scmp.ne.s32.totalorder %s174, %s188
      %p190 = scmp.eq.s32.totalorder %s33, 0
      %p191 = por %p189, %p190
      %s193 = sadd.s32 %s192, 1
      %p196 = scmp.eq.s32.totalorder %s27, 1
      %p197 = scmp.ne.s32.totalorder %s192, %s194
      %p198 = scmp.eq.s32.totalorder %s27, 0
      %p199 = por %p197, %p198
      %p200 = scmp.ne.s32.totalorder %s192, %s194
      %p201 = scmp.eq.s32.totalorder %s32, 1
      %p202 = por %p200, %p201
      %p203 = scmp.ne.s32.totalorder %s194, %s195
      %p204 = scmp.eq.s32.totalorder %s32, 0
      %p205 = por %p203, %p204
      %p206 = scmp.ne.s32.totalorder %s194, %s195
      %p207 = scmp.eq.s32.totalorder %s33, 1
      %p208 = por %p206, %p207
      %p210 = scmp.ne.s32.totalorder %s195, %s209
      %p211 = scmp.eq.s32.totalorder %s33, 0
      %p212 = por %p210, %p211
      %s214 = sadd.s32 %s213, 1
      %p217 = scmp.eq.s32.totalorder %s27, 1
      %p218 = scmp.ne.s32.totalorder %s213, %s215
      %p219 = scmp.eq.s32.totalorder %s27, 0
      %p220 = por %p218, %p219
      %p221 = scmp.ne.s32.totalorder %s213, %s215
      %p222 = scmp.eq.s32.totalorder %s32, 1
      %p223 = por %p221, %p222
      %p224 = scmp.ne.s32.totalorder %s215, %s216
      %p225 = scmp.eq.s32.totalorder %s32, 0
      %p226 = por %p224, %p225
      %p227 = scmp.ne.s32.totalorder %s215, %s216
      %p228 = scmp.eq.s32.totalorder %s33, 1
      %p229 = por %p227, %p228
      %p231 = scmp.ne.s32.totalorder %s216, %s230
      %p232 = scmp.eq.s32.totalorder %s33, 0
      %p233 = por %p231, %p232
      %s235 = sadd.s32 %s234, 1
      %p238 = scmp.eq.s32.totalorder %s27, 1
      %p239 = scmp.ne.s32.totalorder %s234, %s236
      %p240 = scmp.eq.s32.totalorder %s27, 0
      %p241 = por %p239, %p240
      %p242 = scmp.ne.s32.totalorder %s234, %s236
      %p243 = scmp.eq.s32.totalorder %s32, 1
      %p244 = por %p242, %p243
      %p245 = scmp.ne.s32.totalorder %s236, %s237
      %p246 = scmp.eq.s32.totalorder %s32, 0
      %p247 = por %p245, %p246
      %p248 = scmp.ne.s32.totalorder %s236, %s237
      %p249 = scmp.eq.s32.totalorder %s33, 1
      %p250 = por %p248, %p249
      %p252 = scmp.ne.s32.totalorder %s237, %s251
      %p253 = scmp.eq.s32.totalorder %s33, 0
      %p254 = por %p252, %p253
      %s256 = sadd.s32 %s255, 1
      %p259 = scmp.eq.s32.totalorder %s27, 1
      %p260 = scmp.ne.s32.totalorder %s255, %s257
      %p261 = scmp.eq.s32.totalorder %s27, 0
      %p262 = por %p260, %p261
      %p263 = scmp.ne.s32.totalorder %s255, %s257
      %p264 = scmp.eq.s32.totalorder %s32, 1
      %p265 = por %p263, %p264
      %p266 = scmp.ne.s32.totalorder %s257, %s258
      %p267 = scmp.eq.s32.totalorder %s32, 0
      %p268 = por %p266, %p267
      %p269 = scmp.ne.s32.totalorder %s257, %s258
      %p270 = scmp.eq.s32.totalorder %s33, 1
      %p271 = por %p269, %p270
      %p273 = scmp.ne.s32.totalorder %s258, %s272
      %p274 = scmp.eq.s32.totalorder %s33, 0
      %p275 = por %p273, %p274
      %s277 = sadd.s32 %s276, 1
      %p280 = scmp.eq.s32.totalorder %s27, 1
      %p281 = scmp.ne.s32.totalorder %s276, %s278
      %p282 = scmp.eq.s32.totalorder %s27, 0
      %p283 = por %p281, %p282
      %p284 = scmp.ne.s32.totalorder %s276, %s278
      %p285 = scmp.eq.s32.totalorder %s32, 1
      %p286 = por %p284, %p285
      %p287 = scmp.ne.s32.totalorder %s278, %s279
      %p288 = scmp.eq.s32.totalorder %s32, 0
      %p289 = por %p287, %p288
      %p290 = scmp.ne.s32.totalorder %s278, %s279
      %p291 = scmp.eq.s32.totalorder %s33, 1
      %p292 = por %p290, %p291
      %p294 = scmp.ne.s32.totalorder %s279, %s293
      %p295 = scmp.eq.s32.totalorder %s33, 0
      %p296 = por %p294, %p295
      %s298 = sadd.s32 %s297, 1
      %p301 = scmp.eq.s32.totalorder %s27, 1
      %p302 = scmp.ne.s32.totalorder %s297, %s299
      %p303 = scmp.eq.s32.totalorder %s27, 0
      %p304 = por %p302, %p303
      %p305 = scmp.ne.s32.totalorder %s297, %s299
      %p306 = scmp.eq.s32.totalorder %s32, 1
      %p307 = por %p305, %p306
      %p308 = scmp.ne.s32.totalorder %s299, %s300
      %p309 = scmp.eq.s32.totalorder %s32, 0
      %p310 = por %p308, %p309
      %p311 = scmp.ne.s32.totalorder %s299, %s300
      %p312 = scmp.eq.s32.totalorder %s33, 1
      %p313 = por %p311, %p312
      %p315 = scmp.ne.s32.totalorder %s300, %s314
      %p316 = scmp.eq.s32.totalorder %s33, 0
      %p317 = por %p315, %p316
      %s319 = sadd.s32 %s318, 1
      %p322 = scmp.eq.s32.totalorder %s27, 1
      %p323 = scmp.ne.s32.totalorder %s318, %s320
      %p324 = scmp.eq.s32.totalorder %s27, 0
      %p325 = por %p323, %p324
      %p326 = scmp.ne.s32.totalorder %s318, %s320
      %p327 = scmp.eq.s32.totalorder %s32, 1
      %p328 = por %p326, %p327
      %p329 = scmp.ne.s32.totalorder %s320, %s321
      %p330 = scmp.eq.s32.totalorder %s32, 0
      %p331 = por %p329, %p330
      %p332 = scmp.ne.s32.totalorder %s320, %s321
      %p333 = scmp.eq.s32.totalorder %s33, 1
      %p334 = por %p332, %p333
      %p336 = scmp.ne.s32.totalorder %s321, %s335
      %p337 = scmp.eq.s32.totalorder %s33, 0
      %p338 = por %p336, %p337
      %s340 = sadd.s32 %s339, 1
      %p343 = scmp.eq.s32.totalorder %s27, 1
      %p344 = scmp.ne.s32.totalorder %s339, %s341
      %p345 = scmp.eq.s32.totalorder %s27, 0
      %p346 = por %p344, %p345
      %p347 = scmp.ne.s32.totalorder %s339, %s341
      %p348 = scmp.eq.s32.totalorder %s32, 1
      %p349 = por %p347, %p348
      %p350 = scmp.ne.s32.totalorder %s341, %s342
      %p351 = scmp.eq.s32.totalorder %s32, 0
      %p352 = por %p350, %p351
      %p353 = scmp.ne.s32.totalorder %s341, %s342
      %p354 = scmp.eq.s32.totalorder %s33, 1
      %p355 = por %p353, %p354
      %p357 = scmp.ne.s32.totalorder %s342, %s356
      %p358 = scmp.eq.s32.totalorder %s33, 0
      %p359 = por %p357, %p358
      %s361 = sadd.s32 %s360, 1
      %p364 = scmp.eq.s32.totalorder %s27, 1
      %p365 = scmp.ne.s32.totalorder %s360, %s362
      %p366 = scmp.eq.s32.totalorder %s27, 0
      %p367 = por %p365, %p366
      %p368 = scmp.ne.s32.totalorder %s360, %s362
      %p369 = scmp.eq.s32.totalorder %s32, 1
      %p370 = por %p368, %p369
      %p371 = scmp.ne.s32.totalorder %s362, %s363
      %p372 = scmp.eq.s32.totalorder %s32, 0
      %p373 = por %p371, %p372
      %p374 = scmp.ne.s32.totalorder %s362, %s363
      %p375 = scmp.eq.s32.totalorder %s33, 1
      %p376 = por %p374, %p375
      %p378 = scmp.ne.s32.totalorder %s363, %s377
      %p379 = scmp.eq.s32.totalorder %s33, 0
      %p380 = por %p378, %p379
      %s382 = sadd.s32 %s381, 1
      %p385 = scmp.eq.s32.totalorder %s27, 1
      %p386 = scmp.ne.s32.totalorder %s381, %s383
      %p387 = scmp.eq.s32.totalorder %s27, 0
      %p388 = por %p386, %p387
      %p389 = scmp.ne.s32.totalorder %s381, %s383
      %p390 = scmp.eq.s32.totalorder %s32, 1
      %p391 = por %p389, %p390
      %p392 = scmp.ne.s32.totalorder %s383, %s384
      %p393 = scmp.eq.s32.totalorder %s32, 0
      %p394 = por %p392, %p393
      %p395 = scmp.ne.s32.totalorder %s383, %s384
      %p396 = scmp.eq.s32.totalorder %s33, 1
      %p397 = por %p395, %p396
      %p399 = scmp.ne.s32.totalorder %s384, %s398
      %p400 = scmp.eq.s32.totalorder %s33, 0
      %p401 = por %p399, %p400
      %s402 = ssub.s32 %s27, %s34
      %p403 = scmp.eq.s32.totalorder %s402, 0
      %s405 = sadd.s32 %s404, 1
      %s406 = scalar_select %p403, %s404, %s405
      %p409 = pneg %p403
      %p410 = scmp.eq.s32.totalorder %s27, 1
      %p411 = por %p409, %p410
      %p412 = scmp.ne.s32.totalorder %s404, %s407
      %p413 = scmp.eq.s32.totalorder %s27, 0
      %p414 = por %p412, %p413
      %p415 = scmp.ne.s32.totalorder %s404, %s407
      %p416 = scmp.eq.s32.totalorder %s32, 1
      %p417 = por %p415, %p416
      %p418 = scmp.ne.s32.totalorder %s407, %s408
      %p419 = scmp.eq.s32.totalorder %s32, 0
      %p420 = por %p418, %p419
      %p421 = scmp.ne.s32.totalorder %s407, %s408
      %p422 = scmp.eq.s32.totalorder %s33, 1
      %p423 = por %p421, %p422
      %p425 = scmp.ne.s32.totalorder %s408, %s424
      %p426 = scmp.eq.s32.totalorder %s33, 0
      %p427 = por %p425, %p426
      %p428 = scmp.le.s32.totalorder 1, %s27
      %p429 = scmp.lt.s32.totalorder %s27, 3
      %p430 = pnand %p428, %p429
      %p431 = pneg %p430
      // Predicated region
      $region9: #{transformer_forward.1} parent=5 // pred_check
        _
      $region10: #{transformer_forward.1} parent=5 // pred_check_branch
        %433 = sbr.rel (%p430) target = $region12
      $region11: #{transformer_forward.1} parent=5 // pred_region
        %s434 = ssub.s32 %s27, 1
        // Predicated region
        $region13: #{transformer_forward.1} parent=11 // pred_check
          %p435 = pneg %p100
        $region14: #{transformer_forward.1} parent=11 // pred_check_branch
          %437 = sbr.rel (%p435) target = $region16
        $region15: #{transformer_forward.1} parent=11 // pred_region
          _
        $region16: #{transformer_forward.1} parent=11 // pred_fallthru
          _
        // Predicated region
        $region17: #{transformer_forward.1} parent=11 // pred_check
          %p438 = pneg %p121
        $region18: #{transformer_forward.1} parent=11 // pred_check_branch
          %440 = sbr.rel (%p438) target = $region20
        $region19: #{transformer_forward.1} parent=11 // pred_region
          _
        $region20: #{transformer_forward.1} parent=11 // pred_fallthru
          _
        // Predicated region
        $region21: #{transformer_forward.1} parent=11 // pred_check
          %p441 = pneg %p142
        $region22: #{transformer_forward.1} parent=11 // pred_check_branch
          %443 = sbr.rel (%p441) target = $region24
        $region23: #{transformer_forward.1} parent=11 // pred_region
          _
        $region24: #{transformer_forward.1} parent=11 // pred_fallthru
          _
        // Predicated region
        $region25: #{transformer_forward.1} parent=11 // pred_check
          %p444 = pneg %p163
        $region26: #{transformer_forward.1} parent=11 // pred_check_branch
          %446 = sbr.rel (%p444) target = $region28
        $region27: #{transformer_forward.1} parent=11 // pred_region
          %448 = vsyncadd [#allocation4], 0
          %s449 = sshll.u32 %s5, 4
          %s450 = int_to_ptr.hbm [resolvable:$true] %s449
          %s451 = sshll.u32 [#allocation3], 4
          %s452 = int_to_ptr.vmem [resolvable:$true] %s451
          %457 = dma.hbm_to_vmem [thread:$0]  %s450, 5120, %s452, [#allocation4], 128, 128, 8
        $region28: #{transformer_forward.1} parent=11 // pred_fallthru
          _
        // Predicated region
        $region29: #{transformer_forward.1} parent=11 // pred_check
          %p458 = pneg %p184
        $region30: #{transformer_forward.1} parent=11 // pred_check_branch
          %460 = sbr.rel (%p458) target = $region32
        $region31: #{transformer_forward.1} parent=11 // pred_region
          _
        $region32: #{transformer_forward.1} parent=11 // pred_fallthru
          _
        // Predicated region
        $region33: #{transformer_forward.1} parent=11 // pred_check
          %p461 = pneg %p205
        $region34: #{transformer_forward.1} parent=11 // pred_check_branch
          %463 = sbr.rel (%p461) target = $region36
        $region35: #{transformer_forward.1} parent=11 // pred_region
          _
        $region36: #{transformer_forward.1} parent=11 // pred_fallthru
          _
        // Predicated region
        $region37: #{transformer_forward.1} parent=11 // pred_check
          %p464 = pneg %p226
        $region38: #{transformer_forward.1} parent=11 // pred_check_branch
          %466 = sbr.rel (%p464) target = $region40
        $region39: #{transformer_forward.1} parent=11 // pred_region
          _
        $region40: #{transformer_forward.1} parent=11 // pred_fallthru
          _
        // Predicated region
        $region41: #{transformer_forward.1} parent=11 // pred_check
          %p467 = pneg %p247
        $region42: #{transformer_forward.1} parent=11 // pred_check_branch
          %469 = sbr.rel (%p467) target = $region44
        $region43: #{transformer_forward.1} parent=11 // pred_region
          _
        $region44: #{transformer_forward.1} parent=11 // pred_fallthru
          _
        // Predicated region
        $region45: #{transformer_forward.1} parent=11 // pred_check
          %p470 = pneg %p268
        $region46: #{transformer_forward.1} parent=11 // pred_check_branch
          %472 = sbr.rel (%p470) target = $region48
        $region47: #{transformer_forward.1} parent=11 // pred_region
          _
        $region48: #{transformer_forward.1} parent=11 // pred_fallthru
          _
        // Predicated region
        $region49: #{transformer_forward.1} parent=11 // pred_check
          %p473 = pneg %p289
        $region50: #{transformer_forward.1} parent=11 // pred_check_branch
          %475 = sbr.rel (%p473) target = $region52
        $region51: #{transformer_forward.1} parent=11 // pred_region
          %477 = vsyncadd [#allocation6], 0
          %s478 = sshll.u32 %s11, 4
          %s479 = int_to_ptr.hbm [resolvable:$true] %s478
          %s480 = sshll.u32 [#allocation5], 4
          %s481 = int_to_ptr.vmem [resolvable:$true] %s480
          %486 = dma.hbm_to_vmem [thread:$0]  %s479, 32768, %s481, [#allocation6], 128, 128, 8
        $region52: #{transformer_forward.1} parent=11 // pred_fallthru
          _
        // Predicated region
        $region53: #{transformer_forward.1} parent=11 // pred_check
          %p487 = pneg %p310
        $region54: #{transformer_forward.1} parent=11 // pred_check_branch
          %489 = sbr.rel (%p487) target = $region56
        $region55: #{transformer_forward.1} parent=11 // pred_region
          _
        $region56: #{transformer_forward.1} parent=11 // pred_fallthru
          _
        // Predicated region
        $region57: #{transformer_forward.1} parent=11 // pred_check
          %p490 = pneg %p331
        $region58: #{transformer_forward.1} parent=11 // pred_check_branch
          %492 = sbr.rel (%p490) target = $region60
        $region59: #{transformer_forward.1} parent=11 // pred_region
          _
        $region60: #{transformer_forward.1} parent=11 // pred_fallthru
          _
        // Predicated region
        $region61: #{transformer_forward.1} parent=11 // pred_check
          %p493 = pneg %p352
        $region62: #{transformer_forward.1} parent=11 // pred_check_branch
          %495 = sbr.rel (%p493) target = $region64
        $region63: #{transformer_forward.1} parent=11 // pred_region
          _
        $region64: #{transformer_forward.1} parent=11 // pred_fallthru
          _
        // Predicated region
        $region65: #{transformer_forward.1} parent=11 // pred_check
          %p496 = pneg %p373
        $region66: #{transformer_forward.1} parent=11 // pred_check_branch
          %498 = sbr.rel (%p496) target = $region68
        $region67: #{transformer_forward.1} parent=11 // pred_region
          _
        $region68: #{transformer_forward.1} parent=11 // pred_fallthru
          _
        // Predicated region
        $region69: #{transformer_forward.1} parent=11 // pred_check
          %p499 = pneg %p394
        $region70: #{transformer_forward.1} parent=11 // pred_check_branch
          %501 = sbr.rel (%p499) target = $region72
        $region71: #{transformer_forward.1} parent=11 // pred_region
          _
        $region72: #{transformer_forward.1} parent=11 // pred_fallthru
          _
      $region12: #{transformer_forward.1} parent=5 // pred_fallthru
        _
      %p502 = scmp.lt.s32.totalorder %s27, 2
      // Predicated region
      $region73: #{transformer_forward.1} parent=5 // pred_check
        %p503 = pneg %p502
      $region74: #{transformer_forward.1} parent=5 // pred_check_branch
        %505 = sbr.rel (%p503) target = $region76
      $region75: #{transformer_forward.1} parent=5 // pred_region
        // Predicated region
        $region77: #{transformer_forward.1} parent=75 // pred_check
          %p506 = pneg %p47
        $region78: #{transformer_forward.1} parent=75 // pred_check_branch
          %508 = sbr.rel (%p506) target = $region80
        $region79: #{transformer_forward.1} parent=75 // pred_region
          %p509 = scmp.lt.s32.totalorder %s27, 1
          %s510 = scalar_select %p509, %s27, 1
          %s511 = smul.addr %s510, 2
          %s512 = smul.addr %s511, 8
          %s513 = scalar_lea.vmem %s0, %s512
        $region80: #{transformer_forward.1} parent=75 // pred_fallthru
          _
        // Predicated region
        $region81: #{transformer_forward.1} parent=75 // pred_check
          %p514 = pneg %p73
        $region82: #{transformer_forward.1} parent=75 // pred_check_branch
          %516 = sbr.rel (%p514) target = $region84
        $region83: #{transformer_forward.1} parent=75 // pred_region
          %p517 = scmp.lt.s32.totalorder %s27, 1
          %s518 = scalar_select %p517, %s27, 1
          %s519 = smul.addr %s518, 4
          %s520 = smul.addr %s519, 8
          %s521 = scalar_lea.vmem %s1, %s520
        $region84: #{transformer_forward.1} parent=75 // pred_fallthru
          _
      $region76: #{transformer_forward.1} parent=5 // pred_fallthru
        _
      %p522 = scmp.le.s32.totalorder 1, %s27
      %p523 = scmp.lt.s32.totalorder %s27, 3
      %p524 = pnand %p522, %p523
      %p525 = pneg %p524
      // Predicated region
      $region85: #{transformer_forward.1} parent=5 // pred_check
        _
      $region86: #{transformer_forward.1} parent=5 // pred_check_branch
        %527 = sbr.rel (%p524) target = $region88
      $region87: #{transformer_forward.1} parent=5 // pred_region
        %s528 = ssub.s32 %s27, 1
        // Predicated region
        $region89: #{transformer_forward.1} parent=87 // pred_check
          %p529 = pneg %p163
        $region90: #{transformer_forward.1} parent=87 // pred_check_branch
          %531 = sbr.rel (%p529) target = $region92
        $region91: #{transformer_forward.1} parent=87 // pred_region
          %533 = dma.done [#allocation4], 5120
        $region92: #{transformer_forward.1} parent=87 // pred_fallthru
          _
        // Predicated region
        $region93: #{transformer_forward.1} parent=87 // pred_check
          %p534 = pneg %p289
        $region94: #{transformer_forward.1} parent=87 // pred_check_branch
          %536 = sbr.rel (%p534) target = $region96
        $region95: #{transformer_forward.1} parent=87 // pred_region
          %538 = dma.done [#allocation6], 32768
        $region96: #{transformer_forward.1} parent=87 // pred_fallthru
          _
        %p539 = scmp.lt.s32.totalorder %s32, 1
        %s540 = scalar_select %p539, %s32, 1
        %s541 = smul.addr %s540, 2
        %s542 = smul.addr %s541, 8
        %s543 = scalar_lea.vmem %s0, %s542
        %p544 = pneg %p53
        %p545 = pneg %p50
        %p546 = scmp.lt.s32.totalorder %s32, 1
        %s547 = scalar_select %p546, %s32, 1
        %s548 = smul.addr %s547, 4
        %s549 = smul.addr %s548, 8
        %s550 = scalar_lea.vmem %s1, %s549
        %p551 = pneg %p79
        %p552 = pneg %p76
        %p553 = pneg %p100
        %p554 = pneg %p97
        %p555 = pneg %p121
        %p556 = pneg %p118
        %p557 = pneg %p142
        %p558 = pneg %p139
        %p559 = pneg %p163
        %p560 = pneg %p160
        %p561 = pneg %p184
        %p562 = pneg %p181
        %p563 = pneg %p205
        %p564 = pneg %p202
        %p565 = pneg %p226
        %p566 = pneg %p223
        %p567 = pneg %p247
        %p568 = pneg %p244
        %p569 = pneg %p268
        %p570 = pneg %p265
        %p571 = pneg %p289
        %p572 = pneg %p286
        %p573 = pneg %p310
        %p574 = pneg %p307
        %p575 = pneg %p331
        %p576 = pneg %p328
        %p577 = pneg %p352
        %p578 = pneg %p349
        %p579 = pneg %p373
        %p580 = pneg %p370
        %p581 = pneg %p394
        %p582 = pneg %p391
        %p583 = pneg %p420
        %p584 = pneg %p417
        %p585 = scmp.lt.s32.totalorder %s32, 1
        %s586 = scalar_select %p585, %s32, 1
        %s587 = smul.addr %s586, 2
        %s588 = smul.addr %s587, 8
        %s589 = scalar_lea.vmem %s17, %s588
        %p590 = scmp.lt.s32.totalorder %s32, 1
        %s591 = scalar_select %p590, %s32, 1
        %s592 = smul.addr %s591, 2
        %s593 = smul.addr %s592, 8
        %s594 = scalar_lea.vmem %s0, %s593
        %p595 = scmp.lt.s32.totalorder %s32, 1
        %s596 = scalar_select %p595, %s32, 1
        %s597 = smul.addr %s596, 4
        %s598 = smul.addr %s597, 8
        %s599 = scalar_lea.vmem %s1, %s598
        %p600 = scmp.lt.s32.totalorder %s32, 1
        %s601 = scalar_select %p600, %s32, 1
        %s602 = smul.addr %s601, 2
        %s603 = smul.addr %s602, 8
        %s604 = scalar_lea.vmem %s17, %s603
        %v606 = vld [vmem:[%s594] sm:$0xff]
        %v607 = vld [vmem:[%s594 + $0x8] sm:$0xff]
        %v608 = vpack.c.bf16 %v607, %v606
        %v609 = vld [vmem:[%s2] sm:$0xff]
        %v610 = vld [vmem:[%s2 + $0x8] sm:$0xff]
        %v611 = vld [vmem:[%s2 + $0x10] sm:$0xff]
        %v612 = vld [vmem:[%s2 + $0x18] sm:$0xff]
        %v613 = vld [vmem:[%s599] sm:$0xff]
        %v614 = vld [vmem:[%s599 + $0x8] sm:$0xff]
        %v615 = vld [vmem:[%s599 + $0x10] sm:$0xff]
        %v616 = vld [vmem:[%s599 + $0x18] sm:$0xff]
        %v621 = vunpack.c.l.b16 %v609
        %v622 = vunpack.c.h.b16 %v609
        %v623 = vunpack.c.l.b16 %v610
        %v624 = vunpack.c.h.b16 %v610
        %v625 = vunpack.c.l.b16 %v611
        %v626 = vunpack.c.h.b16 %v611
        %v627 = vunpack.c.l.b16 %v612
        %v628 = vunpack.c.h.b16 %v612
        %v629 = vpack.c.b16 %v623, %v621
        %v630 = vpack.c.b16 %v624, %v622
        %v631 = vpack.c.b16 %v627, %v625
        %v632 = vpack.c.b16 %v628, %v626
        %vm637 = vcmask 261120
        %v639 = vsel %vm637, %v608, 0
        %641 = vmatpush.bf16.msra.mxu0 0
        %642 = vmatpush.bf16.msra.mxu0 0
        %643 = vmatpush.bf16.msra.mxu0 0
        %644 = vmatpush.bf16.msra.mxu0 0
        %645 = vmatpush.bf16.msra.mxu0 0
        %646 = vmatpush.bf16.msra.mxu0 0
        %647 = vmatpush.bf16.msra.mxu0 %v631
        %648 = vmatpush.bf16.msra.mxu0 %v629
        %649 = vmatmul.bf16.gmra.mxu0 %v639
        %v650 = vpop.f32.mrf.mxu0
        %v651 = vadd.f32 %v613, %v650
        %v652 = vpop.f32.mrf.mxu0
        %v653 = vadd.f32 %v615, %v652
        %654 = vdwg.mxu0
        %655 = vmatpush.bf16.msra.mxu0 0
        %656 = vmatpush.bf16.msra.mxu0 0
        %657 = vmatpush.bf16.msra.mxu0 0
        %658 = vmatpush.bf16.msra.mxu0 0
        %659 = vmatpush.bf16.msra.mxu0 0
        %660 = vmatpush.bf16.msra.mxu0 0
        %661 = vmatpush.bf16.msra.mxu0 %v632
        %662 = vmatpush.bf16.msra.mxu0 %v630
        %663 = vmatmul.bf16.gmra.mxu0 %v639
        %v664 = vpop.f32.mrf.mxu0
        %v665 = vadd.f32 %v614, %v664
        %v666 = vpop.f32.mrf.mxu0
        %v667 = vadd.f32 %v616, %v666
        %668 = vdwg.mxu0
        %v669 = vpack.c.bf16 %v653, %v651
        %v670 = vpack.c.bf16 %v667, %v665
        %v671 = vld [vmem:[%s3] sm:$0xff]
        %v672 = vld [vmem:[%s3 + $0x8] sm:$0xff]
        %v673 = vld [vmem:[%s3 + $0x10] sm:$0xff]
        %v674 = vld [vmem:[%s3 + $0x18] sm:$0xff]
        %v675 = vld [vmem:[%s3 + $0x20] sm:$0xff]
        %v676 = vld [vmem:[%s3 + $0x28] sm:$0xff]
        %v677 = vld [vmem:[%s3 + $0x30] sm:$0xff]
        %v678 = vld [vmem:[%s3 + $0x38] sm:$0xff]
        %v679 = vld [vmem:[%s3 + $0x40] sm:$0xff]
        %v680 = vld [vmem:[%s3 + $0x48] sm:$0xff]
        %v681 = vld [vmem:[%s3 + $0x50] sm:$0xff]
        %v682 = vld [vmem:[%s3 + $0x58] sm:$0xff]
        %v683 = vld [vmem:[%s3 + $0x60] sm:$0xff]
        %v684 = vld [vmem:[%s3 + $0x68] sm:$0xff]
        %v685 = vld [vmem:[%s3 + $0x70] sm:$0xff]
        %v686 = vld [vmem:[%s3 + $0x78] sm:$0xff]
        %v687 = vld [vmem:[%s3 + $0x80] sm:$0xff]
        %v688 = vld [vmem:[%s3 + $0x88] sm:$0xff]
        %v689 = vld [vmem:[%s3 + $0x90] sm:$0xff]
        %v690 = vld [vmem:[%s3 + $0x98] sm:$0xff]
        %v691 = vld [vmem:[%s3 + $0xa0] sm:$0xff]
        %v692 = vld [vmem:[%s3 + $0xa8] sm:$0xff]
        %v693 = vld [vmem:[%s3 + $0xb0] sm:$0xff]
        %v694 = vld [vmem:[%s3 + $0xb8] sm:$0xff]
        %v695 = vld [vmem:[%s3 + $0xc0] sm:$0xff]
        %v696 = vld [vmem:[%s3 + $0xc8] sm:$0xff]
        %v697 = vld [vmem:[%s3 + $0xd0] sm:$0xff]
        %v698 = vld [vmem:[%s3 + $0xd8] sm:$0xff]
        %v699 = vld [vmem:[%s3 + $0xe0] sm:$0xff]
        %v700 = vld [vmem:[%s3 + $0xe8] sm:$0xff]
        %v701 = vld [vmem:[%s3 + $0xf0] sm:$0xff]
        %v702 = vld [vmem:[%s3 + $0xf8] sm:$0xff]
        %v703 = vld [vmem:[%s3 + $0x100] sm:$0xff]
        %v704 = vld [vmem:[%s3 + $0x108] sm:$0xff]
        %v705 = vld [vmem:[%s3 + $0x110] sm:$0xff]
        %v706 = vld [vmem:[%s3 + $0x118] sm:$0xff]
        %v707 = vld [vmem:[%s3 + $0x120] sm:$0xff]
        %v708 = vld [vmem:[%s3 + $0x128] sm:$0xff]
        %v709 = vld [vmem:[%s3 + $0x130] sm:$0xff]
        %v710 = vld [vmem:[%s3 + $0x138] sm:$0xff]
        %v711 = vld [vmem:[%s3 + $0x140] sm:$0xff]
        %v712 = vld [vmem:[%s3 + $0x148] sm:$0xff]
        %v713 = vld [vmem:[%s3 + $0x150] sm:$0xff]
        %v714 = vld [vmem:[%s3 + $0x158] sm:$0xff]
        %v715 = vld [vmem:[%s3 + $0x160] sm:$0xff]
        %v716 = vld [vmem:[%s3 + $0x168] sm:$0xff]
        %v717 = vld [vmem:[%s3 + $0x170] sm:$0xff]
        %v718 = vld [vmem:[%s3 + $0x178] sm:$0xff]
        %v719 = vld [vmem:[%s3 + $0x180] sm:$0xff]
        %v720 = vld [vmem:[%s3 + $0x188] sm:$0xff]
        %v721 = vld [vmem:[%s3 + $0x190] sm:$0xff]
        %v722 = vld [vmem:[%s3 + $0x198] sm:$0xff]
        %v723 = vld [vmem:[%s3 + $0x1a0] sm:$0xff]
        %v724 = vld [vmem:[%s3 + $0x1a8] sm:$0xff]
        %v725 = vld [vmem:[%s3 + $0x1b0] sm:$0xff]
        %v726 = vld [vmem:[%s3 + $0x1b8] sm:$0xff]
        %v727 = vld [vmem:[%s3 + $0x1c0] sm:$0xff]
        %v728 = vld [vmem:[%s3 + $0x1c8] sm:$0xff]
        %v729 = vld [vmem:[%s3 + $0x1d0] sm:$0xff]
        %v730 = vld [vmem:[%s3 + $0x1d8] sm:$0xff]
        %v731 = vld [vmem:[%s3 + $0x1e0] sm:$0xff]
        %v732 = vld [vmem:[%s3 + $0x1e8] sm:$0xff]
        %v733 = vld [vmem:[%s3 + $0x1f0] sm:$0xff]
        %v734 = vld [vmem:[%s3 + $0x1f8] sm:$0xff]
        %v735 = vld [vmem:[%s3 + $0x200] sm:$0xff]
        %v736 = vld [vmem:[%s3 + $0x208] sm:$0xff]
        %v737 = vld [vmem:[%s3 + $0x210] sm:$0xff]
        %v738 = vld [vmem:[%s3 + $0x218] sm:$0xff]
        %v739 = vld [vmem:[%s3 + $0x220] sm:$0xff]
        %v740 = vld [vmem:[%s3 + $0x228] sm:$0xff]
        %v741 = vld [vmem:[%s3 + $0x230] sm:$0xff]
        %v742 = vld [vmem:[%s3 + $0x238] sm:$0xff]
        %v743 = vld [vmem:[%s3 + $0x240] sm:$0xff]
        %v744 = vld [vmem:[%s3 + $0x248] sm:$0xff]
        %v745 = vld [vmem:[%s3 + $0x250] sm:$0xff]
        %v746 = vld [vmem:[%s3 + $0x258] sm:$0xff]
        %v747 = vld [vmem:[%s3 + $0x260] sm:$0xff]
        %v748 = vld [vmem:[%s3 + $0x268] sm:$0xff]
        %v749 = vld [vmem:[%s3 + $0x270] sm:$0xff]
        %v750 = vld [vmem:[%s3 + $0x278] sm:$0xff]
        %v751 = vld [vmem:[%s3 + $0x280] sm:$0xff]
        %v752 = vld [vmem:[%s3 + $0x288] sm:$0xff]
        %v753 = vld [vmem:[%s3 + $0x290] sm:$0xff]
        %v754 = vld [vmem:[%s3 + $0x298] sm:$0xff]
        %v755 = vld [vmem:[%s3 + $0x2a0] sm:$0xff]
        %v756 = vld [vmem:[%s3 + $0x2a8] sm:$0xff]
        %v757 = vld [vmem:[%s3 + $0x2b0] sm:$0xff]
        %v758 = vld [vmem:[%s3 + $0x2b8] sm:$0xff]
        %v759 = vld [vmem:[%s3 + $0x2c0] sm:$0xff]
        %v760 = vld [vmem:[%s3 + $0x2c8] sm:$0xff]
        %v761 = vld [vmem:[%s3 + $0x2d0] sm:$0xff]
        %v762 = vld [vmem:[%s3 + $0x2d8] sm:$0xff]
        %v763 = vld [vmem:[%s3 + $0x2e0] sm:$0xff]
        %v764 = vld [vmem:[%s3 + $0x2e8] sm:$0xff]
        %v765 = vld [vmem:[%s3 + $0x2f0] sm:$0xff]
        %v766 = vld [vmem:[%s3 + $0x2f8] sm:$0xff]
        %v767 = vld [vmem:[%s3 + $0x300] sm:$0xff]
        %v768 = vld [vmem:[%s3 + $0x308] sm:$0xff]
        %v769 = vld [vmem:[%s3 + $0x310] sm:$0xff]
        %v770 = vld [vmem:[%s3 + $0x318] sm:$0xff]
        %v771 = vld [vmem:[%s3 + $0x320] sm:$0xff]
        %v772 = vld [vmem:[%s3 + $0x328] sm:$0xff]
        %v773 = vld [vmem:[%s3 + $0x330] sm:$0xff]
        %v774 = vld [vmem:[%s3 + $0x338] sm:$0xff]
        %v775 = vld [vmem:[%s3 + $0x340] sm:$0xff]
        %v776 = vld [vmem:[%s3 + $0x348] sm:$0xff]
        %v777 = vld [vmem:[%s3 + $0x350] sm:$0xff]
        %v778 = vld [vmem:[%s3 + $0x358] sm:$0xff]
        %v779 = vld [vmem:[%s3 + $0x360] sm:$0xff]
        %v780 = vld [vmem:[%s3 + $0x368] sm:$0xff]
        %v781 = vld [vmem:[%s3 + $0x370] sm:$0xff]
        %v782 = vld [vmem:[%s3 + $0x378] sm:$0xff]
        %v783 = vld [vmem:[%s3 + $0x380] sm:$0xff]
        %v784 = vld [vmem:[%s3 + $0x388] sm:$0xff]
        %v785 = vld [vmem:[%s3 + $0x390] sm:$0xff]
        %v786 = vld [vmem:[%s3 + $0x398] sm:$0xff]
        %v787 = vld [vmem:[%s3 + $0x3a0] sm:$0xff]
        %v788 = vld [vmem:[%s3 + $0x3a8] sm:$0xff]
        %v789 = vld [vmem:[%s3 + $0x3b0] sm:$0xff]
        %v790 = vld [vmem:[%s3 + $0x3b8] sm:$0xff]
        %v791 = vld [vmem:[%s3 + $0x3c0] sm:$0xff]
        %v792 = vld [vmem:[%s3 + $0x3c8] sm:$0xff]
        %v793 = vld [vmem:[%s3 + $0x3d0] sm:$0xff]
        %v794 = vld [vmem:[%s3 + $0x3d8] sm:$0xff]
        %v795 = vld [vmem:[%s3 + $0x3e0] sm:$0xff]
        %v796 = vld [vmem:[%s3 + $0x3e8] sm:$0xff]
        %v797 = vld [vmem:[%s3 + $0x3f0] sm:$0xff]
        %v798 = vld [vmem:[%s3 + $0x3f8] sm:$0xff]
        %v799 = vld [vmem:[%s4] sm:$0xff]
        %v801 = vperm.slane %v799, 0
        %v802 = vperm.slane %v799, 1
        %v803 = vperm.slane %v799, 2
        %v804 = vperm.slane %v799, 3
        %v805 = vperm.slane %v799, 4
        %v806 = vperm.slane %v799, 5
        %v807 = vperm.slane %v799, 6
        %v808 = vperm.slane %v799, 7
        %v945 = vunpack.c.l.b16 %v671
        %v946 = vunpack.c.h.b16 %v671
        %v947 = vunpack.c.l.b16 %v672
        %v948 = vunpack.c.h.b16 %v672
        %v949 = vunpack.c.l.b16 %v673
        %v950 = vunpack.c.h.b16 %v673
        %v951 = vunpack.c.l.b16 %v674
        %v952 = vunpack.c.h.b16 %v674
        %v953 = vunpack.c.l.b16 %v675
        %v954 = vunpack.c.h.b16 %v675
        %v955 = vunpack.c.l.b16 %v676
        %v956 = vunpack.c.h.b16 %v676
        %v957 = vunpack.c.l.b16 %v677
        %v958 = vunpack.c.h.b16 %v677
        %v959 = vunpack.c.l.b16 %v678
        %v960 = vunpack.c.h.b16 %v678
        %v961 = vunpack.c.l.b16 %v679
        %v962 = vunpack.c.h.b16 %v679
        %v963 = vunpack.c.l.b16 %v680
        %v964 = vunpack.c.h.b16 %v680
        %v965 = vunpack.c.l.b16 %v681
        %v966 = vunpack.c.h.b16 %v681
        %v967 = vunpack.c.l.b16 %v682
        %v968 = vunpack.c.h.b16 %v682
        %v969 = vunpack.c.l.b16 %v683
        %v970 = vunpack.c.h.b16 %v683
        %v971 = vunpack.c.l.b16 %v684
        %v972 = vunpack.c.h.b16 %v684
        %v973 = vunpack.c.l.b16 %v685
        %v974 = vunpack.c.h.b16 %v685
        %v975 = vunpack.c.l.b16 %v686
        %v976 = vunpack.c.h.b16 %v686
        %v977 = vunpack.c.l.b16 %v687
        %v978 = vunpack.c.h.b16 %v687
        %v979 = vunpack.c.l.b16 %v688
        %v980 = vunpack.c.h.b16 %v688
        %v981 = vunpack.c.l.b16 %v689
        %v982 = vunpack.c.h.b16 %v689
        %v983 = vunpack.c.l.b16 %v690
        %v984 = vunpack.c.h.b16 %v690
        %v985 = vunpack.c.l.b16 %v691
        %v986 = vunpack.c.h.b16 %v691
        %v987 = vunpack.c.l.b16 %v692
        %v988 = vunpack.c.h.b16 %v692
        %v989 = vunpack.c.l.b16 %v693
        %v990 = vunpack.c.h.b16 %v693
        %v991 = vunpack.c.l.b16 %v694
        %v992 = vunpack.c.h.b16 %v694
        %v993 = vunpack.c.l.b16 %v695
        %v994 = vunpack.c.h.b16 %v695
        %v995 = vunpack.c.l.b16 %v696
        %v996 = vunpack.c.h.b16 %v696
        %v997 = vunpack.c.l.b16 %v697
        %v998 = vunpack.c.h.b16 %v697
        %v999 = vunpack.c.l.b16 %v698
        %v1000 = vunpack.c.h.b16 %v698
        %v1001 = vunpack.c.l.b16 %v699
        %v1002 = vunpack.c.h.b16 %v699
        %v1003 = vunpack.c.l.b16 %v700
        %v1004 = vunpack.c.h.b16 %v700
        %v1005 = vunpack.c.l.b16 %v701
        %v1006 = vunpack.c.h.b16 %v701
        %v1007 = vunpack.c.l.b16 %v702
        %v1008 = vunpack.c.h.b16 %v702
        %v1009 = vunpack.c.l.b16 %v703
        %v1010 = vunpack.c.h.b16 %v703
        %v1011 = vunpack.c.l.b16 %v704
        %v1012 = vunpack.c.h.b16 %v704
        %v1013 = vunpack.c.l.b16 %v705
        %v1014 = vunpack.c.h.b16 %v705
        %v1015 = vunpack.c.l.b16 %v706
        %v1016 = vunpack.c.h.b16 %v706
        %v1017 = vunpack.c.l.b16 %v707
        %v1018 = vunpack.c.h.b16 %v707
        %v1019 = vunpack.c.l.b16 %v708
        %v1020 = vunpack.c.h.b16 %v708
        %v1021 = vunpack.c.l.b16 %v709
        %v1022 = vunpack.c.h.b16 %v709
        %v1023 = vunpack.c.l.b16 %v710
        %v1024 = vunpack.c.h.b16 %v710
        %v1025 = vunpack.c.l.b16 %v711
        %v1026 = vunpack.c.h.b16 %v711
        %v1027 = vunpack.c.l.b16 %v712
        %v1028 = vunpack.c.h.b16 %v712
        %v1029 = vunpack.c.l.b16 %v713
        %v1030 = vunpack.c.h.b16 %v713
        %v1031 = vunpack.c.l.b16 %v714
        %v1032 = vunpack.c.h.b16 %v714
        %v1033 = vunpack.c.l.b16 %v715
        %v1034 = vunpack.c.h.b16 %v715
        %v1035 = vunpack.c.l.b16 %v716
        %v1036 = vunpack.c.h.b16 %v716
        %v1037 = vunpack.c.l.b16 %v717
        %v1038 = vunpack.c.h.b16 %v717
        %v1039 = vunpack.c.l.b16 %v718
        %v1040 = vunpack.c.h.b16 %v718
        %v1041 = vunpack.c.l.b16 %v719
        %v1042 = vunpack.c.h.b16 %v719
        %v1043 = vunpack.c.l.b16 %v720
        %v1044 = vunpack.c.h.b16 %v720
        %v1045 = vunpack.c.l.b16 %v721
        %v1046 = vunpack.c.h.b16 %v721
        %v1047 = vunpack.c.l.b16 %v722
        %v1048 = vunpack.c.h.b16 %v722
        %v1049 = vunpack.c.l.b16 %v723
        %v1050 = vunpack.c.h.b16 %v723
        %v1051 = vunpack.c.l.b16 %v724
        %v1052 = vunpack.c.h.b16 %v724
        %v1053 = vunpack.c.l.b16 %v725
        %v1054 = vunpack.c.h.b16 %v725
        %v1055 = vunpack.c.l.b16 %v726
        %v1056 = vunpack.c.h.b16 %v726
        %v1057 = vunpack.c.l.b16 %v727
        %v1058 = vunpack.c.h.b16 %v727
        %v1059 = vunpack.c.l.b16 %v728
        %v1060 = vunpack.c.h.b16 %v728
        %v1061 = vunpack.c.l.b16 %v729
        %v1062 = vunpack.c.h.b16 %v729
        %v1063 = vunpack.c.l.b16 %v730
        %v1064 = vunpack.c.h.b16 %v730
        %v1065 = vunpack.c.l.b16 %v731
        %v1066 = vunpack.c.h.b16 %v731
        %v1067 = vunpack.c.l.b16 %v732
        %v1068 = vunpack.c.h.b16 %v732
        %v1069 = vunpack.c.l.b16 %v733
        %v1070 = vunpack.c.h.b16 %v733
        %v1071 = vunpack.c.l.b16 %v734
        %v1072 = vunpack.c.h.b16 %v734
        %v1073 = vunpack.c.l.b16 %v735
        %v1074 = vunpack.c.h.b16 %v735
        %v1075 = vunpack.c.l.b16 %v736
        %v1076 = vunpack.c.h.b16 %v736
        %v1077 = vunpack.c.l.b16 %v737
        %v1078 = vunpack.c.h.b16 %v737
        %v1079 = vunpack.c.l.b16 %v738
        %v1080 = vunpack.c.h.b16 %v738
        %v1081 = vunpack.c.l.b16 %v739
        %v1082 = vunpack.c.h.b16 %v739
        %v1083 = vunpack.c.l.b16 %v740
        %v1084 = vunpack.c.h.b16 %v740
        %v1085 = vunpack.c.l.b16 %v741
        %v1086 = vunpack.c.h.b16 %v741
        %v1087 = vunpack.c.l.b16 %v742
        %v1088 = vunpack.c.h.b16 %v742
        %v1089 = vunpack.c.l.b16 %v743
        %v1090 = vunpack.c.h.b16 %v743
        %v1091 = vunpack.c.l.b16 %v744
        %v1092 = vunpack.c.h.b16 %v744
        %v1093 = vunpack.c.l.b16 %v745
        %v1094 = vunpack.c.h.b16 %v745
        %v1095 = vunpack.c.l.b16 %v746
        %v1096 = vunpack.c.h.b16 %v746
        %v1097 = vunpack.c.l.b16 %v747
        %v1098 = vunpack.c.h.b16 %v747
        %v1099 = vunpack.c.l.b16 %v748
        %v1100 = vunpack.c.h.b16 %v748
        %v1101 = vunpack.c.l.b16 %v749
        %v1102 = vunpack.c.h.b16 %v749
        %v1103 = vunpack.c.l.b16 %v750
        %v1104 = vunpack.c.h.b16 %v750
        %v1105 = vunpack.c.l.b16 %v751
        %v1106 = vunpack.c.h.b16 %v751
        %v1107 = vunpack.c.l.b16 %v752
        %v1108 = vunpack.c.h.b16 %v752
        %v1109 = vunpack.c.l.b16 %v753
        %v1110 = vunpack.c.h.b16 %v753
        %v1111 = vunpack.c.l.b16 %v754
        %v1112 = vunpack.c.h.b16 %v754
        %v1113 = vunpack.c.l.b16 %v755
        %v1114 = vunpack.c.h.b16 %v755
        %v1115 = vunpack.c.l.b16 %v756
        %v1116 = vunpack.c.h.b16 %v756
        %v1117 = vunpack.c.l.b16 %v757
        %v1118 = vunpack.c.h.b16 %v757
        %v1119 = vunpack.c.l.b16 %v758
        %v1120 = vunpack.c.h.b16 %v758
        %v1121 = vunpack.c.l.b16 %v759
        %v1122 = vunpack.c.h.b16 %v759
        %v1123 = vunpack.c.l.b16 %v760
        %v1124 = vunpack.c.h.b16 %v760
        %v1125 = vunpack.c.l.b16 %v761
        %v1126 = vunpack.c.h.b16 %v761
        %v1127 = vunpack.c.l.b16 %v762
        %v1128 = vunpack.c.h.b16 %v762
        %v1129 = vunpack.c.l.b16 %v763
        %v1130 = vunpack.c.h.b16 %v763
        %v1131 = vunpack.c.l.b16 %v764
        %v1132 = vunpack.c.h.b16 %v764
        %v1133 = vunpack.c.l.b16 %v765
        %v1134 = vunpack.c.h.b16 %v765
        %v1135 = vunpack.c.l.b16 %v766
        %v1136 = vunpack.c.h.b16 %v766
        %v1137 = vunpack.c.l.b16 %v767
        %v1138 = vunpack.c.h.b16 %v767
        %v1139 = vunpack.c.l.b16 %v768
        %v1140 = vunpack.c.h.b16 %v768
        %v1141 = vunpack.c.l.b16 %v769
        %v1142 = vunpack.c.h.b16 %v769
        %v1143 = vunpack.c.l.b16 %v770
        %v1144 = vunpack.c.h.b16 %v770
        %v1145 = vunpack.c.l.b16 %v771
        %v1146 = vunpack.c.h.b16 %v771
        %v1147 = vunpack.c.l.b16 %v772
        %v1148 = vunpack.c.h.b16 %v772
        %v1149 = vunpack.c.l.b16 %v773
        %v1150 = vunpack.c.h.b16 %v773
        %v1151 = vunpack.c.l.b16 %v774
        %v1152 = vunpack.c.h.b16 %v774
        %v1153 = vunpack.c.l.b16 %v775
        %v1154 = vunpack.c.h.b16 %v775
        %v1155 = vunpack.c.l.b16 %v776
        %v1156 = vunpack.c.h.b16 %v776
        %v1157 = vunpack.c.l.b16 %v777
        %v1158 = vunpack.c.h.b16 %v777
        %v1159 = vunpack.c.l.b16 %v778
        %v1160 = vunpack.c.h.b16 %v778
        %v1161 = vunpack.c.l.b16 %v779
        %v1162 = vunpack.c.h.b16 %v779
        %v1163 = vunpack.c.l.b16 %v780
        %v1164 = vunpack.c.h.b16 %v780
        %v1165 = vunpack.c.l.b16 %v781
        %v1166 = vunpack.c.h.b16 %v781
        %v1167 = vunpack.c.l.b16 %v782
        %v1168 = vunpack.c.h.b16 %v782
        %v1169 = vunpack.c.l.b16 %v783
        %v1170 = vunpack.c.h.b16 %v783
        %v1171 = vunpack.c.l.b16 %v784
        %v1172 = vunpack.c.h.b16 %v784
        %v1173 = vunpack.c.l.b16 %v785
        %v1174 = vunpack.c.h.b16 %v785
        %v1175 = vunpack.c.l.b16 %v786
        %v1176 = vunpack.c.h.b16 %v786
        %v1177 = vunpack.c.l.b16 %v787
        %v1178 = vunpack.c.h.b16 %v787
        %v1179 = vunpack.c.l.b16 %v788
        %v1180 = vunpack.c.h.b16 %v788
        %v1181 = vunpack.c.l.b16 %v789
        %v1182 = vunpack.c.h.b16 %v789
        %v1183 = vunpack.c.l.b16 %v790
        %v1184 = vunpack.c.h.b16 %v790
        %v1185 = vunpack.c.l.b16 %v791
        %v1186 = vunpack.c.h.b16 %v791
        %v1187 = vunpack.c.l.b16 %v792
        %v1188 = vunpack.c.h.b16 %v792
        %v1189 = vunpack.c.l.b16 %v793
        %v1190 = vunpack.c.h.b16 %v793
        %v1191 = vunpack.c.l.b16 %v794
        %v1192 = vunpack.c.h.b16 %v794
        %v1193 = vunpack.c.l.b16 %v795
        %v1194 = vunpack.c.h.b16 %v795
        %v1195 = vunpack.c.l.b16 %v796
        %v1196 = vunpack.c.h.b16 %v796
        %v1197 = vunpack.c.l.b16 %v797
        %v1198 = vunpack.c.h.b16 %v797
        %v1199 = vunpack.c.l.b16 %v798
        %v1200 = vunpack.c.h.b16 %v798
        %v1201 = vpack.c.b16 %v953, %v945
        %v1202 = vpack.c.b16 %v954, %v946
        %v1203 = vpack.c.b16 %v955, %v947
        %v1204 = vpack.c.b16 %v956, %v948
        %v1205 = vpack.c.b16 %v957, %v949
        %v1206 = vpack.c.b16 %v958, %v950
        %v1207 = vpack.c.b16 %v959, %v951
        %v1208 = vpack.c.b16 %v960, %v952
        %v1209 = vpack.c.b16 %v969, %v961
        %v1210 = vpack.c.b16 %v970, %v962
        %v1211 = vpack.c.b16 %v971, %v963
        %v1212 = vpack.c.b16 %v972, %v964
        %v1213 = vpack.c.b16 %v973, %v965
        %v1214 = vpack.c.b16 %v974, %v966
        %v1215 = vpack.c.b16 %v975, %v967
        %v1216 = vpack.c.b16 %v976, %v968
        %v1217 = vpack.c.b16 %v985, %v977
        %v1218 = vpack.c.b16 %v986, %v978
        %v1219 = vpack.c.b16 %v987, %v979
        %v1220 = vpack.c.b16 %v988, %v980
        %v1221 = vpack.c.b16 %v989, %v981
        %v1222 = vpack.c.b16 %v990, %v982
        %v1223 = vpack.c.b16 %v991, %v983
        %v1224 = vpack.c.b16 %v992, %v984
        %v1225 = vpack.c.b16 %v1001, %v993
        %v1226 = vpack.c.b16 %v1002, %v994
        %v1227 = vpack.c.b16 %v1003, %v995
        %v1228 = vpack.c.b16 %v1004, %v996
        %v1229 = vpack.c.b16 %v1005, %v997
        %v1230 = vpack.c.b16 %v1006, %v998
        %v1231 = vpack.c.b16 %v1007, %v999
        %v1232 = vpack.c.b16 %v1008, %v1000
        %v1233 = vpack.c.b16 %v1017, %v1009
        %v1234 = vpack.c.b16 %v1018, %v1010
        %v1235 = vpack.c.b16 %v1019, %v1011
        %v1236 = vpack.c.b16 %v1020, %v1012
        %v1237 = vpack.c.b16 %v1021, %v1013
        %v1238 = vpack.c.b16 %v1022, %v1014
        %v1239 = vpack.c.b16 %v1023, %v1015
        %v1240 = vpack.c.b16 %v1024, %v1016
        %v1241 = vpack.c.b16 %v1033, %v1025
        %v1242 = vpack.c.b16 %v1034, %v1026
        %v1243 = vpack.c.b16 %v1035, %v1027
        %v1244 = vpack.c.b16 %v1036, %v1028
        %v1245 = vpack.c.b16 %v1037, %v1029
        %v1246 = vpack.c.b16 %v1038, %v1030
        %v1247 = vpack.c.b16 %v1039, %v1031
        %v1248 = vpack.c.b16 %v1040, %v1032
        %v1249 = vpack.c.b16 %v1049, %v1041
        %v1250 = vpack.c.b16 %v1050, %v1042
        %v1251 = vpack.c.b16 %v1051, %v1043
        %v1252 = vpack.c.b16 %v1052, %v1044
        %v1253 = vpack.c.b16 %v1053, %v1045
        %v1254 = vpack.c.b16 %v1054, %v1046
        %v1255 = vpack.c.b16 %v1055, %v1047
        %v1256 = vpack.c.b16 %v1056, %v1048
        %v1257 = vpack.c.b16 %v1065, %v1057
        %v1258 = vpack.c.b16 %v1066, %v1058
        %v1259 = vpack.c.b16 %v1067, %v1059
        %v1260 = vpack.c.b16 %v1068, %v1060
        %v1261 = vpack.c.b16 %v1069, %v1061
        %v1262 = vpack.c.b16 %v1070, %v1062
        %v1263 = vpack.c.b16 %v1071, %v1063
        %v1264 = vpack.c.b16 %v1072, %v1064
        %v1265 = vpack.c.b16 %v1081, %v1073
        %v1266 = vpack.c.b16 %v1082, %v1074
        %v1267 = vpack.c.b16 %v1083, %v1075
        %v1268 = vpack.c.b16 %v1084, %v1076
        %v1269 = vpack.c.b16 %v1085, %v1077
        %v1270 = vpack.c.b16 %v1086, %v1078
        %v1271 = vpack.c.b16 %v1087, %v1079
        %v1272 = vpack.c.b16 %v1088, %v1080
        %v1273 = vpack.c.b16 %v1097, %v1089
        %v1274 = vpack.c.b16 %v1098, %v1090
        %v1275 = vpack.c.b16 %v1099, %v1091
        %v1276 = vpack.c.b16 %v1100, %v1092
        %v1277 = vpack.c.b16 %v1101, %v1093
        %v1278 = vpack.c.b16 %v1102, %v1094
        %v1279 = vpack.c.b16 %v1103, %v1095
        %v1280 = vpack.c.b16 %v1104, %v1096
        %v1281 = vpack.c.b16 %v1113, %v1105
        %v1282 = vpack.c.b16 %v1114, %v1106
        %v1283 = vpack.c.b16 %v1115, %v1107
        %v1284 = vpack.c.b16 %v1116, %v1108
        %v1285 = vpack.c.b16 %v1117, %v1109
        %v1286 = vpack.c.b16 %v1118, %v1110
        %v1287 = vpack.c.b16 %v1119, %v1111
        %v1288 = vpack.c.b16 %v1120, %v1112
        %v1289 = vpack.c.b16 %v1129, %v1121
        %v1290 = vpack.c.b16 %v1130, %v1122
        %v1291 = vpack.c.b16 %v1131, %v1123
        %v1292 = vpack.c.b16 %v1132, %v1124
        %v1293 = vpack.c.b16 %v1133, %v1125
        %v1294 = vpack.c.b16 %v1134, %v1126
        %v1295 = vpack.c.b16 %v1135, %v1127
        %v1296 = vpack.c.b16 %v1136, %v1128
        %v1297 = vpack.c.b16 %v1145, %v1137
        %v1298 = vpack.c.b16 %v1146, %v1138
        %v1299 = vpack.c.b16 %v1147, %v1139
        %v1300 = vpack.c.b16 %v1148, %v1140
        %v1301 = vpack.c.b16 %v1149, %v1141
        %v1302 = vpack.c.b16 %v1150, %v1142
        %v1303 = vpack.c.b16 %v1151, %v1143
        %v1304 = vpack.c.b16 %v1152, %v1144
        %v1305 = vpack.c.b16 %v1161, %v1153
        %v1306 = vpack.c.b16 %v1162, %v1154
        %v1307 = vpack.c.b16 %v1163, %v1155
        %v1308 = vpack.c.b16 %v1164, %v1156
        %v1309 = vpack.c.b16 %v1165, %v1157
        %v1310 = vpack.c.b16 %v1166, %v1158
        %v1311 = vpack.c.b16 %v1167, %v1159
        %v1312 = vpack.c.b16 %v1168, %v1160
        %v1313 = vpack.c.b16 %v1177, %v1169
        %v1314 = vpack.c.b16 %v1178, %v1170
        %v1315 = vpack.c.b16 %v1179, %v1171
        %v1316 = vpack.c.b16 %v1180, %v1172
        %v1317 = vpack.c.b16 %v1181, %v1173
        %v1318 = vpack.c.b16 %v1182, %v1174
        %v1319 = vpack.c.b16 %v1183, %v1175
        %v1320 = vpack.c.b16 %v1184, %v1176
        %v1321 = vpack.c.b16 %v1193, %v1185
        %v1322 = vpack.c.b16 %v1194, %v1186
        %v1323 = vpack.c.b16 %v1195, %v1187
        %v1324 = vpack.c.b16 %v1196, %v1188
        %v1325 = vpack.c.b16 %v1197, %v1189
        %v1326 = vpack.c.b16 %v1198, %v1190
        %v1327 = vpack.c.b16 %v1199, %v1191
        %v1328 = vpack.c.b16 %v1200, %v1192
        %1457 = vmatpush.bf16.msra.mxu0 %v1257
        %1458 = vmatpush.bf16.msra.mxu0 %v1249
        %1459 = vmatpush.bf16.msra.mxu0 %v1241
        %1460 = vmatpush.bf16.msra.mxu0 %v1233
        %1461 = vmatpush.bf16.msra.mxu0 %v1225
        %1462 = vmatpush.bf16.msra.mxu0 %v1217
        %1463 = vmatpush.bf16.msra.mxu0 %v1209
        %1464 = vmatpush.bf16.msra.mxu0 %v1201
        %1465 = vmatmul.bf16.gmra.mxu0 %v669
        %v1466 = vpop.f32.mrf.mxu0
        %v1467 = vadd.f32 %v801, %v1466
        %v1468 = vpop.f32.mrf.mxu0
        %v1469 = vadd.f32 %v801, %v1468
        %1470 = vdwg.mxu0
        %1471 = vmatpush.bf16.msra.mxu0 %v1321
        %1472 = vmatpush.bf16.msra.mxu0 %v1313
        %1473 = vmatpush.bf16.msra.mxu0 %v1305
        %1474 = vmatpush.bf16.msra.mxu0 %v1297
        %1475 = vmatpush.bf16.msra.mxu0 %v1289
        %1476 = vmatpush.bf16.msra.mxu0 %v1281
        %1477 = vmatpush.bf16.msra.mxu0 %v1273
        %1478 = vmatpush.bf16.msra.mxu0 %v1265
        %1479 = vmatmul.bf16.gmra.mxu0 %v670
        %v1480 = vpop.f32.mrf.mxu0
        %v1481 = vadd.f32 %v1467, %v1480
        %v1482 = vpop.f32.mrf.mxu0
        %v1483 = vadd.f32 %v1469, %v1482
        %1484 = vdwg.mxu0
        %1485 = vmatpush.bf16.msra.mxu0 %v1258
        %1486 = vmatpush.bf16.msra.mxu0 %v1250
        %1487 = vmatpush.bf16.msra.mxu0 %v1242
        %1488 = vmatpush.bf16.msra.mxu0 %v1234
        %1489 = vmatpush.bf16.msra.mxu0 %v1226
        %1490 = vmatpush.bf16.msra.mxu0 %v1218
        %1491 = vmatpush.bf16.msra.mxu0 %v1210
        %1492 = vmatpush.bf16.msra.mxu0 %v1202
        %1493 = vmatmul.bf16.gmra.mxu0 %v669
        %v1494 = vpop.f32.mrf.mxu0
        %v1495 = vadd.f32 %v802, %v1494
        %v1496 = vpop.f32.mrf.mxu0
        %v1497 = vadd.f32 %v802, %v1496
        %1498 = vdwg.mxu0
        %1499 = vmatpush.bf16.msra.mxu0 %v1322
        %1500 = vmatpush.bf16.msra.mxu0 %v1314
        %1501 = vmatpush.bf16.msra.mxu0 %v1306
        %1502 = vmatpush.bf16.msra.mxu0 %v1298
        %1503 = vmatpush.bf16.msra.mxu0 %v1290
        %1504 = vmatpush.bf16.msra.mxu0 %v1282
        %1505 = vmatpush.bf16.msra.mxu0 %v1274
        %1506 = vmatpush.bf16.msra.mxu0 %v1266
        %1507 = vmatmul.bf16.gmra.mxu0 %v670
        %v1508 = vpop.f32.mrf.mxu0
        %v1509 = vadd.f32 %v1495, %v1508
        %v1510 = vpop.f32.mrf.mxu0
        %v1511 = vadd.f32 %v1497, %v1510
        %1512 = vdwg.mxu0
        %1513 = vmatpush.bf16.msra.mxu0 %v1259
        %1514 = vmatpush.bf16.msra.mxu0 %v1251
        %1515 = vmatpush.bf16.msra.mxu0 %v1243
        %1516 = vmatpush.bf16.msra.mxu0 %v1235
        %1517 = vmatpush.bf16.msra.mxu0 %v1227
        %1518 = vmatpush.bf16.msra.mxu0 %v1219
        %1519 = vmatpush.bf16.msra.mxu0 %v1211
        %1520 = vmatpush.bf16.msra.mxu0 %v1203
        %1521 = vmatmul.bf16.gmra.mxu0 %v669
        %v1522 = vpop.f32.mrf.mxu0
        %v1523 = vadd.f32 %v803, %v1522
        %v1524 = vpop.f32.mrf.mxu0
        %v1525 = vadd.f32 %v803, %v1524
        %1526 = vdwg.mxu0
        %1527 = vmatpush.bf16.msra.mxu0 %v1323
        %1528 = vmatpush.bf16.msra.mxu0 %v1315
        %1529 = vmatpush.bf16.msra.mxu0 %v1307
        %1530 = vmatpush.bf16.msra.mxu0 %v1299
        %1531 = vmatpush.bf16.msra.mxu0 %v1291
        %1532 = vmatpush.bf16.msra.mxu0 %v1283
        %1533 = vmatpush.bf16.msra.mxu0 %v1275
        %1534 = vmatpush.bf16.msra.mxu0 %v1267
        %1535 = vmatmul.bf16.gmra.mxu0 %v670
        %v1536 = vpop.f32.mrf.mxu0
        %v1537 = vadd.f32 %v1523, %v1536
        %v1538 = vpop.f32.mrf.mxu0
        %v1539 = vadd.f32 %v1525, %v1538
        %1540 = vdwg.mxu0
        %1541 = vmatpush.bf16.msra.mxu0 %v1260
        %1542 = vmatpush.bf16.msra.mxu0 %v1252
        %1543 = vmatpush.bf16.msra.mxu0 %v1244
        %1544 = vmatpush.bf16.msra.mxu0 %v1236
        %1545 = vmatpush.bf16.msra.mxu0 %v1228
        %1546 = vmatpush.bf16.msra.mxu0 %v1220
        %1547 = vmatpush.bf16.msra.mxu0 %v1212
        %1548 = vmatpush.bf16.msra.mxu0 %v1204
        %1549 = vmatmul.bf16.gmra.mxu0 %v669
        %v1550 = vpop.f32.mrf.mxu0
        %v1551 = vadd.f32 %v804, %v1550
        %v1552 = vpop.f32.mrf.mxu0
        %v1553 = vadd.f32 %v804, %v1552
        %1554 = vdwg.mxu0
        %1555 = vmatpush.bf16.msra.mxu0 %v1324
        %1556 = vmatpush.bf16.msra.mxu0 %v1316
        %1557 = vmatpush.bf16.msra.mxu0 %v1308
        %1558 = vmatpush.bf16.msra.mxu0 %v1300
        %1559 = vmatpush.bf16.msra.mxu0 %v1292
        %1560 = vmatpush.bf16.msra.mxu0 %v1284
        %1561 = vmatpush.bf16.msra.mxu0 %v1276
        %1562 = vmatpush.bf16.msra.mxu0 %v1268
        %1563 = vmatmul.bf16.gmra.mxu0 %v670
        %v1564 = vpop.f32.mrf.mxu0
        %v1565 = vadd.f32 %v1551, %v1564
        %v1566 = vpop.f32.mrf.mxu0
        %v1567 = vadd.f32 %v1553, %v1566
        %1568 = vdwg.mxu0
        %1569 = vmatpush.bf16.msra.mxu0 %v1261
        %1570 = vmatpush.bf16.msra.mxu0 %v1253
        %1571 = vmatpush.bf16.msra.mxu0 %v1245
        %1572 = vmatpush.bf16.msra.mxu0 %v1237
        %1573 = vmatpush.bf16.msra.mxu0 %v1229
        %1574 = vmatpush.bf16.msra.mxu0 %v1221
        %1575 = vmatpush.bf16.msra.mxu0 %v1213
        %1576 = vmatpush.bf16.msra.mxu0 %v1205
        %1577 = vmatmul.bf16.gmra.mxu0 %v669
        %v1578 = vpop.f32.mrf.mxu0
        %v1579 = vadd.f32 %v805, %v1578
        %v1580 = vpop.f32.mrf.mxu0
        %v1581 = vadd.f32 %v805, %v1580
        %1582 = vdwg.mxu0
        %1583 = vmatpush.bf16.msra.mxu0 %v1325
        %1584 = vmatpush.bf16.msra.mxu0 %v1317
        %1585 = vmatpush.bf16.msra.mxu0 %v1309
        %1586 = vmatpush.bf16.msra.mxu0 %v1301
        %1587 = vmatpush.bf16.msra.mxu0 %v1293
        %1588 = vmatpush.bf16.msra.mxu0 %v1285
        %1589 = vmatpush.bf16.msra.mxu0 %v1277
        %1590 = vmatpush.bf16.msra.mxu0 %v1269
        %1591 = vmatmul.bf16.gmra.mxu0 %v670
        %v1592 = vpop.f32.mrf.mxu0
        %v1593 = vadd.f32 %v1579, %v1592
        %v1594 = vpop.f32.mrf.mxu0
        %v1595 = vadd.f32 %v1581, %v1594
        %1596 = vdwg.mxu0
        %1597 = vmatpush.bf16.msra.mxu0 %v1262
        %1598 = vmatpush.bf16.msra.mxu0 %v1254
        %1599 = vmatpush.bf16.msra.mxu0 %v1246
        %1600 = vmatpush.bf16.msra.mxu0 %v1238
        %1601 = vmatpush.bf16.msra.mxu0 %v1230
        %1602 = vmatpush.bf16.msra.mxu0 %v1222
        %1603 = vmatpush.bf16.msra.mxu0 %v1214
        %1604 = vmatpush.bf16.msra.mxu0 %v1206
        %1605 = vmatmul.bf16.gmra.mxu0 %v669
        %v1606 = vpop.f32.mrf.mxu0
        %v1607 = vadd.f32 %v806, %v1606
        %v1608 = vpop.f32.mrf.mxu0
        %v1609 = vadd.f32 %v806, %v1608
        %1610 = vdwg.mxu0
        %1611 = vmatpush.bf16.msra.mxu0 %v1326
        %1612 = vmatpush.bf16.msra.mxu0 %v1318
        %1613 = vmatpush.bf16.msra.mxu0 %v1310
        %1614 = vmatpush.bf16.msra.mxu0 %v1302
        %1615 = vmatpush.bf16.msra.mxu0 %v1294
        %1616 = vmatpush.bf16.msra.mxu0 %v1286
        %1617 = vmatpush.bf16.msra.mxu0 %v1278
        %1618 = vmatpush.bf16.msra.mxu0 %v1270
        %1619 = vmatmul.bf16.gmra.mxu0 %v670
        %v1620 = vpop.f32.mrf.mxu0
        %v1621 = vadd.f32 %v1607, %v1620
        %v1622 = vpop.f32.mrf.mxu0
        %v1623 = vadd.f32 %v1609, %v1622
        %1624 = vdwg.mxu0
        %1625 = vmatpush.bf16.msra.mxu0 %v1263
        %1626 = vmatpush.bf16.msra.mxu0 %v1255
        %1627 = vmatpush.bf16.msra.mxu0 %v1247
        %1628 = vmatpush.bf16.msra.mxu0 %v1239
        %1629 = vmatpush.bf16.msra.mxu0 %v1231
        %1630 = vmatpush.bf16.msra.mxu0 %v1223
        %1631 = vmatpush.bf16.msra.mxu0 %v1215
        %1632 = vmatpush.bf16.msra.mxu0 %v1207
        %1633 = vmatmul.bf16.gmra.mxu0 %v669
        %v1634 = vpop.f32.mrf.mxu0
        %v1635 = vadd.f32 %v807, %v1634
        %v1636 = vpop.f32.mrf.mxu0
        %v1637 = vadd.f32 %v807, %v1636
        %1638 = vdwg.mxu0
        %1639 = vmatpush.bf16.msra.mxu0 %v1327
        %1640 = vmatpush.bf16.msra.mxu0 %v1319
        %1641 = vmatpush.bf16.msra.mxu0 %v1311
        %1642 = vmatpush.bf16.msra.mxu0 %v1303
        %1643 = vmatpush.bf16.msra.mxu0 %v1295
        %1644 = vmatpush.bf16.msra.mxu0 %v1287
        %1645 = vmatpush.bf16.msra.mxu0 %v1279
        %1646 = vmatpush.bf16.msra.mxu0 %v1271
        %1647 = vmatmul.bf16.gmra.mxu0 %v670
        %v1648 = vpop.f32.mrf.mxu0
        %v1649 = vadd.f32 %v1635, %v1648
        %v1650 = vpop.f32.mrf.mxu0
        %v1651 = vadd.f32 %v1637, %v1650
        %1652 = vdwg.mxu0
        %1653 = vmatpush.bf16.msra.mxu0 %v1264
        %1654 = vmatpush.bf16.msra.mxu0 %v1256
        %1655 = vmatpush.bf16.msra.mxu0 %v1248
        %1656 = vmatpush.bf16.msra.mxu0 %v1240
        %1657 = vmatpush.bf16.msra.mxu0 %v1232
        %1658 = vmatpush.bf16.msra.mxu0 %v1224
        %1659 = vmatpush.bf16.msra.mxu0 %v1216
        %1660 = vmatpush.bf16.msra.mxu0 %v1208
        %1661 = vmatmul.bf16.gmra.mxu0 %v669
        %v1662 = vpop.f32.mrf.mxu0
        %v1663 = vadd.f32 %v808, %v1662
        %v1664 = vpop.f32.mrf.mxu0
        %v1665 = vadd.f32 %v808, %v1664
        %1666 = vdwg.mxu0
        %1667 = vmatpush.bf16.msra.mxu0 %v1328
        %1668 = vmatpush.bf16.msra.mxu0 %v1320
        %1669 = vmatpush.bf16.msra.mxu0 %v1312
        %1670 = vmatpush.bf16.msra.mxu0 %v1304
        %1671 = vmatpush.bf16.msra.mxu0 %v1296
        %1672 = vmatpush.bf16.msra.mxu0 %v1288
        %1673 = vmatpush.bf16.msra.mxu0 %v1280
        %1674 = vmatpush.bf16.msra.mxu0 %v1272
        %1675 = vmatmul.bf16.gmra.mxu0 %v670
        %v1676 = vpop.f32.mrf.mxu0
        %v1677 = vadd.f32 %v1663, %v1676
        %v1678 = vpop.f32.mrf.mxu0
        %v1679 = vadd.f32 %v1665, %v1678
        %1680 = vdwg.mxu0
        %v1681 = vlaneseq
        %v1682 = vand.u32 %v1681, 127
        %vm1683 = vcmp.lt.s32.totalorder %v1682, 9
        %v1684 = vsel %vm1683, 0.0, -1e+30
        %1687 = vrot.lane.b32.xlu0 %v1537, 64
        %v1688 = vpop.permute.xlu0 %1687
        %1689 = vrot.lane.b32.xlu0 %v1539, 64
        %v1690 = vpop.permute.xlu0 %1689
        %v1692 = vsel %vm637, %v1481, 0
        %v1695 = vsel %vm637, %v1483, 0
        %v1697 = vsel %vm637, %v1688, 0
        %v1699 = vsel %vm637, %v1690, 0
        %1701 = vmatpush.xpose.msra.mxu0 0.0
        %1702 = vmatpush.xpose.msra.mxu0 0.0
        %1703 = vmatpush.xpose.msra.mxu0 0.0
        %1704 = vmatpush.xpose.msra.mxu0 0.0
        %1705 = vmatpush.xpose.msra.mxu0 0.0
        %1706 = vmatpush.xpose.msra.mxu0 0.0
        %1707 = vmatpush.xpose.msra.mxu0 0.0
        %1708 = vmatpush.xpose.msra.mxu0 0.0
        %1709 = vmatpush.xpose.msra.mxu0 0.0
        %1710 = vmatpush.xpose.msra.mxu0 0.0
        %1711 = vmatpush.xpose.msra.mxu0 0.0
        %1712 = vmatpush.xpose.msra.mxu0 0.0
        %1713 = vmatpush.xpose.msra.mxu0 0.0
        %1714 = vmatpush.xpose.msra.mxu0 0.0
        %1715 = vmatpush.xpose.msra.mxu0 %v1699
        %1716 = vmatpush.xpose.msra.mxu0 %v1697
        %1717 = vmatmul.f32.gmra.mxu0 %v1692
        %v1718 = vpop.f32.mrf.mxu0
        %v1719 = vadd.f32 0.0, %v1718
        %1720 = vmatmul.f32.gmra.mxu0 %v1695
        %v1721 = vpop.f32.mrf.mxu0
        %v1722 = vadd.f32 0.0, %v1721
        %1723 = vdwg.mxu0
        %v1724 = vmul.f32 %v1719, 0.2
        %v1725 = vmul.f32 %v1722, 0.2
        %v1726 = vadd.f32 %v1724, %v1684
        %v1727 = vadd.f32 %v1725, %v1684
        %vm1728 = vcmask 130048
        %v1729 = vsel %vm1728, %v1726, -inf
        %1730 = vmax.xlane.f32.xlu0 %v1729
        %v1731 = vpop.xlane.xlu0 %1730
        %v1732 = vsel %vm1728, %v1727, -inf
        %1733 = vmax.xlane.f32.xlu0 %v1732
        %v1734 = vpop.xlane.xlu0 %1733
        %v1735 = vsub.f32 %v1726, %v1731
        %v1736 = vsub.f32 %v1727, %v1734
        %v1737 = vmul.f32 %v1735, 1.442695
        %v1738 = vpow.pop %v1737
        %v1739 = vmul.f32 %v1736, 1.442695
        %v1740 = vpow.pop %v1739
        %v1741 = vsel %vm1728, %v1738, 0.0
        %1742 = vadd.xlane.f32.xlu0 %v1741
        %v1743 = vpop.xlane.xlu0 %1742
        %v1744 = vsel %vm1728, %v1740, 0.0
        %1745 = vadd.xlane.f32.xlu0 %v1744
        %v1746 = vpop.xlane.xlu0 %1745
        %v1747 = vrcp.pop %v1743
        %v1748 = vrcp.pop %v1746
        %v1749 = vmul.f32 %v1738, %v1747
        %v1750 = vmul.f32 %v1740, %v1748
        %v1751 = vpack.c.bf16 %v1750, %v1749
        %v1752 = vpack.c.bf16 %v1623, %v1621
        %v1754 = vsel %vm1728, %v1751, 0
        %1756 = vmatpush.bf16.msra.mxu0 0
        %1757 = vmatpush.bf16.msra.mxu0 0
        %1758 = vmatpush.bf16.msra.mxu0 0
        %1759 = vmatpush.bf16.msra.mxu0 0
        %1760 = vmatpush.bf16.msra.mxu0 0
        %1761 = vmatpush.bf16.msra.mxu0 0
        %1762 = vmatpush.bf16.msra.mxu0 0
        %1763 = vmatpush.bf16.msra.mxu0 %v1752
        %1764 = vmatmul.bf16.gmra.mxu0 %v1754
        %v1765 = vpop.f32.mrf.mxu0
        %v1766 = vadd.f32 0.0, %v1765
        %v1767 = vpop.f32.mrf.mxu0
        %v1768 = vadd.f32 0.0, %v1767
        %1769 = vdwg.mxu0
        %1770 = vrot.lane.b32.xlu0 %v1481, 96
        %v1771 = vpop.permute.xlu0 %1770
        %1772 = vrot.lane.b32.xlu0 %v1483, 96
        %v1773 = vpop.permute.xlu0 %1772
        %1774 = vrot.lane.b32.xlu0 %v1537, 32
        %v1775 = vpop.permute.xlu0 %1774
        %1776 = vrot.lane.b32.xlu0 %v1539, 32
        %v1777 = vpop.permute.xlu0 %1776
        %v1778 = vsel %vm637, %v1771, 0
        %v1780 = vsel %vm637, %v1773, 0
        %v1782 = vsel %vm637, %v1775, 0
        %v1784 = vsel %vm637, %v1777, 0
        %1786 = vmatpush.xpose.msra.mxu0 0.0
        %1787 = vmatpush.xpose.msra.mxu0 0.0
        %1788 = vmatpush.xpose.msra.mxu0 0.0
        %1789 = vmatpush.xpose.msra.mxu0 0.0
        %1790 = vmatpush.xpose.msra.mxu0 0.0
        %1791 = vmatpush.xpose.msra.mxu0 0.0
        %1792 = vmatpush.xpose.msra.mxu0 0.0
        %1793 = vmatpush.xpose.msra.mxu0 0.0
        %1794 = vmatpush.xpose.msra.mxu0 0.0
        %1795 = vmatpush.xpose.msra.mxu0 0.0
        %1796 = vmatpush.xpose.msra.mxu0 0.0
        %1797 = vmatpush.xpose.msra.mxu0 0.0
        %1798 = vmatpush.xpose.msra.mxu0 0.0
        %1799 = vmatpush.xpose.msra.mxu0 0.0
        %1800 = vmatpush.xpose.msra.mxu0 %v1784
        %1801 = vmatpush.xpose.msra.mxu0 %v1782
        %1802 = vmatmul.f32.gmra.mxu0 %v1778
        %v1803 = vpop.f32.mrf.mxu0
        %v1804 = vadd.f32 0.0, %v1803
        %1805 = vmatmul.f32.gmra.mxu0 %v1780
        %v1806 = vpop.f32.mrf.mxu0
        %v1807 = vadd.f32 0.0, %v1806
        %1808 = vdwg.mxu0
        %v1809 = vmul.f32 %v1804, 0.2
        %v1810 = vmul.f32 %v1807, 0.2
        %v1811 = vadd.f32 %v1809, %v1684
        %v1812 = vadd.f32 %v1810, %v1684
        %v1813 = vsel %vm1728, %v1811, -inf
        %1814 = vmax.xlane.f32.xlu0 %v1813
        %v1815 = vpop.xlane.xlu0 %1814
        %v1816 = vsel %vm1728, %v1812, -inf
        %1817 = vmax.xlane.f32.xlu0 %v1816
        %v1818 = vpop.xlane.xlu0 %1817
        %v1819 = vsub.f32 %v1811, %v1815
        %v1820 = vsub.f32 %v1812, %v1818
        %v1821 = vmul.f32 %v1819, 1.442695
        %v1822 = vpow.pop %v1821
        %v1823 = vmul.f32 %v1820, 1.442695
        %v1824 = vpow.pop %v1823
        %v1825 = vsel %vm1728, %v1822, 0.0
        %1826 = vadd.xlane.f32.xlu0 %v1825
        %v1827 = vpop.xlane.xlu0 %1826
        %v1828 = vsel %vm1728, %v1824, 0.0
        %1829 = vadd.xlane.f32.xlu0 %v1828
        %v1830 = vpop.xlane.xlu0 %1829
        %v1831 = vrcp.pop %v1827
        %v1832 = vrcp.pop %v1830
        %v1833 = vmul.f32 %v1822, %v1831
        %v1834 = vmul.f32 %v1824, %v1832
        %v1835 = vpack.c.bf16 %v1834, %v1833
        %1837 = vrot.lane.b32.xlu0 %v1752, 96
        %v1838 = vpop.permute.xlu0 %1837
        %v1841 = vsel %vm1728, %v1835, 0
        %1843 = vmatpush.bf16.msra.mxu0 0
        %1844 = vmatpush.bf16.msra.mxu0 0
        %1845 = vmatpush.bf16.msra.mxu0 0
        %1846 = vmatpush.bf16.msra.mxu0 0
        %1847 = vmatpush.bf16.msra.mxu0 0
        %1848 = vmatpush.bf16.msra.mxu0 0
        %1849 = vmatpush.bf16.msra.mxu0 0
        %1850 = vmatpush.bf16.msra.mxu0 %v1838
        %1851 = vmatmul.bf16.gmra.mxu0 %v1841
        %v1852 = vpop.f32.mrf.mxu0
        %v1853 = vadd.f32 0.0, %v1852
        %v1854 = vpop.f32.mrf.mxu0
        %v1855 = vadd.f32 0.0, %v1854
        %1856 = vdwg.mxu0
        %1857 = vrot.lane.b32.xlu0 %v1481, 64
        %v1858 = vpop.permute.xlu0 %1857
        %1859 = vrot.lane.b32.xlu0 %v1483, 64
        %v1860 = vpop.permute.xlu0 %1859
        %v1861 = vsel %vm637, %v1858, 0
        %v1863 = vsel %vm637, %v1860, 0
        %v1866 = vsel %vm637, %v1565, 0
        %v1869 = vsel %vm637, %v1567, 0
        %1871 = vmatpush.xpose.msra.mxu0 0.0
        %1872 = vmatpush.xpose.msra.mxu0 0.0
        %1873 = vmatpush.xpose.msra.mxu0 0.0
        %1874 = vmatpush.xpose.msra.mxu0 0.0
        %1875 = vmatpush.xpose.msra.mxu0 0.0
        %1876 = vmatpush.xpose.msra.mxu0 0.0
        %1877 = vmatpush.xpose.msra.mxu0 0.0
        %1878 = vmatpush.xpose.msra.mxu0 0.0
        %1879 = vmatpush.xpose.msra.mxu0 0.0
        %1880 = vmatpush.xpose.msra.mxu0 0.0
        %1881 = vmatpush.xpose.msra.mxu0 0.0
        %1882 = vmatpush.xpose.msra.mxu0 0.0
        %1883 = vmatpush.xpose.msra.mxu0 0.0
        %1884 = vmatpush.xpose.msra.mxu0 0.0
        %1885 = vmatpush.xpose.msra.mxu0 %v1869
        %1886 = vmatpush.xpose.msra.mxu0 %v1866
        %1887 = vmatmul.f32.gmra.mxu0 %v1861
        %v1888 = vpop.f32.mrf.mxu0
        %v1889 = vadd.f32 0.0, %v1888
        %1890 = vmatmul.f32.gmra.mxu0 %v1863
        %v1891 = vpop.f32.mrf.mxu0
        %v1892 = vadd.f32 0.0, %v1891
        %1893 = vdwg.mxu0
        %v1894 = vmul.f32 %v1889, 0.2
        %v1895 = vmul.f32 %v1892, 0.2
        %v1896 = vadd.f32 %v1894, %v1684
        %v1897 = vadd.f32 %v1895, %v1684
        %v1898 = vsel %vm1728, %v1896, -inf
        %1899 = vmax.xlane.f32.xlu0 %v1898
        %v1900 = vpop.xlane.xlu0 %1899
        %v1901 = vsel %vm1728, %v1897, -inf
        %1902 = vmax.xlane.f32.xlu0 %v1901
        %v1903 = vpop.xlane.xlu0 %1902
        %v1904 = vsub.f32 %v1896, %v1900
        %v1905 = vsub.f32 %v1897, %v1903
        %v1906 = vmul.f32 %v1904, 1.442695
        %v1907 = vpow.pop %v1906
        %v1908 = vmul.f32 %v1905, 1.442695
        %v1909 = vpow.pop %v1908
        %v1910 = vsel %vm1728, %v1907, 0.0
        %1911 = vadd.xlane.f32.xlu0 %v1910
        %v1912 = vpop.xlane.xlu0 %1911
        %v1913 = vsel %vm1728, %v1909, 0.0
        %1914 = vadd.xlane.f32.xlu0 %v1913
        %v1915 = vpop.xlane.xlu0 %1914
        %v1916 = vrcp.pop %v1912
        %v1917 = vrcp.pop %v1915
        %v1918 = vmul.f32 %v1907, %v1916
        %v1919 = vmul.f32 %v1909, %v1917
        %v1920 = vpack.c.bf16 %v1919, %v1918
        %1921 = vrot.lane.b32.xlu0 %v1752, 64
        %v1922 = vpop.permute.xlu0 %1921
        %v1925 = vsel %vm1728, %v1920, 0
        %1927 = vmatpush.bf16.msra.mxu0 0
        %1928 = vmatpush.bf16.msra.mxu0 0
        %1929 = vmatpush.bf16.msra.mxu0 0
        %1930 = vmatpush.bf16.msra.mxu0 0
        %1931 = vmatpush.bf16.msra.mxu0 0
        %1932 = vmatpush.bf16.msra.mxu0 0
        %1933 = vmatpush.bf16.msra.mxu0 0
        %1934 = vmatpush.bf16.msra.mxu0 %v1922
        %1935 = vmatmul.bf16.gmra.mxu0 %v1925
        %v1936 = vpop.f32.mrf.mxu0
        %v1937 = vadd.f32 0.0, %v1936
        %v1938 = vpop.f32.mrf.mxu0
        %v1939 = vadd.f32 0.0, %v1938
        %1940 = vdwg.mxu0
        %1941 = vrot.lane.b32.xlu0 %v1481, 32
        %v1942 = vpop.permute.xlu0 %1941
        %1943 = vrot.lane.b32.xlu0 %v1483, 32
        %v1944 = vpop.permute.xlu0 %1943
        %1945 = vrot.lane.b32.xlu0 %v1565, 96
        %v1946 = vpop.permute.xlu0 %1945
        %1947 = vrot.lane.b32.xlu0 %v1567, 96
        %v1948 = vpop.permute.xlu0 %1947
        %v1949 = vsel %vm637, %v1942, 0
        %v1951 = vsel %vm637, %v1944, 0
        %v1953 = vsel %vm637, %v1946, 0
        %v1955 = vsel %vm637, %v1948, 0
        %1957 = vmatpush.xpose.msra.mxu0 0.0
        %1958 = vmatpush.xpose.msra.mxu0 0.0
        %1959 = vmatpush.xpose.msra.mxu0 0.0
        %1960 = vmatpush.xpose.msra.mxu0 0.0
        %1961 = vmatpush.xpose.msra.mxu0 0.0
        %1962 = vmatpush.xpose.msra.mxu0 0.0
        %1963 = vmatpush.xpose.msra.mxu0 0.0
        %1964 = vmatpush.xpose.msra.mxu0 0.0
        %1965 = vmatpush.xpose.msra.mxu0 0.0
        %1966 = vmatpush.xpose.msra.mxu0 0.0
        %1967 = vmatpush.xpose.msra.mxu0 0.0
        %1968 = vmatpush.xpose.msra.mxu0 0.0
        %1969 = vmatpush.xpose.msra.mxu0 0.0
        %1970 = vmatpush.xpose.msra.mxu0 0.0
        %1971 = vmatpush.xpose.msra.mxu0 %v1955
        %1972 = vmatpush.xpose.msra.mxu0 %v1953
        %1973 = vmatmul.f32.gmra.mxu0 %v1949
        %v1974 = vpop.f32.mrf.mxu0
        %v1975 = vadd.f32 0.0, %v1974
        %1976 = vmatmul.f32.gmra.mxu0 %v1951
        %v1977 = vpop.f32.mrf.mxu0
        %v1978 = vadd.f32 0.0, %v1977
        %1979 = vdwg.mxu0
        %v1980 = vmul.f32 %v1975, 0.2
        %v1981 = vmul.f32 %v1978, 0.2
        %v1982 = vadd.f32 %v1980, %v1684
        %v1983 = vadd.f32 %v1981, %v1684
        %v1984 = vsel %vm1728, %v1982, -inf
        %1985 = vmax.xlane.f32.xlu0 %v1984
        %v1986 = vpop.xlane.xlu0 %1985
        %v1987 = vsel %vm1728, %v1983, -inf
        %1988 = vmax.xlane.f32.xlu0 %v1987
        %v1989 = vpop.xlane.xlu0 %1988
        %v1990 = vsub.f32 %v1982, %v1986
        %v1991 = vsub.f32 %v1983, %v1989
        %v1992 = vmul.f32 %v1990, 1.442695
        %v1993 = vpow.pop %v1992
        %v1994 = vmul.f32 %v1991, 1.442695
        %v1995 = vpow.pop %v1994
        %v1996 = vsel %vm1728, %v1993, 0.0
        %1997 = vadd.xlane.f32.xlu0 %v1996
        %v1998 = vpop.xlane.xlu0 %1997
        %v1999 = vsel %vm1728, %v1995, 0.0
        %2000 = vadd.xlane.f32.xlu0 %v1999
        %v2001 = vpop.xlane.xlu0 %2000
        %v2002 = vrcp.pop %v1998
        %v2003 = vrcp.pop %v2001
        %v2004 = vmul.f32 %v1993, %v2002
        %v2005 = vmul.f32 %v1995, %v2003
        %v2006 = vpack.c.bf16 %v2005, %v2004
        %2007 = vrot.lane.b32.xlu0 %v1752, 32
        %v2008 = vpop.permute.xlu0 %2007
        %v2011 = vsel %vm1728, %v2006, 0
        %2013 = vmatpush.bf16.msra.mxu0 0
        %2014 = vmatpush.bf16.msra.mxu0 0
        %2015 = vmatpush.bf16.msra.mxu0 0
        %2016 = vmatpush.bf16.msra.mxu0 0
        %2017 = vmatpush.bf16.msra.mxu0 0
        %2018 = vmatpush.bf16.msra.mxu0 0
        %2019 = vmatpush.bf16.msra.mxu0 0
        %2020 = vmatpush.bf16.msra.mxu0 %v2008
        %2021 = vmatmul.bf16.gmra.mxu0 %v2011
        %v2022 = vpop.f32.mrf.mxu0
        %v2023 = vadd.f32 0.0, %v2022
        %v2024 = vpop.f32.mrf.mxu0
        %v2025 = vadd.f32 0.0, %v2024
        %2026 = vdwg.mxu0
        %2027 = vrot.lane.b32.xlu0 %v1565, 64
        %v2028 = vpop.permute.xlu0 %2027
        %2029 = vrot.lane.b32.xlu0 %v1567, 64
        %v2030 = vpop.permute.xlu0 %2029
        %v2032 = vsel %vm637, %v1509, 0
        %v2035 = vsel %vm637, %v1511, 0
        %v2037 = vsel %vm637, %v2028, 0
        %v2039 = vsel %vm637, %v2030, 0
        %2041 = vmatpush.xpose.msra.mxu0 0.0
        %2042 = vmatpush.xpose.msra.mxu0 0.0
        %2043 = vmatpush.xpose.msra.mxu0 0.0
        %2044 = vmatpush.xpose.msra.mxu0 0.0
        %2045 = vmatpush.xpose.msra.mxu0 0.0
        %2046 = vmatpush.xpose.msra.mxu0 0.0
        %2047 = vmatpush.xpose.msra.mxu0 0.0
        %2048 = vmatpush.xpose.msra.mxu0 0.0
        %2049 = vmatpush.xpose.msra.mxu0 0.0
        %2050 = vmatpush.xpose.msra.mxu0 0.0
        %2051 = vmatpush.xpose.msra.mxu0 0.0
        %2052 = vmatpush.xpose.msra.mxu0 0.0
        %2053 = vmatpush.xpose.msra.mxu0 0.0
        %2054 = vmatpush.xpose.msra.mxu0 0.0
        %2055 = vmatpush.xpose.msra.mxu0 %v2039
        %2056 = vmatpush.xpose.msra.mxu0 %v2037
        %2057 = vmatmul.f32.gmra.mxu0 %v2032
        %v2058 = vpop.f32.mrf.mxu0
        %v2059 = vadd.f32 0.0, %v2058
        %2060 = vmatmul.f32.gmra.mxu0 %v2035
        %v2061 = vpop.f32.mrf.mxu0
        %v2062 = vadd.f32 0.0, %v2061
        %2063 = vdwg.mxu0
        %v2064 = vmul.f32 %v2059, 0.2
        %v2065 = vmul.f32 %v2062, 0.2
        %v2066 = vadd.f32 %v2064, %v1684
        %v2067 = vadd.f32 %v2065, %v1684
        %v2068 = vsel %vm1728, %v2066, -inf
        %2069 = vmax.xlane.f32.xlu0 %v2068
        %v2070 = vpop.xlane.xlu0 %2069
        %v2071 = vsel %vm1728, %v2067, -inf
        %2072 = vmax.xlane.f32.xlu0 %v2071
        %v2073 = vpop.xlane.xlu0 %2072
        %v2074 = vsub.f32 %v2066, %v2070
        %v2075 = vsub.f32 %v2067, %v2073
        %v2076 = vmul.f32 %v2074, 1.442695
        %v2077 = vpow.pop %v2076
        %v2078 = vmul.f32 %v2075, 1.442695
        %v2079 = vpow.pop %v2078
        %v2080 = vsel %vm1728, %v2077, 0.0
        %2081 = vadd.xlane.f32.xlu0 %v2080
        %v2082 = vpop.xlane.xlu0 %2081
        %v2083 = vsel %vm1728, %v2079, 0.0
        %2084 = vadd.xlane.f32.xlu0 %v2083
        %v2085 = vpop.xlane.xlu0 %2084
        %v2086 = vrcp.pop %v2082
        %v2087 = vrcp.pop %v2085
        %v2088 = vmul.f32 %v2077, %v2086
        %v2089 = vmul.f32 %v2079, %v2087
        %v2090 = vpack.c.bf16 %v2089, %v2088
        %v2091 = vpack.c.bf16 %v1651, %v1649
        %v2093 = vsel %vm1728, %v2090, 0
        %2095 = vmatpush.bf16.msra.mxu0 0
        %2096 = vmatpush.bf16.msra.mxu0 0
        %2097 = vmatpush.bf16.msra.mxu0 0
        %2098 = vmatpush.bf16.msra.mxu0 0
        %2099 = vmatpush.bf16.msra.mxu0 0
        %2100 = vmatpush.bf16.msra.mxu0 0
        %2101 = vmatpush.bf16.msra.mxu0 0
        %2102 = vmatpush.bf16.msra.mxu0 %v2091
        %2103 = vmatmul.bf16.gmra.mxu0 %v2093
        %v2104 = vpop.f32.mrf.mxu0
        %v2105 = vadd.f32 0.0, %v2104
        %v2106 = vpop.f32.mrf.mxu0
        %v2107 = vadd.f32 0.0, %v2106
        %2108 = vdwg.mxu0
        %2109 = vrot.lane.b32.xlu0 %v1509, 96
        %v2110 = vpop.permute.xlu0 %2109
        %2111 = vrot.lane.b32.xlu0 %v1511, 96
        %v2112 = vpop.permute.xlu0 %2111
        %2113 = vrot.lane.b32.xlu0 %v1565, 32
        %v2114 = vpop.permute.xlu0 %2113
        %2115 = vrot.lane.b32.xlu0 %v1567, 32
        %v2116 = vpop.permute.xlu0 %2115
        %v2117 = vsel %vm637, %v2110, 0
        %v2119 = vsel %vm637, %v2112, 0
        %v2121 = vsel %vm637, %v2114, 0
        %v2123 = vsel %vm637, %v2116, 0
        %2125 = vmatpush.xpose.msra.mxu0 0.0
        %2126 = vmatpush.xpose.msra.mxu0 0.0
        %2127 = vmatpush.xpose.msra.mxu0 0.0
        %2128 = vmatpush.xpose.msra.mxu0 0.0
        %2129 = vmatpush.xpose.msra.mxu0 0.0
        %2130 = vmatpush.xpose.msra.mxu0 0.0
        %2131 = vmatpush.xpose.msra.mxu0 0.0
        %2132 = vmatpush.xpose.msra.mxu0 0.0
        %2133 = vmatpush.xpose.msra.mxu0 0.0
        %2134 = vmatpush.xpose.msra.mxu0 0.0
        %2135 = vmatpush.xpose.msra.mxu0 0.0
        %2136 = vmatpush.xpose.msra.mxu0 0.0
        %2137 = vmatpush.xpose.msra.mxu0 0.0
        %2138 = vmatpush.xpose.msra.mxu0 0.0
        %2139 = vmatpush.xpose.msra.mxu0 %v2123
        %2140 = vmatpush.xpose.msra.mxu0 %v2121
        %2141 = vmatmul.f32.gmra.mxu0 %v2117
        %v2142 = vpop.f32.mrf.mxu0
        %v2143 = vadd.f32 0.0, %v2142
        %2144 = vmatmul.f32.gmra.mxu0 %v2119
        %v2145 = vpop.f32.mrf.mxu0
        %v2146 = vadd.f32 0.0, %v2145
        %2147 = vdwg.mxu0
        %v2148 = vmul.f32 %v2143, 0.2
        %v2149 = vmul.f32 %v2146, 0.2
        %v2150 = vadd.f32 %v2148, %v1684
        %v2151 = vadd.f32 %v2149, %v1684
        %v2152 = vsel %vm1728, %v2150, -inf
        %2153 = vmax.xlane.f32.xlu0 %v2152
        %v2154 = vpop.xlane.xlu0 %2153
        %v2155 = vsel %vm1728, %v2151, -inf
        %2156 = vmax.xlane.f32.xlu0 %v2155
        %v2157 = vpop.xlane.xlu0 %2156
        %v2158 = vsub.f32 %v2150, %v2154
        %v2159 = vsub.f32 %v2151, %v2157
        %v2160 = vmul.f32 %v2158, 1.442695
        %v2161 = vpow.pop %v2160
        %v2162 = vmul.f32 %v2159, 1.442695
        %v2163 = vpow.pop %v2162
        %v2164 = vsel %vm1728, %v2161, 0.0
        %2165 = vadd.xlane.f32.xlu0 %v2164
        %v2166 = vpop.xlane.xlu0 %2165
        %v2167 = vsel %vm1728, %v2163, 0.0
        %2168 = vadd.xlane.f32.xlu0 %v2167
        %v2169 = vpop.xlane.xlu0 %2168
        %v2170 = vrcp.pop %v2166
        %v2171 = vrcp.pop %v2169
        %v2172 = vmul.f32 %v2161, %v2170
        %v2173 = vmul.f32 %v2163, %v2171
        %v2174 = vpack.c.bf16 %v2173, %v2172
        %2176 = vrot.lane.b32.xlu0 %v2091, 96
        %v2177 = vpop.permute.xlu0 %2176
        %v2180 = vsel %vm1728, %v2174, 0
        %2182 = vmatpush.bf16.msra.mxu0 0
        %2183 = vmatpush.bf16.msra.mxu0 0
        %2184 = vmatpush.bf16.msra.mxu0 0
        %2185 = vmatpush.bf16.msra.mxu0 0
        %2186 = vmatpush.bf16.msra.mxu0 0
        %2187 = vmatpush.bf16.msra.mxu0 0
        %2188 = vmatpush.bf16.msra.mxu0 0
        %2189 = vmatpush.bf16.msra.mxu0 %v2177
        %2190 = vmatmul.bf16.gmra.mxu0 %v2180
        %v2191 = vpop.f32.mrf.mxu0
        %v2192 = vadd.f32 0.0, %v2191
        %v2193 = vpop.f32.mrf.mxu0
        %v2194 = vadd.f32 0.0, %v2193
        %2195 = vdwg.mxu0
        %2196 = vrot.lane.b32.xlu0 %v1509, 64
        %v2197 = vpop.permute.xlu0 %2196
        %2198 = vrot.lane.b32.xlu0 %v1511, 64
        %v2199 = vpop.permute.xlu0 %2198
        %v2200 = vsel %vm637, %v2197, 0
        %v2202 = vsel %vm637, %v2199, 0
        %v2205 = vsel %vm637, %v1593, 0
        %v2208 = vsel %vm637, %v1595, 0
        %2210 = vmatpush.xpose.msra.mxu0 0.0
        %2211 = vmatpush.xpose.msra.mxu0 0.0
        %2212 = vmatpush.xpose.msra.mxu0 0.0
        %2213 = vmatpush.xpose.msra.mxu0 0.0
        %2214 = vmatpush.xpose.msra.mxu0 0.0
        %2215 = vmatpush.xpose.msra.mxu0 0.0
        %2216 = vmatpush.xpose.msra.mxu0 0.0
        %2217 = vmatpush.xpose.msra.mxu0 0.0
        %2218 = vmatpush.xpose.msra.mxu0 0.0
        %2219 = vmatpush.xpose.msra.mxu0 0.0
        %2220 = vmatpush.xpose.msra.mxu0 0.0
        %2221 = vmatpush.xpose.msra.mxu0 0.0
        %2222 = vmatpush.xpose.msra.mxu0 0.0
        %2223 = vmatpush.xpose.msra.mxu0 0.0
        %2224 = vmatpush.xpose.msra.mxu0 %v2208
        %2225 = vmatpush.xpose.msra.mxu0 %v2205
        %2226 = vmatmul.f32.gmra.mxu0 %v2200
        %v2227 = vpop.f32.mrf.mxu0
        %v2228 = vadd.f32 0.0, %v2227
        %2229 = vmatmul.f32.gmra.mxu0 %v2202
        %v2230 = vpop.f32.mrf.mxu0
        %v2231 = vadd.f32 0.0, %v2230
        %2232 = vdwg.mxu0
        %v2233 = vmul.f32 %v2228, 0.2
        %v2234 = vmul.f32 %v2231, 0.2
        %v2235 = vadd.f32 %v2233, %v1684
        %v2236 = vadd.f32 %v2234, %v1684
        %v2237 = vsel %vm1728, %v2235, -inf
        %2238 = vmax.xlane.f32.xlu0 %v2237
        %v2239 = vpop.xlane.xlu0 %2238
        %v2240 = vsel %vm1728, %v2236, -inf
        %2241 = vmax.xlane.f32.xlu0 %v2240
        %v2242 = vpop.xlane.xlu0 %2241
        %v2243 = vsub.f32 %v2235, %v2239
        %v2244 = vsub.f32 %v2236, %v2242
        %v2245 = vmul.f32 %v2243, 1.442695
        %v2246 = vpow.pop %v2245
        %v2247 = vmul.f32 %v2244, 1.442695
        %v2248 = vpow.pop %v2247
        %v2249 = vsel %vm1728, %v2246, 0.0
        %2250 = vadd.xlane.f32.xlu0 %v2249
        %v2251 = vpop.xlane.xlu0 %2250
        %v2252 = vsel %vm1728, %v2248, 0.0
        %2253 = vadd.xlane.f32.xlu0 %v2252
        %v2254 = vpop.xlane.xlu0 %2253
        %v2255 = vrcp.pop %v2251
        %v2256 = vrcp.pop %v2254
        %v2257 = vmul.f32 %v2246, %v2255
        %v2258 = vmul.f32 %v2248, %v2256
        %v2259 = vpack.c.bf16 %v2258, %v2257
        %2260 = vrot.lane.b32.xlu0 %v2091, 64
        %v2261 = vpop.permute.xlu0 %2260
        %v2264 = vsel %vm1728, %v2259, 0
        %2266 = vmatpush.bf16.msra.mxu0 0
        %2267 = vmatpush.bf16.msra.mxu0 0
        %2268 = vmatpush.bf16.msra.mxu0 0
        %2269 = vmatpush.bf16.msra.mxu0 0
        %2270 = vmatpush.bf16.msra.mxu0 0
        %2271 = vmatpush.bf16.msra.mxu0 0
        %2272 = vmatpush.bf16.msra.mxu0 0
        %2273 = vmatpush.bf16.msra.mxu0 %v2261
        %2274 = vmatmul.bf16.gmra.mxu0 %v2264
        %v2275 = vpop.f32.mrf.mxu0
        %v2276 = vadd.f32 0.0, %v2275
        %v2277 = vpop.f32.mrf.mxu0
        %v2278 = vadd.f32 0.0, %v2277
        %2279 = vdwg.mxu0
        %2280 = vrot.lane.b32.xlu0 %v1509, 32
        %v2281 = vpop.permute.xlu0 %2280
        %2282 = vrot.lane.b32.xlu0 %v1511, 32
        %v2283 = vpop.permute.xlu0 %2282
        %2284 = vrot.lane.b32.xlu0 %v1593, 96
        %v2285 = vpop.permute.xlu0 %2284
        %2286 = vrot.lane.b32.xlu0 %v1595, 96
        %v2287 = vpop.permute.xlu0 %2286
        %v2288 = vsel %vm637, %v2281, 0
        %v2290 = vsel %vm637, %v2283, 0
        %v2292 = vsel %vm637, %v2285, 0
        %v2294 = vsel %vm637, %v2287, 0
        %2296 = vmatpush.xpose.msra.mxu0 0.0
        %2297 = vmatpush.xpose.msra.mxu0 0.0
        %2298 = vmatpush.xpose.msra.mxu0 0.0
        %2299 = vmatpush.xpose.msra.mxu0 0.0
        %2300 = vmatpush.xpose.msra.mxu0 0.0
        %2301 = vmatpush.xpose.msra.mxu0 0.0
        %2302 = vmatpush.xpose.msra.mxu0 0.0
        %2303 = vmatpush.xpose.msra.mxu0 0.0
        %2304 = vmatpush.xpose.msra.mxu0 0.0
        %2305 = vmatpush.xpose.msra.mxu0 0.0
        %2306 = vmatpush.xpose.msra.mxu0 0.0
        %2307 = vmatpush.xpose.msra.mxu0 0.0
        %2308 = vmatpush.xpose.msra.mxu0 0.0
        %2309 = vmatpush.xpose.msra.mxu0 0.0
        %2310 = vmatpush.xpose.msra.mxu0 %v2294
        %2311 = vmatpush.xpose.msra.mxu0 %v2292
        %2312 = vmatmul.f32.gmra.mxu0 %v2288
        %v2313 = vpop.f32.mrf.mxu0
        %v2314 = vadd.f32 0.0, %v2313
        %2315 = vmatmul.f32.gmra.mxu0 %v2290
        %v2316 = vpop.f32.mrf.mxu0
        %v2317 = vadd.f32 0.0, %v2316
        %2318 = vdwg.mxu0
        %v2319 = vmul.f32 %v2314, 0.2
        %v2320 = vmul.f32 %v2317, 0.2
        %v2321 = vadd.f32 %v2319, %v1684
        %v2322 = vadd.f32 %v2320, %v1684
        %v2323 = vsel %vm1728, %v2321, -inf
        %2324 = vmax.xlane.f32.xlu0 %v2323
        %v2325 = vpop.xlane.xlu0 %2324
        %v2326 = vsel %vm1728, %v2322, -inf
        %2327 = vmax.xlane.f32.xlu0 %v2326
        %v2328 = vpop.xlane.xlu0 %2327
        %v2329 = vsub.f32 %v2321, %v2325
        %v2330 = vsub.f32 %v2322, %v2328
        %v2331 = vmul.f32 %v2329, 1.442695
        %v2332 = vpow.pop %v2331
        %v2333 = vmul.f32 %v2330, 1.442695
        %v2334 = vpow.pop %v2333
        %v2335 = vsel %vm1728, %v2332, 0.0
        %2336 = vadd.xlane.f32.xlu0 %v2335
        %v2337 = vpop.xlane.xlu0 %2336
        %v2338 = vsel %vm1728, %v2334, 0.0
        %2339 = vadd.xlane.f32.xlu0 %v2338
        %v2340 = vpop.xlane.xlu0 %2339
        %v2341 = vrcp.pop %v2337
        %v2342 = vrcp.pop %v2340
        %v2343 = vmul.f32 %v2332, %v2341
        %v2344 = vmul.f32 %v2334, %v2342
        %v2345 = vpack.c.bf16 %v2344, %v2343
        %2346 = vrot.lane.b32.xlu0 %v2091, 32
        %v2347 = vpop.permute.xlu0 %2346
        %v2350 = vsel %vm1728, %v2345, 0
        %2352 = vmatpush.bf16.msra.mxu0 0
        %2353 = vmatpush.bf16.msra.mxu0 0
        %2354 = vmatpush.bf16.msra.mxu0 0
        %2355 = vmatpush.bf16.msra.mxu0 0
        %2356 = vmatpush.bf16.msra.mxu0 0
        %2357 = vmatpush.bf16.msra.mxu0 0
        %2358 = vmatpush.bf16.msra.mxu0 0
        %2359 = vmatpush.bf16.msra.mxu0 %v2347
        %2360 = vmatmul.bf16.gmra.mxu0 %v2350
        %v2361 = vpop.f32.mrf.mxu0
        %v2362 = vadd.f32 0.0, %v2361
        %v2363 = vpop.f32.mrf.mxu0
        %v2364 = vadd.f32 0.0, %v2363
        %2365 = vdwg.mxu0
        %2366 = vrot.lane.b32.xlu0 %v1593, 64
        %v2367 = vpop.permute.xlu0 %2366
        %2368 = vrot.lane.b32.xlu0 %v1595, 64
        %v2369 = vpop.permute.xlu0 %2368
        %v2370 = vsel %vm637, %v1537, 0
        %v2372 = vsel %vm637, %v1539, 0
        %v2374 = vsel %vm637, %v2367, 0
        %v2376 = vsel %vm637, %v2369, 0
        %2378 = vmatpush.xpose.msra.mxu0 0.0
        %2379 = vmatpush.xpose.msra.mxu0 0.0
        %2380 = vmatpush.xpose.msra.mxu0 0.0
        %2381 = vmatpush.xpose.msra.mxu0 0.0
        %2382 = vmatpush.xpose.msra.mxu0 0.0
        %2383 = vmatpush.xpose.msra.mxu0 0.0
        %2384 = vmatpush.xpose.msra.mxu0 0.0
        %2385 = vmatpush.xpose.msra.mxu0 0.0
        %2386 = vmatpush.xpose.msra.mxu0 0.0
        %2387 = vmatpush.xpose.msra.mxu0 0.0
        %2388 = vmatpush.xpose.msra.mxu0 0.0
        %2389 = vmatpush.xpose.msra.mxu0 0.0
        %2390 = vmatpush.xpose.msra.mxu0 0.0
        %2391 = vmatpush.xpose.msra.mxu0 0.0
        %2392 = vmatpush.xpose.msra.mxu0 %v2376
        %2393 = vmatpush.xpose.msra.mxu0 %v2374
        %2394 = vmatmul.f32.gmra.mxu0 %v2370
        %v2395 = vpop.f32.mrf.mxu0
        %v2396 = vadd.f32 0.0, %v2395
        %2397 = vmatmul.f32.gmra.mxu0 %v2372
        %v2398 = vpop.f32.mrf.mxu0
        %v2399 = vadd.f32 0.0, %v2398
        %2400 = vdwg.mxu0
        %v2401 = vmul.f32 %v2396, 0.2
        %v2402 = vmul.f32 %v2399, 0.2
        %v2403 = vadd.f32 %v2401, %v1684
        %v2404 = vadd.f32 %v2402, %v1684
        %v2405 = vsel %vm1728, %v2403, -inf
        %2406 = vmax.xlane.f32.xlu0 %v2405
        %v2407 = vpop.xlane.xlu0 %2406
        %v2408 = vsel %vm1728, %v2404, -inf
        %2409 = vmax.xlane.f32.xlu0 %v2408
        %v2410 = vpop.xlane.xlu0 %2409
        %v2411 = vsub.f32 %v2403, %v2407
        %v2412 = vsub.f32 %v2404, %v2410
        %v2413 = vmul.f32 %v2411, 1.442695
        %v2414 = vpow.pop %v2413
        %v2415 = vmul.f32 %v2412, 1.442695
        %v2416 = vpow.pop %v2415
        %v2417 = vsel %vm1728, %v2414, 0.0
        %2418 = vadd.xlane.f32.xlu0 %v2417
        %v2419 = vpop.xlane.xlu0 %2418
        %v2420 = vsel %vm1728, %v2416, 0.0
        %2421 = vadd.xlane.f32.xlu0 %v2420
        %v2422 = vpop.xlane.xlu0 %2421
        %v2423 = vrcp.pop %v2419
        %v2424 = vrcp.pop %v2422
        %v2425 = vmul.f32 %v2414, %v2423
        %v2426 = vmul.f32 %v2416, %v2424
        %v2427 = vpack.c.bf16 %v2426, %v2425
        %v2428 = vpack.c.bf16 %v1679, %v1677
        %v2430 = vsel %vm1728, %v2427, 0
        %2432 = vmatpush.bf16.msra.mxu0 0
        %2433 = vmatpush.bf16.msra.mxu0 0
        %2434 = vmatpush.bf16.msra.mxu0 0
        %2435 = vmatpush.bf16.msra.mxu0 0
        %2436 = vmatpush.bf16.msra.mxu0 0
        %2437 = vmatpush.bf16.msra.mxu0 0
        %2438 = vmatpush.bf16.msra.mxu0 0
        %2439 = vmatpush.bf16.msra.mxu0 %v2428
        %2440 = vmatmul.bf16.gmra.mxu0 %v2430
        %v2441 = vpop.f32.mrf.mxu0
        %v2442 = vadd.f32 0.0, %v2441
        %v2443 = vpop.f32.mrf.mxu0
        %v2444 = vadd.f32 0.0, %v2443
        %2445 = vdwg.mxu0
        %2446 = vrot.lane.b32.xlu0 %v1537, 96
        %v2447 = vpop.permute.xlu0 %2446
        %2448 = vrot.lane.b32.xlu0 %v1539, 96
        %v2449 = vpop.permute.xlu0 %2448
        %2450 = vrot.lane.b32.xlu0 %v1593, 32
        %v2451 = vpop.permute.xlu0 %2450
        %2452 = vrot.lane.b32.xlu0 %v1595, 32
        %v2453 = vpop.permute.xlu0 %2452
        %v2454 = vsel %vm637, %v2447, 0
        %v2456 = vsel %vm637, %v2449, 0
        %v2458 = vsel %vm637, %v2451, 0
        %v2460 = vsel %vm637, %v2453, 0
        %2462 = vmatpush.xpose.msra.mxu0 0.0
        %2463 = vmatpush.xpose.msra.mxu0 0.0
        %2464 = vmatpush.xpose.msra.mxu0 0.0
        %2465 = vmatpush.xpose.msra.mxu0 0.0
        %2466 = vmatpush.xpose.msra.mxu0 0.0
        %2467 = vmatpush.xpose.msra.mxu0 0.0
        %2468 = vmatpush.xpose.msra.mxu0 0.0
        %2469 = vmatpush.xpose.msra.mxu0 0.0
        %2470 = vmatpush.xpose.msra.mxu0 0.0
        %2471 = vmatpush.xpose.msra.mxu0 0.0
        %2472 = vmatpush.xpose.msra.mxu0 0.0
        %2473 = vmatpush.xpose.msra.mxu0 0.0
        %2474 = vmatpush.xpose.msra.mxu0 0.0
        %2475 = vmatpush.xpose.msra.mxu0 0.0
        %2476 = vmatpush.xpose.msra.mxu0 %v2460
        %2477 = vmatpush.xpose.msra.mxu0 %v2458
        %2478 = vmatmul.f32.gmra.mxu0 %v2454
        %v2479 = vpop.f32.mrf.mxu0
        %v2480 = vadd.f32 0.0, %v2479
        %2481 = vmatmul.f32.gmra.mxu0 %v2456
        %v2482 = vpop.f32.mrf.mxu0
        %v2483 = vadd.f32 0.0, %v2482
        %2484 = vdwg.mxu0
        %v2485 = vmul.f32 %v2480, 0.2
        %v2486 = vmul.f32 %v2483, 0.2
        %v2487 = vadd.f32 %v2485, %v1684
        %v2488 = vadd.f32 %v2486, %v1684
        %v2489 = vsel %vm1728, %v2487, -inf
        %2490 = vmax.xlane.f32.xlu0 %v2489
        %v2491 = vpop.xlane.xlu0 %2490
        %v2492 = vsel %vm1728, %v2488, -inf
        %2493 = vmax.xlane.f32.xlu0 %v2492
        %v2494 = vpop.xlane.xlu0 %2493
        %v2495 = vsub.f32 %v2487, %v2491
        %v2496 = vsub.f32 %v2488, %v2494
        %v2497 = vmul.f32 %v2495, 1.442695
        %v2498 = vpow.pop %v2497
        %v2499 = vmul.f32 %v2496, 1.442695
        %v2500 = vpow.pop %v2499
        %v2501 = vsel %vm1728, %v2498, 0.0
        %2502 = vadd.xlane.f32.xlu0 %v2501
        %v2503 = vpop.xlane.xlu0 %2502
        %v2504 = vsel %vm1728, %v2500, 0.0
        %2505 = vadd.xlane.f32.xlu0 %v2504
        %v2506 = vpop.xlane.xlu0 %2505
        %v2507 = vrcp.pop %v2503
        %v2508 = vrcp.pop %v2506
        %v2509 = vmul.f32 %v2498, %v2507
        %v2510 = vmul.f32 %v2500, %v2508
        %v2511 = vpack.c.bf16 %v2510, %v2509
        %2513 = vrot.lane.b32.xlu0 %v2428, 96
        %v2514 = vpop.permute.xlu0 %2513
        %v2517 = vsel %vm1728, %v2511, 0
        %2519 = vmatpush.bf16.msra.mxu0 0
        %2520 = vmatpush.bf16.msra.mxu0 0
        %2521 = vmatpush.bf16.msra.mxu0 0
        %2522 = vmatpush.bf16.msra.mxu0 0
        %2523 = vmatpush.bf16.msra.mxu0 0
        %2524 = vmatpush.bf16.msra.mxu0 0
        %2525 = vmatpush.bf16.msra.mxu0 0
        %2526 = vmatpush.bf16.msra.mxu0 %v2514
        %2527 = vmatmul.bf16.gmra.mxu0 %v2517
        %v2528 = vpop.f32.mrf.mxu0
        %v2529 = vadd.f32 0.0, %v2528
        %v2530 = vpop.f32.mrf.mxu0
        %v2531 = vadd.f32 0.0, %v2530
        %2532 = vdwg.mxu0
        %2535 = vrot.lane.b32.xlu0 %v1853, 32
        %v2536 = vpop.permute.xlu0 %2535
        %2537 = vrot.lane.b32.xlu0 %v1855, 32
        %v2538 = vpop.permute.xlu0 %2537
        %2543 = vrot.lane.b32.xlu0 %v1937, 64
        %v2544 = vpop.permute.xlu0 %2543
        %2545 = vrot.lane.b32.xlu0 %v1939, 64
        %v2546 = vpop.permute.xlu0 %2545
        %2551 = vrot.lane.b32.xlu0 %v2023, 96
        %v2552 = vpop.permute.xlu0 %2551
        %2553 = vrot.lane.b32.xlu0 %v2025, 96
        %v2554 = vpop.permute.xlu0 %2553
        %2559 = vrot.lane.b32.xlu0 %v2192, 32
        %v2560 = vpop.permute.xlu0 %2559
        %2561 = vrot.lane.b32.xlu0 %v2194, 32
        %v2562 = vpop.permute.xlu0 %2561
        %2567 = vrot.lane.b32.xlu0 %v2276, 64
        %v2568 = vpop.permute.xlu0 %2567
        %2569 = vrot.lane.b32.xlu0 %v2278, 64
        %v2570 = vpop.permute.xlu0 %2569
        %2575 = vrot.lane.b32.xlu0 %v2362, 96
        %v2576 = vpop.permute.xlu0 %2575
        %2577 = vrot.lane.b32.xlu0 %v2364, 96
        %v2578 = vpop.permute.xlu0 %2577
        %2583 = vrot.lane.b32.xlu0 %v2529, 32
        %v2584 = vpop.permute.xlu0 %2583
        %2585 = vrot.lane.b32.xlu0 %v2531, 32
        %v2586 = vpop.permute.xlu0 %2585
        %v2589 = vsel %vm637, %v1766, %v2536
        %v2590 = vsel %vm637, %v1768, %v2538
        %vm2591 = vcmask 523264
        %v2592 = vsel %vm2591, %v2589, %v2544
        %v2593 = vsel %vm2591, %v2590, %v2546
        %vm2594 = vcmask 785408
        %v2595 = vsel %vm2594, %v2592, %v2552
        %v2596 = vsel %vm2594, %v2593, %v2554
        %v2597 = vsel %vm637, %v2105, %v2560
        %v2598 = vsel %vm637, %v2107, %v2562
        %v2599 = vsel %vm2591, %v2597, %v2568
        %v2600 = vsel %vm2591, %v2598, %v2570
        %v2601 = vsel %vm2594, %v2599, %v2576
        %v2602 = vsel %vm2594, %v2600, %v2578
        %v2603 = vsel %vm637, %v2442, %v2584
        %v2604 = vsel %vm637, %v2444, %v2586
        %v2605 = vpack.c.bf16 %v2596, %v2595
        %v2606 = vpack.c.bf16 %v2602, %v2601
        %v2607 = vpack.c.bf16 %v2604, %v2603
        %v2608 = vld [vmem:[#allocation3] sm:$0xff]
        %v2609 = vld [vmem:[#allocation3 + $0x8] sm:$0xff]
        %v2610 = vld [vmem:[#allocation3 + $0x10] sm:$0xff]
        %v2611 = vld [vmem:[#allocation3 + $0x18] sm:$0xff]
        %v2612 = vld [vmem:[#allocation3 + $0x20] sm:$0xff]
        %v2613 = vld [vmem:[#allocation3 + $0x28] sm:$0xff]
        %v2614 = vld [vmem:[#allocation3 + $0x30] sm:$0xff]
        %v2615 = vld [vmem:[#allocation3 + $0x38] sm:$0xff]
        %v2616 = vld [vmem:[#allocation3 + $0x40] sm:$0xff]
        %v2617 = vld [vmem:[#allocation3 + $0x48] sm:$0xff]
        %v2618 = vld [vmem:[#allocation3 + $0x50] sm:$0xff]
        %v2619 = vld [vmem:[#allocation3 + $0x58] sm:$0xff]
        %v2620 = vld [vmem:[#allocation3 + $0x60] sm:$0xff]
        %v2621 = vld [vmem:[#allocation3 + $0x68] sm:$0xff]
        %v2622 = vld [vmem:[#allocation3 + $0x70] sm:$0xff]
        %v2623 = vld [vmem:[#allocation3 + $0x78] sm:$0xff]
        %v2624 = vld [vmem:[#allocation3 + $0x80] sm:$0xff]
        %v2625 = vld [vmem:[#allocation3 + $0x88] sm:$0xff]
        %v2626 = vld [vmem:[#allocation3 + $0x90] sm:$0xff]
        %v2627 = vld [vmem:[#allocation3 + $0x98] sm:$0xff]
        %v2628 = vld [vmem:[#allocation3 + $0xa0] sm:$0xff]
        %v2629 = vld [vmem:[#allocation3 + $0xa8] sm:$0xff]
        %v2630 = vld [vmem:[#allocation3 + $0xb0] sm:$0xff]
        %v2631 = vld [vmem:[#allocation3 + $0xb8] sm:$0xff]
        %v2632 = vld [vmem:[#allocation3 + $0xc0] sm:$0xff]
        %v2633 = vld [vmem:[#allocation3 + $0xc8] sm:$0xff]
        %v2634 = vld [vmem:[#allocation3 + $0xd0] sm:$0xff]
        %v2635 = vld [vmem:[#allocation3 + $0xd8] sm:$0xff]
        %v2636 = vld [vmem:[#allocation3 + $0xe0] sm:$0xff]
        %v2637 = vld [vmem:[#allocation3 + $0xe8] sm:$0xff]
        %v2638 = vld [vmem:[#allocation3 + $0xf0] sm:$0xff]
        %v2639 = vld [vmem:[#allocation3 + $0xf8] sm:$0xff]
        %v2640 = vld [vmem:[#allocation3 + $0x100] sm:$0xff]
        %v2641 = vld [vmem:[#allocation3 + $0x108] sm:$0xff]
        %v2642 = vld [vmem:[#allocation3 + $0x110] sm:$0xff]
        %v2643 = vld [vmem:[#allocation3 + $0x118] sm:$0xff]
        %v2644 = vld [vmem:[#allocation3 + $0x120] sm:$0xff]
        %v2645 = vld [vmem:[#allocation3 + $0x128] sm:$0xff]
        %v2646 = vld [vmem:[#allocation3 + $0x130] sm:$0xff]
        %v2647 = vld [vmem:[#allocation3 + $0x138] sm:$0xff]
        %v2648 = vld [vmem:[%s6] sm:$0x3]
        %v2650 = vperm.slane %v2648, 0
        %v2651 = vperm.slane %v2648, 1
        %v2694 = vunpack.c.l.b16 %v2608
        %v2695 = vunpack.c.h.b16 %v2608
        %v2696 = vunpack.c.l.b16 %v2609
        %v2697 = vunpack.c.h.b16 %v2609
        %v2698 = vunpack.c.l.b16 %v2610
        %v2699 = vunpack.c.h.b16 %v2610
        %v2700 = vunpack.c.l.b16 %v2611
        %v2701 = vunpack.c.h.b16 %v2611
        %v2702 = vunpack.c.l.b16 %v2612
        %v2703 = vunpack.c.h.b16 %v2612
        %v2704 = vunpack.c.l.b16 %v2613
        %v2705 = vunpack.c.h.b16 %v2613
        %v2706 = vunpack.c.l.b16 %v2614
        %v2707 = vunpack.c.h.b16 %v2614
        %v2708 = vunpack.c.l.b16 %v2615
        %v2709 = vunpack.c.h.b16 %v2615
        %v2710 = vunpack.c.l.b16 %v2616
        %v2711 = vunpack.c.h.b16 %v2616
        %v2712 = vunpack.c.l.b16 %v2617
        %v2713 = vunpack.c.h.b16 %v2617
        %v2714 = vunpack.c.l.b16 %v2618
        %v2715 = vunpack.c.h.b16 %v2618
        %v2716 = vunpack.c.l.b16 %v2619
        %v2717 = vunpack.c.h.b16 %v2619
        %v2718 = vunpack.c.l.b16 %v2620
        %v2719 = vunpack.c.h.b16 %v2620
        %v2720 = vunpack.c.l.b16 %v2621
        %v2721 = vunpack.c.h.b16 %v2621
        %v2722 = vunpack.c.l.b16 %v2622
        %v2723 = vunpack.c.h.b16 %v2622
        %v2724 = vunpack.c.l.b16 %v2623
        %v2725 = vunpack.c.h.b16 %v2623
        %v2726 = vunpack.c.l.b16 %v2624
        %v2727 = vunpack.c.h.b16 %v2624
        %v2728 = vunpack.c.l.b16 %v2625
        %v2729 = vunpack.c.h.b16 %v2625
        %v2730 = vunpack.c.l.b16 %v2626
        %v2731 = vunpack.c.h.b16 %v2626
        %v2732 = vunpack.c.l.b16 %v2627
        %v2733 = vunpack.c.h.b16 %v2627
        %v2734 = vunpack.c.l.b16 %v2628
        %v2735 = vunpack.c.h.b16 %v2628
        %v2736 = vunpack.c.l.b16 %v2629
        %v2737 = vunpack.c.h.b16 %v2629
        %v2738 = vunpack.c.l.b16 %v2630
        %v2739 = vunpack.c.h.b16 %v2630
        %v2740 = vunpack.c.l.b16 %v2631
        %v2741 = vunpack.c.h.b16 %v2631
        %v2742 = vunpack.c.l.b16 %v2632
        %v2743 = vunpack.c.h.b16 %v2632
        %v2744 = vunpack.c.l.b16 %v2633
        %v2745 = vunpack.c.h.b16 %v2633
        %v2746 = vunpack.c.l.b16 %v2634
        %v2747 = vunpack.c.h.b16 %v2634
        %v2748 = vunpack.c.l.b16 %v2635
        %v2749 = vunpack.c.h.b16 %v2635
        %v2750 = vunpack.c.l.b16 %v2636
        %v2751 = vunpack.c.h.b16 %v2636
        %v2752 = vunpack.c.l.b16 %v2637
        %v2753 = vunpack.c.h.b16 %v2637
        %v2754 = vunpack.c.l.b16 %v2638
        %v2755 = vunpack.c.h.b16 %v2638
        %v2756 = vunpack.c.l.b16 %v2639
        %v2757 = vunpack.c.h.b16 %v2639
        %v2758 = vunpack.c.l.b16 %v2640
        %v2759 = vunpack.c.h.b16 %v2640
        %v2760 = vunpack.c.l.b16 %v2641
        %v2761 = vunpack.c.h.b16 %v2641
        %v2762 = vunpack.c.l.b16 %v2642
        %v2763 = vunpack.c.h.b16 %v2642
        %v2764 = vunpack.c.l.b16 %v2643
        %v2765 = vunpack.c.h.b16 %v2643
        %v2766 = vunpack.c.l.b16 %v2644
        %v2767 = vunpack.c.h.b16 %v2644
        %v2768 = vunpack.c.l.b16 %v2645
        %v2769 = vunpack.c.h.b16 %v2645
        %v2770 = vunpack.c.l.b16 %v2646
        %v2771 = vunpack.c.h.b16 %v2646
        %v2772 = vunpack.c.l.b16 %v2647
        %v2773 = vunpack.c.h.b16 %v2647
        %v2774 = vpack.c.b16 %v2696, %v2694
        %v2775 = vpack.c.b16 %v2697, %v2695
        %v2776 = vpack.c.b16 %v2700, %v2698
        %v2777 = vpack.c.b16 %v2701, %v2699
        %v2778 = vpack.c.b16 %v2704, %v2702
        %v2779 = vpack.c.b16 %v2705, %v2703
        %v2780 = vpack.c.b16 %v2708, %v2706
        %v2781 = vpack.c.b16 %v2709, %v2707
        %v2782 = vpack.c.b16 %v2712, %v2710
        %v2783 = vpack.c.b16 %v2713, %v2711
        %v2784 = vpack.c.b16 %v2716, %v2714
        %v2785 = vpack.c.b16 %v2717, %v2715
        %v2786 = vpack.c.b16 %v2720, %v2718
        %v2787 = vpack.c.b16 %v2721, %v2719
        %v2788 = vpack.c.b16 %v2724, %v2722
        %v2789 = vpack.c.b16 %v2725, %v2723
        %v2790 = vpack.c.b16 %v2728, %v2726
        %v2791 = vpack.c.b16 %v2729, %v2727
        %v2792 = vpack.c.b16 %v2732, %v2730
        %v2793 = vpack.c.b16 %v2733, %v2731
        %v2794 = vpack.c.b16 %v2736, %v2734
        %v2795 = vpack.c.b16 %v2737, %v2735
        %v2796 = vpack.c.b16 %v2740, %v2738
        %v2797 = vpack.c.b16 %v2741, %v2739
        %v2798 = vpack.c.b16 %v2744, %v2742
        %v2799 = vpack.c.b16 %v2745, %v2743
        %v2800 = vpack.c.b16 %v2748, %v2746
        %v2801 = vpack.c.b16 %v2749, %v2747
        %v2802 = vpack.c.b16 %v2752, %v2750
        %v2803 = vpack.c.b16 %v2753, %v2751
        %v2804 = vpack.c.b16 %v2756, %v2754
        %v2805 = vpack.c.b16 %v2757, %v2755
        %v2806 = vpack.c.b16 %v2760, %v2758
        %v2807 = vpack.c.b16 %v2761, %v2759
        %v2808 = vpack.c.b16 %v2764, %v2762
        %v2809 = vpack.c.b16 %v2765, %v2763
        %v2810 = vpack.c.b16 %v2768, %v2766
        %v2811 = vpack.c.b16 %v2769, %v2767
        %v2812 = vpack.c.b16 %v2772, %v2770
        %v2813 = vpack.c.b16 %v2773, %v2771
        %v2855 = vsel %vm2591, %v2607, 0
        %2857 = vmatpush.bf16.msra.mxu0 %v2788
        %2858 = vmatpush.bf16.msra.mxu0 %v2786
        %2859 = vmatpush.bf16.msra.mxu0 %v2784
        %2860 = vmatpush.bf16.msra.mxu0 %v2782
        %2861 = vmatpush.bf16.msra.mxu0 %v2780
        %2862 = vmatpush.bf16.msra.mxu0 %v2778
        %2863 = vmatpush.bf16.msra.mxu0 %v2776
        %2864 = vmatpush.bf16.msra.mxu0 %v2774
        %2865 = vmatmul.bf16.gmra.mxu0 %v2605
        %v2866 = vpop.f32.mrf.mxu0
        %v2867 = vadd.f32 %v2650, %v2866
        %v2868 = vpop.f32.mrf.mxu0
        %v2869 = vadd.f32 %v2650, %v2868
        %2870 = vdwg.mxu0
        %2871 = vmatpush.bf16.msra.mxu0 %v2804
        %2872 = vmatpush.bf16.msra.mxu0 %v2802
        %2873 = vmatpush.bf16.msra.mxu0 %v2800
        %2874 = vmatpush.bf16.msra.mxu0 %v2798
        %2875 = vmatpush.bf16.msra.mxu0 %v2796
        %2876 = vmatpush.bf16.msra.mxu0 %v2794
        %2877 = vmatpush.bf16.msra.mxu0 %v2792
        %2878 = vmatpush.bf16.msra.mxu0 %v2790
        %2879 = vmatmul.bf16.gmra.mxu0 %v2606
        %v2880 = vpop.f32.mrf.mxu0
        %v2881 = vadd.f32 %v2867, %v2880
        %v2882 = vpop.f32.mrf.mxu0
        %v2883 = vadd.f32 %v2869, %v2882
        %2884 = vdwg.mxu0
        %2885 = vmatpush.bf16.msra.mxu0 0
        %2886 = vmatpush.bf16.msra.mxu0 0
        %2887 = vmatpush.bf16.msra.mxu0 0
        %2888 = vmatpush.bf16.msra.mxu0 0
        %2889 = vmatpush.bf16.msra.mxu0 %v2812
        %2890 = vmatpush.bf16.msra.mxu0 %v2810
        %2891 = vmatpush.bf16.msra.mxu0 %v2808
        %2892 = vmatpush.bf16.msra.mxu0 %v2806
        %2893 = vmatmul.bf16.gmra.mxu0 %v2855
        %v2894 = vpop.f32.mrf.mxu0
        %v2895 = vadd.f32 %v2881, %v2894
        %v2896 = vpop.f32.mrf.mxu0
        %v2897 = vadd.f32 %v2883, %v2896
        %2898 = vdwg.mxu0
        %2899 = vmatpush.bf16.msra.mxu0 %v2789
        %2900 = vmatpush.bf16.msra.mxu0 %v2787
        %2901 = vmatpush.bf16.msra.mxu0 %v2785
        %2902 = vmatpush.bf16.msra.mxu0 %v2783
        %2903 = vmatpush.bf16.msra.mxu0 %v2781
        %2904 = vmatpush.bf16.msra.mxu0 %v2779
        %2905 = vmatpush.bf16.msra.mxu0 %v2777
        %2906 = vmatpush.bf16.msra.mxu0 %v2775
        %2907 = vmatmul.bf16.gmra.mxu0 %v2605
        %v2908 = vpop.f32.mrf.mxu0
        %v2909 = vadd.f32 %v2651, %v2908
        %v2910 = vpop.f32.mrf.mxu0
        %v2911 = vadd.f32 %v2651, %v2910
        %2912 = vdwg.mxu0
        %2913 = vmatpush.bf16.msra.mxu0 %v2805
        %2914 = vmatpush.bf16.msra.mxu0 %v2803
        %2915 = vmatpush.bf16.msra.mxu0 %v2801
        %2916 = vmatpush.bf16.msra.mxu0 %v2799
        %2917 = vmatpush.bf16.msra.mxu0 %v2797
        %2918 = vmatpush.bf16.msra.mxu0 %v2795
        %2919 = vmatpush.bf16.msra.mxu0 %v2793
        %2920 = vmatpush.bf16.msra.mxu0 %v2791
        %2921 = vmatmul.bf16.gmra.mxu0 %v2606
        %v2922 = vpop.f32.mrf.mxu0
        %v2923 = vadd.f32 %v2909, %v2922
        %v2924 = vpop.f32.mrf.mxu0
        %v2925 = vadd.f32 %v2911, %v2924
        %2926 = vdwg.mxu0
        %2927 = vmatpush.bf16.msra.mxu0 0
        %2928 = vmatpush.bf16.msra.mxu0 0
        %2929 = vmatpush.bf16.msra.mxu0 0
        %2930 = vmatpush.bf16.msra.mxu0 0
        %2931 = vmatpush.bf16.msra.mxu0 %v2813
        %2932 = vmatpush.bf16.msra.mxu0 %v2811
        %2933 = vmatpush.bf16.msra.mxu0 %v2809
        %2934 = vmatpush.bf16.msra.mxu0 %v2807
        %2935 = vmatmul.bf16.gmra.mxu0 %v2855
        %v2936 = vpop.f32.mrf.mxu0
        %v2937 = vadd.f32 %v2923, %v2936
        %v2938 = vpop.f32.mrf.mxu0
        %v2939 = vadd.f32 %v2925, %v2938
        %2940 = vdwg.mxu0
        %v2941 = vadd.f32 %v651, %v2895
        %v2942 = vadd.f32 %v665, %v2937
        %v2943 = vadd.f32 %v653, %v2897
        %v2944 = vadd.f32 %v667, %v2939
        %v2945 = vld [vmem:[%s7] sm:$0x3]
        %v2946 = vld [vmem:[%s8] sm:$0x3]
        %v2947 = vadd.f32 %v2941, %v2942
        %2948 = vadd.xlane.f32.xlu0 %v2947
        %v2949 = vpop.xlane.xlu0 %2948
        %v2950 = vadd.f32 %v2943, %v2944
        %2951 = vadd.xlane.f32.xlu0 %v2950
        %v2952 = vpop.xlane.xlu0 %2951
        %v2953 = vmul.f32 %v2949, 0.004
        %v2954 = vmul.f32 %v2952, 0.004
        %v2955 = vmul.f32 %v2941, %v2941
        %v2956 = vmul.f32 %v2942, %v2942
        %v2957 = vmul.f32 %v2943, %v2943
        %v2958 = vmul.f32 %v2944, %v2944
        %v2959 = vadd.f32 %v2955, %v2956
        %2960 = vadd.xlane.f32.xlu0 %v2959
        %v2961 = vpop.xlane.xlu0 %2960
        %v2962 = vadd.f32 %v2957, %v2958
        %2963 = vadd.xlane.f32.xlu0 %v2962
        %v2964 = vpop.xlane.xlu0 %2963
        %v2965 = vmul.f32 %v2961, 0.004
        %v2966 = vmul.f32 %v2964, 0.004
        %v2967 = vmul.f32 %v2953, %v2953
        %v2968 = vmul.f32 %v2954, %v2954
        %v2969 = vsub.f32 %v2965, %v2967
        %v2970 = vsub.f32 %v2966, %v2968
        %v2971 = vsub.f32 %v2941, %v2953
        %v2972 = vsub.f32 %v2942, %v2953
        %v2973 = vsub.f32 %v2943, %v2954
        %v2974 = vsub.f32 %v2944, %v2954
        %v2975 = vadd.f32 %v2969, 1e-05
        %v2976 = vadd.f32 %v2970, 1e-05
        %v2977 = vrsqrt.pop %v2975
        %v2978 = vmul.f32 %v2977, %v2975
        %v2979 = vmul.f32 %v2978, %v2977
        %v2980 = vmul.f32 0.5, %v2979
        %v2981 = vsub.f32 1.5, %v2980
        %v2982 = vmul.f32 %v2977, %v2981
        %vm2983 = vweird.f32 %v2975
        %vm2984 = vweird.f32 %v2977
        %vm2985 = vmor %vm2983, %vm2984
        %v2986 = vsel %vm2985, %v2977, %v2982
        %v2987 = vrsqrt.pop %v2976
        %v2988 = vmul.f32 %v2987, %v2976
        %v2989 = vmul.f32 %v2988, %v2987
        %v2990 = vmul.f32 0.5, %v2989
        %v2991 = vsub.f32 1.5, %v2990
        %v2992 = vmul.f32 %v2987, %v2991
        %vm2993 = vweird.f32 %v2976
        %vm2994 = vweird.f32 %v2987
        %vm2995 = vmor %vm2993, %vm2994
        %v2996 = vsel %vm2995, %v2987, %v2992
        %v2997 = vmul.f32 %v2971, %v2986
        %v2998 = vmul.f32 %v2972, %v2986
        %v2999 = vmul.f32 %v2973, %v2996
        %v3000 = vmul.f32 %v2974, %v2996
        %v3002 = vperm.slane %v2945, 0
        %v3003 = vperm.slane %v2945, 1
        %v3006 = vmul.f32 %v2997, %v3002
        %v3007 = vmul.f32 %v2998, %v3003
        %v3008 = vmul.f32 %v2999, %v3002
        %v3009 = vmul.f32 %v3000, %v3003
        %v3011 = vperm.slane %v2946, 0
        %v3012 = vperm.slane %v2946, 1
        %v3015 = vadd.f32 %v3006, %v3011
        %v3016 = vadd.f32 %v3007, %v3012
        %v3017 = vadd.f32 %v3008, %v3011
        %v3018 = vadd.f32 %v3009, %v3012
        %v3019 = vpack.c.bf16 %v3017, %v3015
        %v3020 = vpack.c.bf16 %v3018, %v3016
        %v3021 = vld [vmem:[%s9] sm:$0xff]
        %v3022 = vld [vmem:[%s9 + $0x8] sm:$0xff]
        %v3023 = vld [vmem:[%s9 + $0x10] sm:$0xff]
        %v3024 = vld [vmem:[%s9 + $0x18] sm:$0xff]
        %v3025 = vld [vmem:[%s9 + $0x20] sm:$0xff]
        %v3026 = vld [vmem:[%s9 + $0x28] sm:$0xff]
        %v3027 = vld [vmem:[%s9 + $0x30] sm:$0xff]
        %v3028 = vld [vmem:[%s9 + $0x38] sm:$0xff]
        %v3029 = vld [vmem:[%s9 + $0x40] sm:$0xff]
        %v3030 = vld [vmem:[%s9 + $0x48] sm:$0xff]
        %v3031 = vld [vmem:[%s9 + $0x50] sm:$0xff]
        %v3032 = vld [vmem:[%s9 + $0x58] sm:$0xff]
        %v3033 = vld [vmem:[%s9 + $0x60] sm:$0xff]
        %v3034 = vld [vmem:[%s9 + $0x68] sm:$0xff]
        %v3035 = vld [vmem:[%s9 + $0x70] sm:$0xff]
        %v3036 = vld [vmem:[%s9 + $0x78] sm:$0xff]
        %v3037 = vld [vmem:[%s9 + $0x80] sm:$0xff]
        %v3038 = vld [vmem:[%s9 + $0x88] sm:$0xff]
        %v3039 = vld [vmem:[%s9 + $0x90] sm:$0xff]
        %v3040 = vld [vmem:[%s9 + $0x98] sm:$0xff]
        %v3041 = vld [vmem:[%s9 + $0xa0] sm:$0xff]
        %v3042 = vld [vmem:[%s9 + $0xa8] sm:$0xff]
        %v3043 = vld [vmem:[%s9 + $0xb0] sm:$0xff]
        %v3044 = vld [vmem:[%s9 + $0xb8] sm:$0xff]
        %v3045 = vld [vmem:[%s9 + $0xc0] sm:$0xff]
        %v3046 = vld [vmem:[%s9 + $0xc8] sm:$0xff]
        %v3047 = vld [vmem:[%s9 + $0xd0] sm:$0xff]
        %v3048 = vld [vmem:[%s9 + $0xd8] sm:$0xff]
        %v3049 = vld [vmem:[%s9 + $0xe0] sm:$0xff]
        %v3050 = vld [vmem:[%s9 + $0xe8] sm:$0xff]
        %v3051 = vld [vmem:[%s9 + $0xf0] sm:$0xff]
        %v3052 = vld [vmem:[%s9 + $0xf8] sm:$0xff]
        %v3053 = vld [vmem:[%s9 + $0x100] sm:$0xff]
        %v3054 = vld [vmem:[%s9 + $0x108] sm:$0xff]
        %v3055 = vld [vmem:[%s9 + $0x110] sm:$0xff]
        %v3056 = vld [vmem:[%s9 + $0x118] sm:$0xff]
        %v3057 = vld [vmem:[%s9 + $0x120] sm:$0xff]
        %v3058 = vld [vmem:[%s9 + $0x128] sm:$0xff]
        %v3059 = vld [vmem:[%s9 + $0x130] sm:$0xff]
        %v3060 = vld [vmem:[%s9 + $0x138] sm:$0xff]
        %v3061 = vld [vmem:[%s9 + $0x140] sm:$0xff]
        %v3062 = vld [vmem:[%s9 + $0x148] sm:$0xff]
        %v3063 = vld [vmem:[%s9 + $0x150] sm:$0xff]
        %v3064 = vld [vmem:[%s9 + $0x158] sm:$0xff]
        %v3065 = vld [vmem:[%s9 + $0x160] sm:$0xff]
        %v3066 = vld [vmem:[%s9 + $0x168] sm:$0xff]
        %v3067 = vld [vmem:[%s9 + $0x170] sm:$0xff]
        %v3068 = vld [vmem:[%s9 + $0x178] sm:$0xff]
        %v3069 = vld [vmem:[%s9 + $0x180] sm:$0xff]
        %v3070 = vld [vmem:[%s9 + $0x188] sm:$0xff]
        %v3071 = vld [vmem:[%s9 + $0x190] sm:$0xff]
        %v3072 = vld [vmem:[%s9 + $0x198] sm:$0xff]
        %v3073 = vld [vmem:[%s9 + $0x1a0] sm:$0xff]
        %v3074 = vld [vmem:[%s9 + $0x1a8] sm:$0xff]
        %v3075 = vld [vmem:[%s9 + $0x1b0] sm:$0xff]
        %v3076 = vld [vmem:[%s9 + $0x1b8] sm:$0xff]
        %v3077 = vld [vmem:[%s9 + $0x1c0] sm:$0xff]
        %v3078 = vld [vmem:[%s9 + $0x1c8] sm:$0xff]
        %v3079 = vld [vmem:[%s9 + $0x1d0] sm:$0xff]
        %v3080 = vld [vmem:[%s9 + $0x1d8] sm:$0xff]
        %v3081 = vld [vmem:[%s9 + $0x1e0] sm:$0xff]
        %v3082 = vld [vmem:[%s9 + $0x1e8] sm:$0xff]
        %v3083 = vld [vmem:[%s9 + $0x1f0] sm:$0xff]
        %v3084 = vld [vmem:[%s9 + $0x1f8] sm:$0xff]
        %v3085 = vld [vmem:[%s9 + $0x200] sm:$0xff]
        %v3086 = vld [vmem:[%s9 + $0x208] sm:$0xff]
        %v3087 = vld [vmem:[%s9 + $0x210] sm:$0xff]
        %v3088 = vld [vmem:[%s9 + $0x218] sm:$0xff]
        %v3089 = vld [vmem:[%s9 + $0x220] sm:$0xff]
        %v3090 = vld [vmem:[%s9 + $0x228] sm:$0xff]
        %v3091 = vld [vmem:[%s9 + $0x230] sm:$0xff]
        %v3092 = vld [vmem:[%s9 + $0x238] sm:$0xff]
        %v3093 = vld [vmem:[%s9 + $0x240] sm:$0xff]
        %v3094 = vld [vmem:[%s9 + $0x248] sm:$0xff]
        %v3095 = vld [vmem:[%s9 + $0x250] sm:$0xff]
        %v3096 = vld [vmem:[%s9 + $0x258] sm:$0xff]
        %v3097 = vld [vmem:[%s9 + $0x260] sm:$0xff]
        %v3098 = vld [vmem:[%s9 + $0x268] sm:$0xff]
        %v3099 = vld [vmem:[%s9 + $0x270] sm:$0xff]
        %v3100 = vld [vmem:[%s9 + $0x278] sm:$0xff]
        %v3101 = vld [vmem:[%s9 + $0x280] sm:$0xff]
        %v3102 = vld [vmem:[%s9 + $0x288] sm:$0xff]
        %v3103 = vld [vmem:[%s9 + $0x290] sm:$0xff]
        %v3104 = vld [vmem:[%s9 + $0x298] sm:$0xff]
        %v3105 = vld [vmem:[%s9 + $0x2a0] sm:$0xff]
        %v3106 = vld [vmem:[%s9 + $0x2a8] sm:$0xff]
        %v3107 = vld [vmem:[%s9 + $0x2b0] sm:$0xff]
        %v3108 = vld [vmem:[%s9 + $0x2b8] sm:$0xff]
        %v3109 = vld [vmem:[%s9 + $0x2c0] sm:$0xff]
        %v3110 = vld [vmem:[%s9 + $0x2c8] sm:$0xff]
        %v3111 = vld [vmem:[%s9 + $0x2d0] sm:$0xff]
        %v3112 = vld [vmem:[%s9 + $0x2d8] sm:$0xff]
        %v3113 = vld [vmem:[%s9 + $0x2e0] sm:$0xff]
        %v3114 = vld [vmem:[%s9 + $0x2e8] sm:$0xff]
        %v3115 = vld [vmem:[%s9 + $0x2f0] sm:$0xff]
        %v3116 = vld [vmem:[%s9 + $0x2f8] sm:$0xff]
        %v3117 = vld [vmem:[%s9 + $0x300] sm:$0xff]
        %v3118 = vld [vmem:[%s9 + $0x308] sm:$0xff]
        %v3119 = vld [vmem:[%s9 + $0x310] sm:$0xff]
        %v3120 = vld [vmem:[%s9 + $0x318] sm:$0xff]
        %v3121 = vld [vmem:[%s9 + $0x320] sm:$0xff]
        %v3122 = vld [vmem:[%s9 + $0x328] sm:$0xff]
        %v3123 = vld [vmem:[%s9 + $0x330] sm:$0xff]
        %v3124 = vld [vmem:[%s9 + $0x338] sm:$0xff]
        %v3125 = vld [vmem:[%s9 + $0x340] sm:$0xff]
        %v3126 = vld [vmem:[%s9 + $0x348] sm:$0xff]
        %v3127 = vld [vmem:[%s9 + $0x350] sm:$0xff]
        %v3128 = vld [vmem:[%s9 + $0x358] sm:$0xff]
        %v3129 = vld [vmem:[%s9 + $0x360] sm:$0xff]
        %v3130 = vld [vmem:[%s9 + $0x368] sm:$0xff]
        %v3131 = vld [vmem:[%s9 + $0x370] sm:$0xff]
        %v3132 = vld [vmem:[%s9 + $0x378] sm:$0xff]
        %v3133 = vld [vmem:[%s9 + $0x380] sm:$0xff]
        %v3134 = vld [vmem:[%s9 + $0x388] sm:$0xff]
        %v3135 = vld [vmem:[%s9 + $0x390] sm:$0xff]
        %v3136 = vld [vmem:[%s9 + $0x398] sm:$0xff]
        %v3137 = vld [vmem:[%s9 + $0x3a0] sm:$0xff]
        %v3138 = vld [vmem:[%s9 + $0x3a8] sm:$0xff]
        %v3139 = vld [vmem:[%s9 + $0x3b0] sm:$0xff]
        %v3140 = vld [vmem:[%s9 + $0x3b8] sm:$0xff]
        %v3141 = vld [vmem:[%s9 + $0x3c0] sm:$0xff]
        %v3142 = vld [vmem:[%s9 + $0x3c8] sm:$0xff]
        %v3143 = vld [vmem:[%s9 + $0x3d0] sm:$0xff]
        %v3144 = vld [vmem:[%s9 + $0x3d8] sm:$0xff]
        %v3145 = vld [vmem:[%s9 + $0x3e0] sm:$0xff]
        %v3146 = vld [vmem:[%s9 + $0x3e8] sm:$0xff]
        %v3147 = vld [vmem:[%s9 + $0x3f0] sm:$0xff]
        %v3148 = vld [vmem:[%s9 + $0x3f8] sm:$0xff]
        %v3149 = vld [vmem:[%s9 + $0x400] sm:$0xff]
        %v3150 = vld [vmem:[%s9 + $0x408] sm:$0xff]
        %v3151 = vld [vmem:[%s9 + $0x410] sm:$0xff]
        %v3152 = vld [vmem:[%s9 + $0x418] sm:$0xff]
        %v3153 = vld [vmem:[%s9 + $0x420] sm:$0xff]
        %v3154 = vld [vmem:[%s9 + $0x428] sm:$0xff]
        %v3155 = vld [vmem:[%s9 + $0x430] sm:$0xff]
        %v3156 = vld [vmem:[%s9 + $0x438] sm:$0xff]
        %v3157 = vld [vmem:[%s9 + $0x440] sm:$0xff]
        %v3158 = vld [vmem:[%s9 + $0x448] sm:$0xff]
        %v3159 = vld [vmem:[%s9 + $0x450] sm:$0xff]
        %v3160 = vld [vmem:[%s9 + $0x458] sm:$0xff]
        %v3161 = vld [vmem:[%s9 + $0x460] sm:$0xff]
        %v3162 = vld [vmem:[%s9 + $0x468] sm:$0xff]
        %v3163 = vld [vmem:[%s9 + $0x470] sm:$0xff]
        %v3164 = vld [vmem:[%s9 + $0x478] sm:$0xff]
        %v3165 = vld [vmem:[%s9 + $0x480] sm:$0xff]
        %v3166 = vld [vmem:[%s9 + $0x488] sm:$0xff]
        %v3167 = vld [vmem:[%s9 + $0x490] sm:$0xff]
        %v3168 = vld [vmem:[%s9 + $0x498] sm:$0xff]
        %v3169 = vld [vmem:[%s9 + $0x4a0] sm:$0xff]
        %v3170 = vld [vmem:[%s9 + $0x4a8] sm:$0xff]
        %v3171 = vld [vmem:[%s9 + $0x4b0] sm:$0xff]
        %v3172 = vld [vmem:[%s9 + $0x4b8] sm:$0xff]
        %v3173 = vld [vmem:[%s9 + $0x4c0] sm:$0xff]
        %v3174 = vld [vmem:[%s9 + $0x4c8] sm:$0xff]
        %v3175 = vld [vmem:[%s9 + $0x4d0] sm:$0xff]
        %v3176 = vld [vmem:[%s9 + $0x4d8] sm:$0xff]
        %v3177 = vld [vmem:[%s9 + $0x4e0] sm:$0xff]
        %v3178 = vld [vmem:[%s9 + $0x4e8] sm:$0xff]
        %v3179 = vld [vmem:[%s9 + $0x4f0] sm:$0xff]
        %v3180 = vld [vmem:[%s9 + $0x4f8] sm:$0xff]
        %v3181 = vld [vmem:[%s9 + $0x500] sm:$0xff]
        %v3182 = vld [vmem:[%s9 + $0x508] sm:$0xff]
        %v3183 = vld [vmem:[%s9 + $0x510] sm:$0xff]
        %v3184 = vld [vmem:[%s9 + $0x518] sm:$0xff]
        %v3185 = vld [vmem:[%s9 + $0x520] sm:$0xff]
        %v3186 = vld [vmem:[%s9 + $0x528] sm:$0xff]
        %v3187 = vld [vmem:[%s9 + $0x530] sm:$0xff]
        %v3188 = vld [vmem:[%s9 + $0x538] sm:$0xff]
        %v3189 = vld [vmem:[%s9 + $0x540] sm:$0xff]
        %v3190 = vld [vmem:[%s9 + $0x548] sm:$0xff]
        %v3191 = vld [vmem:[%s9 + $0x550] sm:$0xff]
        %v3192 = vld [vmem:[%s9 + $0x558] sm:$0xff]
        %v3193 = vld [vmem:[%s9 + $0x560] sm:$0xff]
        %v3194 = vld [vmem:[%s9 + $0x568] sm:$0xff]
        %v3195 = vld [vmem:[%s9 + $0x570] sm:$0xff]
        %v3196 = vld [vmem:[%s9 + $0x578] sm:$0xff]
        %v3197 = vld [vmem:[%s9 + $0x580] sm:$0xff]
        %v3198 = vld [vmem:[%s9 + $0x588] sm:$0xff]
        %v3199 = vld [vmem:[%s9 + $0x590] sm:$0xff]
        %v3200 = vld [vmem:[%s9 + $0x598] sm:$0xff]
        %v3201 = vld [vmem:[%s9 + $0x5a0] sm:$0xff]
        %v3202 = vld [vmem:[%s9 + $0x5a8] sm:$0xff]
        %v3203 = vld [vmem:[%s9 + $0x5b0] sm:$0xff]
        %v3204 = vld [vmem:[%s9 + $0x5b8] sm:$0xff]
        %v3205 = vld [vmem:[%s9 + $0x5c0] sm:$0xff]
        %v3206 = vld [vmem:[%s9 + $0x5c8] sm:$0xff]
        %v3207 = vld [vmem:[%s9 + $0x5d0] sm:$0xff]
        %v3208 = vld [vmem:[%s9 + $0x5d8] sm:$0xff]
        %v3209 = vld [vmem:[%s9 + $0x5e0] sm:$0xff]
        %v3210 = vld [vmem:[%s9 + $0x5e8] sm:$0xff]
        %v3211 = vld [vmem:[%s9 + $0x5f0] sm:$0xff]
        %v3212 = vld [vmem:[%s9 + $0x5f8] sm:$0xff]
        %v3213 = vld [vmem:[%s9 + $0x600] sm:$0xff]
        %v3214 = vld [vmem:[%s9 + $0x608] sm:$0xff]
        %v3215 = vld [vmem:[%s9 + $0x610] sm:$0xff]
        %v3216 = vld [vmem:[%s9 + $0x618] sm:$0xff]
        %v3217 = vld [vmem:[%s9 + $0x620] sm:$0xff]
        %v3218 = vld [vmem:[%s9 + $0x628] sm:$0xff]
        %v3219 = vld [vmem:[%s9 + $0x630] sm:$0xff]
        %v3220 = vld [vmem:[%s9 + $0x638] sm:$0xff]
        %v3221 = vld [vmem:[%s9 + $0x640] sm:$0xff]
        %v3222 = vld [vmem:[%s9 + $0x648] sm:$0xff]
        %v3223 = vld [vmem:[%s9 + $0x650] sm:$0xff]
        %v3224 = vld [vmem:[%s9 + $0x658] sm:$0xff]
        %v3225 = vld [vmem:[%s9 + $0x660] sm:$0xff]
        %v3226 = vld [vmem:[%s9 + $0x668] sm:$0xff]
        %v3227 = vld [vmem:[%s9 + $0x670] sm:$0xff]
        %v3228 = vld [vmem:[%s9 + $0x678] sm:$0xff]
        %v3229 = vld [vmem:[%s9 + $0x680] sm:$0xff]
        %v3230 = vld [vmem:[%s9 + $0x688] sm:$0xff]
        %v3231 = vld [vmem:[%s9 + $0x690] sm:$0xff]
        %v3232 = vld [vmem:[%s9 + $0x698] sm:$0xff]
        %v3233 = vld [vmem:[%s9 + $0x6a0] sm:$0xff]
        %v3234 = vld [vmem:[%s9 + $0x6a8] sm:$0xff]
        %v3235 = vld [vmem:[%s9 + $0x6b0] sm:$0xff]
        %v3236 = vld [vmem:[%s9 + $0x6b8] sm:$0xff]
        %v3237 = vld [vmem:[%s9 + $0x6c0] sm:$0xff]
        %v3238 = vld [vmem:[%s9 + $0x6c8] sm:$0xff]
        %v3239 = vld [vmem:[%s9 + $0x6d0] sm:$0xff]
        %v3240 = vld [vmem:[%s9 + $0x6d8] sm:$0xff]
        %v3241 = vld [vmem:[%s9 + $0x6e0] sm:$0xff]
        %v3242 = vld [vmem:[%s9 + $0x6e8] sm:$0xff]
        %v3243 = vld [vmem:[%s9 + $0x6f0] sm:$0xff]
        %v3244 = vld [vmem:[%s9 + $0x6f8] sm:$0xff]
        %v3245 = vld [vmem:[%s9 + $0x700] sm:$0xff]
        %v3246 = vld [vmem:[%s9 + $0x708] sm:$0xff]
        %v3247 = vld [vmem:[%s9 + $0x710] sm:$0xff]
        %v3248 = vld [vmem:[%s9 + $0x718] sm:$0xff]
        %v3249 = vld [vmem:[%s9 + $0x720] sm:$0xff]
        %v3250 = vld [vmem:[%s9 + $0x728] sm:$0xff]
        %v3251 = vld [vmem:[%s9 + $0x730] sm:$0xff]
        %v3252 = vld [vmem:[%s9 + $0x738] sm:$0xff]
        %v3253 = vld [vmem:[%s9 + $0x740] sm:$0xff]
        %v3254 = vld [vmem:[%s9 + $0x748] sm:$0xff]
        %v3255 = vld [vmem:[%s9 + $0x750] sm:$0xff]
        %v3256 = vld [vmem:[%s9 + $0x758] sm:$0xff]
        %v3257 = vld [vmem:[%s9 + $0x760] sm:$0xff]
        %v3258 = vld [vmem:[%s9 + $0x768] sm:$0xff]
        %v3259 = vld [vmem:[%s9 + $0x770] sm:$0xff]
        %v3260 = vld [vmem:[%s9 + $0x778] sm:$0xff]
        %v3261 = vld [vmem:[%s9 + $0x780] sm:$0xff]
        %v3262 = vld [vmem:[%s9 + $0x788] sm:$0xff]
        %v3263 = vld [vmem:[%s9 + $0x790] sm:$0xff]
        %v3264 = vld [vmem:[%s9 + $0x798] sm:$0xff]
        %v3265 = vld [vmem:[%s9 + $0x7a0] sm:$0xff]
        %v3266 = vld [vmem:[%s9 + $0x7a8] sm:$0xff]
        %v3267 = vld [vmem:[%s9 + $0x7b0] sm:$0xff]
        %v3268 = vld [vmem:[%s9 + $0x7b8] sm:$0xff]
        %v3269 = vld [vmem:[%s9 + $0x7c0] sm:$0xff]
        %v3270 = vld [vmem:[%s9 + $0x7c8] sm:$0xff]
        %v3271 = vld [vmem:[%s9 + $0x7d0] sm:$0xff]
        %v3272 = vld [vmem:[%s9 + $0x7d8] sm:$0xff]
        %v3273 = vld [vmem:[%s9 + $0x7e0] sm:$0xff]
        %v3274 = vld [vmem:[%s9 + $0x7e8] sm:$0xff]
        %v3275 = vld [vmem:[%s9 + $0x7f0] sm:$0xff]
        %v3276 = vld [vmem:[%s9 + $0x7f8] sm:$0xff]
        %v3277 = vld [vmem:[%s10] sm:$0xff]
        %v3278 = vld [vmem:[%s10 + $0x8] sm:$0xff]
        %v3281 = vperm.slane %v3277, 0
        %v3282 = vperm.slane %v3277, 1
        %v3283 = vperm.slane %v3277, 2
        %v3284 = vperm.slane %v3277, 3
        %v3285 = vperm.slane %v3277, 4
        %v3286 = vperm.slane %v3277, 5
        %v3287 = vperm.slane %v3277, 6
        %v3288 = vperm.slane %v3277, 7
        %v3289 = vperm.slane %v3278, 0
        %v3290 = vperm.slane %v3278, 1
        %v3291 = vperm.slane %v3278, 2
        %v3292 = vperm.slane %v3278, 3
        %v3293 = vperm.slane %v3278, 4
        %v3294 = vperm.slane %v3278, 5
        %v3295 = vperm.slane %v3278, 6
        %v3296 = vperm.slane %v3278, 7
        %v3569 = vunpack.c.l.b16 %v3021
        %v3570 = vunpack.c.h.b16 %v3021
        %v3571 = vunpack.c.l.b16 %v3022
        %v3572 = vunpack.c.h.b16 %v3022
        %v3573 = vunpack.c.l.b16 %v3023
        %v3574 = vunpack.c.h.b16 %v3023
        %v3575 = vunpack.c.l.b16 %v3024
        %v3576 = vunpack.c.h.b16 %v3024
        %v3577 = vunpack.c.l.b16 %v3025
        %v3578 = vunpack.c.h.b16 %v3025
        %v3579 = vunpack.c.l.b16 %v3026
        %v3580 = vunpack.c.h.b16 %v3026
        %v3581 = vunpack.c.l.b16 %v3027
        %v3582 = vunpack.c.h.b16 %v3027
        %v3583 = vunpack.c.l.b16 %v3028
        %v3584 = vunpack.c.h.b16 %v3028
        %v3585 = vunpack.c.l.b16 %v3029
        %v3586 = vunpack.c.h.b16 %v3029
        %v3587 = vunpack.c.l.b16 %v3030
        %v3588 = vunpack.c.h.b16 %v3030
        %v3589 = vunpack.c.l.b16 %v3031
        %v3590 = vunpack.c.h.b16 %v3031
        %v3591 = vunpack.c.l.b16 %v3032
        %v3592 = vunpack.c.h.b16 %v3032
        %v3593 = vunpack.c.l.b16 %v3033
        %v3594 = vunpack.c.h.b16 %v3033
        %v3595 = vunpack.c.l.b16 %v3034
        %v3596 = vunpack.c.h.b16 %v3034
        %v3597 = vunpack.c.l.b16 %v3035
        %v3598 = vunpack.c.h.b16 %v3035
        %v3599 = vunpack.c.l.b16 %v3036
        %v3600 = vunpack.c.h.b16 %v3036
        %v3601 = vunpack.c.l.b16 %v3037
        %v3602 = vunpack.c.h.b16 %v3037
        %v3603 = vunpack.c.l.b16 %v3038
        %v3604 = vunpack.c.h.b16 %v3038
        %v3605 = vunpack.c.l.b16 %v3039
        %v3606 = vunpack.c.h.b16 %v3039
        %v3607 = vunpack.c.l.b16 %v3040
        %v3608 = vunpack.c.h.b16 %v3040
        %v3609 = vunpack.c.l.b16 %v3041
        %v3610 = vunpack.c.h.b16 %v3041
        %v3611 = vunpack.c.l.b16 %v3042
        %v3612 = vunpack.c.h.b16 %v3042
        %v3613 = vunpack.c.l.b16 %v3043
        %v3614 = vunpack.c.h.b16 %v3043
        %v3615 = vunpack.c.l.b16 %v3044
        %v3616 = vunpack.c.h.b16 %v3044
        %v3617 = vunpack.c.l.b16 %v3045
        %v3618 = vunpack.c.h.b16 %v3045
        %v3619 = vunpack.c.l.b16 %v3046
        %v3620 = vunpack.c.h.b16 %v3046
        %v3621 = vunpack.c.l.b16 %v3047
        %v3622 = vunpack.c.h.b16 %v3047
        %v3623 = vunpack.c.l.b16 %v3048
        %v3624 = vunpack.c.h.b16 %v3048
        %v3625 = vunpack.c.l.b16 %v3049
        %v3626 = vunpack.c.h.b16 %v3049
        %v3627 = vunpack.c.l.b16 %v3050
        %v3628 = vunpack.c.h.b16 %v3050
        %v3629 = vunpack.c.l.b16 %v3051
        %v3630 = vunpack.c.h.b16 %v3051
        %v3631 = vunpack.c.l.b16 %v3052
        %v3632 = vunpack.c.h.b16 %v3052
        %v3633 = vunpack.c.l.b16 %v3053
        %v3634 = vunpack.c.h.b16 %v3053
        %v3635 = vunpack.c.l.b16 %v3054
        %v3636 = vunpack.c.h.b16 %v3054
        %v3637 = vunpack.c.l.b16 %v3055
        %v3638 = vunpack.c.h.b16 %v3055
        %v3639 = vunpack.c.l.b16 %v3056
        %v3640 = vunpack.c.h.b16 %v3056
        %v3641 = vunpack.c.l.b16 %v3057
        %v3642 = vunpack.c.h.b16 %v3057
        %v3643 = vunpack.c.l.b16 %v3058
        %v3644 = vunpack.c.h.b16 %v3058
        %v3645 = vunpack.c.l.b16 %v3059
        %v3646 = vunpack.c.h.b16 %v3059
        %v3647 = vunpack.c.l.b16 %v3060
        %v3648 = vunpack.c.h.b16 %v3060
        %v3649 = vunpack.c.l.b16 %v3061
        %v3650 = vunpack.c.h.b16 %v3061
        %v3651 = vunpack.c.l.b16 %v3062
        %v3652 = vunpack.c.h.b16 %v3062
        %v3653 = vunpack.c.l.b16 %v3063
        %v3654 = vunpack.c.h.b16 %v3063
        %v3655 = vunpack.c.l.b16 %v3064
        %v3656 = vunpack.c.h.b16 %v3064
        %v3657 = vunpack.c.l.b16 %v3065
        %v3658 = vunpack.c.h.b16 %v3065
        %v3659 = vunpack.c.l.b16 %v3066
        %v3660 = vunpack.c.h.b16 %v3066
        %v3661 = vunpack.c.l.b16 %v3067
        %v3662 = vunpack.c.h.b16 %v3067
        %v3663 = vunpack.c.l.b16 %v3068
        %v3664 = vunpack.c.h.b16 %v3068
        %v3665 = vunpack.c.l.b16 %v3069
        %v3666 = vunpack.c.h.b16 %v3069
        %v3667 = vunpack.c.l.b16 %v3070
        %v3668 = vunpack.c.h.b16 %v3070
        %v3669 = vunpack.c.l.b16 %v3071
        %v3670 = vunpack.c.h.b16 %v3071
        %v3671 = vunpack.c.l.b16 %v3072
        %v3672 = vunpack.c.h.b16 %v3072
        %v3673 = vunpack.c.l.b16 %v3073
        %v3674 = vunpack.c.h.b16 %v3073
        %v3675 = vunpack.c.l.b16 %v3074
        %v3676 = vunpack.c.h.b16 %v3074
        %v3677 = vunpack.c.l.b16 %v3075
        %v3678 = vunpack.c.h.b16 %v3075
        %v3679 = vunpack.c.l.b16 %v3076
        %v3680 = vunpack.c.h.b16 %v3076
        %v3681 = vunpack.c.l.b16 %v3077
        %v3682 = vunpack.c.h.b16 %v3077
        %v3683 = vunpack.c.l.b16 %v3078
        %v3684 = vunpack.c.h.b16 %v3078
        %v3685 = vunpack.c.l.b16 %v3079
        %v3686 = vunpack.c.h.b16 %v3079
        %v3687 = vunpack.c.l.b16 %v3080
        %v3688 = vunpack.c.h.b16 %v3080
        %v3689 = vunpack.c.l.b16 %v3081
        %v3690 = vunpack.c.h.b16 %v3081
        %v3691 = vunpack.c.l.b16 %v3082
        %v3692 = vunpack.c.h.b16 %v3082
        %v3693 = vunpack.c.l.b16 %v3083
        %v3694 = vunpack.c.h.b16 %v3083
        %v3695 = vunpack.c.l.b16 %v3084
        %v3696 = vunpack.c.h.b16 %v3084
        %v3697 = vunpack.c.l.b16 %v3085
        %v3698 = vunpack.c.h.b16 %v3085
        %v3699 = vunpack.c.l.b16 %v3086
        %v3700 = vunpack.c.h.b16 %v3086
        %v3701 = vunpack.c.l.b16 %v3087
        %v3702 = vunpack.c.h.b16 %v3087
        %v3703 = vunpack.c.l.b16 %v3088
        %v3704 = vunpack.c.h.b16 %v3088
        %v3705 = vunpack.c.l.b16 %v3089
        %v3706 = vunpack.c.h.b16 %v3089
        %v3707 = vunpack.c.l.b16 %v3090
        %v3708 = vunpack.c.h.b16 %v3090
        %v3709 = vunpack.c.l.b16 %v3091
        %v3710 = vunpack.c.h.b16 %v3091
        %v3711 = vunpack.c.l.b16 %v3092
        %v3712 = vunpack.c.h.b16 %v3092
        %v3713 = vunpack.c.l.b16 %v3093
        %v3714 = vunpack.c.h.b16 %v3093
        %v3715 = vunpack.c.l.b16 %v3094
        %v3716 = vunpack.c.h.b16 %v3094
        %v3717 = vunpack.c.l.b16 %v3095
        %v3718 = vunpack.c.h.b16 %v3095
        %v3719 = vunpack.c.l.b16 %v3096
        %v3720 = vunpack.c.h.b16 %v3096
        %v3721 = vunpack.c.l.b16 %v3097
        %v3722 = vunpack.c.h.b16 %v3097
        %v3723 = vunpack.c.l.b16 %v3098
        %v3724 = vunpack.c.h.b16 %v3098
        %v3725 = vunpack.c.l.b16 %v3099
        %v3726 = vunpack.c.h.b16 %v3099
        %v3727 = vunpack.c.l.b16 %v3100
        %v3728 = vunpack.c.h.b16 %v3100
        %v3729 = vunpack.c.l.b16 %v3101
        %v3730 = vunpack.c.h.b16 %v3101
        %v3731 = vunpack.c.l.b16 %v3102
        %v3732 = vunpack.c.h.b16 %v3102
        %v3733 = vunpack.c.l.b16 %v3103
        %v3734 = vunpack.c.h.b16 %v3103
        %v3735 = vunpack.c.l.b16 %v3104
        %v3736 = vunpack.c.h.b16 %v3104
        %v3737 = vunpack.c.l.b16 %v3105
        %v3738 = vunpack.c.h.b16 %v3105
        %v3739 = vunpack.c.l.b16 %v3106
        %v3740 = vunpack.c.h.b16 %v3106
        %v3741 = vunpack.c.l.b16 %v3107
        %v3742 = vunpack.c.h.b16 %v3107
        %v3743 = vunpack.c.l.b16 %v3108
        %v3744 = vunpack.c.h.b16 %v3108
        %v3745 = vunpack.c.l.b16 %v3109
        %v3746 = vunpack.c.h.b16 %v3109
        %v3747 = vunpack.c.l.b16 %v3110
        %v3748 = vunpack.c.h.b16 %v3110
        %v3749 = vunpack.c.l.b16 %v3111
        %v3750 = vunpack.c.h.b16 %v3111
        %v3751 = vunpack.c.l.b16 %v3112
        %v3752 = vunpack.c.h.b16 %v3112
        %v3753 = vunpack.c.l.b16 %v3113
        %v3754 = vunpack.c.h.b16 %v3113
        %v3755 = vunpack.c.l.b16 %v3114
        %v3756 = vunpack.c.h.b16 %v3114
        %v3757 = vunpack.c.l.b16 %v3115
        %v3758 = vunpack.c.h.b16 %v3115
        %v3759 = vunpack.c.l.b16 %v3116
        %v3760 = vunpack.c.h.b16 %v3116
        %v3761 = vunpack.c.l.b16 %v3117
        %v3762 = vunpack.c.h.b16 %v3117
        %v3763 = vunpack.c.l.b16 %v3118
        %v3764 = vunpack.c.h.b16 %v3118
        %v3765 = vunpack.c.l.b16 %v3119
        %v3766 = vunpack.c.h.b16 %v3119
        %v3767 = vunpack.c.l.b16 %v3120
        %v3768 = vunpack.c.h.b16 %v3120
        %v3769 = vunpack.c.l.b16 %v3121
        %v3770 = vunpack.c.h.b16 %v3121
        %v3771 = vunpack.c.l.b16 %v3122
        %v3772 = vunpack.c.h.b16 %v3122
        %v3773 = vunpack.c.l.b16 %v3123
        %v3774 = vunpack.c.h.b16 %v3123
        %v3775 = vunpack.c.l.b16 %v3124
        %v3776 = vunpack.c.h.b16 %v3124
        %v3777 = vunpack.c.l.b16 %v3125
        %v3778 = vunpack.c.h.b16 %v3125
        %v3779 = vunpack.c.l.b16 %v3126
        %v3780 = vunpack.c.h.b16 %v3126
        %v3781 = vunpack.c.l.b16 %v3127
        %v3782 = vunpack.c.h.b16 %v3127
        %v3783 = vunpack.c.l.b16 %v3128
        %v3784 = vunpack.c.h.b16 %v3128
        %v3785 = vunpack.c.l.b16 %v3129
        %v3786 = vunpack.c.h.b16 %v3129
        %v3787 = vunpack.c.l.b16 %v3130
        %v3788 = vunpack.c.h.b16 %v3130
        %v3789 = vunpack.c.l.b16 %v3131
        %v3790 = vunpack.c.h.b16 %v3131
        %v3791 = vunpack.c.l.b16 %v3132
        %v3792 = vunpack.c.h.b16 %v3132
        %v3793 = vunpack.c.l.b16 %v3133
        %v3794 = vunpack.c.h.b16 %v3133
        %v3795 = vunpack.c.l.b16 %v3134
        %v3796 = vunpack.c.h.b16 %v3134
        %v3797 = vunpack.c.l.b16 %v3135
        %v3798 = vunpack.c.h.b16 %v3135
        %v3799 = vunpack.c.l.b16 %v3136
        %v3800 = vunpack.c.h.b16 %v3136
        %v3801 = vunpack.c.l.b16 %v3137
        %v3802 = vunpack.c.h.b16 %v3137
        %v3803 = vunpack.c.l.b16 %v3138
        %v3804 = vunpack.c.h.b16 %v3138
        %v3805 = vunpack.c.l.b16 %v3139
        %v3806 = vunpack.c.h.b16 %v3139
        %v3807 = vunpack.c.l.b16 %v3140
        %v3808 = vunpack.c.h.b16 %v3140
        %v3809 = vunpack.c.l.b16 %v3141
        %v3810 = vunpack.c.h.b16 %v3141
        %v3811 = vunpack.c.l.b16 %v3142
        %v3812 = vunpack.c.h.b16 %v3142
        %v3813 = vunpack.c.l.b16 %v3143
        %v3814 = vunpack.c.h.b16 %v3143
        %v3815 = vunpack.c.l.b16 %v3144
        %v3816 = vunpack.c.h.b16 %v3144
        %v3817 = vunpack.c.l.b16 %v3145
        %v3818 = vunpack.c.h.b16 %v3145
        %v3819 = vunpack.c.l.b16 %v3146
        %v3820 = vunpack.c.h.b16 %v3146
        %v3821 = vunpack.c.l.b16 %v3147
        %v3822 = vunpack.c.h.b16 %v3147
        %v3823 = vunpack.c.l.b16 %v3148
        %v3824 = vunpack.c.h.b16 %v3148
        %v3825 = vunpack.c.l.b16 %v3149
        %v3826 = vunpack.c.h.b16 %v3149
        %v3827 = vunpack.c.l.b16 %v3150
        %v3828 = vunpack.c.h.b16 %v3150
        %v3829 = vunpack.c.l.b16 %v3151
        %v3830 = vunpack.c.h.b16 %v3151
        %v3831 = vunpack.c.l.b16 %v3152
        %v3832 = vunpack.c.h.b16 %v3152
        %v3833 = vunpack.c.l.b16 %v3153
        %v3834 = vunpack.c.h.b16 %v3153
        %v3835 = vunpack.c.l.b16 %v3154
        %v3836 = vunpack.c.h.b16 %v3154
        %v3837 = vunpack.c.l.b16 %v3155
        %v3838 = vunpack.c.h.b16 %v3155
        %v3839 = vunpack.c.l.b16 %v3156
        %v3840 = vunpack.c.h.b16 %v3156
        %v3841 = vunpack.c.l.b16 %v3157
        %v3842 = vunpack.c.h.b16 %v3157
        %v3843 = vunpack.c.l.b16 %v3158
        %v3844 = vunpack.c.h.b16 %v3158
        %v3845 = vunpack.c.l.b16 %v3159
        %v3846 = vunpack.c.h.b16 %v3159
        %v3847 = vunpack.c.l.b16 %v3160
        %v3848 = vunpack.c.h.b16 %v3160
        %v3849 = vunpack.c.l.b16 %v3161
        %v3850 = vunpack.c.h.b16 %v3161
        %v3851 = vunpack.c.l.b16 %v3162
        %v3852 = vunpack.c.h.b16 %v3162
        %v3853 = vunpack.c.l.b16 %v3163
        %v3854 = vunpack.c.h.b16 %v3163
        %v3855 = vunpack.c.l.b16 %v3164
        %v3856 = vunpack.c.h.b16 %v3164
        %v3857 = vunpack.c.l.b16 %v3165
        %v3858 = vunpack.c.h.b16 %v3165
        %v3859 = vunpack.c.l.b16 %v3166
        %v3860 = vunpack.c.h.b16 %v3166
        %v3861 = vunpack.c.l.b16 %v3167
        %v3862 = vunpack.c.h.b16 %v3167
        %v3863 = vunpack.c.l.b16 %v3168
        %v3864 = vunpack.c.h.b16 %v3168
        %v3865 = vunpack.c.l.b16 %v3169
        %v3866 = vunpack.c.h.b16 %v3169
        %v3867 = vunpack.c.l.b16 %v3170
        %v3868 = vunpack.c.h.b16 %v3170
        %v3869 = vunpack.c.l.b16 %v3171
        %v3870 = vunpack.c.h.b16 %v3171
        %v3871 = vunpack.c.l.b16 %v3172
        %v3872 = vunpack.c.h.b16 %v3172
        %v3873 = vunpack.c.l.b16 %v3173
        %v3874 = vunpack.c.h.b16 %v3173
        %v3875 = vunpack.c.l.b16 %v3174
        %v3876 = vunpack.c.h.b16 %v3174
        %v3877 = vunpack.c.l.b16 %v3175
        %v3878 = vunpack.c.h.b16 %v3175
        %v3879 = vunpack.c.l.b16 %v3176
        %v3880 = vunpack.c.h.b16 %v3176
        %v3881 = vunpack.c.l.b16 %v3177
        %v3882 = vunpack.c.h.b16 %v3177
        %v3883 = vunpack.c.l.b16 %v3178
        %v3884 = vunpack.c.h.b16 %v3178
        %v3885 = vunpack.c.l.b16 %v3179
        %v3886 = vunpack.c.h.b16 %v3179
        %v3887 = vunpack.c.l.b16 %v3180
        %v3888 = vunpack.c.h.b16 %v3180
        %v3889 = vunpack.c.l.b16 %v3181
        %v3890 = vunpack.c.h.b16 %v3181
        %v3891 = vunpack.c.l.b16 %v3182
        %v3892 = vunpack.c.h.b16 %v3182
        %v3893 = vunpack.c.l.b16 %v3183
        %v3894 = vunpack.c.h.b16 %v3183
        %v3895 = vunpack.c.l.b16 %v3184
        %v3896 = vunpack.c.h.b16 %v3184
        %v3897 = vunpack.c.l.b16 %v3185
        %v3898 = vunpack.c.h.b16 %v3185
        %v3899 = vunpack.c.l.b16 %v3186
        %v3900 = vunpack.c.h.b16 %v3186
        %v3901 = vunpack.c.l.b16 %v3187
        %v3902 = vunpack.c.h.b16 %v3187
        %v3903 = vunpack.c.l.b16 %v3188
        %v3904 = vunpack.c.h.b16 %v3188
        %v3905 = vunpack.c.l.b16 %v3189
        %v3906 = vunpack.c.h.b16 %v3189
        %v3907 = vunpack.c.l.b16 %v3190
        %v3908 = vunpack.c.h.b16 %v3190
        %v3909 = vunpack.c.l.b16 %v3191
        %v3910 = vunpack.c.h.b16 %v3191
        %v3911 = vunpack.c.l.b16 %v3192
        %v3912 = vunpack.c.h.b16 %v3192
        %v3913 = vunpack.c.l.b16 %v3193
        %v3914 = vunpack.c.h.b16 %v3193
        %v3915 = vunpack.c.l.b16 %v3194
        %v3916 = vunpack.c.h.b16 %v3194
        %v3917 = vunpack.c.l.b16 %v3195
        %v3918 = vunpack.c.h.b16 %v3195
        %v3919 = vunpack.c.l.b16 %v3196
        %v3920 = vunpack.c.h.b16 %v3196
        %v3921 = vunpack.c.l.b16 %v3197
        %v3922 = vunpack.c.h.b16 %v3197
        %v3923 = vunpack.c.l.b16 %v3198
        %v3924 = vunpack.c.h.b16 %v3198
        %v3925 = vunpack.c.l.b16 %v3199
        %v3926 = vunpack.c.h.b16 %v3199
        %v3927 = vunpack.c.l.b16 %v3200
        %v3928 = vunpack.c.h.b16 %v3200
        %v3929 = vunpack.c.l.b16 %v3201
        %v3930 = vunpack.c.h.b16 %v3201
        %v3931 = vunpack.c.l.b16 %v3202
        %v3932 = vunpack.c.h.b16 %v3202
        %v3933 = vunpack.c.l.b16 %v3203
        %v3934 = vunpack.c.h.b16 %v3203
        %v3935 = vunpack.c.l.b16 %v3204
        %v3936 = vunpack.c.h.b16 %v3204
        %v3937 = vunpack.c.l.b16 %v3205
        %v3938 = vunpack.c.h.b16 %v3205
        %v3939 = vunpack.c.l.b16 %v3206
        %v3940 = vunpack.c.h.b16 %v3206
        %v3941 = vunpack.c.l.b16 %v3207
        %v3942 = vunpack.c.h.b16 %v3207
        %v3943 = vunpack.c.l.b16 %v3208
        %v3944 = vunpack.c.h.b16 %v3208
        %v3945 = vunpack.c.l.b16 %v3209
        %v3946 = vunpack.c.h.b16 %v3209
        %v3947 = vunpack.c.l.b16 %v3210
        %v3948 = vunpack.c.h.b16 %v3210
        %v3949 = vunpack.c.l.b16 %v3211
        %v3950 = vunpack.c.h.b16 %v3211
        %v3951 = vunpack.c.l.b16 %v3212
        %v3952 = vunpack.c.h.b16 %v3212
        %v3953 = vunpack.c.l.b16 %v3213
        %v3954 = vunpack.c.h.b16 %v3213
        %v3955 = vunpack.c.l.b16 %v3214
        %v3956 = vunpack.c.h.b16 %v3214
        %v3957 = vunpack.c.l.b16 %v3215
        %v3958 = vunpack.c.h.b16 %v3215
        %v3959 = vunpack.c.l.b16 %v3216
        %v3960 = vunpack.c.h.b16 %v3216
        %v3961 = vunpack.c.l.b16 %v3217
        %v3962 = vunpack.c.h.b16 %v3217
        %v3963 = vunpack.c.l.b16 %v3218
        %v3964 = vunpack.c.h.b16 %v3218
        %v3965 = vunpack.c.l.b16 %v3219
        %v3966 = vunpack.c.h.b16 %v3219
        %v3967 = vunpack.c.l.b16 %v3220
        %v3968 = vunpack.c.h.b16 %v3220
        %v3969 = vunpack.c.l.b16 %v3221
        %v3970 = vunpack.c.h.b16 %v3221
        %v3971 = vunpack.c.l.b16 %v3222
        %v3972 = vunpack.c.h.b16 %v3222
        %v3973 = vunpack.c.l.b16 %v3223
        %v3974 = vunpack.c.h.b16 %v3223
        %v3975 = vunpack.c.l.b16 %v3224
        %v3976 = vunpack.c.h.b16 %v3224
        %v3977 = vunpack.c.l.b16 %v3225
        %v3978 = vunpack.c.h.b16 %v3225
        %v3979 = vunpack.c.l.b16 %v3226
        %v3980 = vunpack.c.h.b16 %v3226
        %v3981 = vunpack.c.l.b16 %v3227
        %v3982 = vunpack.c.h.b16 %v3227
        %v3983 = vunpack.c.l.b16 %v3228
        %v3984 = vunpack.c.h.b16 %v3228
        %v3985 = vunpack.c.l.b16 %v3229
        %v3986 = vunpack.c.h.b16 %v3229
        %v3987 = vunpack.c.l.b16 %v3230
        %v3988 = vunpack.c.h.b16 %v3230
        %v3989 = vunpack.c.l.b16 %v3231
        %v3990 = vunpack.c.h.b16 %v3231
        %v3991 = vunpack.c.l.b16 %v3232
        %v3992 = vunpack.c.h.b16 %v3232
        %v3993 = vunpack.c.l.b16 %v3233
        %v3994 = vunpack.c.h.b16 %v3233
        %v3995 = vunpack.c.l.b16 %v3234
        %v3996 = vunpack.c.h.b16 %v3234
        %v3997 = vunpack.c.l.b16 %v3235
        %v3998 = vunpack.c.h.b16 %v3235
        %v3999 = vunpack.c.l.b16 %v3236
        %v4000 = vunpack.c.h.b16 %v3236
        %v4001 = vunpack.c.l.b16 %v3237
        %v4002 = vunpack.c.h.b16 %v3237
        %v4003 = vunpack.c.l.b16 %v3238
        %v4004 = vunpack.c.h.b16 %v3238
        %v4005 = vunpack.c.l.b16 %v3239
        %v4006 = vunpack.c.h.b16 %v3239
        %v4007 = vunpack.c.l.b16 %v3240
        %v4008 = vunpack.c.h.b16 %v3240
        %v4009 = vunpack.c.l.b16 %v3241
        %v4010 = vunpack.c.h.b16 %v3241
        %v4011 = vunpack.c.l.b16 %v3242
        %v4012 = vunpack.c.h.b16 %v3242
        %v4013 = vunpack.c.l.b16 %v3243
        %v4014 = vunpack.c.h.b16 %v3243
        %v4015 = vunpack.c.l.b16 %v3244
        %v4016 = vunpack.c.h.b16 %v3244
        %v4017 = vunpack.c.l.b16 %v3245
        %v4018 = vunpack.c.h.b16 %v3245
        %v4019 = vunpack.c.l.b16 %v3246
        %v4020 = vunpack.c.h.b16 %v3246
        %v4021 = vunpack.c.l.b16 %v3247
        %v4022 = vunpack.c.h.b16 %v3247
        %v4023 = vunpack.c.l.b16 %v3248
        %v4024 = vunpack.c.h.b16 %v3248
        %v4025 = vunpack.c.l.b16 %v3249
        %v4026 = vunpack.c.h.b16 %v3249
        %v4027 = vunpack.c.l.b16 %v3250
        %v4028 = vunpack.c.h.b16 %v3250
        %v4029 = vunpack.c.l.b16 %v3251
        %v4030 = vunpack.c.h.b16 %v3251
        %v4031 = vunpack.c.l.b16 %v3252
        %v4032 = vunpack.c.h.b16 %v3252
        %v4033 = vunpack.c.l.b16 %v3253
        %v4034 = vunpack.c.h.b16 %v3253
        %v4035 = vunpack.c.l.b16 %v3254
        %v4036 = vunpack.c.h.b16 %v3254
        %v4037 = vunpack.c.l.b16 %v3255
        %v4038 = vunpack.c.h.b16 %v3255
        %v4039 = vunpack.c.l.b16 %v3256
        %v4040 = vunpack.c.h.b16 %v3256
        %v4041 = vunpack.c.l.b16 %v3257
        %v4042 = vunpack.c.h.b16 %v3257
        %v4043 = vunpack.c.l.b16 %v3258
        %v4044 = vunpack.c.h.b16 %v3258
        %v4045 = vunpack.c.l.b16 %v3259
        %v4046 = vunpack.c.h.b16 %v3259
        %v4047 = vunpack.c.l.b16 %v3260
        %v4048 = vunpack.c.h.b16 %v3260
        %v4049 = vunpack.c.l.b16 %v3261
        %v4050 = vunpack.c.h.b16 %v3261
        %v4051 = vunpack.c.l.b16 %v3262
        %v4052 = vunpack.c.h.b16 %v3262
        %v4053 = vunpack.c.l.b16 %v3263
        %v4054 = vunpack.c.h.b16 %v3263
        %v4055 = vunpack.c.l.b16 %v3264
        %v4056 = vunpack.c.h.b16 %v3264
        %v4057 = vunpack.c.l.b16 %v3265
        %v4058 = vunpack.c.h.b16 %v3265
        %v4059 = vunpack.c.l.b16 %v3266
        %v4060 = vunpack.c.h.b16 %v3266
        %v4061 = vunpack.c.l.b16 %v3267
        %v4062 = vunpack.c.h.b16 %v3267
        %v4063 = vunpack.c.l.b16 %v3268
        %v4064 = vunpack.c.h.b16 %v3268
        %v4065 = vunpack.c.l.b16 %v3269
        %v4066 = vunpack.c.h.b16 %v3269
        %v4067 = vunpack.c.l.b16 %v3270
        %v4068 = vunpack.c.h.b16 %v3270
        %v4069 = vunpack.c.l.b16 %v3271
        %v4070 = vunpack.c.h.b16 %v3271
        %v4071 = vunpack.c.l.b16 %v3272
        %v4072 = vunpack.c.h.b16 %v3272
        %v4073 = vunpack.c.l.b16 %v3273
        %v4074 = vunpack.c.h.b16 %v3273
        %v4075 = vunpack.c.l.b16 %v3274
        %v4076 = vunpack.c.h.b16 %v3274
        %v4077 = vunpack.c.l.b16 %v3275
        %v4078 = vunpack.c.h.b16 %v3275
        %v4079 = vunpack.c.l.b16 %v3276
        %v4080 = vunpack.c.h.b16 %v3276
        %v4081 = vpack.c.b16 %v3585, %v3569
        %v4082 = vpack.c.b16 %v3586, %v3570
        %v4083 = vpack.c.b16 %v3587, %v3571
        %v4084 = vpack.c.b16 %v3588, %v3572
        %v4085 = vpack.c.b16 %v3589, %v3573
        %v4086 = vpack.c.b16 %v3590, %v3574
        %v4087 = vpack.c.b16 %v3591, %v3575
        %v4088 = vpack.c.b16 %v3592, %v3576
        %v4089 = vpack.c.b16 %v3593, %v3577
        %v4090 = vpack.c.b16 %v3594, %v3578
        %v4091 = vpack.c.b16 %v3595, %v3579
        %v4092 = vpack.c.b16 %v3596, %v3580
        %v4093 = vpack.c.b16 %v3597, %v3581
        %v4094 = vpack.c.b16 %v3598, %v3582
        %v4095 = vpack.c.b16 %v3599, %v3583
        %v4096 = vpack.c.b16 %v3600, %v3584
        %v4097 = vpack.c.b16 %v3617, %v3601
        %v4098 = vpack.c.b16 %v3618, %v3602
        %v4099 = vpack.c.b16 %v3619, %v3603
        %v4100 = vpack.c.b16 %v3620, %v3604
        %v4101 = vpack.c.b16 %v3621, %v3605
        %v4102 = vpack.c.b16 %v3622, %v3606
        %v4103 = vpack.c.b16 %v3623, %v3607
        %v4104 = vpack.c.b16 %v3624, %v3608
        %v4105 = vpack.c.b16 %v3625, %v3609
        %v4106 = vpack.c.b16 %v3626, %v3610
        %v4107 = vpack.c.b16 %v3627, %v3611
        %v4108 = vpack.c.b16 %v3628, %v3612
        %v4109 = vpack.c.b16 %v3629, %v3613
        %v4110 = vpack.c.b16 %v3630, %v3614
        %v4111 = vpack.c.b16 %v3631, %v3615
        %v4112 = vpack.c.b16 %v3632, %v3616
        %v4113 = vpack.c.b16 %v3649, %v3633
        %v4114 = vpack.c.b16 %v3650, %v3634
        %v4115 = vpack.c.b16 %v3651, %v3635
        %v4116 = vpack.c.b16 %v3652, %v3636
        %v4117 = vpack.c.b16 %v3653, %v3637
        %v4118 = vpack.c.b16 %v3654, %v3638
        %v4119 = vpack.c.b16 %v3655, %v3639
        %v4120 = vpack.c.b16 %v3656, %v3640
        %v4121 = vpack.c.b16 %v3657, %v3641
        %v4122 = vpack.c.b16 %v3658, %v3642
        %v4123 = vpack.c.b16 %v3659, %v3643
        %v4124 = vpack.c.b16 %v3660, %v3644
        %v4125 = vpack.c.b16 %v3661, %v3645
        %v4126 = vpack.c.b16 %v3662, %v3646
        %v4127 = vpack.c.b16 %v3663, %v3647
        %v4128 = vpack.c.b16 %v3664, %v3648
        %v4129 = vpack.c.b16 %v3681, %v3665
        %v4130 = vpack.c.b16 %v3682, %v3666
        %v4131 = vpack.c.b16 %v3683, %v3667
        %v4132 = vpack.c.b16 %v3684, %v3668
        %v4133 = vpack.c.b16 %v3685, %v3669
        %v4134 = vpack.c.b16 %v3686, %v3670
        %v4135 = vpack.c.b16 %v3687, %v3671
        %v4136 = vpack.c.b16 %v3688, %v3672
        %v4137 = vpack.c.b16 %v3689, %v3673
        %v4138 = vpack.c.b16 %v3690, %v3674
        %v4139 = vpack.c.b16 %v3691, %v3675
        %v4140 = vpack.c.b16 %v3692, %v3676
        %v4141 = vpack.c.b16 %v3693, %v3677
        %v4142 = vpack.c.b16 %v3694, %v3678
        %v4143 = vpack.c.b16 %v3695, %v3679
        %v4144 = vpack.c.b16 %v3696, %v3680
        %v4145 = vpack.c.b16 %v3713, %v3697
        %v4146 = vpack.c.b16 %v3714, %v3698
        %v4147 = vpack.c.b16 %v3715, %v3699
        %v4148 = vpack.c.b16 %v3716, %v3700
        %v4149 = vpack.c.b16 %v3717, %v3701
        %v4150 = vpack.c.b16 %v3718, %v3702
        %v4151 = vpack.c.b16 %v3719, %v3703
        %v4152 = vpack.c.b16 %v3720, %v3704
        %v4153 = vpack.c.b16 %v3721, %v3705
        %v4154 = vpack.c.b16 %v3722, %v3706
        %v4155 = vpack.c.b16 %v3723, %v3707
        %v4156 = vpack.c.b16 %v3724, %v3708
        %v4157 = vpack.c.b16 %v3725, %v3709
        %v4158 = vpack.c.b16 %v3726, %v3710
        %v4159 = vpack.c.b16 %v3727, %v3711
        %v4160 = vpack.c.b16 %v3728, %v3712
        %v4161 = vpack.c.b16 %v3745, %v3729
        %v4162 = vpack.c.b16 %v3746, %v3730
        %v4163 = vpack.c.b16 %v3747, %v3731
        %v4164 = vpack.c.b16 %v3748, %v3732
        %v4165 = vpack.c.b16 %v3749, %v3733
        %v4166 = vpack.c.b16 %v3750, %v3734
        %v4167 = vpack.c.b16 %v3751, %v3735
        %v4168 = vpack.c.b16 %v3752, %v3736
        %v4169 = vpack.c.b16 %v3753, %v3737
        %v4170 = vpack.c.b16 %v3754, %v3738
        %v4171 = vpack.c.b16 %v3755, %v3739
        %v4172 = vpack.c.b16 %v3756, %v3740
        %v4173 = vpack.c.b16 %v3757, %v3741
        %v4174 = vpack.c.b16 %v3758, %v3742
        %v4175 = vpack.c.b16 %v3759, %v3743
        %v4176 = vpack.c.b16 %v3760, %v3744
        %v4177 = vpack.c.b16 %v3777, %v3761
        %v4178 = vpack.c.b16 %v3778, %v3762
        %v4179 = vpack.c.b16 %v3779, %v3763
        %v4180 = vpack.c.b16 %v3780, %v3764
        %v4181 = vpack.c.b16 %v3781, %v3765
        %v4182 = vpack.c.b16 %v3782, %v3766
        %v4183 = vpack.c.b16 %v3783, %v3767
        %v4184 = vpack.c.b16 %v3784, %v3768
        %v4185 = vpack.c.b16 %v3785, %v3769
        %v4186 = vpack.c.b16 %v3786, %v3770
        %v4187 = vpack.c.b16 %v3787, %v3771
        %v4188 = vpack.c.b16 %v3788, %v3772
        %v4189 = vpack.c.b16 %v3789, %v3773
        %v4190 = vpack.c.b16 %v3790, %v3774
        %v4191 = vpack.c.b16 %v3791, %v3775
        %v4192 = vpack.c.b16 %v3792, %v3776
        %v4193 = vpack.c.b16 %v3809, %v3793
        %v4194 = vpack.c.b16 %v3810, %v3794
        %v4195 = vpack.c.b16 %v3811, %v3795
        %v4196 = vpack.c.b16 %v3812, %v3796
        %v4197 = vpack.c.b16 %v3813, %v3797
        %v4198 = vpack.c.b16 %v3814, %v3798
        %v4199 = vpack.c.b16 %v3815, %v3799
        %v4200 = vpack.c.b16 %v3816, %v3800
        %v4201 = vpack.c.b16 %v3817, %v3801
        %v4202 = vpack.c.b16 %v3818, %v3802
        %v4203 = vpack.c.b16 %v3819, %v3803
        %v4204 = vpack.c.b16 %v3820, %v3804
        %v4205 = vpack.c.b16 %v3821, %v3805
        %v4206 = vpack.c.b16 %v3822, %v3806
        %v4207 = vpack.c.b16 %v3823, %v3807
        %v4208 = vpack.c.b16 %v3824, %v3808
        %v4209 = vpack.c.b16 %v3841, %v3825
        %v4210 = vpack.c.b16 %v3842, %v3826
        %v4211 = vpack.c.b16 %v3843, %v3827
        %v4212 = vpack.c.b16 %v3844, %v3828
        %v4213 = vpack.c.b16 %v3845, %v3829
        %v4214 = vpack.c.b16 %v3846, %v3830
        %v4215 = vpack.c.b16 %v3847, %v3831
        %v4216 = vpack.c.b16 %v3848, %v3832
        %v4217 = vpack.c.b16 %v3849, %v3833
        %v4218 = vpack.c.b16 %v3850, %v3834
        %v4219 = vpack.c.b16 %v3851, %v3835
        %v4220 = vpack.c.b16 %v3852, %v3836
        %v4221 = vpack.c.b16 %v3853, %v3837
        %v4222 = vpack.c.b16 %v3854, %v3838
        %v4223 = vpack.c.b16 %v3855, %v3839
        %v4224 = vpack.c.b16 %v3856, %v3840
        %v4225 = vpack.c.b16 %v3873, %v3857
        %v4226 = vpack.c.b16 %v3874, %v3858
        %v4227 = vpack.c.b16 %v3875, %v3859
        %v4228 = vpack.c.b16 %v3876, %v3860
        %v4229 = vpack.c.b16 %v3877, %v3861
        %v4230 = vpack.c.b16 %v3878, %v3862
        %v4231 = vpack.c.b16 %v3879, %v3863
        %v4232 = vpack.c.b16 %v3880, %v3864
        %v4233 = vpack.c.b16 %v3881, %v3865
        %v4234 = vpack.c.b16 %v3882, %v3866
        %v4235 = vpack.c.b16 %v3883, %v3867
        %v4236 = vpack.c.b16 %v3884, %v3868
        %v4237 = vpack.c.b16 %v3885, %v3869
        %v4238 = vpack.c.b16 %v3886, %v3870
        %v4239 = vpack.c.b16 %v3887, %v3871
        %v4240 = vpack.c.b16 %v3888, %v3872
        %v4241 = vpack.c.b16 %v3905, %v3889
        %v4242 = vpack.c.b16 %v3906, %v3890
        %v4243 = vpack.c.b16 %v3907, %v3891
        %v4244 = vpack.c.b16 %v3908, %v3892
        %v4245 = vpack.c.b16 %v3909, %v3893
        %v4246 = vpack.c.b16 %v3910, %v3894
        %v4247 = vpack.c.b16 %v3911, %v3895
        %v4248 = vpack.c.b16 %v3912, %v3896
        %v4249 = vpack.c.b16 %v3913, %v3897
        %v4250 = vpack.c.b16 %v3914, %v3898
        %v4251 = vpack.c.b16 %v3915, %v3899
        %v4252 = vpack.c.b16 %v3916, %v3900
        %v4253 = vpack.c.b16 %v3917, %v3901
        %v4254 = vpack.c.b16 %v3918, %v3902
        %v4255 = vpack.c.b16 %v3919, %v3903
        %v4256 = vpack.c.b16 %v3920, %v3904
        %v4257 = vpack.c.b16 %v3937, %v3921
        %v4258 = vpack.c.b16 %v3938, %v3922
        %v4259 = vpack.c.b16 %v3939, %v3923
        %v4260 = vpack.c.b16 %v3940, %v3924
        %v4261 = vpack.c.b16 %v3941, %v3925
        %v4262 = vpack.c.b16 %v3942, %v3926
        %v4263 = vpack.c.b16 %v3943, %v3927
        %v4264 = vpack.c.b16 %v3944, %v3928
        %v4265 = vpack.c.b16 %v3945, %v3929
        %v4266 = vpack.c.b16 %v3946, %v3930
        %v4267 = vpack.c.b16 %v3947, %v3931
        %v4268 = vpack.c.b16 %v3948, %v3932
        %v4269 = vpack.c.b16 %v3949, %v3933
        %v4270 = vpack.c.b16 %v3950, %v3934
        %v4271 = vpack.c.b16 %v3951, %v3935
        %v4272 = vpack.c.b16 %v3952, %v3936
        %v4273 = vpack.c.b16 %v3969, %v3953
        %v4274 = vpack.c.b16 %v3970, %v3954
        %v4275 = vpack.c.b16 %v3971, %v3955
        %v4276 = vpack.c.b16 %v3972, %v3956
        %v4277 = vpack.c.b16 %v3973, %v3957
        %v4278 = vpack.c.b16 %v3974, %v3958
        %v4279 = vpack.c.b16 %v3975, %v3959
        %v4280 = vpack.c.b16 %v3976, %v3960
        %v4281 = vpack.c.b16 %v3977, %v3961
        %v4282 = vpack.c.b16 %v3978, %v3962
        %v4283 = vpack.c.b16 %v3979, %v3963
        %v4284 = vpack.c.b16 %v3980, %v3964
        %v4285 = vpack.c.b16 %v3981, %v3965
        %v4286 = vpack.c.b16 %v3982, %v3966
        %v4287 = vpack.c.b16 %v3983, %v3967
        %v4288 = vpack.c.b16 %v3984, %v3968
        %v4289 = vpack.c.b16 %v4001, %v3985
        %v4290 = vpack.c.b16 %v4002, %v3986
        %v4291 = vpack.c.b16 %v4003, %v3987
        %v4292 = vpack.c.b16 %v4004, %v3988
        %v4293 = vpack.c.b16 %v4005, %v3989
        %v4294 = vpack.c.b16 %v4006, %v3990
        %v4295 = vpack.c.b16 %v4007, %v3991
        %v4296 = vpack.c.b16 %v4008, %v3992
        %v4297 = vpack.c.b16 %v4009, %v3993
        %v4298 = vpack.c.b16 %v4010, %v3994
        %v4299 = vpack.c.b16 %v4011, %v3995
        %v4300 = vpack.c.b16 %v4012, %v3996
        %v4301 = vpack.c.b16 %v4013, %v3997
        %v4302 = vpack.c.b16 %v4014, %v3998
        %v4303 = vpack.c.b16 %v4015, %v3999
        %v4304 = vpack.c.b16 %v4016, %v4000
        %v4305 = vpack.c.b16 %v4033, %v4017
        %v4306 = vpack.c.b16 %v4034, %v4018
        %v4307 = vpack.c.b16 %v4035, %v4019
        %v4308 = vpack.c.b16 %v4036, %v4020
        %v4309 = vpack.c.b16 %v4037, %v4021
        %v4310 = vpack.c.b16 %v4038, %v4022
        %v4311 = vpack.c.b16 %v4039, %v4023
        %v4312 = vpack.c.b16 %v4040, %v4024
        %v4313 = vpack.c.b16 %v4041, %v4025
        %v4314 = vpack.c.b16 %v4042, %v4026
        %v4315 = vpack.c.b16 %v4043, %v4027
        %v4316 = vpack.c.b16 %v4044, %v4028
        %v4317 = vpack.c.b16 %v4045, %v4029
        %v4318 = vpack.c.b16 %v4046, %v4030
        %v4319 = vpack.c.b16 %v4047, %v4031
        %v4320 = vpack.c.b16 %v4048, %v4032
        %v4321 = vpack.c.b16 %v4065, %v4049
        %v4322 = vpack.c.b16 %v4066, %v4050
        %v4323 = vpack.c.b16 %v4067, %v4051
        %v4324 = vpack.c.b16 %v4068, %v4052
        %v4325 = vpack.c.b16 %v4069, %v4053
        %v4326 = vpack.c.b16 %v4070, %v4054
        %v4327 = vpack.c.b16 %v4071, %v4055
        %v4328 = vpack.c.b16 %v4072, %v4056
        %v4329 = vpack.c.b16 %v4073, %v4057
        %v4330 = vpack.c.b16 %v4074, %v4058
        %v4331 = vpack.c.b16 %v4075, %v4059
        %v4332 = vpack.c.b16 %v4076, %v4060
        %v4333 = vpack.c.b16 %v4077, %v4061
        %v4334 = vpack.c.b16 %v4078, %v4062
        %v4335 = vpack.c.b16 %v4079, %v4063
        %v4336 = vpack.c.b16 %v4080, %v4064
        %4593 = vmatpush.bf16.msra.mxu0 %v4193
        %4594 = vmatpush.bf16.msra.mxu0 %v4177
        %4595 = vmatpush.bf16.msra.mxu0 %v4161
        %4596 = vmatpush.bf16.msra.mxu0 %v4145
        %4597 = vmatpush.bf16.msra.mxu0 %v4129
        %4598 = vmatpush.bf16.msra.mxu0 %v4113
        %4599 = vmatpush.bf16.msra.mxu0 %v4097
        %4600 = vmatpush.bf16.msra.mxu0 %v4081
        %4601 = vmatmul.bf16.gmra.mxu0 %v3019
        %v4602 = vpop.f32.mrf.mxu0
        %v4603 = vadd.f32 %v3281, %v4602
        %v4604 = vpop.f32.mrf.mxu0
        %v4605 = vadd.f32 %v3281, %v4604
        %4606 = vdwg.mxu0
        %4607 = vmatpush.bf16.msra.mxu0 %v4321
        %4608 = vmatpush.bf16.msra.mxu0 %v4305
        %4609 = vmatpush.bf16.msra.mxu0 %v4289
        %4610 = vmatpush.bf16.msra.mxu0 %v4273
        %4611 = vmatpush.bf16.msra.mxu0 %v4257
        %4612 = vmatpush.bf16.msra.mxu0 %v4241
        %4613 = vmatpush.bf16.msra.mxu0 %v4225
        %4614 = vmatpush.bf16.msra.mxu0 %v4209
        %4615 = vmatmul.bf16.gmra.mxu0 %v3020
        %v4616 = vpop.f32.mrf.mxu0
        %v4617 = vadd.f32 %v4603, %v4616
        %v4618 = vpop.f32.mrf.mxu0
        %v4619 = vadd.f32 %v4605, %v4618
        %4620 = vdwg.mxu0
        %4621 = vmatpush.bf16.msra.mxu0 %v4194
        %4622 = vmatpush.bf16.msra.mxu0 %v4178
        %4623 = vmatpush.bf16.msra.mxu0 %v4162
        %4624 = vmatpush.bf16.msra.mxu0 %v4146
        %4625 = vmatpush.bf16.msra.mxu0 %v4130
        %4626 = vmatpush.bf16.msra.mxu0 %v4114
        %4627 = vmatpush.bf16.msra.mxu0 %v4098
        %4628 = vmatpush.bf16.msra.mxu0 %v4082
        %4629 = vmatmul.bf16.gmra.mxu0 %v3019
        %v4630 = vpop.f32.mrf.mxu0
        %v4631 = vadd.f32 %v3282, %v4630
        %v4632 = vpop.f32.mrf.mxu0
        %v4633 = vadd.f32 %v3282, %v4632
        %4634 = vdwg.mxu0
        %4635 = vmatpush.bf16.msra.mxu0 %v4322
        %4636 = vmatpush.bf16.msra.mxu0 %v4306
        %4637 = vmatpush.bf16.msra.mxu0 %v4290
        %4638 = vmatpush.bf16.msra.mxu0 %v4274
        %4639 = vmatpush.bf16.msra.mxu0 %v4258
        %4640 = vmatpush.bf16.msra.mxu0 %v4242
        %4641 = vmatpush.bf16.msra.mxu0 %v4226
        %4642 = vmatpush.bf16.msra.mxu0 %v4210
        %4643 = vmatmul.bf16.gmra.mxu0 %v3020
        %v4644 = vpop.f32.mrf.mxu0
        %v4645 = vadd.f32 %v4631, %v4644
        %v4646 = vpop.f32.mrf.mxu0
        %v4647 = vadd.f32 %v4633, %v4646
        %4648 = vdwg.mxu0
        %4649 = vmatpush.bf16.msra.mxu0 %v4195
        %4650 = vmatpush.bf16.msra.mxu0 %v4179
        %4651 = vmatpush.bf16.msra.mxu0 %v4163
        %4652 = vmatpush.bf16.msra.mxu0 %v4147
        %4653 = vmatpush.bf16.msra.mxu0 %v4131
        %4654 = vmatpush.bf16.msra.mxu0 %v4115
        %4655 = vmatpush.bf16.msra.mxu0 %v4099
        %4656 = vmatpush.bf16.msra.mxu0 %v4083
        %4657 = vmatmul.bf16.gmra.mxu0 %v3019
        %v4658 = vpop.f32.mrf.mxu0
        %v4659 = vadd.f32 %v3283, %v4658
        %v4660 = vpop.f32.mrf.mxu0
        %v4661 = vadd.f32 %v3283, %v4660
        %4662 = vdwg.mxu0
        %4663 = vmatpush.bf16.msra.mxu0 %v4323
        %4664 = vmatpush.bf16.msra.mxu0 %v4307
        %4665 = vmatpush.bf16.msra.mxu0 %v4291
        %4666 = vmatpush.bf16.msra.mxu0 %v4275
        %4667 = vmatpush.bf16.msra.mxu0 %v4259
        %4668 = vmatpush.bf16.msra.mxu0 %v4243
        %4669 = vmatpush.bf16.msra.mxu0 %v4227
        %4670 = vmatpush.bf16.msra.mxu0 %v4211
        %4671 = vmatmul.bf16.gmra.mxu0 %v3020
        %v4672 = vpop.f32.mrf.mxu0
        %v4673 = vadd.f32 %v4659, %v4672
        %v4674 = vpop.f32.mrf.mxu0
        %v4675 = vadd.f32 %v4661, %v4674
        %4676 = vdwg.mxu0
        %4677 = vmatpush.bf16.msra.mxu0 %v4196
        %4678 = vmatpush.bf16.msra.mxu0 %v4180
        %4679 = vmatpush.bf16.msra.mxu0 %v4164
        %4680 = vmatpush.bf16.msra.mxu0 %v4148
        %4681 = vmatpush.bf16.msra.mxu0 %v4132
        %4682 = vmatpush.bf16.msra.mxu0 %v4116
        %4683 = vmatpush.bf16.msra.mxu0 %v4100
        %4684 = vmatpush.bf16.msra.mxu0 %v4084
        %4685 = vmatmul.bf16.gmra.mxu0 %v3019
        %v4686 = vpop.f32.mrf.mxu0
        %v4687 = vadd.f32 %v3284, %v4686
        %v4688 = vpop.f32.mrf.mxu0
        %v4689 = vadd.f32 %v3284, %v4688
        %4690 = vdwg.mxu0
        %4691 = vmatpush.bf16.msra.mxu0 %v4324
        %4692 = vmatpush.bf16.msra.mxu0 %v4308
        %4693 = vmatpush.bf16.msra.mxu0 %v4292
        %4694 = vmatpush.bf16.msra.mxu0 %v4276
        %4695 = vmatpush.bf16.msra.mxu0 %v4260
        %4696 = vmatpush.bf16.msra.mxu0 %v4244
        %4697 = vmatpush.bf16.msra.mxu0 %v4228
        %4698 = vmatpush.bf16.msra.mxu0 %v4212
        %4699 = vmatmul.bf16.gmra.mxu0 %v3020
        %v4700 = vpop.f32.mrf.mxu0
        %v4701 = vadd.f32 %v4687, %v4700
        %v4702 = vpop.f32.mrf.mxu0
        %v4703 = vadd.f32 %v4689, %v4702
        %4704 = vdwg.mxu0
        %4705 = vmatpush.bf16.msra.mxu0 %v4197
        %4706 = vmatpush.bf16.msra.mxu0 %v4181
        %4707 = vmatpush.bf16.msra.mxu0 %v4165
        %4708 = vmatpush.bf16.msra.mxu0 %v4149
        %4709 = vmatpush.bf16.msra.mxu0 %v4133
        %4710 = vmatpush.bf16.msra.mxu0 %v4117
        %4711 = vmatpush.bf16.msra.mxu0 %v4101
        %4712 = vmatpush.bf16.msra.mxu0 %v4085
        %4713 = vmatmul.bf16.gmra.mxu0 %v3019
        %v4714 = vpop.f32.mrf.mxu0
        %v4715 = vadd.f32 %v3285, %v4714
        %v4716 = vpop.f32.mrf.mxu0
        %v4717 = vadd.f32 %v3285, %v4716
        %4718 = vdwg.mxu0
        %4719 = vmatpush.bf16.msra.mxu0 %v4325
        %4720 = vmatpush.bf16.msra.mxu0 %v4309
        %4721 = vmatpush.bf16.msra.mxu0 %v4293
        %4722 = vmatpush.bf16.msra.mxu0 %v4277
        %4723 = vmatpush.bf16.msra.mxu0 %v4261
        %4724 = vmatpush.bf16.msra.mxu0 %v4245
        %4725 = vmatpush.bf16.msra.mxu0 %v4229
        %4726 = vmatpush.bf16.msra.mxu0 %v4213
        %4727 = vmatmul.bf16.gmra.mxu0 %v3020
        %v4728 = vpop.f32.mrf.mxu0
        %v4729 = vadd.f32 %v4715, %v4728
        %v4730 = vpop.f32.mrf.mxu0
        %v4731 = vadd.f32 %v4717, %v4730
        %4732 = vdwg.mxu0
        %4733 = vmatpush.bf16.msra.mxu0 %v4198
        %4734 = vmatpush.bf16.msra.mxu0 %v4182
        %4735 = vmatpush.bf16.msra.mxu0 %v4166
        %4736 = vmatpush.bf16.msra.mxu0 %v4150
        %4737 = vmatpush.bf16.msra.mxu0 %v4134
        %4738 = vmatpush.bf16.msra.mxu0 %v4118
        %4739 = vmatpush.bf16.msra.mxu0 %v4102
        %4740 = vmatpush.bf16.msra.mxu0 %v4086
        %4741 = vmatmul.bf16.gmra.mxu0 %v3019
        %v4742 = vpop.f32.mrf.mxu0
        %v4743 = vadd.f32 %v3286, %v4742
        %v4744 = vpop.f32.mrf.mxu0
        %v4745 = vadd.f32 %v3286, %v4744
        %4746 = vdwg.mxu0
        %4747 = vmatpush.bf16.msra.mxu0 %v4326
        %4748 = vmatpush.bf16.msra.mxu0 %v4310
        %4749 = vmatpush.bf16.msra.mxu0 %v4294
        %4750 = vmatpush.bf16.msra.mxu0 %v4278
        %4751 = vmatpush.bf16.msra.mxu0 %v4262
        %4752 = vmatpush.bf16.msra.mxu0 %v4246
        %4753 = vmatpush.bf16.msra.mxu0 %v4230
        %4754 = vmatpush.bf16.msra.mxu0 %v4214
        %4755 = vmatmul.bf16.gmra.mxu0 %v3020
        %v4756 = vpop.f32.mrf.mxu0
        %v4757 = vadd.f32 %v4743, %v4756
        %v4758 = vpop.f32.mrf.mxu0
        %v4759 = vadd.f32 %v4745, %v4758
        %4760 = vdwg.mxu0
        %4761 = vmatpush.bf16.msra.mxu0 %v4199
        %4762 = vmatpush.bf16.msra.mxu0 %v4183
        %4763 = vmatpush.bf16.msra.mxu0 %v4167
        %4764 = vmatpush.bf16.msra.mxu0 %v4151
        %4765 = vmatpush.bf16.msra.mxu0 %v4135
        %4766 = vmatpush.bf16.msra.mxu0 %v4119
        %4767 = vmatpush.bf16.msra.mxu0 %v4103
        %4768 = vmatpush.bf16.msra.mxu0 %v4087
        %4769 = vmatmul.bf16.gmra.mxu0 %v3019
        %v4770 = vpop.f32.mrf.mxu0
        %v4771 = vadd.f32 %v3287, %v4770
        %v4772 = vpop.f32.mrf.mxu0
        %v4773 = vadd.f32 %v3287, %v4772
        %4774 = vdwg.mxu0
        %4775 = vmatpush.bf16.msra.mxu0 %v4327
        %4776 = vmatpush.bf16.msra.mxu0 %v4311
        %4777 = vmatpush.bf16.msra.mxu0 %v4295
        %4778 = vmatpush.bf16.msra.mxu0 %v4279
        %4779 = vmatpush.bf16.msra.mxu0 %v4263
        %4780 = vmatpush.bf16.msra.mxu0 %v4247
        %4781 = vmatpush.bf16.msra.mxu0 %v4231
        %4782 = vmatpush.bf16.msra.mxu0 %v4215
        %4783 = vmatmul.bf16.gmra.mxu0 %v3020
        %v4784 = vpop.f32.mrf.mxu0
        %v4785 = vadd.f32 %v4771, %v4784
        %v4786 = vpop.f32.mrf.mxu0
        %v4787 = vadd.f32 %v4773, %v4786
        %4788 = vdwg.mxu0
        %4789 = vmatpush.bf16.msra.mxu0 %v4200
        %4790 = vmatpush.bf16.msra.mxu0 %v4184
        %4791 = vmatpush.bf16.msra.mxu0 %v4168
        %4792 = vmatpush.bf16.msra.mxu0 %v4152
        %4793 = vmatpush.bf16.msra.mxu0 %v4136
        %4794 = vmatpush.bf16.msra.mxu0 %v4120
        %4795 = vmatpush.bf16.msra.mxu0 %v4104
        %4796 = vmatpush.bf16.msra.mxu0 %v4088
        %4797 = vmatmul.bf16.gmra.mxu0 %v3019
        %v4798 = vpop.f32.mrf.mxu0
        %v4799 = vadd.f32 %v3288, %v4798
        %v4800 = vpop.f32.mrf.mxu0
        %v4801 = vadd.f32 %v3288, %v4800
        %4802 = vdwg.mxu0
        %4803 = vmatpush.bf16.msra.mxu0 %v4328
        %4804 = vmatpush.bf16.msra.mxu0 %v4312
        %4805 = vmatpush.bf16.msra.mxu0 %v4296
        %4806 = vmatpush.bf16.msra.mxu0 %v4280
        %4807 = vmatpush.bf16.msra.mxu0 %v4264
        %4808 = vmatpush.bf16.msra.mxu0 %v4248
        %4809 = vmatpush.bf16.msra.mxu0 %v4232
        %4810 = vmatpush.bf16.msra.mxu0 %v4216
        %4811 = vmatmul.bf16.gmra.mxu0 %v3020
        %v4812 = vpop.f32.mrf.mxu0
        %v4813 = vadd.f32 %v4799, %v4812
        %v4814 = vpop.f32.mrf.mxu0
        %v4815 = vadd.f32 %v4801, %v4814
        %4816 = vdwg.mxu0
        %4817 = vmatpush.bf16.msra.mxu0 %v4201
        %4818 = vmatpush.bf16.msra.mxu0 %v4185
        %4819 = vmatpush.bf16.msra.mxu0 %v4169
        %4820 = vmatpush.bf16.msra.mxu0 %v4153
        %4821 = vmatpush.bf16.msra.mxu0 %v4137
        %4822 = vmatpush.bf16.msra.mxu0 %v4121
        %4823 = vmatpush.bf16.msra.mxu0 %v4105
        %4824 = vmatpush.bf16.msra.mxu0 %v4089
        %4825 = vmatmul.bf16.gmra.mxu0 %v3019
        %v4826 = vpop.f32.mrf.mxu0
        %v4827 = vadd.f32 %v3289, %v4826
        %v4828 = vpop.f32.mrf.mxu0
        %v4829 = vadd.f32 %v3289, %v4828
        %4830 = vdwg.mxu0
        %4831 = vmatpush.bf16.msra.mxu0 %v4329
        %4832 = vmatpush.bf16.msra.mxu0 %v4313
        %4833 = vmatpush.bf16.msra.mxu0 %v4297
        %4834 = vmatpush.bf16.msra.mxu0 %v4281
        %4835 = vmatpush.bf16.msra.mxu0 %v4265
        %4836 = vmatpush.bf16.msra.mxu0 %v4249
        %4837 = vmatpush.bf16.msra.mxu0 %v4233
        %4838 = vmatpush.bf16.msra.mxu0 %v4217
        %4839 = vmatmul.bf16.gmra.mxu0 %v3020
        %v4840 = vpop.f32.mrf.mxu0
        %v4841 = vadd.f32 %v4827, %v4840
        %v4842 = vpop.f32.mrf.mxu0
        %v4843 = vadd.f32 %v4829, %v4842
        %4844 = vdwg.mxu0
        %4845 = vmatpush.bf16.msra.mxu0 %v4202
        %4846 = vmatpush.bf16.msra.mxu0 %v4186
        %4847 = vmatpush.bf16.msra.mxu0 %v4170
        %4848 = vmatpush.bf16.msra.mxu0 %v4154
        %4849 = vmatpush.bf16.msra.mxu0 %v4138
        %4850 = vmatpush.bf16.msra.mxu0 %v4122
        %4851 = vmatpush.bf16.msra.mxu0 %v4106
        %4852 = vmatpush.bf16.msra.mxu0 %v4090
        %4853 = vmatmul.bf16.gmra.mxu0 %v3019
        %v4854 = vpop.f32.mrf.mxu0
        %v4855 = vadd.f32 %v3290, %v4854
        %v4856 = vpop.f32.mrf.mxu0
        %v4857 = vadd.f32 %v3290, %v4856
        %4858 = vdwg.mxu0
        %4859 = vmatpush.bf16.msra.mxu0 %v4330
        %4860 = vmatpush.bf16.msra.mxu0 %v4314
        %4861 = vmatpush.bf16.msra.mxu0 %v4298
        %4862 = vmatpush.bf16.msra.mxu0 %v4282
        %4863 = vmatpush.bf16.msra.mxu0 %v4266
        %4864 = vmatpush.bf16.msra.mxu0 %v4250
        %4865 = vmatpush.bf16.msra.mxu0 %v4234
        %4866 = vmatpush.bf16.msra.mxu0 %v4218
        %4867 = vmatmul.bf16.gmra.mxu0 %v3020
        %v4868 = vpop.f32.mrf.mxu0
        %v4869 = vadd.f32 %v4855, %v4868
        %v4870 = vpop.f32.mrf.mxu0
        %v4871 = vadd.f32 %v4857, %v4870
        %4872 = vdwg.mxu0
        %4873 = vmatpush.bf16.msra.mxu0 %v4203
        %4874 = vmatpush.bf16.msra.mxu0 %v4187
        %4875 = vmatpush.bf16.msra.mxu0 %v4171
        %4876 = vmatpush.bf16.msra.mxu0 %v4155
        %4877 = vmatpush.bf16.msra.mxu0 %v4139
        %4878 = vmatpush.bf16.msra.mxu0 %v4123
        %4879 = vmatpush.bf16.msra.mxu0 %v4107
        %4880 = vmatpush.bf16.msra.mxu0 %v4091
        %4881 = vmatmul.bf16.gmra.mxu0 %v3019
        %v4882 = vpop.f32.mrf.mxu0
        %v4883 = vadd.f32 %v3291, %v4882
        %v4884 = vpop.f32.mrf.mxu0
        %v4885 = vadd.f32 %v3291, %v4884
        %4886 = vdwg.mxu0
        %4887 = vmatpush.bf16.msra.mxu0 %v4331
        %4888 = vmatpush.bf16.msra.mxu0 %v4315
        %4889 = vmatpush.bf16.msra.mxu0 %v4299
        %4890 = vmatpush.bf16.msra.mxu0 %v4283
        %4891 = vmatpush.bf16.msra.mxu0 %v4267
        %4892 = vmatpush.bf16.msra.mxu0 %v4251
        %4893 = vmatpush.bf16.msra.mxu0 %v4235
        %4894 = vmatpush.bf16.msra.mxu0 %v4219
        %4895 = vmatmul.bf16.gmra.mxu0 %v3020
        %v4896 = vpop.f32.mrf.mxu0
        %v4897 = vadd.f32 %v4883, %v4896
        %v4898 = vpop.f32.mrf.mxu0
        %v4899 = vadd.f32 %v4885, %v4898
        %4900 = vdwg.mxu0
        %4901 = vmatpush.bf16.msra.mxu0 %v4204
        %4902 = vmatpush.bf16.msra.mxu0 %v4188
        %4903 = vmatpush.bf16.msra.mxu0 %v4172
        %4904 = vmatpush.bf16.msra.mxu0 %v4156
        %4905 = vmatpush.bf16.msra.mxu0 %v4140
        %4906 = vmatpush.bf16.msra.mxu0 %v4124
        %4907 = vmatpush.bf16.msra.mxu0 %v4108
        %4908 = vmatpush.bf16.msra.mxu0 %v4092
        %4909 = vmatmul.bf16.gmra.mxu0 %v3019
        %v4910 = vpop.f32.mrf.mxu0
        %v4911 = vadd.f32 %v3292, %v4910
        %v4912 = vpop.f32.mrf.mxu0
        %v4913 = vadd.f32 %v3292, %v4912
        %4914 = vdwg.mxu0
        %4915 = vmatpush.bf16.msra.mxu0 %v4332
        %4916 = vmatpush.bf16.msra.mxu0 %v4316
        %4917 = vmatpush.bf16.msra.mxu0 %v4300
        %4918 = vmatpush.bf16.msra.mxu0 %v4284
        %4919 = vmatpush.bf16.msra.mxu0 %v4268
        %4920 = vmatpush.bf16.msra.mxu0 %v4252
        %4921 = vmatpush.bf16.msra.mxu0 %v4236
        %4922 = vmatpush.bf16.msra.mxu0 %v4220
        %4923 = vmatmul.bf16.gmra.mxu0 %v3020
        %v4924 = vpop.f32.mrf.mxu0
        %v4925 = vadd.f32 %v4911, %v4924
        %v4926 = vpop.f32.mrf.mxu0
        %v4927 = vadd.f32 %v4913, %v4926
        %4928 = vdwg.mxu0
        %4929 = vmatpush.bf16.msra.mxu0 %v4205
        %4930 = vmatpush.bf16.msra.mxu0 %v4189
        %4931 = vmatpush.bf16.msra.mxu0 %v4173
        %4932 = vmatpush.bf16.msra.mxu0 %v4157
        %4933 = vmatpush.bf16.msra.mxu0 %v4141
        %4934 = vmatpush.bf16.msra.mxu0 %v4125
        %4935 = vmatpush.bf16.msra.mxu0 %v4109
        %4936 = vmatpush.bf16.msra.mxu0 %v4093
        %4937 = vmatmul.bf16.gmra.mxu0 %v3019
        %v4938 = vpop.f32.mrf.mxu0
        %v4939 = vadd.f32 %v3293, %v4938
        %v4940 = vpop.f32.mrf.mxu0
        %v4941 = vadd.f32 %v3293, %v4940
        %4942 = vdwg.mxu0
        %4943 = vmatpush.bf16.msra.mxu0 %v4333
        %4944 = vmatpush.bf16.msra.mxu0 %v4317
        %4945 = vmatpush.bf16.msra.mxu0 %v4301
        %4946 = vmatpush.bf16.msra.mxu0 %v4285
        %4947 = vmatpush.bf16.msra.mxu0 %v4269
        %4948 = vmatpush.bf16.msra.mxu0 %v4253
        %4949 = vmatpush.bf16.msra.mxu0 %v4237
        %4950 = vmatpush.bf16.msra.mxu0 %v4221
        %4951 = vmatmul.bf16.gmra.mxu0 %v3020
        %v4952 = vpop.f32.mrf.mxu0
        %v4953 = vadd.f32 %v4939, %v4952
        %v4954 = vpop.f32.mrf.mxu0
        %v4955 = vadd.f32 %v4941, %v4954
        %4956 = vdwg.mxu0
        %4957 = vmatpush.bf16.msra.mxu0 %v4206
        %4958 = vmatpush.bf16.msra.mxu0 %v4190
        %4959 = vmatpush.bf16.msra.mxu0 %v4174
        %4960 = vmatpush.bf16.msra.mxu0 %v4158
        %4961 = vmatpush.bf16.msra.mxu0 %v4142
        %4962 = vmatpush.bf16.msra.mxu0 %v4126
        %4963 = vmatpush.bf16.msra.mxu0 %v4110
        %4964 = vmatpush.bf16.msra.mxu0 %v4094
        %4965 = vmatmul.bf16.gmra.mxu0 %v3019
        %v4966 = vpop.f32.mrf.mxu0
        %v4967 = vadd.f32 %v3294, %v4966
        %v4968 = vpop.f32.mrf.mxu0
        %v4969 = vadd.f32 %v3294, %v4968
        %4970 = vdwg.mxu0
        %4971 = vmatpush.bf16.msra.mxu0 %v4334
        %4972 = vmatpush.bf16.msra.mxu0 %v4318
        %4973 = vmatpush.bf16.msra.mxu0 %v4302
        %4974 = vmatpush.bf16.msra.mxu0 %v4286
        %4975 = vmatpush.bf16.msra.mxu0 %v4270
        %4976 = vmatpush.bf16.msra.mxu0 %v4254
        %4977 = vmatpush.bf16.msra.mxu0 %v4238
        %4978 = vmatpush.bf16.msra.mxu0 %v4222
        %4979 = vmatmul.bf16.gmra.mxu0 %v3020
        %v4980 = vpop.f32.mrf.mxu0
        %v4981 = vadd.f32 %v4967, %v4980
        %v4982 = vpop.f32.mrf.mxu0
        %v4983 = vadd.f32 %v4969, %v4982
        %4984 = vdwg.mxu0
        %4985 = vmatpush.bf16.msra.mxu0 %v4207
        %4986 = vmatpush.bf16.msra.mxu0 %v4191
        %4987 = vmatpush.bf16.msra.mxu0 %v4175
        %4988 = vmatpush.bf16.msra.mxu0 %v4159
        %4989 = vmatpush.bf16.msra.mxu0 %v4143
        %4990 = vmatpush.bf16.msra.mxu0 %v4127
        %4991 = vmatpush.bf16.msra.mxu0 %v4111
        %4992 = vmatpush.bf16.msra.mxu0 %v4095
        %4993 = vmatmul.bf16.gmra.mxu0 %v3019
        %v4994 = vpop.f32.mrf.mxu0
        %v4995 = vadd.f32 %v3295, %v4994
        %v4996 = vpop.f32.mrf.mxu0
        %v4997 = vadd.f32 %v3295, %v4996
        %4998 = vdwg.mxu0
        %4999 = vmatpush.bf16.msra.mxu0 %v4335
        %5000 = vmatpush.bf16.msra.mxu0 %v4319
        %5001 = vmatpush.bf16.msra.mxu0 %v4303
        %5002 = vmatpush.bf16.msra.mxu0 %v4287
        %5003 = vmatpush.bf16.msra.mxu0 %v4271
        %5004 = vmatpush.bf16.msra.mxu0 %v4255
        %5005 = vmatpush.bf16.msra.mxu0 %v4239
        %5006 = vmatpush.bf16.msra.mxu0 %v4223
        %5007 = vmatmul.bf16.gmra.mxu0 %v3020
        %v5008 = vpop.f32.mrf.mxu0
        %v5009 = vadd.f32 %v4995, %v5008
        %v5010 = vpop.f32.mrf.mxu0
        %v5011 = vadd.f32 %v4997, %v5010
        %5012 = vdwg.mxu0
        %5013 = vmatpush.bf16.msra.mxu0 %v4208
        %5014 = vmatpush.bf16.msra.mxu0 %v4192
        %5015 = vmatpush.bf16.msra.mxu0 %v4176
        %5016 = vmatpush.bf16.msra.mxu0 %v4160
        %5017 = vmatpush.bf16.msra.mxu0 %v4144
        %5018 = vmatpush.bf16.msra.mxu0 %v4128
        %5019 = vmatpush.bf16.msra.mxu0 %v4112
        %5020 = vmatpush.bf16.msra.mxu0 %v4096
        %5021 = vmatmul.bf16.gmra.mxu0 %v3019
        %v5022 = vpop.f32.mrf.mxu0
        %v5023 = vadd.f32 %v3296, %v5022
        %v5024 = vpop.f32.mrf.mxu0
        %v5025 = vadd.f32 %v3296, %v5024
        %5026 = vdwg.mxu0
        %5027 = vmatpush.bf16.msra.mxu0 %v4336
        %5028 = vmatpush.bf16.msra.mxu0 %v4320
        %5029 = vmatpush.bf16.msra.mxu0 %v4304
        %5030 = vmatpush.bf16.msra.mxu0 %v4288
        %5031 = vmatpush.bf16.msra.mxu0 %v4272
        %5032 = vmatpush.bf16.msra.mxu0 %v4256
        %5033 = vmatpush.bf16.msra.mxu0 %v4240
        %5034 = vmatpush.bf16.msra.mxu0 %v4224
        %5035 = vmatmul.bf16.gmra.mxu0 %v3020
        %v5036 = vpop.f32.mrf.mxu0
        %v5037 = vadd.f32 %v5023, %v5036
        %v5038 = vpop.f32.mrf.mxu0
        %v5039 = vadd.f32 %v5025, %v5038
        %5040 = vdwg.mxu0
        %v5041 = vmul.f32 %v4617, 0.5
        %v5042 = vmul.f32 %v4645, 0.5
        %v5043 = vmul.f32 %v4673, 0.5
        %v5044 = vmul.f32 %v4701, 0.5
        %v5045 = vmul.f32 %v4729, 0.5
        %v5046 = vmul.f32 %v4757, 0.5
        %v5047 = vmul.f32 %v4785, 0.5
        %v5048 = vmul.f32 %v4813, 0.5
        %v5049 = vmul.f32 %v4841, 0.5
        %v5050 = vmul.f32 %v4869, 0.5
        %v5051 = vmul.f32 %v4897, 0.5
        %v5052 = vmul.f32 %v4925, 0.5
        %v5053 = vmul.f32 %v4953, 0.5
        %v5054 = vmul.f32 %v4981, 0.5
        %v5055 = vmul.f32 %v5009, 0.5
        %v5056 = vmul.f32 %v5037, 0.5
        %v5057 = vmul.f32 %v4619, 0.5
        %v5058 = vmul.f32 %v4647, 0.5
        %v5059 = vmul.f32 %v4675, 0.5
        %v5060 = vmul.f32 %v4703, 0.5
        %v5061 = vmul.f32 %v4731, 0.5
        %v5062 = vmul.f32 %v4759, 0.5
        %v5063 = vmul.f32 %v4787, 0.5
        %v5064 = vmul.f32 %v4815, 0.5
        %v5065 = vmul.f32 %v4843, 0.5
        %v5066 = vmul.f32 %v4871, 0.5
        %v5067 = vmul.f32 %v4899, 0.5
        %v5068 = vmul.f32 %v4927, 0.5
        %v5069 = vmul.f32 %v4955, 0.5
        %v5070 = vmul.f32 %v4983, 0.5
        %v5071 = vmul.f32 %v5011, 0.5
        %v5072 = vmul.f32 %v5039, 0.5
        %v5073 = vmul.f32 %v4617, 0.70710677
        %v5074 = vmul.f32 %v4645, 0.70710677
        %v5075 = vmul.f32 %v4673, 0.70710677
        %v5076 = vmul.f32 %v4701, 0.70710677
        %v5077 = vmul.f32 %v4729, 0.70710677
        %v5078 = vmul.f32 %v4757, 0.70710677
        %v5079 = vmul.f32 %v4785, 0.70710677
        %v5080 = vmul.f32 %v4813, 0.70710677
        %v5081 = vmul.f32 %v4841, 0.70710677
        %v5082 = vmul.f32 %v4869, 0.70710677
        %v5083 = vmul.f32 %v4897, 0.70710677
        %v5084 = vmul.f32 %v4925, 0.70710677
        %v5085 = vmul.f32 %v4953, 0.70710677
        %v5086 = vmul.f32 %v4981, 0.70710677
        %v5087 = vmul.f32 %v5009, 0.70710677
        %v5088 = vmul.f32 %v5037, 0.70710677
        %v5089 = vmul.f32 %v4619, 0.70710677
        %v5090 = vmul.f32 %v4647, 0.70710677
        %v5091 = vmul.f32 %v4675, 0.70710677
        %v5092 = vmul.f32 %v4703, 0.70710677
        %v5093 = vmul.f32 %v4731, 0.70710677
        %v5094 = vmul.f32 %v4759, 0.70710677
        %v5095 = vmul.f32 %v4787, 0.70710677
        %v5096 = vmul.f32 %v4815, 0.70710677
        %v5097 = vmul.f32 %v4843, 0.70710677
        %v5098 = vmul.f32 %v4871, 0.70710677
        %v5099 = vmul.f32 %v4899, 0.70710677
        %v5100 = vmul.f32 %v4927, 0.70710677
        %v5101 = vmul.f32 %v4955, 0.70710677
        %v5102 = vmul.f32 %v4983, 0.70710677
        %v5103 = vmul.f32 %v5011, 0.70710677
        %v5104 = vmul.f32 %v5039, 0.70710677
        %v5105 = vmul.f32 %v5073, %v5073
        %v5106 = vmin.f32 16.0, %v5105
        %v5107 = vmul.f32 %v5106, 2.1237322e-06
        %v5108 = vadd.f32 %v5107, 0.00028619796
        %v5109 = vmul.f32 %v5106, %v5108
        %v5110 = vadd.f32 %v5109, 0.0036580483
        %v5111 = vmul.f32 %v5106, %v5110
        %v5112 = vadd.f32 %v5111, 0.05243302
        %v5113 = vmul.f32 %v5106, %v5112
        %v5114 = vadd.f32 %v5113, 0.18741608
        %v5115 = vmul.f32 %v5106, %v5114
        %v5116 = vadd.f32 %v5115, 1.1283791
        %v5117 = vmul.f32 %v5073, %v5116
        %v5118 = vmul.f32 %v5106, 3.8918573e-05
        %v5119 = vadd.f32 %v5118, 0.001143296
        %v5120 = vmul.f32 %v5106, %v5119
        %v5121 = vadd.f32 %v5120, 0.014752088
        %v5122 = vmul.f32 %v5106, %v5121
        %v5123 = vadd.f32 %v5122, 0.112945676
        %v5124 = vmul.f32 %v5106, %v5123
        %v5125 = vadd.f32 %v5124, 0.4994258
        %v5126 = vmul.f32 %v5106, %v5125
        %v5127 = vadd.f32 %v5126, 1.0
        %v5128 = vrcp.pop %v5127
        %v5129 = vmul.f32 %v5127, %v5128
        %v5130 = vsub.f32 1.0, %v5129
        %v5131 = vmul.f32 %v5128, %v5130
        %v5132 = vadd.f32 %v5128, %v5131
        %vm5133 = vweird.f32 %v5127
        %vm5134 = vweird.f32 %v5128
        %vm5135 = vmor %vm5133, %vm5134
        %v5136 = vsel %vm5135, %v5128, %v5132
        %v5137 = vand.u32 2147483647, %v5127
        %vm5138 = vcmp.eq.f32.partialorder %v5137, 8.507059e+37
        %v5139 = vand.u32 %v5127, 2147483648
        %v5140 = vor.u32 1.1754944e-38, %v5139
        %v5141 = vsel %vm5138, %v5140, %v5136
        %v5142 = vmul.f32 %v5117, %v5141
        %v5143 = vmin.f32 %v5142, 1.0
        %v5144 = vmax.f32 %v5143, -1.0
        %v5145 = vmul.f32 %v5074, %v5074
        %v5146 = vmin.f32 16.0, %v5145
        %v5147 = vmul.f32 %v5146, 2.1237322e-06
        %v5148 = vadd.f32 %v5147, 0.00028619796
        %v5149 = vmul.f32 %v5146, %v5148
        %v5150 = vadd.f32 %v5149, 0.0036580483
        %v5151 = vmul.f32 %v5146, %v5150
        %v5152 = vadd.f32 %v5151, 0.05243302
        %v5153 = vmul.f32 %v5146, %v5152
        %v5154 = vadd.f32 %v5153, 0.18741608
        %v5155 = vmul.f32 %v5146, %v5154
        %v5156 = vadd.f32 %v5155, 1.1283791
        %v5157 = vmul.f32 %v5074, %v5156
        %v5158 = vmul.f32 %v5146, 3.8918573e-05
        %v5159 = vadd.f32 %v5158, 0.001143296
        %v5160 = vmul.f32 %v5146, %v5159
        %v5161 = vadd.f32 %v5160, 0.014752088
        %v5162 = vmul.f32 %v5146, %v5161
        %v5163 = vadd.f32 %v5162, 0.112945676
        %v5164 = vmul.f32 %v5146, %v5163
        %v5165 = vadd.f32 %v5164, 0.4994258
        %v5166 = vmul.f32 %v5146, %v5165
        %v5167 = vadd.f32 %v5166, 1.0
        %v5168 = vrcp.pop %v5167
        %v5169 = vmul.f32 %v5167, %v5168
        %v5170 = vsub.f32 1.0, %v5169
        %v5171 = vmul.f32 %v5168, %v5170
        %v5172 = vadd.f32 %v5168, %v5171
        %vm5173 = vweird.f32 %v5167
        %vm5174 = vweird.f32 %v5168
        %vm5175 = vmor %vm5173, %vm5174
        %v5176 = vsel %vm5175, %v5168, %v5172
        %v5177 = vand.u32 2147483647, %v5167
        %vm5178 = vcmp.eq.f32.partialorder %v5177, 8.507059e+37
        %v5179 = vand.u32 %v5167, 2147483648
        %v5180 = vor.u32 1.1754944e-38, %v5179
        %v5181 = vsel %vm5178, %v5180, %v5176
        %v5182 = vmul.f32 %v5157, %v5181
        %v5183 = vmin.f32 %v5182, 1.0
        %v5184 = vmax.f32 %v5183, -1.0
        %v5185 = vmul.f32 %v5075, %v5075
        %v5186 = vmin.f32 16.0, %v5185
        %v5187 = vmul.f32 %v5186, 2.1237322e-06
        %v5188 = vadd.f32 %v5187, 0.00028619796
        %v5189 = vmul.f32 %v5186, %v5188
        %v5190 = vadd.f32 %v5189, 0.0036580483
        %v5191 = vmul.f32 %v5186, %v5190
        %v5192 = vadd.f32 %v5191, 0.05243302
        %v5193 = vmul.f32 %v5186, %v5192
        %v5194 = vadd.f32 %v5193, 0.18741608
        %v5195 = vmul.f32 %v5186, %v5194
        %v5196 = vadd.f32 %v5195, 1.1283791
        %v5197 = vmul.f32 %v5075, %v5196
        %v5198 = vmul.f32 %v5186, 3.8918573e-05
        %v5199 = vadd.f32 %v5198, 0.001143296
        %v5200 = vmul.f32 %v5186, %v5199
        %v5201 = vadd.f32 %v5200, 0.014752088
        %v5202 = vmul.f32 %v5186, %v5201
        %v5203 = vadd.f32 %v5202, 0.112945676
        %v5204 = vmul.f32 %v5186, %v5203
        %v5205 = vadd.f32 %v5204, 0.4994258
        %v5206 = vmul.f32 %v5186, %v5205
        %v5207 = vadd.f32 %v5206, 1.0
        %v5208 = vrcp.pop %v5207
        %v5209 = vmul.f32 %v5207, %v5208
        %v5210 = vsub.f32 1.0, %v5209
        %v5211 = vmul.f32 %v5208, %v5210
        %v5212 = vadd.f32 %v5208, %v5211
        %vm5213 = vweird.f32 %v5207
        %vm5214 = vweird.f32 %v5208
        %vm5215 = vmor %vm5213, %vm5214
        %v5216 = vsel %vm5215, %v5208, %v5212
        %v5217 = vand.u32 2147483647, %v5207
        %vm5218 = vcmp.eq.f32.partialorder %v5217, 8.507059e+37
        %v5219 = vand.u32 %v5207, 2147483648
        %v5220 = vor.u32 1.1754944e-38, %v5219
        %v5221 = vsel %vm5218, %v5220, %v5216
        %v5222 = vmul.f32 %v5197, %v5221
        %v5223 = vmin.f32 %v5222, 1.0
        %v5224 = vmax.f32 %v5223, -1.0
        %v5225 = vmul.f32 %v5076, %v5076
        %v5226 = vmin.f32 16.0, %v5225
        %v5227 = vmul.f32 %v5226, 2.1237322e-06
        %v5228 = vadd.f32 %v5227, 0.00028619796
        %v5229 = vmul.f32 %v5226, %v5228
        %v5230 = vadd.f32 %v5229, 0.0036580483
        %v5231 = vmul.f32 %v5226, %v5230
        %v5232 = vadd.f32 %v5231, 0.05243302
        %v5233 = vmul.f32 %v5226, %v5232
        %v5234 = vadd.f32 %v5233, 0.18741608
        %v5235 = vmul.f32 %v5226, %v5234
        %v5236 = vadd.f32 %v5235, 1.1283791
        %v5237 = vmul.f32 %v5076, %v5236
        %v5238 = vmul.f32 %v5226, 3.8918573e-05
        %v5239 = vadd.f32 %v5238, 0.001143296
        %v5240 = vmul.f32 %v5226, %v5239
        %v5241 = vadd.f32 %v5240, 0.014752088
        %v5242 = vmul.f32 %v5226, %v5241
        %v5243 = vadd.f32 %v5242, 0.112945676
        %v5244 = vmul.f32 %v5226, %v5243
        %v5245 = vadd.f32 %v5244, 0.4994258
        %v5246 = vmul.f32 %v5226, %v5245
        %v5247 = vadd.f32 %v5246, 1.0
        %v5248 = vrcp.pop %v5247
        %v5249 = vmul.f32 %v5247, %v5248
        %v5250 = vsub.f32 1.0, %v5249
        %v5251 = vmul.f32 %v5248, %v5250
        %v5252 = vadd.f32 %v5248, %v5251
        %vm5253 = vweird.f32 %v5247
        %vm5254 = vweird.f32 %v5248
        %vm5255 = vmor %vm5253, %vm5254
        %v5256 = vsel %vm5255, %v5248, %v5252
        %v5257 = vand.u32 2147483647, %v5247
        %vm5258 = vcmp.eq.f32.partialorder %v5257, 8.507059e+37
        %v5259 = vand.u32 %v5247, 2147483648
        %v5260 = vor.u32 1.1754944e-38, %v5259
        %v5261 = vsel %vm5258, %v5260, %v5256
        %v5262 = vmul.f32 %v5237, %v5261
        %v5263 = vmin.f32 %v5262, 1.0
        %v5264 = vmax.f32 %v5263, -1.0
        %v5265 = vmul.f32 %v5077, %v5077
        %v5266 = vmin.f32 16.0, %v5265
        %v5267 = vmul.f32 %v5266, 2.1237322e-06
        %v5268 = vadd.f32 %v5267, 0.00028619796
        %v5269 = vmul.f32 %v5266, %v5268
        %v5270 = vadd.f32 %v5269, 0.0036580483
        %v5271 = vmul.f32 %v5266, %v5270
        %v5272 = vadd.f32 %v5271, 0.05243302
        %v5273 = vmul.f32 %v5266, %v5272
        %v5274 = vadd.f32 %v5273, 0.18741608
        %v5275 = vmul.f32 %v5266, %v5274
        %v5276 = vadd.f32 %v5275, 1.1283791
        %v5277 = vmul.f32 %v5077, %v5276
        %v5278 = vmul.f32 %v5266, 3.8918573e-05
        %v5279 = vadd.f32 %v5278, 0.001143296
        %v5280 = vmul.f32 %v5266, %v5279
        %v5281 = vadd.f32 %v5280, 0.014752088
        %v5282 = vmul.f32 %v5266, %v5281
        %v5283 = vadd.f32 %v5282, 0.112945676
        %v5284 = vmul.f32 %v5266, %v5283
        %v5285 = vadd.f32 %v5284, 0.4994258
        %v5286 = vmul.f32 %v5266, %v5285
        %v5287 = vadd.f32 %v5286, 1.0
        %v5288 = vrcp.pop %v5287
        %v5289 = vmul.f32 %v5287, %v5288
        %v5290 = vsub.f32 1.0, %v5289
        %v5291 = vmul.f32 %v5288, %v5290
        %v5292 = vadd.f32 %v5288, %v5291
        %vm5293 = vweird.f32 %v5287
        %vm5294 = vweird.f32 %v5288
        %vm5295 = vmor %vm5293, %vm5294
        %v5296 = vsel %vm5295, %v5288, %v5292
        %v5297 = vand.u32 2147483647, %v5287
        %vm5298 = vcmp.eq.f32.partialorder %v5297, 8.507059e+37
        %v5299 = vand.u32 %v5287, 2147483648
        %v5300 = vor.u32 1.1754944e-38, %v5299
        %v5301 = vsel %vm5298, %v5300, %v5296
        %v5302 = vmul.f32 %v5277, %v5301
        %v5303 = vmin.f32 %v5302, 1.0
        %v5304 = vmax.f32 %v5303, -1.0
        %v5305 = vmul.f32 %v5078, %v5078
        %v5306 = vmin.f32 16.0, %v5305
        %v5307 = vmul.f32 %v5306, 2.1237322e-06
        %v5308 = vadd.f32 %v5307, 0.00028619796
        %v5309 = vmul.f32 %v5306, %v5308
        %v5310 = vadd.f32 %v5309, 0.0036580483
        %v5311 = vmul.f32 %v5306, %v5310
        %v5312 = vadd.f32 %v5311, 0.05243302
        %v5313 = vmul.f32 %v5306, %v5312
        %v5314 = vadd.f32 %v5313, 0.18741608
        %v5315 = vmul.f32 %v5306, %v5314
        %v5316 = vadd.f32 %v5315, 1.1283791
        %v5317 = vmul.f32 %v5078, %v5316
        %v5318 = vmul.f32 %v5306, 3.8918573e-05
        %v5319 = vadd.f32 %v5318, 0.001143296
        %v5320 = vmul.f32 %v5306, %v5319
        %v5321 = vadd.f32 %v5320, 0.014752088
        %v5322 = vmul.f32 %v5306, %v5321
        %v5323 = vadd.f32 %v5322, 0.112945676
        %v5324 = vmul.f32 %v5306, %v5323
        %v5325 = vadd.f32 %v5324, 0.4994258
        %v5326 = vmul.f32 %v5306, %v5325
        %v5327 = vadd.f32 %v5326, 1.0
        %v5328 = vrcp.pop %v5327
        %v5329 = vmul.f32 %v5327, %v5328
        %v5330 = vsub.f32 1.0, %v5329
        %v5331 = vmul.f32 %v5328, %v5330
        %v5332 = vadd.f32 %v5328, %v5331
        %vm5333 = vweird.f32 %v5327
        %vm5334 = vweird.f32 %v5328
        %vm5335 = vmor %vm5333, %vm5334
        %v5336 = vsel %vm5335, %v5328, %v5332
        %v5337 = vand.u32 2147483647, %v5327
        %vm5338 = vcmp.eq.f32.partialorder %v5337, 8.507059e+37
        %v5339 = vand.u32 %v5327, 2147483648
        %v5340 = vor.u32 1.1754944e-38, %v5339
        %v5341 = vsel %vm5338, %v5340, %v5336
        %v5342 = vmul.f32 %v5317, %v5341
        %v5343 = vmin.f32 %v5342, 1.0
        %v5344 = vmax.f32 %v5343, -1.0
        %v5345 = vmul.f32 %v5079, %v5079
        %v5346 = vmin.f32 16.0, %v5345
        %v5347 = vmul.f32 %v5346, 2.1237322e-06
        %v5348 = vadd.f32 %v5347, 0.00028619796
        %v5349 = vmul.f32 %v5346, %v5348
        %v5350 = vadd.f32 %v5349, 0.0036580483
        %v5351 = vmul.f32 %v5346, %v5350
        %v5352 = vadd.f32 %v5351, 0.05243302
        %v5353 = vmul.f32 %v5346, %v5352
        %v5354 = vadd.f32 %v5353, 0.18741608
        %v5355 = vmul.f32 %v5346, %v5354
        %v5356 = vadd.f32 %v5355, 1.1283791
        %v5357 = vmul.f32 %v5079, %v5356
        %v5358 = vmul.f32 %v5346, 3.8918573e-05
        %v5359 = vadd.f32 %v5358, 0.001143296
        %v5360 = vmul.f32 %v5346, %v5359
        %v5361 = vadd.f32 %v5360, 0.014752088
        %v5362 = vmul.f32 %v5346, %v5361
        %v5363 = vadd.f32 %v5362, 0.112945676
        %v5364 = vmul.f32 %v5346, %v5363
        %v5365 = vadd.f32 %v5364, 0.4994258
        %v5366 = vmul.f32 %v5346, %v5365
        %v5367 = vadd.f32 %v5366, 1.0
        %v5368 = vrcp.pop %v5367
        %v5369 = vmul.f32 %v5367, %v5368
        %v5370 = vsub.f32 1.0, %v5369
        %v5371 = vmul.f32 %v5368, %v5370
        %v5372 = vadd.f32 %v5368, %v5371
        %vm5373 = vweird.f32 %v5367
        %vm5374 = vweird.f32 %v5368
        %vm5375 = vmor %vm5373, %vm5374
        %v5376 = vsel %vm5375, %v5368, %v5372
        %v5377 = vand.u32 2147483647, %v5367
        %vm5378 = vcmp.eq.f32.partialorder %v5377, 8.507059e+37
        %v5379 = vand.u32 %v5367, 2147483648
        %v5380 = vor.u32 1.1754944e-38, %v5379
        %v5381 = vsel %vm5378, %v5380, %v5376
        %v5382 = vmul.f32 %v5357, %v5381
        %v5383 = vmin.f32 %v5382, 1.0
        %v5384 = vmax.f32 %v5383, -1.0
        %v5385 = vmul.f32 %v5080, %v5080
        %v5386 = vmin.f32 16.0, %v5385
        %v5387 = vmul.f32 %v5386, 2.1237322e-06
        %v5388 = vadd.f32 %v5387, 0.00028619796
        %v5389 = vmul.f32 %v5386, %v5388
        %v5390 = vadd.f32 %v5389, 0.0036580483
        %v5391 = vmul.f32 %v5386, %v5390
        %v5392 = vadd.f32 %v5391, 0.05243302
        %v5393 = vmul.f32 %v5386, %v5392
        %v5394 = vadd.f32 %v5393, 0.18741608
        %v5395 = vmul.f32 %v5386, %v5394
        %v5396 = vadd.f32 %v5395, 1.1283791
        %v5397 = vmul.f32 %v5080, %v5396
        %v5398 = vmul.f32 %v5386, 3.8918573e-05
        %v5399 = vadd.f32 %v5398, 0.001143296
        %v5400 = vmul.f32 %v5386, %v5399
        %v5401 = vadd.f32 %v5400, 0.014752088
        %v5402 = vmul.f32 %v5386, %v5401
        %v5403 = vadd.f32 %v5402, 0.112945676
        %v5404 = vmul.f32 %v5386, %v5403
        %v5405 = vadd.f32 %v5404, 0.4994258
        %v5406 = vmul.f32 %v5386, %v5405
        %v5407 = vadd.f32 %v5406, 1.0
        %v5408 = vrcp.pop %v5407
        %v5409 = vmul.f32 %v5407, %v5408
        %v5410 = vsub.f32 1.0, %v5409
        %v5411 = vmul.f32 %v5408, %v5410
        %v5412 = vadd.f32 %v5408, %v5411
        %vm5413 = vweird.f32 %v5407
        %vm5414 = vweird.f32 %v5408
        %vm5415 = vmor %vm5413, %vm5414
        %v5416 = vsel %vm5415, %v5408, %v5412
        %v5417 = vand.u32 2147483647, %v5407
        %vm5418 = vcmp.eq.f32.partialorder %v5417, 8.507059e+37
        %v5419 = vand.u32 %v5407, 2147483648
        %v5420 = vor.u32 1.1754944e-38, %v5419
        %v5421 = vsel %vm5418, %v5420, %v5416
        %v5422 = vmul.f32 %v5397, %v5421
        %v5423 = vmin.f32 %v5422, 1.0
        %v5424 = vmax.f32 %v5423, -1.0
        %v5425 = vmul.f32 %v5081, %v5081
        %v5426 = vmin.f32 16.0, %v5425
        %v5427 = vmul.f32 %v5426, 2.1237322e-06
        %v5428 = vadd.f32 %v5427, 0.00028619796
        %v5429 = vmul.f32 %v5426, %v5428
        %v5430 = vadd.f32 %v5429, 0.0036580483
        %v5431 = vmul.f32 %v5426, %v5430
        %v5432 = vadd.f32 %v5431, 0.05243302
        %v5433 = vmul.f32 %v5426, %v5432
        %v5434 = vadd.f32 %v5433, 0.18741608
        %v5435 = vmul.f32 %v5426, %v5434
        %v5436 = vadd.f32 %v5435, 1.1283791
        %v5437 = vmul.f32 %v5081, %v5436
        %v5438 = vmul.f32 %v5426, 3.8918573e-05
        %v5439 = vadd.f32 %v5438, 0.001143296
        %v5440 = vmul.f32 %v5426, %v5439
        %v5441 = vadd.f32 %v5440, 0.014752088
        %v5442 = vmul.f32 %v5426, %v5441
        %v5443 = vadd.f32 %v5442, 0.112945676
        %v5444 = vmul.f32 %v5426, %v5443
        %v5445 = vadd.f32 %v5444, 0.4994258
        %v5446 = vmul.f32 %v5426, %v5445
        %v5447 = vadd.f32 %v5446, 1.0
        %v5448 = vrcp.pop %v5447
        %v5449 = vmul.f32 %v5447, %v5448
        %v5450 = vsub.f32 1.0, %v5449
        %v5451 = vmul.f32 %v5448, %v5450
        %v5452 = vadd.f32 %v5448, %v5451
        %vm5453 = vweird.f32 %v5447
        %vm5454 = vweird.f32 %v5448
        %vm5455 = vmor %vm5453, %vm5454
        %v5456 = vsel %vm5455, %v5448, %v5452
        %v5457 = vand.u32 2147483647, %v5447
        %vm5458 = vcmp.eq.f32.partialorder %v5457, 8.507059e+37
        %v5459 = vand.u32 %v5447, 2147483648
        %v5460 = vor.u32 1.1754944e-38, %v5459
        %v5461 = vsel %vm5458, %v5460, %v5456
        %v5462 = vmul.f32 %v5437, %v5461
        %v5463 = vmin.f32 %v5462, 1.0
        %v5464 = vmax.f32 %v5463, -1.0
        %v5465 = vmul.f32 %v5082, %v5082
        %v5466 = vmin.f32 16.0, %v5465
        %v5467 = vmul.f32 %v5466, 2.1237322e-06
        %v5468 = vadd.f32 %v5467, 0.00028619796
        %v5469 = vmul.f32 %v5466, %v5468
        %v5470 = vadd.f32 %v5469, 0.0036580483
        %v5471 = vmul.f32 %v5466, %v5470
        %v5472 = vadd.f32 %v5471, 0.05243302
        %v5473 = vmul.f32 %v5466, %v5472
        %v5474 = vadd.f32 %v5473, 0.18741608
        %v5475 = vmul.f32 %v5466, %v5474
        %v5476 = vadd.f32 %v5475, 1.1283791
        %v5477 = vmul.f32 %v5082, %v5476
        %v5478 = vmul.f32 %v5466, 3.8918573e-05
        %v5479 = vadd.f32 %v5478, 0.001143296
        %v5480 = vmul.f32 %v5466, %v5479
        %v5481 = vadd.f32 %v5480, 0.014752088
        %v5482 = vmul.f32 %v5466, %v5481
        %v5483 = vadd.f32 %v5482, 0.112945676
        %v5484 = vmul.f32 %v5466, %v5483
        %v5485 = vadd.f32 %v5484, 0.4994258
        %v5486 = vmul.f32 %v5466, %v5485
        %v5487 = vadd.f32 %v5486, 1.0
        %v5488 = vrcp.pop %v5487
        %v5489 = vmul.f32 %v5487, %v5488
        %v5490 = vsub.f32 1.0, %v5489
        %v5491 = vmul.f32 %v5488, %v5490
        %v5492 = vadd.f32 %v5488, %v5491
        %vm5493 = vweird.f32 %v5487
        %vm5494 = vweird.f32 %v5488
        %vm5495 = vmor %vm5493, %vm5494
        %v5496 = vsel %vm5495, %v5488, %v5492
        %v5497 = vand.u32 2147483647, %v5487
        %vm5498 = vcmp.eq.f32.partialorder %v5497, 8.507059e+37
        %v5499 = vand.u32 %v5487, 2147483648
        %v5500 = vor.u32 1.1754944e-38, %v5499
        %v5501 = vsel %vm5498, %v5500, %v5496
        %v5502 = vmul.f32 %v5477, %v5501
        %v5503 = vmin.f32 %v5502, 1.0
        %v5504 = vmax.f32 %v5503, -1.0
        %v5505 = vmul.f32 %v5083, %v5083
        %v5506 = vmin.f32 16.0, %v5505
        %v5507 = vmul.f32 %v5506, 2.1237322e-06
        %v5508 = vadd.f32 %v5507, 0.00028619796
        %v5509 = vmul.f32 %v5506, %v5508
        %v5510 = vadd.f32 %v5509, 0.0036580483
        %v5511 = vmul.f32 %v5506, %v5510
        %v5512 = vadd.f32 %v5511, 0.05243302
        %v5513 = vmul.f32 %v5506, %v5512
        %v5514 = vadd.f32 %v5513, 0.18741608
        %v5515 = vmul.f32 %v5506, %v5514
        %v5516 = vadd.f32 %v5515, 1.1283791
        %v5517 = vmul.f32 %v5083, %v5516
        %v5518 = vmul.f32 %v5506, 3.8918573e-05
        %v5519 = vadd.f32 %v5518, 0.001143296
        %v5520 = vmul.f32 %v5506, %v5519
        %v5521 = vadd.f32 %v5520, 0.014752088
        %v5522 = vmul.f32 %v5506, %v5521
        %v5523 = vadd.f32 %v5522, 0.112945676
        %v5524 = vmul.f32 %v5506, %v5523
        %v5525 = vadd.f32 %v5524, 0.4994258
        %v5526 = vmul.f32 %v5506, %v5525
        %v5527 = vadd.f32 %v5526, 1.0
        %v5528 = vrcp.pop %v5527
        %v5529 = vmul.f32 %v5527, %v5528
        %v5530 = vsub.f32 1.0, %v5529
        %v5531 = vmul.f32 %v5528, %v5530
        %v5532 = vadd.f32 %v5528, %v5531
        %vm5533 = vweird.f32 %v5527
        %vm5534 = vweird.f32 %v5528
        %vm5535 = vmor %vm5533, %vm5534
        %v5536 = vsel %vm5535, %v5528, %v5532
        %v5537 = vand.u32 2147483647, %v5527
        %vm5538 = vcmp.eq.f32.partialorder %v5537, 8.507059e+37
        %v5539 = vand.u32 %v5527, 2147483648
        %v5540 = vor.u32 1.1754944e-38, %v5539
        %v5541 = vsel %vm5538, %v5540, %v5536
        %v5542 = vmul.f32 %v5517, %v5541
        %v5543 = vmin.f32 %v5542, 1.0
        %v5544 = vmax.f32 %v5543, -1.0
        %v5545 = vmul.f32 %v5084, %v5084
        %v5546 = vmin.f32 16.0, %v5545
        %v5547 = vmul.f32 %v5546, 2.1237322e-06
        %v5548 = vadd.f32 %v5547, 0.00028619796
        %v5549 = vmul.f32 %v5546, %v5548
        %v5550 = vadd.f32 %v5549, 0.0036580483
        %v5551 = vmul.f32 %v5546, %v5550
        %v5552 = vadd.f32 %v5551, 0.05243302
        %v5553 = vmul.f32 %v5546, %v5552
        %v5554 = vadd.f32 %v5553, 0.18741608
        %v5555 = vmul.f32 %v5546, %v5554
        %v5556 = vadd.f32 %v5555, 1.1283791
        %v5557 = vmul.f32 %v5084, %v5556
        %v5558 = vmul.f32 %v5546, 3.8918573e-05
        %v5559 = vadd.f32 %v5558, 0.001143296
        %v5560 = vmul.f32 %v5546, %v5559
        %v5561 = vadd.f32 %v5560, 0.014752088
        %v5562 = vmul.f32 %v5546, %v5561
        %v5563 = vadd.f32 %v5562, 0.112945676
        %v5564 = vmul.f32 %v5546, %v5563
        %v5565 = vadd.f32 %v5564, 0.4994258
        %v5566 = vmul.f32 %v5546, %v5565
        %v5567 = vadd.f32 %v5566, 1.0
        %v5568 = vrcp.pop %v5567
        %v5569 = vmul.f32 %v5567, %v5568
        %v5570 = vsub.f32 1.0, %v5569
        %v5571 = vmul.f32 %v5568, %v5570
        %v5572 = vadd.f32 %v5568, %v5571
        %vm5573 = vweird.f32 %v5567
        %vm5574 = vweird.f32 %v5568
        %vm5575 = vmor %vm5573, %vm5574
        %v5576 = vsel %vm5575, %v5568, %v5572
        %v5577 = vand.u32 2147483647, %v5567
        %vm5578 = vcmp.eq.f32.partialorder %v5577, 8.507059e+37
        %v5579 = vand.u32 %v5567, 2147483648
        %v5580 = vor.u32 1.1754944e-38, %v5579
        %v5581 = vsel %vm5578, %v5580, %v5576
        %v5582 = vmul.f32 %v5557, %v5581
        %v5583 = vmin.f32 %v5582, 1.0
        %v5584 = vmax.f32 %v5583, -1.0
        %v5585 = vmul.f32 %v5085, %v5085
        %v5586 = vmin.f32 16.0, %v5585
        %v5587 = vmul.f32 %v5586, 2.1237322e-06
        %v5588 = vadd.f32 %v5587, 0.00028619796
        %v5589 = vmul.f32 %v5586, %v5588
        %v5590 = vadd.f32 %v5589, 0.0036580483
        %v5591 = vmul.f32 %v5586, %v5590
        %v5592 = vadd.f32 %v5591, 0.05243302
        %v5593 = vmul.f32 %v5586, %v5592
        %v5594 = vadd.f32 %v5593, 0.18741608
        %v5595 = vmul.f32 %v5586, %v5594
        %v5596 = vadd.f32 %v5595, 1.1283791
        %v5597 = vmul.f32 %v5085, %v5596
        %v5598 = vmul.f32 %v5586, 3.8918573e-05
        %v5599 = vadd.f32 %v5598, 0.001143296
        %v5600 = vmul.f32 %v5586, %v5599
        %v5601 = vadd.f32 %v5600, 0.014752088
        %v5602 = vmul.f32 %v5586, %v5601
        %v5603 = vadd.f32 %v5602, 0.112945676
        %v5604 = vmul.f32 %v5586, %v5603
        %v5605 = vadd.f32 %v5604, 0.4994258
        %v5606 = vmul.f32 %v5586, %v5605
        %v5607 = vadd.f32 %v5606, 1.0
        %v5608 = vrcp.pop %v5607
        %v5609 = vmul.f32 %v5607, %v5608
        %v5610 = vsub.f32 1.0, %v5609
        %v5611 = vmul.f32 %v5608, %v5610
        %v5612 = vadd.f32 %v5608, %v5611
        %vm5613 = vweird.f32 %v5607
        %vm5614 = vweird.f32 %v5608
        %vm5615 = vmor %vm5613, %vm5614
        %v5616 = vsel %vm5615, %v5608, %v5612
        %v5617 = vand.u32 2147483647, %v5607
        %vm5618 = vcmp.eq.f32.partialorder %v5617, 8.507059e+37
        %v5619 = vand.u32 %v5607, 2147483648
        %v5620 = vor.u32 1.1754944e-38, %v5619
        %v5621 = vsel %vm5618, %v5620, %v5616
        %v5622 = vmul.f32 %v5597, %v5621
        %v5623 = vmin.f32 %v5622, 1.0
        %v5624 = vmax.f32 %v5623, -1.0
        %v5625 = vmul.f32 %v5086, %v5086
        %v5626 = vmin.f32 16.0, %v5625
        %v5627 = vmul.f32 %v5626, 2.1237322e-06
        %v5628 = vadd.f32 %v5627, 0.00028619796
        %v5629 = vmul.f32 %v5626, %v5628
        %v5630 = vadd.f32 %v5629, 0.0036580483
        %v5631 = vmul.f32 %v5626, %v5630
        %v5632 = vadd.f32 %v5631, 0.05243302
        %v5633 = vmul.f32 %v5626, %v5632
        %v5634 = vadd.f32 %v5633, 0.18741608
        %v5635 = vmul.f32 %v5626, %v5634
        %v5636 = vadd.f32 %v5635, 1.1283791
        %v5637 = vmul.f32 %v5086, %v5636
        %v5638 = vmul.f32 %v5626, 3.8918573e-05
        %v5639 = vadd.f32 %v5638, 0.001143296
        %v5640 = vmul.f32 %v5626, %v5639
        %v5641 = vadd.f32 %v5640, 0.014752088
        %v5642 = vmul.f32 %v5626, %v5641
        %v5643 = vadd.f32 %v5642, 0.112945676
        %v5644 = vmul.f32 %v5626, %v5643
        %v5645 = vadd.f32 %v5644, 0.4994258
        %v5646 = vmul.f32 %v5626, %v5645
        %v5647 = vadd.f32 %v5646, 1.0
        %v5648 = vrcp.pop %v5647
        %v5649 = vmul.f32 %v5647, %v5648
        %v5650 = vsub.f32 1.0, %v5649
        %v5651 = vmul.f32 %v5648, %v5650
        %v5652 = vadd.f32 %v5648, %v5651
        %vm5653 = vweird.f32 %v5647
        %vm5654 = vweird.f32 %v5648
        %vm5655 = vmor %vm5653, %vm5654
        %v5656 = vsel %vm5655, %v5648, %v5652
        %v5657 = vand.u32 2147483647, %v5647
        %vm5658 = vcmp.eq.f32.partialorder %v5657, 8.507059e+37
        %v5659 = vand.u32 %v5647, 2147483648
        %v5660 = vor.u32 1.1754944e-38, %v5659
        %v5661 = vsel %vm5658, %v5660, %v5656
        %v5662 = vmul.f32 %v5637, %v5661
        %v5663 = vmin.f32 %v5662, 1.0
        %v5664 = vmax.f32 %v5663, -1.0
        %v5665 = vmul.f32 %v5087, %v5087
        %v5666 = vmin.f32 16.0, %v5665
        %v5667 = vmul.f32 %v5666, 2.1237322e-06
        %v5668 = vadd.f32 %v5667, 0.00028619796
        %v5669 = vmul.f32 %v5666, %v5668
        %v5670 = vadd.f32 %v5669, 0.0036580483
        %v5671 = vmul.f32 %v5666, %v5670
        %v5672 = vadd.f32 %v5671, 0.05243302
        %v5673 = vmul.f32 %v5666, %v5672
        %v5674 = vadd.f32 %v5673, 0.18741608
        %v5675 = vmul.f32 %v5666, %v5674
        %v5676 = vadd.f32 %v5675, 1.1283791
        %v5677 = vmul.f32 %v5087, %v5676
        %v5678 = vmul.f32 %v5666, 3.8918573e-05
        %v5679 = vadd.f32 %v5678, 0.001143296
        %v5680 = vmul.f32 %v5666, %v5679
        %v5681 = vadd.f32 %v5680, 0.014752088
        %v5682 = vmul.f32 %v5666, %v5681
        %v5683 = vadd.f32 %v5682, 0.112945676
        %v5684 = vmul.f32 %v5666, %v5683
        %v5685 = vadd.f32 %v5684, 0.4994258
        %v5686 = vmul.f32 %v5666, %v5685
        %v5687 = vadd.f32 %v5686, 1.0
        %v5688 = vrcp.pop %v5687
        %v5689 = vmul.f32 %v5687, %v5688
        %v5690 = vsub.f32 1.0, %v5689
        %v5691 = vmul.f32 %v5688, %v5690
        %v5692 = vadd.f32 %v5688, %v5691
        %vm5693 = vweird.f32 %v5687
        %vm5694 = vweird.f32 %v5688
        %vm5695 = vmor %vm5693, %vm5694
        %v5696 = vsel %vm5695, %v5688, %v5692
        %v5697 = vand.u32 2147483647, %v5687
        %vm5698 = vcmp.eq.f32.partialorder %v5697, 8.507059e+37
        %v5699 = vand.u32 %v5687, 2147483648
        %v5700 = vor.u32 1.1754944e-38, %v5699
        %v5701 = vsel %vm5698, %v5700, %v5696
        %v5702 = vmul.f32 %v5677, %v5701
        %v5703 = vmin.f32 %v5702, 1.0
        %v5704 = vmax.f32 %v5703, -1.0
        %v5705 = vmul.f32 %v5088, %v5088
        %v5706 = vmin.f32 16.0, %v5705
        %v5707 = vmul.f32 %v5706, 2.1237322e-06
        %v5708 = vadd.f32 %v5707, 0.00028619796
        %v5709 = vmul.f32 %v5706, %v5708
        %v5710 = vadd.f32 %v5709, 0.0036580483
        %v5711 = vmul.f32 %v5706, %v5710
        %v5712 = vadd.f32 %v5711, 0.05243302
        %v5713 = vmul.f32 %v5706, %v5712
        %v5714 = vadd.f32 %v5713, 0.18741608
        %v5715 = vmul.f32 %v5706, %v5714
        %v5716 = vadd.f32 %v5715, 1.1283791
        %v5717 = vmul.f32 %v5088, %v5716
        %v5718 = vmul.f32 %v5706, 3.8918573e-05
        %v5719 = vadd.f32 %v5718, 0.001143296
        %v5720 = vmul.f32 %v5706, %v5719
        %v5721 = vadd.f32 %v5720, 0.014752088
        %v5722 = vmul.f32 %v5706, %v5721
        %v5723 = vadd.f32 %v5722, 0.112945676
        %v5724 = vmul.f32 %v5706, %v5723
        %v5725 = vadd.f32 %v5724, 0.4994258
        %v5726 = vmul.f32 %v5706, %v5725
        %v5727 = vadd.f32 %v5726, 1.0
        %v5728 = vrcp.pop %v5727
        %v5729 = vmul.f32 %v5727, %v5728
        %v5730 = vsub.f32 1.0, %v5729
        %v5731 = vmul.f32 %v5728, %v5730
        %v5732 = vadd.f32 %v5728, %v5731
        %vm5733 = vweird.f32 %v5727
        %vm5734 = vweird.f32 %v5728
        %vm5735 = vmor %vm5733, %vm5734
        %v5736 = vsel %vm5735, %v5728, %v5732
        %v5737 = vand.u32 2147483647, %v5727
        %vm5738 = vcmp.eq.f32.partialorder %v5737, 8.507059e+37
        %v5739 = vand.u32 %v5727, 2147483648
        %v5740 = vor.u32 1.1754944e-38, %v5739
        %v5741 = vsel %vm5738, %v5740, %v5736
        %v5742 = vmul.f32 %v5717, %v5741
        %v5743 = vmin.f32 %v5742, 1.0
        %v5744 = vmax.f32 %v5743, -1.0
        %v5745 = vmul.f32 %v5089, %v5089
        %v5746 = vmin.f32 16.0, %v5745
        %v5747 = vmul.f32 %v5746, 2.1237322e-06
        %v5748 = vadd.f32 %v5747, 0.00028619796
        %v5749 = vmul.f32 %v5746, %v5748
        %v5750 = vadd.f32 %v5749, 0.0036580483
        %v5751 = vmul.f32 %v5746, %v5750
        %v5752 = vadd.f32 %v5751, 0.05243302
        %v5753 = vmul.f32 %v5746, %v5752
        %v5754 = vadd.f32 %v5753, 0.18741608
        %v5755 = vmul.f32 %v5746, %v5754
        %v5756 = vadd.f32 %v5755, 1.1283791
        %v5757 = vmul.f32 %v5089, %v5756
        %v5758 = vmul.f32 %v5746, 3.8918573e-05
        %v5759 = vadd.f32 %v5758, 0.001143296
        %v5760 = vmul.f32 %v5746, %v5759
        %v5761 = vadd.f32 %v5760, 0.014752088
        %v5762 = vmul.f32 %v5746, %v5761
        %v5763 = vadd.f32 %v5762, 0.112945676
        %v5764 = vmul.f32 %v5746, %v5763
        %v5765 = vadd.f32 %v5764, 0.4994258
        %v5766 = vmul.f32 %v5746, %v5765
        %v5767 = vadd.f32 %v5766, 1.0
        %v5768 = vrcp.pop %v5767
        %v5769 = vmul.f32 %v5767, %v5768
        %v5770 = vsub.f32 1.0, %v5769
        %v5771 = vmul.f32 %v5768, %v5770
        %v5772 = vadd.f32 %v5768, %v5771
        %vm5773 = vweird.f32 %v5767
        %vm5774 = vweird.f32 %v5768
        %vm5775 = vmor %vm5773, %vm5774
        %v5776 = vsel %vm5775, %v5768, %v5772
        %v5777 = vand.u32 2147483647, %v5767
        %vm5778 = vcmp.eq.f32.partialorder %v5777, 8.507059e+37
        %v5779 = vand.u32 %v5767, 2147483648
        %v5780 = vor.u32 1.1754944e-38, %v5779
        %v5781 = vsel %vm5778, %v5780, %v5776
        %v5782 = vmul.f32 %v5757, %v5781
        %v5783 = vmin.f32 %v5782, 1.0
        %v5784 = vmax.f32 %v5783, -1.0
        %v5785 = vmul.f32 %v5090, %v5090
        %v5786 = vmin.f32 16.0, %v5785
        %v5787 = vmul.f32 %v5786, 2.1237322e-06
        %v5788 = vadd.f32 %v5787, 0.00028619796
        %v5789 = vmul.f32 %v5786, %v5788
        %v5790 = vadd.f32 %v5789, 0.0036580483
        %v5791 = vmul.f32 %v5786, %v5790
        %v5792 = vadd.f32 %v5791, 0.05243302
        %v5793 = vmul.f32 %v5786, %v5792
        %v5794 = vadd.f32 %v5793, 0.18741608
        %v5795 = vmul.f32 %v5786, %v5794
        %v5796 = vadd.f32 %v5795, 1.1283791
        %v5797 = vmul.f32 %v5090, %v5796
        %v5798 = vmul.f32 %v5786, 3.8918573e-05
        %v5799 = vadd.f32 %v5798, 0.001143296
        %v5800 = vmul.f32 %v5786, %v5799
        %v5801 = vadd.f32 %v5800, 0.014752088
        %v5802 = vmul.f32 %v5786, %v5801
        %v5803 = vadd.f32 %v5802, 0.112945676
        %v5804 = vmul.f32 %v5786, %v5803
        %v5805 = vadd.f32 %v5804, 0.4994258
        %v5806 = vmul.f32 %v5786, %v5805
        %v5807 = vadd.f32 %v5806, 1.0
        %v5808 = vrcp.pop %v5807
        %v5809 = vmul.f32 %v5807, %v5808
        %v5810 = vsub.f32 1.0, %v5809
        %v5811 = vmul.f32 %v5808, %v5810
        %v5812 = vadd.f32 %v5808, %v5811
        %vm5813 = vweird.f32 %v5807
        %vm5814 = vweird.f32 %v5808
        %vm5815 = vmor %vm5813, %vm5814
        %v5816 = vsel %vm5815, %v5808, %v5812
        %v5817 = vand.u32 2147483647, %v5807
        %vm5818 = vcmp.eq.f32.partialorder %v5817, 8.507059e+37
        %v5819 = vand.u32 %v5807, 2147483648
        %v5820 = vor.u32 1.1754944e-38, %v5819
        %v5821 = vsel %vm5818, %v5820, %v5816
        %v5822 = vmul.f32 %v5797, %v5821
        %v5823 = vmin.f32 %v5822, 1.0
        %v5824 = vmax.f32 %v5823, -1.0
        %v5825 = vmul.f32 %v5091, %v5091
        %v5826 = vmin.f32 16.0, %v5825
        %v5827 = vmul.f32 %v5826, 2.1237322e-06
        %v5828 = vadd.f32 %v5827, 0.00028619796
        %v5829 = vmul.f32 %v5826, %v5828
        %v5830 = vadd.f32 %v5829, 0.0036580483
        %v5831 = vmul.f32 %v5826, %v5830
        %v5832 = vadd.f32 %v5831, 0.05243302
        %v5833 = vmul.f32 %v5826, %v5832
        %v5834 = vadd.f32 %v5833, 0.18741608
        %v5835 = vmul.f32 %v5826, %v5834
        %v5836 = vadd.f32 %v5835, 1.1283791
        %v5837 = vmul.f32 %v5091, %v5836
        %v5838 = vmul.f32 %v5826, 3.8918573e-05
        %v5839 = vadd.f32 %v5838, 0.001143296
        %v5840 = vmul.f32 %v5826, %v5839
        %v5841 = vadd.f32 %v5840, 0.014752088
        %v5842 = vmul.f32 %v5826, %v5841
        %v5843 = vadd.f32 %v5842, 0.112945676
        %v5844 = vmul.f32 %v5826, %v5843
        %v5845 = vadd.f32 %v5844, 0.4994258
        %v5846 = vmul.f32 %v5826, %v5845
        %v5847 = vadd.f32 %v5846, 1.0
        %v5848 = vrcp.pop %v5847
        %v5849 = vmul.f32 %v5847, %v5848
        %v5850 = vsub.f32 1.0, %v5849
        %v5851 = vmul.f32 %v5848, %v5850
        %v5852 = vadd.f32 %v5848, %v5851
        %vm5853 = vweird.f32 %v5847
        %vm5854 = vweird.f32 %v5848
        %vm5855 = vmor %vm5853, %vm5854
        %v5856 = vsel %vm5855, %v5848, %v5852
        %v5857 = vand.u32 2147483647, %v5847
        %vm5858 = vcmp.eq.f32.partialorder %v5857, 8.507059e+37
        %v5859 = vand.u32 %v5847, 2147483648
        %v5860 = vor.u32 1.1754944e-38, %v5859
        %v5861 = vsel %vm5858, %v5860, %v5856
        %v5862 = vmul.f32 %v5837, %v5861
        %v5863 = vmin.f32 %v5862, 1.0
        %v5864 = vmax.f32 %v5863, -1.0
        %v5865 = vmul.f32 %v5092, %v5092
        %v5866 = vmin.f32 16.0, %v5865
        %v5867 = vmul.f32 %v5866, 2.1237322e-06
        %v5868 = vadd.f32 %v5867, 0.00028619796
        %v5869 = vmul.f32 %v5866, %v5868
        %v5870 = vadd.f32 %v5869, 0.0036580483
        %v5871 = vmul.f32 %v5866, %v5870
        %v5872 = vadd.f32 %v5871, 0.05243302
        %v5873 = vmul.f32 %v5866, %v5872
        %v5874 = vadd.f32 %v5873, 0.18741608
        %v5875 = vmul.f32 %v5866, %v5874
        %v5876 = vadd.f32 %v5875, 1.1283791
        %v5877 = vmul.f32 %v5092, %v5876
        %v5878 = vmul.f32 %v5866, 3.8918573e-05
        %v5879 = vadd.f32 %v5878, 0.001143296
        %v5880 = vmul.f32 %v5866, %v5879
        %v5881 = vadd.f32 %v5880, 0.014752088
        %v5882 = vmul.f32 %v5866, %v5881
        %v5883 = vadd.f32 %v5882, 0.112945676
        %v5884 = vmul.f32 %v5866, %v5883
        %v5885 = vadd.f32 %v5884, 0.4994258
        %v5886 = vmul.f32 %v5866, %v5885
        %v5887 = vadd.f32 %v5886, 1.0
        %v5888 = vrcp.pop %v5887
        %v5889 = vmul.f32 %v5887, %v5888
        %v5890 = vsub.f32 1.0, %v5889
        %v5891 = vmul.f32 %v5888, %v5890
        %v5892 = vadd.f32 %v5888, %v5891
        %vm5893 = vweird.f32 %v5887
        %vm5894 = vweird.f32 %v5888
        %vm5895 = vmor %vm5893, %vm5894
        %v5896 = vsel %vm5895, %v5888, %v5892
        %v5897 = vand.u32 2147483647, %v5887
        %vm5898 = vcmp.eq.f32.partialorder %v5897, 8.507059e+37
        %v5899 = vand.u32 %v5887, 2147483648
        %v5900 = vor.u32 1.1754944e-38, %v5899
        %v5901 = vsel %vm5898, %v5900, %v5896
        %v5902 = vmul.f32 %v5877, %v5901
        %v5903 = vmin.f32 %v5902, 1.0
        %v5904 = vmax.f32 %v5903, -1.0
        %v5905 = vmul.f32 %v5093, %v5093
        %v5906 = vmin.f32 16.0, %v5905
        %v5907 = vmul.f32 %v5906, 2.1237322e-06
        %v5908 = vadd.f32 %v5907, 0.00028619796
        %v5909 = vmul.f32 %v5906, %v5908
        %v5910 = vadd.f32 %v5909, 0.0036580483
        %v5911 = vmul.f32 %v5906, %v5910
        %v5912 = vadd.f32 %v5911, 0.05243302
        %v5913 = vmul.f32 %v5906, %v5912
        %v5914 = vadd.f32 %v5913, 0.18741608
        %v5915 = vmul.f32 %v5906, %v5914
        %v5916 = vadd.f32 %v5915, 1.1283791
        %v5917 = vmul.f32 %v5093, %v5916
        %v5918 = vmul.f32 %v5906, 3.8918573e-05
        %v5919 = vadd.f32 %v5918, 0.001143296
        %v5920 = vmul.f32 %v5906, %v5919
        %v5921 = vadd.f32 %v5920, 0.014752088
        %v5922 = vmul.f32 %v5906, %v5921
        %v5923 = vadd.f32 %v5922, 0.112945676
        %v5924 = vmul.f32 %v5906, %v5923
        %v5925 = vadd.f32 %v5924, 0.4994258
        %v5926 = vmul.f32 %v5906, %v5925
        %v5927 = vadd.f32 %v5926, 1.0
        %v5928 = vrcp.pop %v5927
        %v5929 = vmul.f32 %v5927, %v5928
        %v5930 = vsub.f32 1.0, %v5929
        %v5931 = vmul.f32 %v5928, %v5930
        %v5932 = vadd.f32 %v5928, %v5931
        %vm5933 = vweird.f32 %v5927
        %vm5934 = vweird.f32 %v5928
        %vm5935 = vmor %vm5933, %vm5934
        %v5936 = vsel %vm5935, %v5928, %v5932
        %v5937 = vand.u32 2147483647, %v5927
        %vm5938 = vcmp.eq.f32.partialorder %v5937, 8.507059e+37
        %v5939 = vand.u32 %v5927, 2147483648
        %v5940 = vor.u32 1.1754944e-38, %v5939
        %v5941 = vsel %vm5938, %v5940, %v5936
        %v5942 = vmul.f32 %v5917, %v5941
        %v5943 = vmin.f32 %v5942, 1.0
        %v5944 = vmax.f32 %v5943, -1.0
        %v5945 = vmul.f32 %v5094, %v5094
        %v5946 = vmin.f32 16.0, %v5945
        %v5947 = vmul.f32 %v5946, 2.1237322e-06
        %v5948 = vadd.f32 %v5947, 0.00028619796
        %v5949 = vmul.f32 %v5946, %v5948
        %v5950 = vadd.f32 %v5949, 0.0036580483
        %v5951 = vmul.f32 %v5946, %v5950
        %v5952 = vadd.f32 %v5951, 0.05243302
        %v5953 = vmul.f32 %v5946, %v5952
        %v5954 = vadd.f32 %v5953, 0.18741608
        %v5955 = vmul.f32 %v5946, %v5954
        %v5956 = vadd.f32 %v5955, 1.1283791
        %v5957 = vmul.f32 %v5094, %v5956
        %v5958 = vmul.f32 %v5946, 3.8918573e-05
        %v5959 = vadd.f32 %v5958, 0.001143296
        %v5960 = vmul.f32 %v5946, %v5959
        %v5961 = vadd.f32 %v5960, 0.014752088
        %v5962 = vmul.f32 %v5946, %v5961
        %v5963 = vadd.f32 %v5962, 0.112945676
        %v5964 = vmul.f32 %v5946, %v5963
        %v5965 = vadd.f32 %v5964, 0.4994258
        %v5966 = vmul.f32 %v5946, %v5965
        %v5967 = vadd.f32 %v5966, 1.0
        %v5968 = vrcp.pop %v5967
        %v5969 = vmul.f32 %v5967, %v5968
        %v5970 = vsub.f32 1.0, %v5969
        %v5971 = vmul.f32 %v5968, %v5970
        %v5972 = vadd.f32 %v5968, %v5971
        %vm5973 = vweird.f32 %v5967
        %vm5974 = vweird.f32 %v5968
        %vm5975 = vmor %vm5973, %vm5974
        %v5976 = vsel %vm5975, %v5968, %v5972
        %v5977 = vand.u32 2147483647, %v5967
        %vm5978 = vcmp.eq.f32.partialorder %v5977, 8.507059e+37
        %v5979 = vand.u32 %v5967, 2147483648
        %v5980 = vor.u32 1.1754944e-38, %v5979
        %v5981 = vsel %vm5978, %v5980, %v5976
        %v5982 = vmul.f32 %v5957, %v5981
        %v5983 = vmin.f32 %v5982, 1.0
        %v5984 = vmax.f32 %v5983, -1.0
        %v5985 = vmul.f32 %v5095, %v5095
        %v5986 = vmin.f32 16.0, %v5985
        %v5987 = vmul.f32 %v5986, 2.1237322e-06
        %v5988 = vadd.f32 %v5987, 0.00028619796
        %v5989 = vmul.f32 %v5986, %v5988
        %v5990 = vadd.f32 %v5989, 0.0036580483
        %v5991 = vmul.f32 %v5986, %v5990
        %v5992 = vadd.f32 %v5991, 0.05243302
        %v5993 = vmul.f32 %v5986, %v5992
        %v5994 = vadd.f32 %v5993, 0.18741608
        %v5995 = vmul.f32 %v5986, %v5994
        %v5996 = vadd.f32 %v5995, 1.1283791
        %v5997 = vmul.f32 %v5095, %v5996
        %v5998 = vmul.f32 %v5986, 3.8918573e-05
        %v5999 = vadd.f32 %v5998, 0.001143296
        %v6000 = vmul.f32 %v5986, %v5999
        %v6001 = vadd.f32 %v6000, 0.014752088
        %v6002 = vmul.f32 %v5986, %v6001
        %v6003 = vadd.f32 %v6002, 0.112945676
        %v6004 = vmul.f32 %v5986, %v6003
        %v6005 = vadd.f32 %v6004, 0.4994258
        %v6006 = vmul.f32 %v5986, %v6005
        %v6007 = vadd.f32 %v6006, 1.0
        %v6008 = vrcp.pop %v6007
        %v6009 = vmul.f32 %v6007, %v6008
        %v6010 = vsub.f32 1.0, %v6009
        %v6011 = vmul.f32 %v6008, %v6010
        %v6012 = vadd.f32 %v6008, %v6011
        %vm6013 = vweird.f32 %v6007
        %vm6014 = vweird.f32 %v6008
        %vm6015 = vmor %vm6013, %vm6014
        %v6016 = vsel %vm6015, %v6008, %v6012
        %v6017 = vand.u32 2147483647, %v6007
        %vm6018 = vcmp.eq.f32.partialorder %v6017, 8.507059e+37
        %v6019 = vand.u32 %v6007, 2147483648
        %v6020 = vor.u32 1.1754944e-38, %v6019
        %v6021 = vsel %vm6018, %v6020, %v6016
        %v6022 = vmul.f32 %v5997, %v6021
        %v6023 = vmin.f32 %v6022, 1.0
        %v6024 = vmax.f32 %v6023, -1.0
        %v6025 = vmul.f32 %v5096, %v5096
        %v6026 = vmin.f32 16.0, %v6025
        %v6027 = vmul.f32 %v6026, 2.1237322e-06
        %v6028 = vadd.f32 %v6027, 0.00028619796
        %v6029 = vmul.f32 %v6026, %v6028
        %v6030 = vadd.f32 %v6029, 0.0036580483
        %v6031 = vmul.f32 %v6026, %v6030
        %v6032 = vadd.f32 %v6031, 0.05243302
        %v6033 = vmul.f32 %v6026, %v6032
        %v6034 = vadd.f32 %v6033, 0.18741608
        %v6035 = vmul.f32 %v6026, %v6034
        %v6036 = vadd.f32 %v6035, 1.1283791
        %v6037 = vmul.f32 %v5096, %v6036
        %v6038 = vmul.f32 %v6026, 3.8918573e-05
        %v6039 = vadd.f32 %v6038, 0.001143296
        %v6040 = vmul.f32 %v6026, %v6039
        %v6041 = vadd.f32 %v6040, 0.014752088
        %v6042 = vmul.f32 %v6026, %v6041
        %v6043 = vadd.f32 %v6042, 0.112945676
        %v6044 = vmul.f32 %v6026, %v6043
        %v6045 = vadd.f32 %v6044, 0.4994258
        %v6046 = vmul.f32 %v6026, %v6045
        %v6047 = vadd.f32 %v6046, 1.0
        %v6048 = vrcp.pop %v6047
        %v6049 = vmul.f32 %v6047, %v6048
        %v6050 = vsub.f32 1.0, %v6049
        %v6051 = vmul.f32 %v6048, %v6050
        %v6052 = vadd.f32 %v6048, %v6051
        %vm6053 = vweird.f32 %v6047
        %vm6054 = vweird.f32 %v6048
        %vm6055 = vmor %vm6053, %vm6054
        %v6056 = vsel %vm6055, %v6048, %v6052
        %v6057 = vand.u32 2147483647, %v6047
        %vm6058 = vcmp.eq.f32.partialorder %v6057, 8.507059e+37
        %v6059 = vand.u32 %v6047, 2147483648
        %v6060 = vor.u32 1.1754944e-38, %v6059
        %v6061 = vsel %vm6058, %v6060, %v6056
        %v6062 = vmul.f32 %v6037, %v6061
        %v6063 = vmin.f32 %v6062, 1.0
        %v6064 = vmax.f32 %v6063, -1.0
        %v6065 = vmul.f32 %v5097, %v5097
        %v6066 = vmin.f32 16.0, %v6065
        %v6067 = vmul.f32 %v6066, 2.1237322e-06
        %v6068 = vadd.f32 %v6067, 0.00028619796
        %v6069 = vmul.f32 %v6066, %v6068
        %v6070 = vadd.f32 %v6069, 0.0036580483
        %v6071 = vmul.f32 %v6066, %v6070
        %v6072 = vadd.f32 %v6071, 0.05243302
        %v6073 = vmul.f32 %v6066, %v6072
        %v6074 = vadd.f32 %v6073, 0.18741608
        %v6075 = vmul.f32 %v6066, %v6074
        %v6076 = vadd.f32 %v6075, 1.1283791
        %v6077 = vmul.f32 %v5097, %v6076
        %v6078 = vmul.f32 %v6066, 3.8918573e-05
        %v6079 = vadd.f32 %v6078, 0.001143296
        %v6080 = vmul.f32 %v6066, %v6079
        %v6081 = vadd.f32 %v6080, 0.014752088
        %v6082 = vmul.f32 %v6066, %v6081
        %v6083 = vadd.f32 %v6082, 0.112945676
        %v6084 = vmul.f32 %v6066, %v6083
        %v6085 = vadd.f32 %v6084, 0.4994258
        %v6086 = vmul.f32 %v6066, %v6085
        %v6087 = vadd.f32 %v6086, 1.0
        %v6088 = vrcp.pop %v6087
        %v6089 = vmul.f32 %v6087, %v6088
        %v6090 = vsub.f32 1.0, %v6089
        %v6091 = vmul.f32 %v6088, %v6090
        %v6092 = vadd.f32 %v6088, %v6091
        %vm6093 = vweird.f32 %v6087
        %vm6094 = vweird.f32 %v6088
        %vm6095 = vmor %vm6093, %vm6094
        %v6096 = vsel %vm6095, %v6088, %v6092
        %v6097 = vand.u32 2147483647, %v6087
        %vm6098 = vcmp.eq.f32.partialorder %v6097, 8.507059e+37
        %v6099 = vand.u32 %v6087, 2147483648
        %v6100 = vor.u32 1.1754944e-38, %v6099
        %v6101 = vsel %vm6098, %v6100, %v6096
        %v6102 = vmul.f32 %v6077, %v6101
        %v6103 = vmin.f32 %v6102, 1.0
        %v6104 = vmax.f32 %v6103, -1.0
        %v6105 = vmul.f32 %v5098, %v5098
        %v6106 = vmin.f32 16.0, %v6105
        %v6107 = vmul.f32 %v6106, 2.1237322e-06
        %v6108 = vadd.f32 %v6107, 0.00028619796
        %v6109 = vmul.f32 %v6106, %v6108
        %v6110 = vadd.f32 %v6109, 0.0036580483
        %v6111 = vmul.f32 %v6106, %v6110
        %v6112 = vadd.f32 %v6111, 0.05243302
        %v6113 = vmul.f32 %v6106, %v6112
        %v6114 = vadd.f32 %v6113, 0.18741608
        %v6115 = vmul.f32 %v6106, %v6114
        %v6116 = vadd.f32 %v6115, 1.1283791
        %v6117 = vmul.f32 %v5098, %v6116
        %v6118 = vmul.f32 %v6106, 3.8918573e-05
        %v6119 = vadd.f32 %v6118, 0.001143296
        %v6120 = vmul.f32 %v6106, %v6119
        %v6121 = vadd.f32 %v6120, 0.014752088
        %v6122 = vmul.f32 %v6106, %v6121
        %v6123 = vadd.f32 %v6122, 0.112945676
        %v6124 = vmul.f32 %v6106, %v6123
        %v6125 = vadd.f32 %v6124, 0.4994258
        %v6126 = vmul.f32 %v6106, %v6125
        %v6127 = vadd.f32 %v6126, 1.0
        %v6128 = vrcp.pop %v6127
        %v6129 = vmul.f32 %v6127, %v6128
        %v6130 = vsub.f32 1.0, %v6129
        %v6131 = vmul.f32 %v6128, %v6130
        %v6132 = vadd.f32 %v6128, %v6131
        %vm6133 = vweird.f32 %v6127
        %vm6134 = vweird.f32 %v6128
        %vm6135 = vmor %vm6133, %vm6134
        %v6136 = vsel %vm6135, %v6128, %v6132
        %v6137 = vand.u32 2147483647, %v6127
        %vm6138 = vcmp.eq.f32.partialorder %v6137, 8.507059e+37
        %v6139 = vand.u32 %v6127, 2147483648
        %v6140 = vor.u32 1.1754944e-38, %v6139
        %v6141 = vsel %vm6138, %v6140, %v6136
        %v6142 = vmul.f32 %v6117, %v6141
        %v6143 = vmin.f32 %v6142, 1.0
        %v6144 = vmax.f32 %v6143, -1.0
        %v6145 = vmul.f32 %v5099, %v5099
        %v6146 = vmin.f32 16.0, %v6145
        %v6147 = vmul.f32 %v6146, 2.1237322e-06
        %v6148 = vadd.f32 %v6147, 0.00028619796
        %v6149 = vmul.f32 %v6146, %v6148
        %v6150 = vadd.f32 %v6149, 0.0036580483
        %v6151 = vmul.f32 %v6146, %v6150
        %v6152 = vadd.f32 %v6151, 0.05243302
        %v6153 = vmul.f32 %v6146, %v6152
        %v6154 = vadd.f32 %v6153, 0.18741608
        %v6155 = vmul.f32 %v6146, %v6154
        %v6156 = vadd.f32 %v6155, 1.1283791
        %v6157 = vmul.f32 %v5099, %v6156
        %v6158 = vmul.f32 %v6146, 3.8918573e-05
        %v6159 = vadd.f32 %v6158, 0.001143296
        %v6160 = vmul.f32 %v6146, %v6159
        %v6161 = vadd.f32 %v6160, 0.014752088
        %v6162 = vmul.f32 %v6146, %v6161
        %v6163 = vadd.f32 %v6162, 0.112945676
        %v6164 = vmul.f32 %v6146, %v6163
        %v6165 = vadd.f32 %v6164, 0.4994258
        %v6166 = vmul.f32 %v6146, %v6165
        %v6167 = vadd.f32 %v6166, 1.0
        %v6168 = vrcp.pop %v6167
        %v6169 = vmul.f32 %v6167, %v6168
        %v6170 = vsub.f32 1.0, %v6169
        %v6171 = vmul.f32 %v6168, %v6170
        %v6172 = vadd.f32 %v6168, %v6171
        %vm6173 = vweird.f32 %v6167
        %vm6174 = vweird.f32 %v6168
        %vm6175 = vmor %vm6173, %vm6174
        %v6176 = vsel %vm6175, %v6168, %v6172
        %v6177 = vand.u32 2147483647, %v6167
        %vm6178 = vcmp.eq.f32.partialorder %v6177, 8.507059e+37
        %v6179 = vand.u32 %v6167, 2147483648
        %v6180 = vor.u32 1.1754944e-38, %v6179
        %v6181 = vsel %vm6178, %v6180, %v6176
        %v6182 = vmul.f32 %v6157, %v6181
        %v6183 = vmin.f32 %v6182, 1.0
        %v6184 = vmax.f32 %v6183, -1.0
        %v6185 = vmul.f32 %v5100, %v5100
        %v6186 = vmin.f32 16.0, %v6185
        %v6187 = vmul.f32 %v6186, 2.1237322e-06
        %v6188 = vadd.f32 %v6187, 0.00028619796
        %v6189 = vmul.f32 %v6186, %v6188
        %v6190 = vadd.f32 %v6189, 0.0036580483
        %v6191 = vmul.f32 %v6186, %v6190
        %v6192 = vadd.f32 %v6191, 0.05243302
        %v6193 = vmul.f32 %v6186, %v6192
        %v6194 = vadd.f32 %v6193, 0.18741608
        %v6195 = vmul.f32 %v6186, %v6194
        %v6196 = vadd.f32 %v6195, 1.1283791
        %v6197 = vmul.f32 %v5100, %v6196
        %v6198 = vmul.f32 %v6186, 3.8918573e-05
        %v6199 = vadd.f32 %v6198, 0.001143296
        %v6200 = vmul.f32 %v6186, %v6199
        %v6201 = vadd.f32 %v6200, 0.014752088
        %v6202 = vmul.f32 %v6186, %v6201
        %v6203 = vadd.f32 %v6202, 0.112945676
        %v6204 = vmul.f32 %v6186, %v6203
        %v6205 = vadd.f32 %v6204, 0.4994258
        %v6206 = vmul.f32 %v6186, %v6205
        %v6207 = vadd.f32 %v6206, 1.0
        %v6208 = vrcp.pop %v6207
        %v6209 = vmul.f32 %v6207, %v6208
        %v6210 = vsub.f32 1.0, %v6209
        %v6211 = vmul.f32 %v6208, %v6210
        %v6212 = vadd.f32 %v6208, %v6211
        %vm6213 = vweird.f32 %v6207
        %vm6214 = vweird.f32 %v6208
        %vm6215 = vmor %vm6213, %vm6214
        %v6216 = vsel %vm6215, %v6208, %v6212
        %v6217 = vand.u32 2147483647, %v6207
        %vm6218 = vcmp.eq.f32.partialorder %v6217, 8.507059e+37
        %v6219 = vand.u32 %v6207, 2147483648
        %v6220 = vor.u32 1.1754944e-38, %v6219
        %v6221 = vsel %vm6218, %v6220, %v6216
        %v6222 = vmul.f32 %v6197, %v6221
        %v6223 = vmin.f32 %v6222, 1.0
        %v6224 = vmax.f32 %v6223, -1.0
        %v6225 = vmul.f32 %v5101, %v5101
        %v6226 = vmin.f32 16.0, %v6225
        %v6227 = vmul.f32 %v6226, 2.1237322e-06
        %v6228 = vadd.f32 %v6227, 0.00028619796
        %v6229 = vmul.f32 %v6226, %v6228
        %v6230 = vadd.f32 %v6229, 0.0036580483
        %v6231 = vmul.f32 %v6226, %v6230
        %v6232 = vadd.f32 %v6231, 0.05243302
        %v6233 = vmul.f32 %v6226, %v6232
        %v6234 = vadd.f32 %v6233, 0.18741608
        %v6235 = vmul.f32 %v6226, %v6234
        %v6236 = vadd.f32 %v6235, 1.1283791
        %v6237 = vmul.f32 %v5101, %v6236
        %v6238 = vmul.f32 %v6226, 3.8918573e-05
        %v6239 = vadd.f32 %v6238, 0.001143296
        %v6240 = vmul.f32 %v6226, %v6239
        %v6241 = vadd.f32 %v6240, 0.014752088
        %v6242 = vmul.f32 %v6226, %v6241
        %v6243 = vadd.f32 %v6242, 0.112945676
        %v6244 = vmul.f32 %v6226, %v6243
        %v6245 = vadd.f32 %v6244, 0.4994258
        %v6246 = vmul.f32 %v6226, %v6245
        %v6247 = vadd.f32 %v6246, 1.0
        %v6248 = vrcp.pop %v6247
        %v6249 = vmul.f32 %v6247, %v6248
        %v6250 = vsub.f32 1.0, %v6249
        %v6251 = vmul.f32 %v6248, %v6250
        %v6252 = vadd.f32 %v6248, %v6251
        %vm6253 = vweird.f32 %v6247
        %vm6254 = vweird.f32 %v6248
        %vm6255 = vmor %vm6253, %vm6254
        %v6256 = vsel %vm6255, %v6248, %v6252
        %v6257 = vand.u32 2147483647, %v6247
        %vm6258 = vcmp.eq.f32.partialorder %v6257, 8.507059e+37
        %v6259 = vand.u32 %v6247, 2147483648
        %v6260 = vor.u32 1.1754944e-38, %v6259
        %v6261 = vsel %vm6258, %v6260, %v6256
        %v6262 = vmul.f32 %v6237, %v6261
        %v6263 = vmin.f32 %v6262, 1.0
        %v6264 = vmax.f32 %v6263, -1.0
        %v6265 = vmul.f32 %v5102, %v5102
        %v6266 = vmin.f32 16.0, %v6265
        %v6267 = vmul.f32 %v6266, 2.1237322e-06
        %v6268 = vadd.f32 %v6267, 0.00028619796
        %v6269 = vmul.f32 %v6266, %v6268
        %v6270 = vadd.f32 %v6269, 0.0036580483
        %v6271 = vmul.f32 %v6266, %v6270
        %v6272 = vadd.f32 %v6271, 0.05243302
        %v6273 = vmul.f32 %v6266, %v6272
        %v6274 = vadd.f32 %v6273, 0.18741608
        %v6275 = vmul.f32 %v6266, %v6274
        %v6276 = vadd.f32 %v6275, 1.1283791
        %v6277 = vmul.f32 %v5102, %v6276
        %v6278 = vmul.f32 %v6266, 3.8918573e-05
        %v6279 = vadd.f32 %v6278, 0.001143296
        %v6280 = vmul.f32 %v6266, %v6279
        %v6281 = vadd.f32 %v6280, 0.014752088
        %v6282 = vmul.f32 %v6266, %v6281
        %v6283 = vadd.f32 %v6282, 0.112945676
        %v6284 = vmul.f32 %v6266, %v6283
        %v6285 = vadd.f32 %v6284, 0.4994258
        %v6286 = vmul.f32 %v6266, %v6285
        %v6287 = vadd.f32 %v6286, 1.0
        %v6288 = vrcp.pop %v6287
        %v6289 = vmul.f32 %v6287, %v6288
        %v6290 = vsub.f32 1.0, %v6289
        %v6291 = vmul.f32 %v6288, %v6290
        %v6292 = vadd.f32 %v6288, %v6291
        %vm6293 = vweird.f32 %v6287
        %vm6294 = vweird.f32 %v6288
        %vm6295 = vmor %vm6293, %vm6294
        %v6296 = vsel %vm6295, %v6288, %v6292
        %v6297 = vand.u32 2147483647, %v6287
        %vm6298 = vcmp.eq.f32.partialorder %v6297, 8.507059e+37
        %v6299 = vand.u32 %v6287, 2147483648
        %v6300 = vor.u32 1.1754944e-38, %v6299
        %v6301 = vsel %vm6298, %v6300, %v6296
        %v6302 = vmul.f32 %v6277, %v6301
        %v6303 = vmin.f32 %v6302, 1.0
        %v6304 = vmax.f32 %v6303, -1.0
        %v6305 = vmul.f32 %v5103, %v5103
        %v6306 = vmin.f32 16.0, %v6305
        %v6307 = vmul.f32 %v6306, 2.1237322e-06
        %v6308 = vadd.f32 %v6307, 0.00028619796
        %v6309 = vmul.f32 %v6306, %v6308
        %v6310 = vadd.f32 %v6309, 0.0036580483
        %v6311 = vmul.f32 %v6306, %v6310
        %v6312 = vadd.f32 %v6311, 0.05243302
        %v6313 = vmul.f32 %v6306, %v6312
        %v6314 = vadd.f32 %v6313, 0.18741608
        %v6315 = vmul.f32 %v6306, %v6314
        %v6316 = vadd.f32 %v6315, 1.1283791
        %v6317 = vmul.f32 %v5103, %v6316
        %v6318 = vmul.f32 %v6306, 3.8918573e-05
        %v6319 = vadd.f32 %v6318, 0.001143296
        %v6320 = vmul.f32 %v6306, %v6319
        %v6321 = vadd.f32 %v6320, 0.014752088
        %v6322 = vmul.f32 %v6306, %v6321
        %v6323 = vadd.f32 %v6322, 0.112945676
        %v6324 = vmul.f32 %v6306, %v6323
        %v6325 = vadd.f32 %v6324, 0.4994258
        %v6326 = vmul.f32 %v6306, %v6325
        %v6327 = vadd.f32 %v6326, 1.0
        %v6328 = vrcp.pop %v6327
        %v6329 = vmul.f32 %v6327, %v6328
        %v6330 = vsub.f32 1.0, %v6329
        %v6331 = vmul.f32 %v6328, %v6330
        %v6332 = vadd.f32 %v6328, %v6331
        %vm6333 = vweird.f32 %v6327
        %vm6334 = vweird.f32 %v6328
        %vm6335 = vmor %vm6333, %vm6334
        %v6336 = vsel %vm6335, %v6328, %v6332
        %v6337 = vand.u32 2147483647, %v6327
        %vm6338 = vcmp.eq.f32.partialorder %v6337, 8.507059e+37
        %v6339 = vand.u32 %v6327, 2147483648
        %v6340 = vor.u32 1.1754944e-38, %v6339
        %v6341 = vsel %vm6338, %v6340, %v6336
        %v6342 = vmul.f32 %v6317, %v6341
        %v6343 = vmin.f32 %v6342, 1.0
        %v6344 = vmax.f32 %v6343, -1.0
        %v6345 = vmul.f32 %v5104, %v5104
        %v6346 = vmin.f32 16.0, %v6345
        %v6347 = vmul.f32 %v6346, 2.1237322e-06
        %v6348 = vadd.f32 %v6347, 0.00028619796
        %v6349 = vmul.f32 %v6346, %v6348
        %v6350 = vadd.f32 %v6349, 0.0036580483
        %v6351 = vmul.f32 %v6346, %v6350
        %v6352 = vadd.f32 %v6351, 0.05243302
        %v6353 = vmul.f32 %v6346, %v6352
        %v6354 = vadd.f32 %v6353, 0.18741608
        %v6355 = vmul.f32 %v6346, %v6354
        %v6356 = vadd.f32 %v6355, 1.1283791
        %v6357 = vmul.f32 %v5104, %v6356
        %v6358 = vmul.f32 %v6346, 3.8918573e-05
        %v6359 = vadd.f32 %v6358, 0.001143296
        %v6360 = vmul.f32 %v6346, %v6359
        %v6361 = vadd.f32 %v6360, 0.014752088
        %v6362 = vmul.f32 %v6346, %v6361
        %v6363 = vadd.f32 %v6362, 0.112945676
        %v6364 = vmul.f32 %v6346, %v6363
        %v6365 = vadd.f32 %v6364, 0.4994258
        %v6366 = vmul.f32 %v6346, %v6365
        %v6367 = vadd.f32 %v6366, 1.0
        %v6368 = vrcp.pop %v6367
        %v6369 = vmul.f32 %v6367, %v6368
        %v6370 = vsub.f32 1.0, %v6369
        %v6371 = vmul.f32 %v6368, %v6370
        %v6372 = vadd.f32 %v6368, %v6371
        %vm6373 = vweird.f32 %v6367
        %vm6374 = vweird.f32 %v6368
        %vm6375 = vmor %vm6373, %vm6374
        %v6376 = vsel %vm6375, %v6368, %v6372
        %v6377 = vand.u32 2147483647, %v6367
        %vm6378 = vcmp.eq.f32.partialorder %v6377, 8.507059e+37
        %v6379 = vand.u32 %v6367, 2147483648
        %v6380 = vor.u32 1.1754944e-38, %v6379
        %v6381 = vsel %vm6378, %v6380, %v6376
        %v6382 = vmul.f32 %v6357, %v6381
        %v6383 = vmin.f32 %v6382, 1.0
        %v6384 = vmax.f32 %v6383, -1.0
        %v6385 = vadd.f32 %v5144, 1.0
        %v6386 = vadd.f32 %v5184, 1.0
        %v6387 = vadd.f32 %v5224, 1.0
        %v6388 = vadd.f32 %v5264, 1.0
        %v6389 = vadd.f32 %v5304, 1.0
        %v6390 = vadd.f32 %v5344, 1.0
        %v6391 = vadd.f32 %v5384, 1.0
        %v6392 = vadd.f32 %v5424, 1.0
        %v6393 = vadd.f32 %v5464, 1.0
        %v6394 = vadd.f32 %v5504, 1.0
        %v6395 = vadd.f32 %v5544, 1.0
        %v6396 = vadd.f32 %v5584, 1.0
        %v6397 = vadd.f32 %v5624, 1.0
        %v6398 = vadd.f32 %v5664, 1.0
        %v6399 = vadd.f32 %v5704, 1.0
        %v6400 = vadd.f32 %v5744, 1.0
        %v6401 = vadd.f32 %v5784, 1.0
        %v6402 = vadd.f32 %v5824, 1.0
        %v6403 = vadd.f32 %v5864, 1.0
        %v6404 = vadd.f32 %v5904, 1.0
        %v6405 = vadd.f32 %v5944, 1.0
        %v6406 = vadd.f32 %v5984, 1.0
        %v6407 = vadd.f32 %v6024, 1.0
        %v6408 = vadd.f32 %v6064, 1.0
        %v6409 = vadd.f32 %v6104, 1.0
        %v6410 = vadd.f32 %v6144, 1.0
        %v6411 = vadd.f32 %v6184, 1.0
        %v6412 = vadd.f32 %v6224, 1.0
        %v6413 = vadd.f32 %v6264, 1.0
        %v6414 = vadd.f32 %v6304, 1.0
        %v6415 = vadd.f32 %v6344, 1.0
        %v6416 = vadd.f32 %v6384, 1.0
        %v6417 = vmul.f32 %v5041, %v6385
        %v6418 = vmul.f32 %v5042, %v6386
        %v6419 = vmul.f32 %v5043, %v6387
        %v6420 = vmul.f32 %v5044, %v6388
        %v6421 = vmul.f32 %v5045, %v6389
        %v6422 = vmul.f32 %v5046, %v6390
        %v6423 = vmul.f32 %v5047, %v6391
        %v6424 = vmul.f32 %v5048, %v6392
        %v6425 = vmul.f32 %v5049, %v6393
        %v6426 = vmul.f32 %v5050, %v6394
        %v6427 = vmul.f32 %v5051, %v6395
        %v6428 = vmul.f32 %v5052, %v6396
        %v6429 = vmul.f32 %v5053, %v6397
        %v6430 = vmul.f32 %v5054, %v6398
        %v6431 = vmul.f32 %v5055, %v6399
        %v6432 = vmul.f32 %v5056, %v6400
        %v6433 = vmul.f32 %v5057, %v6401
        %v6434 = vmul.f32 %v5058, %v6402
        %v6435 = vmul.f32 %v5059, %v6403
        %v6436 = vmul.f32 %v5060, %v6404
        %v6437 = vmul.f32 %v5061, %v6405
        %v6438 = vmul.f32 %v5062, %v6406
        %v6439 = vmul.f32 %v5063, %v6407
        %v6440 = vmul.f32 %v5064, %v6408
        %v6441 = vmul.f32 %v5065, %v6409
        %v6442 = vmul.f32 %v5066, %v6410
        %v6443 = vmul.f32 %v5067, %v6411
        %v6444 = vmul.f32 %v5068, %v6412
        %v6445 = vmul.f32 %v5069, %v6413
        %v6446 = vmul.f32 %v5070, %v6414
        %v6447 = vmul.f32 %v5071, %v6415
        %v6448 = vmul.f32 %v5072, %v6416
        %v6449 = vpack.c.bf16 %v6433, %v6417
        %v6450 = vpack.c.bf16 %v6434, %v6418
        %v6451 = vpack.c.bf16 %v6435, %v6419
        %v6452 = vpack.c.bf16 %v6436, %v6420
        %v6453 = vpack.c.bf16 %v6437, %v6421
        %v6454 = vpack.c.bf16 %v6438, %v6422
        %v6455 = vpack.c.bf16 %v6439, %v6423
        %v6456 = vpack.c.bf16 %v6440, %v6424
        %v6457 = vpack.c.bf16 %v6441, %v6425
        %v6458 = vpack.c.bf16 %v6442, %v6426
        %v6459 = vpack.c.bf16 %v6443, %v6427
        %v6460 = vpack.c.bf16 %v6444, %v6428
        %v6461 = vpack.c.bf16 %v6445, %v6429
        %v6462 = vpack.c.bf16 %v6446, %v6430
        %v6463 = vpack.c.bf16 %v6447, %v6431
        %v6464 = vpack.c.bf16 %v6448, %v6432
        %v6465 = vld [vmem:[#allocation5] sm:$0xff]
        %v6466 = vld [vmem:[#allocation5 + $0x8] sm:$0xff]
        %v6467 = vld [vmem:[#allocation5 + $0x10] sm:$0xff]
        %v6468 = vld [vmem:[#allocation5 + $0x18] sm:$0xff]
        %v6469 = vld [vmem:[#allocation5 + $0x20] sm:$0xff]
        %v6470 = vld [vmem:[#allocation5 + $0x28] sm:$0xff]
        %v6471 = vld [vmem:[#allocation5 + $0x30] sm:$0xff]
        %v6472 = vld [vmem:[#allocation5 + $0x38] sm:$0xff]
        %v6473 = vld [vmem:[#allocation5 + $0x40] sm:$0xff]
        %v6474 = vld [vmem:[#allocation5 + $0x48] sm:$0xff]
        %v6475 = vld [vmem:[#allocation5 + $0x50] sm:$0xff]
        %v6476 = vld [vmem:[#allocation5 + $0x58] sm:$0xff]
        %v6477 = vld [vmem:[#allocation5 + $0x60] sm:$0xff]
        %v6478 = vld [vmem:[#allocation5 + $0x68] sm:$0xff]
        %v6479 = vld [vmem:[#allocation5 + $0x70] sm:$0xff]
        %v6480 = vld [vmem:[#allocation5 + $0x78] sm:$0xff]
        %v6481 = vld [vmem:[#allocation5 + $0x80] sm:$0xff]
        %v6482 = vld [vmem:[#allocation5 + $0x88] sm:$0xff]
        %v6483 = vld [vmem:[#allocation5 + $0x90] sm:$0xff]
        %v6484 = vld [vmem:[#allocation5 + $0x98] sm:$0xff]
        %v6485 = vld [vmem:[#allocation5 + $0xa0] sm:$0xff]
        %v6486 = vld [vmem:[#allocation5 + $0xa8] sm:$0xff]
        %v6487 = vld [vmem:[#allocation5 + $0xb0] sm:$0xff]
        %v6488 = vld [vmem:[#allocation5 + $0xb8] sm:$0xff]
        %v6489 = vld [vmem:[#allocation5 + $0xc0] sm:$0xff]
        %v6490 = vld [vmem:[#allocation5 + $0xc8] sm:$0xff]
        %v6491 = vld [vmem:[#allocation5 + $0xd0] sm:$0xff]
        %v6492 = vld [vmem:[#allocation5 + $0xd8] sm:$0xff]
        %v6493 = vld [vmem:[#allocation5 + $0xe0] sm:$0xff]
        %v6494 = vld [vmem:[#allocation5 + $0xe8] sm:$0xff]
        %v6495 = vld [vmem:[#allocation5 + $0xf0] sm:$0xff]
        %v6496 = vld [vmem:[#allocation5 + $0xf8] sm:$0xff]
        %v6497 = vld [vmem:[#allocation5 + $0x100] sm:$0xff]
        %v6498 = vld [vmem:[#allocation5 + $0x108] sm:$0xff]
        %v6499 = vld [vmem:[#allocation5 + $0x110] sm:$0xff]
        %v6500 = vld [vmem:[#allocation5 + $0x118] sm:$0xff]
        %v6501 = vld [vmem:[#allocation5 + $0x120] sm:$0xff]
        %v6502 = vld [vmem:[#allocation5 + $0x128] sm:$0xff]
        %v6503 = vld [vmem:[#allocation5 + $0x130] sm:$0xff]
        %v6504 = vld [vmem:[#allocation5 + $0x138] sm:$0xff]
        %v6505 = vld [vmem:[#allocation5 + $0x140] sm:$0xff]
        %v6506 = vld [vmem:[#allocation5 + $0x148] sm:$0xff]
        %v6507 = vld [vmem:[#allocation5 + $0x150] sm:$0xff]
        %v6508 = vld [vmem:[#allocation5 + $0x158] sm:$0xff]
        %v6509 = vld [vmem:[#allocation5 + $0x160] sm:$0xff]
        %v6510 = vld [vmem:[#allocation5 + $0x168] sm:$0xff]
        %v6511 = vld [vmem:[#allocation5 + $0x170] sm:$0xff]
        %v6512 = vld [vmem:[#allocation5 + $0x178] sm:$0xff]
        %v6513 = vld [vmem:[#allocation5 + $0x180] sm:$0xff]
        %v6514 = vld [vmem:[#allocation5 + $0x188] sm:$0xff]
        %v6515 = vld [vmem:[#allocation5 + $0x190] sm:$0xff]
        %v6516 = vld [vmem:[#allocation5 + $0x198] sm:$0xff]
        %v6517 = vld [vmem:[#allocation5 + $0x1a0] sm:$0xff]
        %v6518 = vld [vmem:[#allocation5 + $0x1a8] sm:$0xff]
        %v6519 = vld [vmem:[#allocation5 + $0x1b0] sm:$0xff]
        %v6520 = vld [vmem:[#allocation5 + $0x1b8] sm:$0xff]
        %v6521 = vld [vmem:[#allocation5 + $0x1c0] sm:$0xff]
        %v6522 = vld [vmem:[#allocation5 + $0x1c8] sm:$0xff]
        %v6523 = vld [vmem:[#allocation5 + $0x1d0] sm:$0xff]
        %v6524 = vld [vmem:[#allocation5 + $0x1d8] sm:$0xff]
        %v6525 = vld [vmem:[#allocation5 + $0x1e0] sm:$0xff]
        %v6526 = vld [vmem:[#allocation5 + $0x1e8] sm:$0xff]
        %v6527 = vld [vmem:[#allocation5 + $0x1f0] sm:$0xff]
        %v6528 = vld [vmem:[#allocation5 + $0x1f8] sm:$0xff]
        %v6529 = vld [vmem:[#allocation5 + $0x200] sm:$0xff]
        %v6530 = vld [vmem:[#allocation5 + $0x208] sm:$0xff]
        %v6531 = vld [vmem:[#allocation5 + $0x210] sm:$0xff]
        %v6532 = vld [vmem:[#allocation5 + $0x218] sm:$0xff]
        %v6533 = vld [vmem:[#allocation5 + $0x220] sm:$0xff]
        %v6534 = vld [vmem:[#allocation5 + $0x228] sm:$0xff]
        %v6535 = vld [vmem:[#allocation5 + $0x230] sm:$0xff]
        %v6536 = vld [vmem:[#allocation5 + $0x238] sm:$0xff]
        %v6537 = vld [vmem:[#allocation5 + $0x240] sm:$0xff]
        %v6538 = vld [vmem:[#allocation5 + $0x248] sm:$0xff]
        %v6539 = vld [vmem:[#allocation5 + $0x250] sm:$0xff]
        %v6540 = vld [vmem:[#allocation5 + $0x258] sm:$0xff]
        %v6541 = vld [vmem:[#allocation5 + $0x260] sm:$0xff]
        %v6542 = vld [vmem:[#allocation5 + $0x268] sm:$0xff]
        %v6543 = vld [vmem:[#allocation5 + $0x270] sm:$0xff]
        %v6544 = vld [vmem:[#allocation5 + $0x278] sm:$0xff]
        %v6545 = vld [vmem:[#allocation5 + $0x280] sm:$0xff]
        %v6546 = vld [vmem:[#allocation5 + $0x288] sm:$0xff]
        %v6547 = vld [vmem:[#allocation5 + $0x290] sm:$0xff]
        %v6548 = vld [vmem:[#allocation5 + $0x298] sm:$0xff]
        %v6549 = vld [vmem:[#allocation5 + $0x2a0] sm:$0xff]
        %v6550 = vld [vmem:[#allocation5 + $0x2a8] sm:$0xff]
        %v6551 = vld [vmem:[#allocation5 + $0x2b0] sm:$0xff]
        %v6552 = vld [vmem:[#allocation5 + $0x2b8] sm:$0xff]
        %v6553 = vld [vmem:[#allocation5 + $0x2c0] sm:$0xff]
        %v6554 = vld [vmem:[#allocation5 + $0x2c8] sm:$0xff]
        %v6555 = vld [vmem:[#allocation5 + $0x2d0] sm:$0xff]
        %v6556 = vld [vmem:[#allocation5 + $0x2d8] sm:$0xff]
        %v6557 = vld [vmem:[#allocation5 + $0x2e0] sm:$0xff]
        %v6558 = vld [vmem:[#allocation5 + $0x2e8] sm:$0xff]
        %v6559 = vld [vmem:[#allocation5 + $0x2f0] sm:$0xff]
        %v6560 = vld [vmem:[#allocation5 + $0x2f8] sm:$0xff]
        %v6561 = vld [vmem:[#allocation5 + $0x300] sm:$0xff]
        %v6562 = vld [vmem:[#allocation5 + $0x308] sm:$0xff]
        %v6563 = vld [vmem:[#allocation5 + $0x310] sm:$0xff]
        %v6564 = vld [vmem:[#allocation5 + $0x318] sm:$0xff]
        %v6565 = vld [vmem:[#allocation5 + $0x320] sm:$0xff]
        %v6566 = vld [vmem:[#allocation5 + $0x328] sm:$0xff]
        %v6567 = vld [vmem:[#allocation5 + $0x330] sm:$0xff]
        %v6568 = vld [vmem:[#allocation5 + $0x338] sm:$0xff]
        %v6569 = vld [vmem:[#allocation5 + $0x340] sm:$0xff]
        %v6570 = vld [vmem:[#allocation5 + $0x348] sm:$0xff]
        %v6571 = vld [vmem:[#allocation5 + $0x350] sm:$0xff]
        %v6572 = vld [vmem:[#allocation5 + $0x358] sm:$0xff]
        %v6573 = vld [vmem:[#allocation5 + $0x360] sm:$0xff]
        %v6574 = vld [vmem:[#allocation5 + $0x368] sm:$0xff]
        %v6575 = vld [vmem:[#allocation5 + $0x370] sm:$0xff]
        %v6576 = vld [vmem:[#allocation5 + $0x378] sm:$0xff]
        %v6577 = vld [vmem:[#allocation5 + $0x380] sm:$0xff]
        %v6578 = vld [vmem:[#allocation5 + $0x388] sm:$0xff]
        %v6579 = vld [vmem:[#allocation5 + $0x390] sm:$0xff]
        %v6580 = vld [vmem:[#allocation5 + $0x398] sm:$0xff]
        %v6581 = vld [vmem:[#allocation5 + $0x3a0] sm:$0xff]
        %v6582 = vld [vmem:[#allocation5 + $0x3a8] sm:$0xff]
        %v6583 = vld [vmem:[#allocation5 + $0x3b0] sm:$0xff]
        %v6584 = vld [vmem:[#allocation5 + $0x3b8] sm:$0xff]
        %v6585 = vld [vmem:[#allocation5 + $0x3c0] sm:$0xff]
        %v6586 = vld [vmem:[#allocation5 + $0x3c8] sm:$0xff]
        %v6587 = vld [vmem:[#allocation5 + $0x3d0] sm:$0xff]
        %v6588 = vld [vmem:[#allocation5 + $0x3d8] sm:$0xff]
        %v6589 = vld [vmem:[#allocation5 + $0x3e0] sm:$0xff]
        %v6590 = vld [vmem:[#allocation5 + $0x3e8] sm:$0xff]
        %v6591 = vld [vmem:[#allocation5 + $0x3f0] sm:$0xff]
        %v6592 = vld [vmem:[#allocation5 + $0x3f8] sm:$0xff]
        %v6593 = vld [vmem:[#allocation5 + $0x400] sm:$0xff]
        %v6594 = vld [vmem:[#allocation5 + $0x408] sm:$0xff]
        %v6595 = vld [vmem:[#allocation5 + $0x410] sm:$0xff]
        %v6596 = vld [vmem:[#allocation5 + $0x418] sm:$0xff]
        %v6597 = vld [vmem:[#allocation5 + $0x420] sm:$0xff]
        %v6598 = vld [vmem:[#allocation5 + $0x428] sm:$0xff]
        %v6599 = vld [vmem:[#allocation5 + $0x430] sm:$0xff]
        %v6600 = vld [vmem:[#allocation5 + $0x438] sm:$0xff]
        %v6601 = vld [vmem:[#allocation5 + $0x440] sm:$0xff]
        %v6602 = vld [vmem:[#allocation5 + $0x448] sm:$0xff]
        %v6603 = vld [vmem:[#allocation5 + $0x450] sm:$0xff]
        %v6604 = vld [vmem:[#allocation5 + $0x458] sm:$0xff]
        %v6605 = vld [vmem:[#allocation5 + $0x460] sm:$0xff]
        %v6606 = vld [vmem:[#allocation5 + $0x468] sm:$0xff]
        %v6607 = vld [vmem:[#allocation5 + $0x470] sm:$0xff]
        %v6608 = vld [vmem:[#allocation5 + $0x478] sm:$0xff]
        %v6609 = vld [vmem:[#allocation5 + $0x480] sm:$0xff]
        %v6610 = vld [vmem:[#allocation5 + $0x488] sm:$0xff]
        %v6611 = vld [vmem:[#allocation5 + $0x490] sm:$0xff]
        %v6612 = vld [vmem:[#allocation5 + $0x498] sm:$0xff]
        %v6613 = vld [vmem:[#allocation5 + $0x4a0] sm:$0xff]
        %v6614 = vld [vmem:[#allocation5 + $0x4a8] sm:$0xff]
        %v6615 = vld [vmem:[#allocation5 + $0x4b0] sm:$0xff]
        %v6616 = vld [vmem:[#allocation5 + $0x4b8] sm:$0xff]
        %v6617 = vld [vmem:[#allocation5 + $0x4c0] sm:$0xff]
        %v6618 = vld [vmem:[#allocation5 + $0x4c8] sm:$0xff]
        %v6619 = vld [vmem:[#allocation5 + $0x4d0] sm:$0xff]
        %v6620 = vld [vmem:[#allocation5 + $0x4d8] sm:$0xff]
        %v6621 = vld [vmem:[#allocation5 + $0x4e0] sm:$0xff]
        %v6622 = vld [vmem:[#allocation5 + $0x4e8] sm:$0xff]
        %v6623 = vld [vmem:[#allocation5 + $0x4f0] sm:$0xff]
        %v6624 = vld [vmem:[#allocation5 + $0x4f8] sm:$0xff]
        %v6625 = vld [vmem:[#allocation5 + $0x500] sm:$0xff]
        %v6626 = vld [vmem:[#allocation5 + $0x508] sm:$0xff]
        %v6627 = vld [vmem:[#allocation5 + $0x510] sm:$0xff]
        %v6628 = vld [vmem:[#allocation5 + $0x518] sm:$0xff]
        %v6629 = vld [vmem:[#allocation5 + $0x520] sm:$0xff]
        %v6630 = vld [vmem:[#allocation5 + $0x528] sm:$0xff]
        %v6631 = vld [vmem:[#allocation5 + $0x530] sm:$0xff]
        %v6632 = vld [vmem:[#allocation5 + $0x538] sm:$0xff]
        %v6633 = vld [vmem:[#allocation5 + $0x540] sm:$0xff]
        %v6634 = vld [vmem:[#allocation5 + $0x548] sm:$0xff]
        %v6635 = vld [vmem:[#allocation5 + $0x550] sm:$0xff]
        %v6636 = vld [vmem:[#allocation5 + $0x558] sm:$0xff]
        %v6637 = vld [vmem:[#allocation5 + $0x560] sm:$0xff]
        %v6638 = vld [vmem:[#allocation5 + $0x568] sm:$0xff]
        %v6639 = vld [vmem:[#allocation5 + $0x570] sm:$0xff]
        %v6640 = vld [vmem:[#allocation5 + $0x578] sm:$0xff]
        %v6641 = vld [vmem:[#allocation5 + $0x580] sm:$0xff]
        %v6642 = vld [vmem:[#allocation5 + $0x588] sm:$0xff]
        %v6643 = vld [vmem:[#allocation5 + $0x590] sm:$0xff]
        %v6644 = vld [vmem:[#allocation5 + $0x598] sm:$0xff]
        %v6645 = vld [vmem:[#allocation5 + $0x5a0] sm:$0xff]
        %v6646 = vld [vmem:[#allocation5 + $0x5a8] sm:$0xff]
        %v6647 = vld [vmem:[#allocation5 + $0x5b0] sm:$0xff]
        %v6648 = vld [vmem:[#allocation5 + $0x5b8] sm:$0xff]
        %v6649 = vld [vmem:[#allocation5 + $0x5c0] sm:$0xff]
        %v6650 = vld [vmem:[#allocation5 + $0x5c8] sm:$0xff]
        %v6651 = vld [vmem:[#allocation5 + $0x5d0] sm:$0xff]
        %v6652 = vld [vmem:[#allocation5 + $0x5d8] sm:$0xff]
        %v6653 = vld [vmem:[#allocation5 + $0x5e0] sm:$0xff]
        %v6654 = vld [vmem:[#allocation5 + $0x5e8] sm:$0xff]
        %v6655 = vld [vmem:[#allocation5 + $0x5f0] sm:$0xff]
        %v6656 = vld [vmem:[#allocation5 + $0x5f8] sm:$0xff]
        %v6657 = vld [vmem:[#allocation5 + $0x600] sm:$0xff]
        %v6658 = vld [vmem:[#allocation5 + $0x608] sm:$0xff]
        %v6659 = vld [vmem:[#allocation5 + $0x610] sm:$0xff]
        %v6660 = vld [vmem:[#allocation5 + $0x618] sm:$0xff]
        %v6661 = vld [vmem:[#allocation5 + $0x620] sm:$0xff]
        %v6662 = vld [vmem:[#allocation5 + $0x628] sm:$0xff]
        %v6663 = vld [vmem:[#allocation5 + $0x630] sm:$0xff]
        %v6664 = vld [vmem:[#allocation5 + $0x638] sm:$0xff]
        %v6665 = vld [vmem:[#allocation5 + $0x640] sm:$0xff]
        %v6666 = vld [vmem:[#allocation5 + $0x648] sm:$0xff]
        %v6667 = vld [vmem:[#allocation5 + $0x650] sm:$0xff]
        %v6668 = vld [vmem:[#allocation5 + $0x658] sm:$0xff]
        %v6669 = vld [vmem:[#allocation5 + $0x660] sm:$0xff]
        %v6670 = vld [vmem:[#allocation5 + $0x668] sm:$0xff]
        %v6671 = vld [vmem:[#allocation5 + $0x670] sm:$0xff]
        %v6672 = vld [vmem:[#allocation5 + $0x678] sm:$0xff]
        %v6673 = vld [vmem:[#allocation5 + $0x680] sm:$0xff]
        %v6674 = vld [vmem:[#allocation5 + $0x688] sm:$0xff]
        %v6675 = vld [vmem:[#allocation5 + $0x690] sm:$0xff]
        %v6676 = vld [vmem:[#allocation5 + $0x698] sm:$0xff]
        %v6677 = vld [vmem:[#allocation5 + $0x6a0] sm:$0xff]
        %v6678 = vld [vmem:[#allocation5 + $0x6a8] sm:$0xff]
        %v6679 = vld [vmem:[#allocation5 + $0x6b0] sm:$0xff]
        %v6680 = vld [vmem:[#allocation5 + $0x6b8] sm:$0xff]
        %v6681 = vld [vmem:[#allocation5 + $0x6c0] sm:$0xff]
        %v6682 = vld [vmem:[#allocation5 + $0x6c8] sm:$0xff]
        %v6683 = vld [vmem:[#allocation5 + $0x6d0] sm:$0xff]
        %v6684 = vld [vmem:[#allocation5 + $0x6d8] sm:$0xff]
        %v6685 = vld [vmem:[#allocation5 + $0x6e0] sm:$0xff]
        %v6686 = vld [vmem:[#allocation5 + $0x6e8] sm:$0xff]
        %v6687 = vld [vmem:[#allocation5 + $0x6f0] sm:$0xff]
        %v6688 = vld [vmem:[#allocation5 + $0x6f8] sm:$0xff]
        %v6689 = vld [vmem:[#allocation5 + $0x700] sm:$0xff]
        %v6690 = vld [vmem:[#allocation5 + $0x708] sm:$0xff]
        %v6691 = vld [vmem:[#allocation5 + $0x710] sm:$0xff]
        %v6692 = vld [vmem:[#allocation5 + $0x718] sm:$0xff]
        %v6693 = vld [vmem:[#allocation5 + $0x720] sm:$0xff]
        %v6694 = vld [vmem:[#allocation5 + $0x728] sm:$0xff]
        %v6695 = vld [vmem:[#allocation5 + $0x730] sm:$0xff]
        %v6696 = vld [vmem:[#allocation5 + $0x738] sm:$0xff]
        %v6697 = vld [vmem:[#allocation5 + $0x740] sm:$0xff]
        %v6698 = vld [vmem:[#allocation5 + $0x748] sm:$0xff]
        %v6699 = vld [vmem:[#allocation5 + $0x750] sm:$0xff]
        %v6700 = vld [vmem:[#allocation5 + $0x758] sm:$0xff]
        %v6701 = vld [vmem:[#allocation5 + $0x760] sm:$0xff]
        %v6702 = vld [vmem:[#allocation5 + $0x768] sm:$0xff]
        %v6703 = vld [vmem:[#allocation5 + $0x770] sm:$0xff]
        %v6704 = vld [vmem:[#allocation5 + $0x778] sm:$0xff]
        %v6705 = vld [vmem:[#allocation5 + $0x780] sm:$0xff]
        %v6706 = vld [vmem:[#allocation5 + $0x788] sm:$0xff]
        %v6707 = vld [vmem:[#allocation5 + $0x790] sm:$0xff]
        %v6708 = vld [vmem:[#allocation5 + $0x798] sm:$0xff]
        %v6709 = vld [vmem:[#allocation5 + $0x7a0] sm:$0xff]
        %v6710 = vld [vmem:[#allocation5 + $0x7a8] sm:$0xff]
        %v6711 = vld [vmem:[#allocation5 + $0x7b0] sm:$0xff]
        %v6712 = vld [vmem:[#allocation5 + $0x7b8] sm:$0xff]
        %v6713 = vld [vmem:[#allocation5 + $0x7c0] sm:$0xff]
        %v6714 = vld [vmem:[#allocation5 + $0x7c8] sm:$0xff]
        %v6715 = vld [vmem:[#allocation5 + $0x7d0] sm:$0xff]
        %v6716 = vld [vmem:[#allocation5 + $0x7d8] sm:$0xff]
        %v6717 = vld [vmem:[#allocation5 + $0x7e0] sm:$0xff]
        %v6718 = vld [vmem:[#allocation5 + $0x7e8] sm:$0xff]
        %v6719 = vld [vmem:[#allocation5 + $0x7f0] sm:$0xff]
        %v6720 = vld [vmem:[#allocation5 + $0x7f8] sm:$0xff]
        %v6721 = vld [vmem:[%s12] sm:$0x3]
        %v6723 = vperm.slane %v6721, 0
        %v6724 = vperm.slane %v6721, 1
        %v6983 = vunpack.c.l.b16 %v6465
        %v6984 = vunpack.c.h.b16 %v6465
        %v6985 = vunpack.c.l.b16 %v6466
        %v6986 = vunpack.c.h.b16 %v6466
        %v6987 = vunpack.c.l.b16 %v6467
        %v6988 = vunpack.c.h.b16 %v6467
        %v6989 = vunpack.c.l.b16 %v6468
        %v6990 = vunpack.c.h.b16 %v6468
        %v6991 = vunpack.c.l.b16 %v6469
        %v6992 = vunpack.c.h.b16 %v6469
        %v6993 = vunpack.c.l.b16 %v6470
        %v6994 = vunpack.c.h.b16 %v6470
        %v6995 = vunpack.c.l.b16 %v6471
        %v6996 = vunpack.c.h.b16 %v6471
        %v6997 = vunpack.c.l.b16 %v6472
        %v6998 = vunpack.c.h.b16 %v6472
        %v6999 = vunpack.c.l.b16 %v6473
        %v7000 = vunpack.c.h.b16 %v6473
        %v7001 = vunpack.c.l.b16 %v6474
        %v7002 = vunpack.c.h.b16 %v6474
        %v7003 = vunpack.c.l.b16 %v6475
        %v7004 = vunpack.c.h.b16 %v6475
        %v7005 = vunpack.c.l.b16 %v6476
        %v7006 = vunpack.c.h.b16 %v6476
        %v7007 = vunpack.c.l.b16 %v6477
        %v7008 = vunpack.c.h.b16 %v6477
        %v7009 = vunpack.c.l.b16 %v6478
        %v7010 = vunpack.c.h.b16 %v6478
        %v7011 = vunpack.c.l.b16 %v6479
        %v7012 = vunpack.c.h.b16 %v6479
        %v7013 = vunpack.c.l.b16 %v6480
        %v7014 = vunpack.c.h.b16 %v6480
        %v7015 = vunpack.c.l.b16 %v6481
        %v7016 = vunpack.c.h.b16 %v6481
        %v7017 = vunpack.c.l.b16 %v6482
        %v7018 = vunpack.c.h.b16 %v6482
        %v7019 = vunpack.c.l.b16 %v6483
        %v7020 = vunpack.c.h.b16 %v6483
        %v7021 = vunpack.c.l.b16 %v6484
        %v7022 = vunpack.c.h.b16 %v6484
        %v7023 = vunpack.c.l.b16 %v6485
        %v7024 = vunpack.c.h.b16 %v6485
        %v7025 = vunpack.c.l.b16 %v6486
        %v7026 = vunpack.c.h.b16 %v6486
        %v7027 = vunpack.c.l.b16 %v6487
        %v7028 = vunpack.c.h.b16 %v6487
        %v7029 = vunpack.c.l.b16 %v6488
        %v7030 = vunpack.c.h.b16 %v6488
        %v7031 = vunpack.c.l.b16 %v6489
        %v7032 = vunpack.c.h.b16 %v6489
        %v7033 = vunpack.c.l.b16 %v6490
        %v7034 = vunpack.c.h.b16 %v6490
        %v7035 = vunpack.c.l.b16 %v6491
        %v7036 = vunpack.c.h.b16 %v6491
        %v7037 = vunpack.c.l.b16 %v6492
        %v7038 = vunpack.c.h.b16 %v6492
        %v7039 = vunpack.c.l.b16 %v6493
        %v7040 = vunpack.c.h.b16 %v6493
        %v7041 = vunpack.c.l.b16 %v6494
        %v7042 = vunpack.c.h.b16 %v6494
        %v7043 = vunpack.c.l.b16 %v6495
        %v7044 = vunpack.c.h.b16 %v6495
        %v7045 = vunpack.c.l.b16 %v6496
        %v7046 = vunpack.c.h.b16 %v6496
        %v7047 = vunpack.c.l.b16 %v6497
        %v7048 = vunpack.c.h.b16 %v6497
        %v7049 = vunpack.c.l.b16 %v6498
        %v7050 = vunpack.c.h.b16 %v6498
        %v7051 = vunpack.c.l.b16 %v6499
        %v7052 = vunpack.c.h.b16 %v6499
        %v7053 = vunpack.c.l.b16 %v6500
        %v7054 = vunpack.c.h.b16 %v6500
        %v7055 = vunpack.c.l.b16 %v6501
        %v7056 = vunpack.c.h.b16 %v6501
        %v7057 = vunpack.c.l.b16 %v6502
        %v7058 = vunpack.c.h.b16 %v6502
        %v7059 = vunpack.c.l.b16 %v6503
        %v7060 = vunpack.c.h.b16 %v6503
        %v7061 = vunpack.c.l.b16 %v6504
        %v7062 = vunpack.c.h.b16 %v6504
        %v7063 = vunpack.c.l.b16 %v6505
        %v7064 = vunpack.c.h.b16 %v6505
        %v7065 = vunpack.c.l.b16 %v6506
        %v7066 = vunpack.c.h.b16 %v6506
        %v7067 = vunpack.c.l.b16 %v6507
        %v7068 = vunpack.c.h.b16 %v6507
        %v7069 = vunpack.c.l.b16 %v6508
        %v7070 = vunpack.c.h.b16 %v6508
        %v7071 = vunpack.c.l.b16 %v6509
        %v7072 = vunpack.c.h.b16 %v6509
        %v7073 = vunpack.c.l.b16 %v6510
        %v7074 = vunpack.c.h.b16 %v6510
        %v7075 = vunpack.c.l.b16 %v6511
        %v7076 = vunpack.c.h.b16 %v6511
        %v7077 = vunpack.c.l.b16 %v6512
        %v7078 = vunpack.c.h.b16 %v6512
        %v7079 = vunpack.c.l.b16 %v6513
        %v7080 = vunpack.c.h.b16 %v6513
        %v7081 = vunpack.c.l.b16 %v6514
        %v7082 = vunpack.c.h.b16 %v6514
        %v7083 = vunpack.c.l.b16 %v6515
        %v7084 = vunpack.c.h.b16 %v6515
        %v7085 = vunpack.c.l.b16 %v6516
        %v7086 = vunpack.c.h.b16 %v6516
        %v7087 = vunpack.c.l.b16 %v6517
        %v7088 = vunpack.c.h.b16 %v6517
        %v7089 = vunpack.c.l.b16 %v6518
        %v7090 = vunpack.c.h.b16 %v6518
        %v7091 = vunpack.c.l.b16 %v6519
        %v7092 = vunpack.c.h.b16 %v6519
        %v7093 = vunpack.c.l.b16 %v6520
        %v7094 = vunpack.c.h.b16 %v6520
        %v7095 = vunpack.c.l.b16 %v6521
        %v7096 = vunpack.c.h.b16 %v6521
        %v7097 = vunpack.c.l.b16 %v6522
        %v7098 = vunpack.c.h.b16 %v6522
        %v7099 = vunpack.c.l.b16 %v6523
        %v7100 = vunpack.c.h.b16 %v6523
        %v7101 = vunpack.c.l.b16 %v6524
        %v7102 = vunpack.c.h.b16 %v6524
        %v7103 = vunpack.c.l.b16 %v6525
        %v7104 = vunpack.c.h.b16 %v6525
        %v7105 = vunpack.c.l.b16 %v6526
        %v7106 = vunpack.c.h.b16 %v6526
        %v7107 = vunpack.c.l.b16 %v6527
        %v7108 = vunpack.c.h.b16 %v6527
        %v7109 = vunpack.c.l.b16 %v6528
        %v7110 = vunpack.c.h.b16 %v6528
        %v7111 = vunpack.c.l.b16 %v6529
        %v7112 = vunpack.c.h.b16 %v6529
        %v7113 = vunpack.c.l.b16 %v6530
        %v7114 = vunpack.c.h.b16 %v6530
        %v7115 = vunpack.c.l.b16 %v6531
        %v7116 = vunpack.c.h.b16 %v6531
        %v7117 = vunpack.c.l.b16 %v6532
        %v7118 = vunpack.c.h.b16 %v6532
        %v7119 = vunpack.c.l.b16 %v6533
        %v7120 = vunpack.c.h.b16 %v6533
        %v7121 = vunpack.c.l.b16 %v6534
        %v7122 = vunpack.c.h.b16 %v6534
        %v7123 = vunpack.c.l.b16 %v6535
        %v7124 = vunpack.c.h.b16 %v6535
        %v7125 = vunpack.c.l.b16 %v6536
        %v7126 = vunpack.c.h.b16 %v6536
        %v7127 = vunpack.c.l.b16 %v6537
        %v7128 = vunpack.c.h.b16 %v6537
        %v7129 = vunpack.c.l.b16 %v6538
        %v7130 = vunpack.c.h.b16 %v6538
        %v7131 = vunpack.c.l.b16 %v6539
        %v7132 = vunpack.c.h.b16 %v6539
        %v7133 = vunpack.c.l.b16 %v6540
        %v7134 = vunpack.c.h.b16 %v6540
        %v7135 = vunpack.c.l.b16 %v6541
        %v7136 = vunpack.c.h.b16 %v6541
        %v7137 = vunpack.c.l.b16 %v6542
        %v7138 = vunpack.c.h.b16 %v6542
        %v7139 = vunpack.c.l.b16 %v6543
        %v7140 = vunpack.c.h.b16 %v6543
        %v7141 = vunpack.c.l.b16 %v6544
        %v7142 = vunpack.c.h.b16 %v6544
        %v7143 = vunpack.c.l.b16 %v6545
        %v7144 = vunpack.c.h.b16 %v6545
        %v7145 = vunpack.c.l.b16 %v6546
        %v7146 = vunpack.c.h.b16 %v6546
        %v7147 = vunpack.c.l.b16 %v6547
        %v7148 = vunpack.c.h.b16 %v6547
        %v7149 = vunpack.c.l.b16 %v6548
        %v7150 = vunpack.c.h.b16 %v6548
        %v7151 = vunpack.c.l.b16 %v6549
        %v7152 = vunpack.c.h.b16 %v6549
        %v7153 = vunpack.c.l.b16 %v6550
        %v7154 = vunpack.c.h.b16 %v6550
        %v7155 = vunpack.c.l.b16 %v6551
        %v7156 = vunpack.c.h.b16 %v6551
        %v7157 = vunpack.c.l.b16 %v6552
        %v7158 = vunpack.c.h.b16 %v6552
        %v7159 = vunpack.c.l.b16 %v6553
        %v7160 = vunpack.c.h.b16 %v6553
        %v7161 = vunpack.c.l.b16 %v6554
        %v7162 = vunpack.c.h.b16 %v6554
        %v7163 = vunpack.c.l.b16 %v6555
        %v7164 = vunpack.c.h.b16 %v6555
        %v7165 = vunpack.c.l.b16 %v6556
        %v7166 = vunpack.c.h.b16 %v6556
        %v7167 = vunpack.c.l.b16 %v6557
        %v7168 = vunpack.c.h.b16 %v6557
        %v7169 = vunpack.c.l.b16 %v6558
        %v7170 = vunpack.c.h.b16 %v6558
        %v7171 = vunpack.c.l.b16 %v6559
        %v7172 = vunpack.c.h.b16 %v6559
        %v7173 = vunpack.c.l.b16 %v6560
        %v7174 = vunpack.c.h.b16 %v6560
        %v7175 = vunpack.c.l.b16 %v6561
        %v7176 = vunpack.c.h.b16 %v6561
        %v7177 = vunpack.c.l.b16 %v6562
        %v7178 = vunpack.c.h.b16 %v6562
        %v7179 = vunpack.c.l.b16 %v6563
        %v7180 = vunpack.c.h.b16 %v6563
        %v7181 = vunpack.c.l.b16 %v6564
        %v7182 = vunpack.c.h.b16 %v6564
        %v7183 = vunpack.c.l.b16 %v6565
        %v7184 = vunpack.c.h.b16 %v6565
        %v7185 = vunpack.c.l.b16 %v6566
        %v7186 = vunpack.c.h.b16 %v6566
        %v7187 = vunpack.c.l.b16 %v6567
        %v7188 = vunpack.c.h.b16 %v6567
        %v7189 = vunpack.c.l.b16 %v6568
        %v7190 = vunpack.c.h.b16 %v6568
        %v7191 = vunpack.c.l.b16 %v6569
        %v7192 = vunpack.c.h.b16 %v6569
        %v7193 = vunpack.c.l.b16 %v6570
        %v7194 = vunpack.c.h.b16 %v6570
        %v7195 = vunpack.c.l.b16 %v6571
        %v7196 = vunpack.c.h.b16 %v6571
        %v7197 = vunpack.c.l.b16 %v6572
        %v7198 = vunpack.c.h.b16 %v6572
        %v7199 = vunpack.c.l.b16 %v6573
        %v7200 = vunpack.c.h.b16 %v6573
        %v7201 = vunpack.c.l.b16 %v6574
        %v7202 = vunpack.c.h.b16 %v6574
        %v7203 = vunpack.c.l.b16 %v6575
        %v7204 = vunpack.c.h.b16 %v6575
        %v7205 = vunpack.c.l.b16 %v6576
        %v7206 = vunpack.c.h.b16 %v6576
        %v7207 = vunpack.c.l.b16 %v6577
        %v7208 = vunpack.c.h.b16 %v6577
        %v7209 = vunpack.c.l.b16 %v6578
        %v7210 = vunpack.c.h.b16 %v6578
        %v7211 = vunpack.c.l.b16 %v6579
        %v7212 = vunpack.c.h.b16 %v6579
        %v7213 = vunpack.c.l.b16 %v6580
        %v7214 = vunpack.c.h.b16 %v6580
        %v7215 = vunpack.c.l.b16 %v6581
        %v7216 = vunpack.c.h.b16 %v6581
        %v7217 = vunpack.c.l.b16 %v6582
        %v7218 = vunpack.c.h.b16 %v6582
        %v7219 = vunpack.c.l.b16 %v6583
        %v7220 = vunpack.c.h.b16 %v6583
        %v7221 = vunpack.c.l.b16 %v6584
        %v7222 = vunpack.c.h.b16 %v6584
        %v7223 = vunpack.c.l.b16 %v6585
        %v7224 = vunpack.c.h.b16 %v6585
        %v7225 = vunpack.c.l.b16 %v6586
        %v7226 = vunpack.c.h.b16 %v6586
        %v7227 = vunpack.c.l.b16 %v6587
        %v7228 = vunpack.c.h.b16 %v6587
        %v7229 = vunpack.c.l.b16 %v6588
        %v7230 = vunpack.c.h.b16 %v6588
        %v7231 = vunpack.c.l.b16 %v6589
        %v7232 = vunpack.c.h.b16 %v6589
        %v7233 = vunpack.c.l.b16 %v6590
        %v7234 = vunpack.c.h.b16 %v6590
        %v7235 = vunpack.c.l.b16 %v6591
        %v7236 = vunpack.c.h.b16 %v6591
        %v7237 = vunpack.c.l.b16 %v6592
        %v7238 = vunpack.c.h.b16 %v6592
        %v7239 = vunpack.c.l.b16 %v6593
        %v7240 = vunpack.c.h.b16 %v6593
        %v7241 = vunpack.c.l.b16 %v6594
        %v7242 = vunpack.c.h.b16 %v6594
        %v7243 = vunpack.c.l.b16 %v6595
        %v7244 = vunpack.c.h.b16 %v6595
        %v7245 = vunpack.c.l.b16 %v6596
        %v7246 = vunpack.c.h.b16 %v6596
        %v7247 = vunpack.c.l.b16 %v6597
        %v7248 = vunpack.c.h.b16 %v6597
        %v7249 = vunpack.c.l.b16 %v6598
        %v7250 = vunpack.c.h.b16 %v6598
        %v7251 = vunpack.c.l.b16 %v6599
        %v7252 = vunpack.c.h.b16 %v6599
        %v7253 = vunpack.c.l.b16 %v6600
        %v7254 = vunpack.c.h.b16 %v6600
        %v7255 = vunpack.c.l.b16 %v6601
        %v7256 = vunpack.c.h.b16 %v6601
        %v7257 = vunpack.c.l.b16 %v6602
        %v7258 = vunpack.c.h.b16 %v6602
        %v7259 = vunpack.c.l.b16 %v6603
        %v7260 = vunpack.c.h.b16 %v6603
        %v7261 = vunpack.c.l.b16 %v6604
        %v7262 = vunpack.c.h.b16 %v6604
        %v7263 = vunpack.c.l.b16 %v6605
        %v7264 = vunpack.c.h.b16 %v6605
        %v7265 = vunpack.c.l.b16 %v6606
        %v7266 = vunpack.c.h.b16 %v6606
        %v7267 = vunpack.c.l.b16 %v6607
        %v7268 = vunpack.c.h.b16 %v6607
        %v7269 = vunpack.c.l.b16 %v6608
        %v7270 = vunpack.c.h.b16 %v6608
        %v7271 = vunpack.c.l.b16 %v6609
        %v7272 = vunpack.c.h.b16 %v6609
        %v7273 = vunpack.c.l.b16 %v6610
        %v7274 = vunpack.c.h.b16 %v6610
        %v7275 = vunpack.c.l.b16 %v6611
        %v7276 = vunpack.c.h.b16 %v6611
        %v7277 = vunpack.c.l.b16 %v6612
        %v7278 = vunpack.c.h.b16 %v6612
        %v7279 = vunpack.c.l.b16 %v6613
        %v7280 = vunpack.c.h.b16 %v6613
        %v7281 = vunpack.c.l.b16 %v6614
        %v7282 = vunpack.c.h.b16 %v6614
        %v7283 = vunpack.c.l.b16 %v6615
        %v7284 = vunpack.c.h.b16 %v6615
        %v7285 = vunpack.c.l.b16 %v6616
        %v7286 = vunpack.c.h.b16 %v6616
        %v7287 = vunpack.c.l.b16 %v6617
        %v7288 = vunpack.c.h.b16 %v6617
        %v7289 = vunpack.c.l.b16 %v6618
        %v7290 = vunpack.c.h.b16 %v6618
        %v7291 = vunpack.c.l.b16 %v6619
        %v7292 = vunpack.c.h.b16 %v6619
        %v7293 = vunpack.c.l.b16 %v6620
        %v7294 = vunpack.c.h.b16 %v6620
        %v7295 = vunpack.c.l.b16 %v6621
        %v7296 = vunpack.c.h.b16 %v6621
        %v7297 = vunpack.c.l.b16 %v6622
        %v7298 = vunpack.c.h.b16 %v6622
        %v7299 = vunpack.c.l.b16 %v6623
        %v7300 = vunpack.c.h.b16 %v6623
        %v7301 = vunpack.c.l.b16 %v6624
        %v7302 = vunpack.c.h.b16 %v6624
        %v7303 = vunpack.c.l.b16 %v6625
        %v7304 = vunpack.c.h.b16 %v6625
        %v7305 = vunpack.c.l.b16 %v6626
        %v7306 = vunpack.c.h.b16 %v6626
        %v7307 = vunpack.c.l.b16 %v6627
        %v7308 = vunpack.c.h.b16 %v6627
        %v7309 = vunpack.c.l.b16 %v6628
        %v7310 = vunpack.c.h.b16 %v6628
        %v7311 = vunpack.c.l.b16 %v6629
        %v7312 = vunpack.c.h.b16 %v6629
        %v7313 = vunpack.c.l.b16 %v6630
        %v7314 = vunpack.c.h.b16 %v6630
        %v7315 = vunpack.c.l.b16 %v6631
        %v7316 = vunpack.c.h.b16 %v6631
        %v7317 = vunpack.c.l.b16 %v6632
        %v7318 = vunpack.c.h.b16 %v6632
        %v7319 = vunpack.c.l.b16 %v6633
        %v7320 = vunpack.c.h.b16 %v6633
        %v7321 = vunpack.c.l.b16 %v6634
        %v7322 = vunpack.c.h.b16 %v6634
        %v7323 = vunpack.c.l.b16 %v6635
        %v7324 = vunpack.c.h.b16 %v6635
        %v7325 = vunpack.c.l.b16 %v6636
        %v7326 = vunpack.c.h.b16 %v6636
        %v7327 = vunpack.c.l.b16 %v6637
        %v7328 = vunpack.c.h.b16 %v6637
        %v7329 = vunpack.c.l.b16 %v6638
        %v7330 = vunpack.c.h.b16 %v6638
        %v7331 = vunpack.c.l.b16 %v6639
        %v7332 = vunpack.c.h.b16 %v6639
        %v7333 = vunpack.c.l.b16 %v6640
        %v7334 = vunpack.c.h.b16 %v6640
        %v7335 = vunpack.c.l.b16 %v6641
        %v7336 = vunpack.c.h.b16 %v6641
        %v7337 = vunpack.c.l.b16 %v6642
        %v7338 = vunpack.c.h.b16 %v6642
        %v7339 = vunpack.c.l.b16 %v6643
        %v7340 = vunpack.c.h.b16 %v6643
        %v7341 = vunpack.c.l.b16 %v6644
        %v7342 = vunpack.c.h.b16 %v6644
        %v7343 = vunpack.c.l.b16 %v6645
        %v7344 = vunpack.c.h.b16 %v6645
        %v7345 = vunpack.c.l.b16 %v6646
        %v7346 = vunpack.c.h.b16 %v6646
        %v7347 = vunpack.c.l.b16 %v6647
        %v7348 = vunpack.c.h.b16 %v6647
        %v7349 = vunpack.c.l.b16 %v6648
        %v7350 = vunpack.c.h.b16 %v6648
        %v7351 = vunpack.c.l.b16 %v6649
        %v7352 = vunpack.c.h.b16 %v6649
        %v7353 = vunpack.c.l.b16 %v6650
        %v7354 = vunpack.c.h.b16 %v6650
        %v7355 = vunpack.c.l.b16 %v6651
        %v7356 = vunpack.c.h.b16 %v6651
        %v7357 = vunpack.c.l.b16 %v6652
        %v7358 = vunpack.c.h.b16 %v6652
        %v7359 = vunpack.c.l.b16 %v6653
        %v7360 = vunpack.c.h.b16 %v6653
        %v7361 = vunpack.c.l.b16 %v6654
        %v7362 = vunpack.c.h.b16 %v6654
        %v7363 = vunpack.c.l.b16 %v6655
        %v7364 = vunpack.c.h.b16 %v6655
        %v7365 = vunpack.c.l.b16 %v6656
        %v7366 = vunpack.c.h.b16 %v6656
        %v7367 = vunpack.c.l.b16 %v6657
        %v7368 = vunpack.c.h.b16 %v6657
        %v7369 = vunpack.c.l.b16 %v6658
        %v7370 = vunpack.c.h.b16 %v6658
        %v7371 = vunpack.c.l.b16 %v6659
        %v7372 = vunpack.c.h.b16 %v6659
        %v7373 = vunpack.c.l.b16 %v6660
        %v7374 = vunpack.c.h.b16 %v6660
        %v7375 = vunpack.c.l.b16 %v6661
        %v7376 = vunpack.c.h.b16 %v6661
        %v7377 = vunpack.c.l.b16 %v6662
        %v7378 = vunpack.c.h.b16 %v6662
        %v7379 = vunpack.c.l.b16 %v6663
        %v7380 = vunpack.c.h.b16 %v6663
        %v7381 = vunpack.c.l.b16 %v6664
        %v7382 = vunpack.c.h.b16 %v6664
        %v7383 = vunpack.c.l.b16 %v6665
        %v7384 = vunpack.c.h.b16 %v6665
        %v7385 = vunpack.c.l.b16 %v6666
        %v7386 = vunpack.c.h.b16 %v6666
        %v7387 = vunpack.c.l.b16 %v6667
        %v7388 = vunpack.c.h.b16 %v6667
        %v7389 = vunpack.c.l.b16 %v6668
        %v7390 = vunpack.c.h.b16 %v6668
        %v7391 = vunpack.c.l.b16 %v6669
        %v7392 = vunpack.c.h.b16 %v6669
        %v7393 = vunpack.c.l.b16 %v6670
        %v7394 = vunpack.c.h.b16 %v6670
        %v7395 = vunpack.c.l.b16 %v6671
        %v7396 = vunpack.c.h.b16 %v6671
        %v7397 = vunpack.c.l.b16 %v6672
        %v7398 = vunpack.c.h.b16 %v6672
        %v7399 = vunpack.c.l.b16 %v6673
        %v7400 = vunpack.c.h.b16 %v6673
        %v7401 = vunpack.c.l.b16 %v6674
        %v7402 = vunpack.c.h.b16 %v6674
        %v7403 = vunpack.c.l.b16 %v6675
        %v7404 = vunpack.c.h.b16 %v6675
        %v7405 = vunpack.c.l.b16 %v6676
        %v7406 = vunpack.c.h.b16 %v6676
        %v7407 = vunpack.c.l.b16 %v6677
        %v7408 = vunpack.c.h.b16 %v6677
        %v7409 = vunpack.c.l.b16 %v6678
        %v7410 = vunpack.c.h.b16 %v6678
        %v7411 = vunpack.c.l.b16 %v6679
        %v7412 = vunpack.c.h.b16 %v6679
        %v7413 = vunpack.c.l.b16 %v6680
        %v7414 = vunpack.c.h.b16 %v6680
        %v7415 = vunpack.c.l.b16 %v6681
        %v7416 = vunpack.c.h.b16 %v6681
        %v7417 = vunpack.c.l.b16 %v6682
        %v7418 = vunpack.c.h.b16 %v6682
        %v7419 = vunpack.c.l.b16 %v6683
        %v7420 = vunpack.c.h.b16 %v6683
        %v7421 = vunpack.c.l.b16 %v6684
        %v7422 = vunpack.c.h.b16 %v6684
        %v7423 = vunpack.c.l.b16 %v6685
        %v7424 = vunpack.c.h.b16 %v6685
        %v7425 = vunpack.c.l.b16 %v6686
        %v7426 = vunpack.c.h.b16 %v6686
        %v7427 = vunpack.c.l.b16 %v6687
        %v7428 = vunpack.c.h.b16 %v6687
        %v7429 = vunpack.c.l.b16 %v6688
        %v7430 = vunpack.c.h.b16 %v6688
        %v7431 = vunpack.c.l.b16 %v6689
        %v7432 = vunpack.c.h.b16 %v6689
        %v7433 = vunpack.c.l.b16 %v6690
        %v7434 = vunpack.c.h.b16 %v6690
        %v7435 = vunpack.c.l.b16 %v6691
        %v7436 = vunpack.c.h.b16 %v6691
        %v7437 = vunpack.c.l.b16 %v6692
        %v7438 = vunpack.c.h.b16 %v6692
        %v7439 = vunpack.c.l.b16 %v6693
        %v7440 = vunpack.c.h.b16 %v6693
        %v7441 = vunpack.c.l.b16 %v6694
        %v7442 = vunpack.c.h.b16 %v6694
        %v7443 = vunpack.c.l.b16 %v6695
        %v7444 = vunpack.c.h.b16 %v6695
        %v7445 = vunpack.c.l.b16 %v6696
        %v7446 = vunpack.c.h.b16 %v6696
        %v7447 = vunpack.c.l.b16 %v6697
        %v7448 = vunpack.c.h.b16 %v6697
        %v7449 = vunpack.c.l.b16 %v6698
        %v7450 = vunpack.c.h.b16 %v6698
        %v7451 = vunpack.c.l.b16 %v6699
        %v7452 = vunpack.c.h.b16 %v6699
        %v7453 = vunpack.c.l.b16 %v6700
        %v7454 = vunpack.c.h.b16 %v6700
        %v7455 = vunpack.c.l.b16 %v6701
        %v7456 = vunpack.c.h.b16 %v6701
        %v7457 = vunpack.c.l.b16 %v6702
        %v7458 = vunpack.c.h.b16 %v6702
        %v7459 = vunpack.c.l.b16 %v6703
        %v7460 = vunpack.c.h.b16 %v6703
        %v7461 = vunpack.c.l.b16 %v6704
        %v7462 = vunpack.c.h.b16 %v6704
        %v7463 = vunpack.c.l.b16 %v6705
        %v7464 = vunpack.c.h.b16 %v6705
        %v7465 = vunpack.c.l.b16 %v6706
        %v7466 = vunpack.c.h.b16 %v6706
        %v7467 = vunpack.c.l.b16 %v6707
        %v7468 = vunpack.c.h.b16 %v6707
        %v7469 = vunpack.c.l.b16 %v6708
        %v7470 = vunpack.c.h.b16 %v6708
        %v7471 = vunpack.c.l.b16 %v6709
        %v7472 = vunpack.c.h.b16 %v6709
        %v7473 = vunpack.c.l.b16 %v6710
        %v7474 = vunpack.c.h.b16 %v6710
        %v7475 = vunpack.c.l.b16 %v6711
        %v7476 = vunpack.c.h.b16 %v6711
        %v7477 = vunpack.c.l.b16 %v6712
        %v7478 = vunpack.c.h.b16 %v6712
        %v7479 = vunpack.c.l.b16 %v6713
        %v7480 = vunpack.c.h.b16 %v6713
        %v7481 = vunpack.c.l.b16 %v6714
        %v7482 = vunpack.c.h.b16 %v6714
        %v7483 = vunpack.c.l.b16 %v6715
        %v7484 = vunpack.c.h.b16 %v6715
        %v7485 = vunpack.c.l.b16 %v6716
        %v7486 = vunpack.c.h.b16 %v6716
        %v7487 = vunpack.c.l.b16 %v6717
        %v7488 = vunpack.c.h.b16 %v6717
        %v7489 = vunpack.c.l.b16 %v6718
        %v7490 = vunpack.c.h.b16 %v6718
        %v7491 = vunpack.c.l.b16 %v6719
        %v7492 = vunpack.c.h.b16 %v6719
        %v7493 = vunpack.c.l.b16 %v6720
        %v7494 = vunpack.c.h.b16 %v6720
        %v7495 = vpack.c.b16 %v6985, %v6983
        %v7496 = vpack.c.b16 %v6986, %v6984
        %v7497 = vpack.c.b16 %v6989, %v6987
        %v7498 = vpack.c.b16 %v6990, %v6988
        %v7499 = vpack.c.b16 %v6993, %v6991
        %v7500 = vpack.c.b16 %v6994, %v6992
        %v7501 = vpack.c.b16 %v6997, %v6995
        %v7502 = vpack.c.b16 %v6998, %v6996
        %v7503 = vpack.c.b16 %v7001, %v6999
        %v7504 = vpack.c.b16 %v7002, %v7000
        %v7505 = vpack.c.b16 %v7005, %v7003
        %v7506 = vpack.c.b16 %v7006, %v7004
        %v7507 = vpack.c.b16 %v7009, %v7007
        %v7508 = vpack.c.b16 %v7010, %v7008
        %v7509 = vpack.c.b16 %v7013, %v7011
        %v7510 = vpack.c.b16 %v7014, %v7012
        %v7511 = vpack.c.b16 %v7017, %v7015
        %v7512 = vpack.c.b16 %v7018, %v7016
        %v7513 = vpack.c.b16 %v7021, %v7019
        %v7514 = vpack.c.b16 %v7022, %v7020
        %v7515 = vpack.c.b16 %v7025, %v7023
        %v7516 = vpack.c.b16 %v7026, %v7024
        %v7517 = vpack.c.b16 %v7029, %v7027
        %v7518 = vpack.c.b16 %v7030, %v7028
        %v7519 = vpack.c.b16 %v7033, %v7031
        %v7520 = vpack.c.b16 %v7034, %v7032
        %v7521 = vpack.c.b16 %v7037, %v7035
        %v7522 = vpack.c.b16 %v7038, %v7036
        %v7523 = vpack.c.b16 %v7041, %v7039
        %v7524 = vpack.c.b16 %v7042, %v7040
        %v7525 = vpack.c.b16 %v7045, %v7043
        %v7526 = vpack.c.b16 %v7046, %v7044
        %v7527 = vpack.c.b16 %v7049, %v7047
        %v7528 = vpack.c.b16 %v7050, %v7048
        %v7529 = vpack.c.b16 %v7053, %v7051
        %v7530 = vpack.c.b16 %v7054, %v7052
        %v7531 = vpack.c.b16 %v7057, %v7055
        %v7532 = vpack.c.b16 %v7058, %v7056
        %v7533 = vpack.c.b16 %v7061, %v7059
        %v7534 = vpack.c.b16 %v7062, %v7060
        %v7535 = vpack.c.b16 %v7065, %v7063
        %v7536 = vpack.c.b16 %v7066, %v7064
        %v7537 = vpack.c.b16 %v7069, %v7067
        %v7538 = vpack.c.b16 %v7070, %v7068
        %v7539 = vpack.c.b16 %v7073, %v7071
        %v7540 = vpack.c.b16 %v7074, %v7072
        %v7541 = vpack.c.b16 %v7077, %v7075
        %v7542 = vpack.c.b16 %v7078, %v7076
        %v7543 = vpack.c.b16 %v7081, %v7079
        %v7544 = vpack.c.b16 %v7082, %v7080
        %v7545 = vpack.c.b16 %v7085, %v7083
        %v7546 = vpack.c.b16 %v7086, %v7084
        %v7547 = vpack.c.b16 %v7089, %v7087
        %v7548 = vpack.c.b16 %v7090, %v7088
        %v7549 = vpack.c.b16 %v7093, %v7091
        %v7550 = vpack.c.b16 %v7094, %v7092
        %v7551 = vpack.c.b16 %v7097, %v7095
        %v7552 = vpack.c.b16 %v7098, %v7096
        %v7553 = vpack.c.b16 %v7101, %v7099
        %v7554 = vpack.c.b16 %v7102, %v7100
        %v7555 = vpack.c.b16 %v7105, %v7103
        %v7556 = vpack.c.b16 %v7106, %v7104
        %v7557 = vpack.c.b16 %v7109, %v7107
        %v7558 = vpack.c.b16 %v7110, %v7108
        %v7559 = vpack.c.b16 %v7113, %v7111
        %v7560 = vpack.c.b16 %v7114, %v7112
        %v7561 = vpack.c.b16 %v7117, %v7115
        %v7562 = vpack.c.b16 %v7118, %v7116
        %v7563 = vpack.c.b16 %v7121, %v7119
        %v7564 = vpack.c.b16 %v7122, %v7120
        %v7565 = vpack.c.b16 %v7125, %v7123
        %v7566 = vpack.c.b16 %v7126, %v7124
        %v7567 = vpack.c.b16 %v7129, %v7127
        %v7568 = vpack.c.b16 %v7130, %v7128
        %v7569 = vpack.c.b16 %v7133, %v7131
        %v7570 = vpack.c.b16 %v7134, %v7132
        %v7571 = vpack.c.b16 %v7137, %v7135
        %v7572 = vpack.c.b16 %v7138, %v7136
        %v7573 = vpack.c.b16 %v7141, %v7139
        %v7574 = vpack.c.b16 %v7142, %v7140
        %v7575 = vpack.c.b16 %v7145, %v7143
        %v7576 = vpack.c.b16 %v7146, %v7144
        %v7577 = vpack.c.b16 %v7149, %v7147
        %v7578 = vpack.c.b16 %v7150, %v7148
        %v7579 = vpack.c.b16 %v7153, %v7151
        %v7580 = vpack.c.b16 %v7154, %v7152
        %v7581 = vpack.c.b16 %v7157, %v7155
        %v7582 = vpack.c.b16 %v7158, %v7156
        %v7583 = vpack.c.b16 %v7161, %v7159
        %v7584 = vpack.c.b16 %v7162, %v7160
        %v7585 = vpack.c.b16 %v7165, %v7163
        %v7586 = vpack.c.b16 %v7166, %v7164
        %v7587 = vpack.c.b16 %v7169, %v7167
        %v7588 = vpack.c.b16 %v7170, %v7168
        %v7589 = vpack.c.b16 %v7173, %v7171
        %v7590 = vpack.c.b16 %v7174, %v7172
        %v7591 = vpack.c.b16 %v7177, %v7175
        %v7592 = vpack.c.b16 %v7178, %v7176
        %v7593 = vpack.c.b16 %v7181, %v7179
        %v7594 = vpack.c.b16 %v7182, %v7180
        %v7595 = vpack.c.b16 %v7185, %v7183
        %v7596 = vpack.c.b16 %v7186, %v7184
        %v7597 = vpack.c.b16 %v7189, %v7187
        %v7598 = vpack.c.b16 %v7190, %v7188
        %v7599 = vpack.c.b16 %v7193, %v7191
        %v7600 = vpack.c.b16 %v7194, %v7192
        %v7601 = vpack.c.b16 %v7197, %v7195
        %v7602 = vpack.c.b16 %v7198, %v7196
        %v7603 = vpack.c.b16 %v7201, %v7199
        %v7604 = vpack.c.b16 %v7202, %v7200
        %v7605 = vpack.c.b16 %v7205, %v7203
        %v7606 = vpack.c.b16 %v7206, %v7204
        %v7607 = vpack.c.b16 %v7209, %v7207
        %v7608 = vpack.c.b16 %v7210, %v7208
        %v7609 = vpack.c.b16 %v7213, %v7211
        %v7610 = vpack.c.b16 %v7214, %v7212
        %v7611 = vpack.c.b16 %v7217, %v7215
        %v7612 = vpack.c.b16 %v7218, %v7216
        %v7613 = vpack.c.b16 %v7221, %v7219
        %v7614 = vpack.c.b16 %v7222, %v7220
        %v7615 = vpack.c.b16 %v7225, %v7223
        %v7616 = vpack.c.b16 %v7226, %v7224
        %v7617 = vpack.c.b16 %v7229, %v7227
        %v7618 = vpack.c.b16 %v7230, %v7228
        %v7619 = vpack.c.b16 %v7233, %v7231
        %v7620 = vpack.c.b16 %v7234, %v7232
        %v7621 = vpack.c.b16 %v7237, %v7235
        %v7622 = vpack.c.b16 %v7238, %v7236
        %v7623 = vpack.c.b16 %v7241, %v7239
        %v7624 = vpack.c.b16 %v7242, %v7240
        %v7625 = vpack.c.b16 %v7245, %v7243
        %v7626 = vpack.c.b16 %v7246, %v7244
        %v7627 = vpack.c.b16 %v7249, %v7247
        %v7628 = vpack.c.b16 %v7250, %v7248
        %v7629 = vpack.c.b16 %v7253, %v7251
        %v7630 = vpack.c.b16 %v7254, %v7252
        %v7631 = vpack.c.b16 %v7257, %v7255
        %v7632 = vpack.c.b16 %v7258, %v7256
        %v7633 = vpack.c.b16 %v7261, %v7259
        %v7634 = vpack.c.b16 %v7262, %v7260
        %v7635 = vpack.c.b16 %v7265, %v7263
        %v7636 = vpack.c.b16 %v7266, %v7264
        %v7637 = vpack.c.b16 %v7269, %v7267
        %v7638 = vpack.c.b16 %v7270, %v7268
        %v7639 = vpack.c.b16 %v7273, %v7271
        %v7640 = vpack.c.b16 %v7274, %v7272
        %v7641 = vpack.c.b16 %v7277, %v7275
        %v7642 = vpack.c.b16 %v7278, %v7276
        %v7643 = vpack.c.b16 %v7281, %v7279
        %v7644 = vpack.c.b16 %v7282, %v7280
        %v7645 = vpack.c.b16 %v7285, %v7283
        %v7646 = vpack.c.b16 %v7286, %v7284
        %v7647 = vpack.c.b16 %v7289, %v7287
        %v7648 = vpack.c.b16 %v7290, %v7288
        %v7649 = vpack.c.b16 %v7293, %v7291
        %v7650 = vpack.c.b16 %v7294, %v7292
        %v7651 = vpack.c.b16 %v7297, %v7295
        %v7652 = vpack.c.b16 %v7298, %v7296
        %v7653 = vpack.c.b16 %v7301, %v7299
        %v7654 = vpack.c.b16 %v7302, %v7300
        %v7655 = vpack.c.b16 %v7305, %v7303
        %v7656 = vpack.c.b16 %v7306, %v7304
        %v7657 = vpack.c.b16 %v7309, %v7307
        %v7658 = vpack.c.b16 %v7310, %v7308
        %v7659 = vpack.c.b16 %v7313, %v7311
        %v7660 = vpack.c.b16 %v7314, %v7312
        %v7661 = vpack.c.b16 %v7317, %v7315
        %v7662 = vpack.c.b16 %v7318, %v7316
        %v7663 = vpack.c.b16 %v7321, %v7319
        %v7664 = vpack.c.b16 %v7322, %v7320
        %v7665 = vpack.c.b16 %v7325, %v7323
        %v7666 = vpack.c.b16 %v7326, %v7324
        %v7667 = vpack.c.b16 %v7329, %v7327
        %v7668 = vpack.c.b16 %v7330, %v7328
        %v7669 = vpack.c.b16 %v7333, %v7331
        %v7670 = vpack.c.b16 %v7334, %v7332
        %v7671 = vpack.c.b16 %v7337, %v7335
        %v7672 = vpack.c.b16 %v7338, %v7336
        %v7673 = vpack.c.b16 %v7341, %v7339
        %v7674 = vpack.c.b16 %v7342, %v7340
        %v7675 = vpack.c.b16 %v7345, %v7343
        %v7676 = vpack.c.b16 %v7346, %v7344
        %v7677 = vpack.c.b16 %v7349, %v7347
        %v7678 = vpack.c.b16 %v7350, %v7348
        %v7679 = vpack.c.b16 %v7353, %v7351
        %v7680 = vpack.c.b16 %v7354, %v7352
        %v7681 = vpack.c.b16 %v7357, %v7355
        %v7682 = vpack.c.b16 %v7358, %v7356
        %v7683 = vpack.c.b16 %v7361, %v7359
        %v7684 = vpack.c.b16 %v7362, %v7360
        %v7685 = vpack.c.b16 %v7365, %v7363
        %v7686 = vpack.c.b16 %v7366, %v7364
        %v7687 = vpack.c.b16 %v7369, %v7367
        %v7688 = vpack.c.b16 %v7370, %v7368
        %v7689 = vpack.c.b16 %v7373, %v7371
        %v7690 = vpack.c.b16 %v7374, %v7372
        %v7691 = vpack.c.b16 %v7377, %v7375
        %v7692 = vpack.c.b16 %v7378, %v7376
        %v7693 = vpack.c.b16 %v7381, %v7379
        %v7694 = vpack.c.b16 %v7382, %v7380
        %v7695 = vpack.c.b16 %v7385, %v7383
        %v7696 = vpack.c.b16 %v7386, %v7384
        %v7697 = vpack.c.b16 %v7389, %v7387
        %v7698 = vpack.c.b16 %v7390, %v7388
        %v7699 = vpack.c.b16 %v7393, %v7391
        %v7700 = vpack.c.b16 %v7394, %v7392
        %v7701 = vpack.c.b16 %v7397, %v7395
        %v7702 = vpack.c.b16 %v7398, %v7396
        %v7703 = vpack.c.b16 %v7401, %v7399
        %v7704 = vpack.c.b16 %v7402, %v7400
        %v7705 = vpack.c.b16 %v7405, %v7403
        %v7706 = vpack.c.b16 %v7406, %v7404
        %v7707 = vpack.c.b16 %v7409, %v7407
        %v7708 = vpack.c.b16 %v7410, %v7408
        %v7709 = vpack.c.b16 %v7413, %v7411
        %v7710 = vpack.c.b16 %v7414, %v7412
        %v7711 = vpack.c.b16 %v7417, %v7415
        %v7712 = vpack.c.b16 %v7418, %v7416
        %v7713 = vpack.c.b16 %v7421, %v7419
        %v7714 = vpack.c.b16 %v7422, %v7420
        %v7715 = vpack.c.b16 %v7425, %v7423
        %v7716 = vpack.c.b16 %v7426, %v7424
        %v7717 = vpack.c.b16 %v7429, %v7427
        %v7718 = vpack.c.b16 %v7430, %v7428
        %v7719 = vpack.c.b16 %v7433, %v7431
        %v7720 = vpack.c.b16 %v7434, %v7432
        %v7721 = vpack.c.b16 %v7437, %v7435
        %v7722 = vpack.c.b16 %v7438, %v7436
        %v7723 = vpack.c.b16 %v7441, %v7439
        %v7724 = vpack.c.b16 %v7442, %v7440
        %v7725 = vpack.c.b16 %v7445, %v7443
        %v7726 = vpack.c.b16 %v7446, %v7444
        %v7727 = vpack.c.b16 %v7449, %v7447
        %v7728 = vpack.c.b16 %v7450, %v7448
        %v7729 = vpack.c.b16 %v7453, %v7451
        %v7730 = vpack.c.b16 %v7454, %v7452
        %v7731 = vpack.c.b16 %v7457, %v7455
        %v7732 = vpack.c.b16 %v7458, %v7456
        %v7733 = vpack.c.b16 %v7461, %v7459
        %v7734 = vpack.c.b16 %v7462, %v7460
        %v7735 = vpack.c.b16 %v7465, %v7463
        %v7736 = vpack.c.b16 %v7466, %v7464
        %v7737 = vpack.c.b16 %v7469, %v7467
        %v7738 = vpack.c.b16 %v7470, %v7468
        %v7739 = vpack.c.b16 %v7473, %v7471
        %v7740 = vpack.c.b16 %v7474, %v7472
        %v7741 = vpack.c.b16 %v7477, %v7475
        %v7742 = vpack.c.b16 %v7478, %v7476
        %v7743 = vpack.c.b16 %v7481, %v7479
        %v7744 = vpack.c.b16 %v7482, %v7480
        %v7745 = vpack.c.b16 %v7485, %v7483
        %v7746 = vpack.c.b16 %v7486, %v7484
        %v7747 = vpack.c.b16 %v7489, %v7487
        %v7748 = vpack.c.b16 %v7490, %v7488
        %v7749 = vpack.c.b16 %v7493, %v7491
        %v7750 = vpack.c.b16 %v7494, %v7492
        %8007 = vmatpush.bf16.msra.mxu0 %v7509
        %8008 = vmatpush.bf16.msra.mxu0 %v7507
        %8009 = vmatpush.bf16.msra.mxu0 %v7505
        %8010 = vmatpush.bf16.msra.mxu0 %v7503
        %8011 = vmatpush.bf16.msra.mxu0 %v7501
        %8012 = vmatpush.bf16.msra.mxu0 %v7499
        %8013 = vmatpush.bf16.msra.mxu0 %v7497
        %8014 = vmatpush.bf16.msra.mxu0 %v7495
        %8015 = vmatmul.bf16.gmra.mxu0 %v6449
        %v8016 = vpop.f32.mrf.mxu0
        %v8017 = vadd.f32 %v6723, %v8016
        %v8018 = vpop.f32.mrf.mxu0
        %v8019 = vadd.f32 %v6723, %v8018
        %8020 = vdwg.mxu0
        %8021 = vmatpush.bf16.msra.mxu0 %v7525
        %8022 = vmatpush.bf16.msra.mxu0 %v7523
        %8023 = vmatpush.bf16.msra.mxu0 %v7521
        %8024 = vmatpush.bf16.msra.mxu0 %v7519
        %8025 = vmatpush.bf16.msra.mxu0 %v7517
        %8026 = vmatpush.bf16.msra.mxu0 %v7515
        %8027 = vmatpush.bf16.msra.mxu0 %v7513
        %8028 = vmatpush.bf16.msra.mxu0 %v7511
        %8029 = vmatmul.bf16.gmra.mxu0 %v6450
        %v8030 = vpop.f32.mrf.mxu0
        %v8031 = vadd.f32 %v8017, %v8030
        %v8032 = vpop.f32.mrf.mxu0
        %v8033 = vadd.f32 %v8019, %v8032
        %8034 = vdwg.mxu0
        %8035 = vmatpush.bf16.msra.mxu0 %v7541
        %8036 = vmatpush.bf16.msra.mxu0 %v7539
        %8037 = vmatpush.bf16.msra.mxu0 %v7537
        %8038 = vmatpush.bf16.msra.mxu0 %v7535
        %8039 = vmatpush.bf16.msra.mxu0 %v7533
        %8040 = vmatpush.bf16.msra.mxu0 %v7531
        %8041 = vmatpush.bf16.msra.mxu0 %v7529
        %8042 = vmatpush.bf16.msra.mxu0 %v7527
        %8043 = vmatmul.bf16.gmra.mxu0 %v6451
        %v8044 = vpop.f32.mrf.mxu0
        %v8045 = vadd.f32 %v8031, %v8044
        %v8046 = vpop.f32.mrf.mxu0
        %v8047 = vadd.f32 %v8033, %v8046
        %8048 = vdwg.mxu0
        %8049 = vmatpush.bf16.msra.mxu0 %v7557
        %8050 = vmatpush.bf16.msra.mxu0 %v7555
        %8051 = vmatpush.bf16.msra.mxu0 %v7553
        %8052 = vmatpush.bf16.msra.mxu0 %v7551
        %8053 = vmatpush.bf16.msra.mxu0 %v7549
        %8054 = vmatpush.bf16.msra.mxu0 %v7547
        %8055 = vmatpush.bf16.msra.mxu0 %v7545
        %8056 = vmatpush.bf16.msra.mxu0 %v7543
        %8057 = vmatmul.bf16.gmra.mxu0 %v6452
        %v8058 = vpop.f32.mrf.mxu0
        %v8059 = vadd.f32 %v8045, %v8058
        %v8060 = vpop.f32.mrf.mxu0
        %v8061 = vadd.f32 %v8047, %v8060
        %8062 = vdwg.mxu0
        %8063 = vmatpush.bf16.msra.mxu0 %v7573
        %8064 = vmatpush.bf16.msra.mxu0 %v7571
        %8065 = vmatpush.bf16.msra.mxu0 %v7569
        %8066 = vmatpush.bf16.msra.mxu0 %v7567
        %8067 = vmatpush.bf16.msra.mxu0 %v7565
        %8068 = vmatpush.bf16.msra.mxu0 %v7563
        %8069 = vmatpush.bf16.msra.mxu0 %v7561
        %8070 = vmatpush.bf16.msra.mxu0 %v7559
        %8071 = vmatmul.bf16.gmra.mxu0 %v6453
        %v8072 = vpop.f32.mrf.mxu0
        %v8073 = vadd.f32 %v8059, %v8072
        %v8074 = vpop.f32.mrf.mxu0
        %v8075 = vadd.f32 %v8061, %v8074
        %8076 = vdwg.mxu0
        %8077 = vmatpush.bf16.msra.mxu0 %v7589
        %8078 = vmatpush.bf16.msra.mxu0 %v7587
        %8079 = vmatpush.bf16.msra.mxu0 %v7585
        %8080 = vmatpush.bf16.msra.mxu0 %v7583
        %8081 = vmatpush.bf16.msra.mxu0 %v7581
        %8082 = vmatpush.bf16.msra.mxu0 %v7579
        %8083 = vmatpush.bf16.msra.mxu0 %v7577
        %8084 = vmatpush.bf16.msra.mxu0 %v7575
        %8085 = vmatmul.bf16.gmra.mxu0 %v6454
        %v8086 = vpop.f32.mrf.mxu0
        %v8087 = vadd.f32 %v8073, %v8086
        %v8088 = vpop.f32.mrf.mxu0
        %v8089 = vadd.f32 %v8075, %v8088
        %8090 = vdwg.mxu0
        %8091 = vmatpush.bf16.msra.mxu0 %v7605
        %8092 = vmatpush.bf16.msra.mxu0 %v7603
        %8093 = vmatpush.bf16.msra.mxu0 %v7601
        %8094 = vmatpush.bf16.msra.mxu0 %v7599
        %8095 = vmatpush.bf16.msra.mxu0 %v7597
        %8096 = vmatpush.bf16.msra.mxu0 %v7595
        %8097 = vmatpush.bf16.msra.mxu0 %v7593
        %8098 = vmatpush.bf16.msra.mxu0 %v7591
        %8099 = vmatmul.bf16.gmra.mxu0 %v6455
        %v8100 = vpop.f32.mrf.mxu0
        %v8101 = vadd.f32 %v8087, %v8100
        %v8102 = vpop.f32.mrf.mxu0
        %v8103 = vadd.f32 %v8089, %v8102
        %8104 = vdwg.mxu0
        %8105 = vmatpush.bf16.msra.mxu0 %v7621
        %8106 = vmatpush.bf16.msra.mxu0 %v7619
        %8107 = vmatpush.bf16.msra.mxu0 %v7617
        %8108 = vmatpush.bf16.msra.mxu0 %v7615
        %8109 = vmatpush.bf16.msra.mxu0 %v7613
        %8110 = vmatpush.bf16.msra.mxu0 %v7611
        %8111 = vmatpush.bf16.msra.mxu0 %v7609
        %8112 = vmatpush.bf16.msra.mxu0 %v7607
        %8113 = vmatmul.bf16.gmra.mxu0 %v6456
        %v8114 = vpop.f32.mrf.mxu0
        %v8115 = vadd.f32 %v8101, %v8114
        %v8116 = vpop.f32.mrf.mxu0
        %v8117 = vadd.f32 %v8103, %v8116
        %8118 = vdwg.mxu0
        %8119 = vmatpush.bf16.msra.mxu0 %v7637
        %8120 = vmatpush.bf16.msra.mxu0 %v7635
        %8121 = vmatpush.bf16.msra.mxu0 %v7633
        %8122 = vmatpush.bf16.msra.mxu0 %v7631
        %8123 = vmatpush.bf16.msra.mxu0 %v7629
        %8124 = vmatpush.bf16.msra.mxu0 %v7627
        %8125 = vmatpush.bf16.msra.mxu0 %v7625
        %8126 = vmatpush.bf16.msra.mxu0 %v7623
        %8127 = vmatmul.bf16.gmra.mxu0 %v6457
        %v8128 = vpop.f32.mrf.mxu0
        %v8129 = vadd.f32 %v8115, %v8128
        %v8130 = vpop.f32.mrf.mxu0
        %v8131 = vadd.f32 %v8117, %v8130
        %8132 = vdwg.mxu0
        %8133 = vmatpush.bf16.msra.mxu0 %v7653
        %8134 = vmatpush.bf16.msra.mxu0 %v7651
        %8135 = vmatpush.bf16.msra.mxu0 %v7649
        %8136 = vmatpush.bf16.msra.mxu0 %v7647
        %8137 = vmatpush.bf16.msra.mxu0 %v7645
        %8138 = vmatpush.bf16.msra.mxu0 %v7643
        %8139 = vmatpush.bf16.msra.mxu0 %v7641
        %8140 = vmatpush.bf16.msra.mxu0 %v7639
        %8141 = vmatmul.bf16.gmra.mxu0 %v6458
        %v8142 = vpop.f32.mrf.mxu0
        %v8143 = vadd.f32 %v8129, %v8142
        %v8144 = vpop.f32.mrf.mxu0
        %v8145 = vadd.f32 %v8131, %v8144
        %8146 = vdwg.mxu0
        %8147 = vmatpush.bf16.msra.mxu0 %v7669
        %8148 = vmatpush.bf16.msra.mxu0 %v7667
        %8149 = vmatpush.bf16.msra.mxu0 %v7665
        %8150 = vmatpush.bf16.msra.mxu0 %v7663
        %8151 = vmatpush.bf16.msra.mxu0 %v7661
        %8152 = vmatpush.bf16.msra.mxu0 %v7659
        %8153 = vmatpush.bf16.msra.mxu0 %v7657
        %8154 = vmatpush.bf16.msra.mxu0 %v7655
        %8155 = vmatmul.bf16.gmra.mxu0 %v6459
        %v8156 = vpop.f32.mrf.mxu0
        %v8157 = vadd.f32 %v8143, %v8156
        %v8158 = vpop.f32.mrf.mxu0
        %v8159 = vadd.f32 %v8145, %v8158
        %8160 = vdwg.mxu0
        %8161 = vmatpush.bf16.msra.mxu0 %v7685
        %8162 = vmatpush.bf16.msra.mxu0 %v7683
        %8163 = vmatpush.bf16.msra.mxu0 %v7681
        %8164 = vmatpush.bf16.msra.mxu0 %v7679
        %8165 = vmatpush.bf16.msra.mxu0 %v7677
        %8166 = vmatpush.bf16.msra.mxu0 %v7675
        %8167 = vmatpush.bf16.msra.mxu0 %v7673
        %8168 = vmatpush.bf16.msra.mxu0 %v7671
        %8169 = vmatmul.bf16.gmra.mxu0 %v6460
        %v8170 = vpop.f32.mrf.mxu0
        %v8171 = vadd.f32 %v8157, %v8170
        %v8172 = vpop.f32.mrf.mxu0
        %v8173 = vadd.f32 %v8159, %v8172
        %8174 = vdwg.mxu0
        %8175 = vmatpush.bf16.msra.mxu0 %v7701
        %8176 = vmatpush.bf16.msra.mxu0 %v7699
        %8177 = vmatpush.bf16.msra.mxu0 %v7697
        %8178 = vmatpush.bf16.msra.mxu0 %v7695
        %8179 = vmatpush.bf16.msra.mxu0 %v7693
        %8180 = vmatpush.bf16.msra.mxu0 %v7691
        %8181 = vmatpush.bf16.msra.mxu0 %v7689
        %8182 = vmatpush.bf16.msra.mxu0 %v7687
        %8183 = vmatmul.bf16.gmra.mxu0 %v6461
        %v8184 = vpop.f32.mrf.mxu0
        %v8185 = vadd.f32 %v8171, %v8184
        %v8186 = vpop.f32.mrf.mxu0
        %v8187 = vadd.f32 %v8173, %v8186
        %8188 = vdwg.mxu0
        %8189 = vmatpush.bf16.msra.mxu0 %v7717
        %8190 = vmatpush.bf16.msra.mxu0 %v7715
        %8191 = vmatpush.bf16.msra.mxu0 %v7713
        %8192 = vmatpush.bf16.msra.mxu0 %v7711
        %8193 = vmatpush.bf16.msra.mxu0 %v7709
        %8194 = vmatpush.bf16.msra.mxu0 %v7707
        %8195 = vmatpush.bf16.msra.mxu0 %v7705
        %8196 = vmatpush.bf16.msra.mxu0 %v7703
        %8197 = vmatmul.bf16.gmra.mxu0 %v6462
        %v8198 = vpop.f32.mrf.mxu0
        %v8199 = vadd.f32 %v8185, %v8198
        %v8200 = vpop.f32.mrf.mxu0
        %v8201 = vadd.f32 %v8187, %v8200
        %8202 = vdwg.mxu0
        %8203 = vmatpush.bf16.msra.mxu0 %v7733
        %8204 = vmatpush.bf16.msra.mxu0 %v7731
        %8205 = vmatpush.bf16.msra.mxu0 %v7729
        %8206 = vmatpush.bf16.msra.mxu0 %v7727
        %8207 = vmatpush.bf16.msra.mxu0 %v7725
        %8208 = vmatpush.bf16.msra.mxu0 %v7723
        %8209 = vmatpush.bf16.msra.mxu0 %v7721
        %8210 = vmatpush.bf16.msra.mxu0 %v7719
        %8211 = vmatmul.bf16.gmra.mxu0 %v6463
        %v8212 = vpop.f32.mrf.mxu0
        %v8213 = vadd.f32 %v8199, %v8212
        %v8214 = vpop.f32.mrf.mxu0
        %v8215 = vadd.f32 %v8201, %v8214
        %8216 = vdwg.mxu0
        %8217 = vmatpush.bf16.msra.mxu0 %v7749
        %8218 = vmatpush.bf16.msra.mxu0 %v7747
        %8219 = vmatpush.bf16.msra.mxu0 %v7745
        %8220 = vmatpush.bf16.msra.mxu0 %v7743
        %8221 = vmatpush.bf16.msra.mxu0 %v7741
        %8222 = vmatpush.bf16.msra.mxu0 %v7739
        %8223 = vmatpush.bf16.msra.mxu0 %v7737
        %8224 = vmatpush.bf16.msra.mxu0 %v7735
        %8225 = vmatmul.bf16.gmra.mxu0 %v6464
        %v8226 = vpop.f32.mrf.mxu0
        %v8227 = vadd.f32 %v8213, %v8226
        %v8228 = vpop.f32.mrf.mxu0
        %v8229 = vadd.f32 %v8215, %v8228
        %8230 = vdwg.mxu0
        %8231 = vmatpush.bf16.msra.mxu0 %v7510
        %8232 = vmatpush.bf16.msra.mxu0 %v7508
        %8233 = vmatpush.bf16.msra.mxu0 %v7506
        %8234 = vmatpush.bf16.msra.mxu0 %v7504
        %8235 = vmatpush.bf16.msra.mxu0 %v7502
        %8236 = vmatpush.bf16.msra.mxu0 %v7500
        %8237 = vmatpush.bf16.msra.mxu0 %v7498
        %8238 = vmatpush.bf16.msra.mxu0 %v7496
        %8239 = vmatmul.bf16.gmra.mxu0 %v6449
        %v8240 = vpop.f32.mrf.mxu0
        %v8241 = vadd.f32 %v6724, %v8240
        %v8242 = vpop.f32.mrf.mxu0
        %v8243 = vadd.f32 %v6724, %v8242
        %8244 = vdwg.mxu0
        %8245 = vmatpush.bf16.msra.mxu0 %v7526
        %8246 = vmatpush.bf16.msra.mxu0 %v7524
        %8247 = vmatpush.bf16.msra.mxu0 %v7522
        %8248 = vmatpush.bf16.msra.mxu0 %v7520
        %8249 = vmatpush.bf16.msra.mxu0 %v7518
        %8250 = vmatpush.bf16.msra.mxu0 %v7516
        %8251 = vmatpush.bf16.msra.mxu0 %v7514
        %8252 = vmatpush.bf16.msra.mxu0 %v7512
        %8253 = vmatmul.bf16.gmra.mxu0 %v6450
        %v8254 = vpop.f32.mrf.mxu0
        %v8255 = vadd.f32 %v8241, %v8254
        %v8256 = vpop.f32.mrf.mxu0
        %v8257 = vadd.f32 %v8243, %v8256
        %8258 = vdwg.mxu0
        %8259 = vmatpush.bf16.msra.mxu0 %v7542
        %8260 = vmatpush.bf16.msra.mxu0 %v7540
        %8261 = vmatpush.bf16.msra.mxu0 %v7538
        %8262 = vmatpush.bf16.msra.mxu0 %v7536
        %8263 = vmatpush.bf16.msra.mxu0 %v7534
        %8264 = vmatpush.bf16.msra.mxu0 %v7532
        %8265 = vmatpush.bf16.msra.mxu0 %v7530
        %8266 = vmatpush.bf16.msra.mxu0 %v7528
        %8267 = vmatmul.bf16.gmra.mxu0 %v6451
        %v8268 = vpop.f32.mrf.mxu0
        %v8269 = vadd.f32 %v8255, %v8268
        %v8270 = vpop.f32.mrf.mxu0
        %v8271 = vadd.f32 %v8257, %v8270
        %8272 = vdwg.mxu0
        %8273 = vmatpush.bf16.msra.mxu0 %v7558
        %8274 = vmatpush.bf16.msra.mxu0 %v7556
        %8275 = vmatpush.bf16.msra.mxu0 %v7554
        %8276 = vmatpush.bf16.msra.mxu0 %v7552
        %8277 = vmatpush.bf16.msra.mxu0 %v7550
        %8278 = vmatpush.bf16.msra.mxu0 %v7548
        %8279 = vmatpush.bf16.msra.mxu0 %v7546
        %8280 = vmatpush.bf16.msra.mxu0 %v7544
        %8281 = vmatmul.bf16.gmra.mxu0 %v6452
        %v8282 = vpop.f32.mrf.mxu0
        %v8283 = vadd.f32 %v8269, %v8282
        %v8284 = vpop.f32.mrf.mxu0
        %v8285 = vadd.f32 %v8271, %v8284
        %8286 = vdwg.mxu0
        %8287 = vmatpush.bf16.msra.mxu0 %v7574
        %8288 = vmatpush.bf16.msra.mxu0 %v7572
        %8289 = vmatpush.bf16.msra.mxu0 %v7570
        %8290 = vmatpush.bf16.msra.mxu0 %v7568
        %8291 = vmatpush.bf16.msra.mxu0 %v7566
        %8292 = vmatpush.bf16.msra.mxu0 %v7564
        %8293 = vmatpush.bf16.msra.mxu0 %v7562
        %8294 = vmatpush.bf16.msra.mxu0 %v7560
        %8295 = vmatmul.bf16.gmra.mxu0 %v6453
        %v8296 = vpop.f32.mrf.mxu0
        %v8297 = vadd.f32 %v8283, %v8296
        %v8298 = vpop.f32.mrf.mxu0
        %v8299 = vadd.f32 %v8285, %v8298
        %8300 = vdwg.mxu0
        %8301 = vmatpush.bf16.msra.mxu0 %v7590
        %8302 = vmatpush.bf16.msra.mxu0 %v7588
        %8303 = vmatpush.bf16.msra.mxu0 %v7586
        %8304 = vmatpush.bf16.msra.mxu0 %v7584
        %8305 = vmatpush.bf16.msra.mxu0 %v7582
        %8306 = vmatpush.bf16.msra.mxu0 %v7580
        %8307 = vmatpush.bf16.msra.mxu0 %v7578
        %8308 = vmatpush.bf16.msra.mxu0 %v7576
        %8309 = vmatmul.bf16.gmra.mxu0 %v6454
        %v8310 = vpop.f32.mrf.mxu0
        %v8311 = vadd.f32 %v8297, %v8310
        %v8312 = vpop.f32.mrf.mxu0
        %v8313 = vadd.f32 %v8299, %v8312
        %8314 = vdwg.mxu0
        %8315 = vmatpush.bf16.msra.mxu0 %v7606
        %8316 = vmatpush.bf16.msra.mxu0 %v7604
        %8317 = vmatpush.bf16.msra.mxu0 %v7602
        %8318 = vmatpush.bf16.msra.mxu0 %v7600
        %8319 = vmatpush.bf16.msra.mxu0 %v7598
        %8320 = vmatpush.bf16.msra.mxu0 %v7596
        %8321 = vmatpush.bf16.msra.mxu0 %v7594
        %8322 = vmatpush.bf16.msra.mxu0 %v7592
        %8323 = vmatmul.bf16.gmra.mxu0 %v6455
        %v8324 = vpop.f32.mrf.mxu0
        %v8325 = vadd.f32 %v8311, %v8324
        %v8326 = vpop.f32.mrf.mxu0
        %v8327 = vadd.f32 %v8313, %v8326
        %8328 = vdwg.mxu0
        %8329 = vmatpush.bf16.msra.mxu0 %v7622
        %8330 = vmatpush.bf16.msra.mxu0 %v7620
        %8331 = vmatpush.bf16.msra.mxu0 %v7618
        %8332 = vmatpush.bf16.msra.mxu0 %v7616
        %8333 = vmatpush.bf16.msra.mxu0 %v7614
        %8334 = vmatpush.bf16.msra.mxu0 %v7612
        %8335 = vmatpush.bf16.msra.mxu0 %v7610
        %8336 = vmatpush.bf16.msra.mxu0 %v7608
        %8337 = vmatmul.bf16.gmra.mxu0 %v6456
        %v8338 = vpop.f32.mrf.mxu0
        %v8339 = vadd.f32 %v8325, %v8338
        %v8340 = vpop.f32.mrf.mxu0
        %v8341 = vadd.f32 %v8327, %v8340
        %8342 = vdwg.mxu0
        %8343 = vmatpush.bf16.msra.mxu0 %v7638
        %8344 = vmatpush.bf16.msra.mxu0 %v7636
        %8345 = vmatpush.bf16.msra.mxu0 %v7634
        %8346 = vmatpush.bf16.msra.mxu0 %v7632
        %8347 = vmatpush.bf16.msra.mxu0 %v7630
        %8348 = vmatpush.bf16.msra.mxu0 %v7628
        %8349 = vmatpush.bf16.msra.mxu0 %v7626
        %8350 = vmatpush.bf16.msra.mxu0 %v7624
        %8351 = vmatmul.bf16.gmra.mxu0 %v6457
        %v8352 = vpop.f32.mrf.mxu0
        %v8353 = vadd.f32 %v8339, %v8352
        %v8354 = vpop.f32.mrf.mxu0
        %v8355 = vadd.f32 %v8341, %v8354
        %8356 = vdwg.mxu0
        %8357 = vmatpush.bf16.msra.mxu0 %v7654
        %8358 = vmatpush.bf16.msra.mxu0 %v7652
        %8359 = vmatpush.bf16.msra.mxu0 %v7650
        %8360 = vmatpush.bf16.msra.mxu0 %v7648
        %8361 = vmatpush.bf16.msra.mxu0 %v7646
        %8362 = vmatpush.bf16.msra.mxu0 %v7644
        %8363 = vmatpush.bf16.msra.mxu0 %v7642
        %8364 = vmatpush.bf16.msra.mxu0 %v7640
        %8365 = vmatmul.bf16.gmra.mxu0 %v6458
        %v8366 = vpop.f32.mrf.mxu0
        %v8367 = vadd.f32 %v8353, %v8366
        %v8368 = vpop.f32.mrf.mxu0
        %v8369 = vadd.f32 %v8355, %v8368
        %8370 = vdwg.mxu0
        %8371 = vmatpush.bf16.msra.mxu0 %v7670
        %8372 = vmatpush.bf16.msra.mxu0 %v7668
        %8373 = vmatpush.bf16.msra.mxu0 %v7666
        %8374 = vmatpush.bf16.msra.mxu0 %v7664
        %8375 = vmatpush.bf16.msra.mxu0 %v7662
        %8376 = vmatpush.bf16.msra.mxu0 %v7660
        %8377 = vmatpush.bf16.msra.mxu0 %v7658
        %8378 = vmatpush.bf16.msra.mxu0 %v7656
        %8379 = vmatmul.bf16.gmra.mxu0 %v6459
        %v8380 = vpop.f32.mrf.mxu0
        %v8381 = vadd.f32 %v8367, %v8380
        %v8382 = vpop.f32.mrf.mxu0
        %v8383 = vadd.f32 %v8369, %v8382
        %8384 = vdwg.mxu0
        %8385 = vmatpush.bf16.msra.mxu0 %v7686
        %8386 = vmatpush.bf16.msra.mxu0 %v7684
        %8387 = vmatpush.bf16.msra.mxu0 %v7682
        %8388 = vmatpush.bf16.msra.mxu0 %v7680
        %8389 = vmatpush.bf16.msra.mxu0 %v7678
        %8390 = vmatpush.bf16.msra.mxu0 %v7676
        %8391 = vmatpush.bf16.msra.mxu0 %v7674
        %8392 = vmatpush.bf16.msra.mxu0 %v7672
        %8393 = vmatmul.bf16.gmra.mxu0 %v6460
        %v8394 = vpop.f32.mrf.mxu0
        %v8395 = vadd.f32 %v8381, %v8394
        %v8396 = vpop.f32.mrf.mxu0
        %v8397 = vadd.f32 %v8383, %v8396
        %8398 = vdwg.mxu0
        %8399 = vmatpush.bf16.msra.mxu0 %v7702
        %8400 = vmatpush.bf16.msra.mxu0 %v7700
        %8401 = vmatpush.bf16.msra.mxu0 %v7698
        %8402 = vmatpush.bf16.msra.mxu0 %v7696
        %8403 = vmatpush.bf16.msra.mxu0 %v7694
        %8404 = vmatpush.bf16.msra.mxu0 %v7692
        %8405 = vmatpush.bf16.msra.mxu0 %v7690
        %8406 = vmatpush.bf16.msra.mxu0 %v7688
        %8407 = vmatmul.bf16.gmra.mxu0 %v6461
        %v8408 = vpop.f32.mrf.mxu0
        %v8409 = vadd.f32 %v8395, %v8408
        %v8410 = vpop.f32.mrf.mxu0
        %v8411 = vadd.f32 %v8397, %v8410
        %8412 = vdwg.mxu0
        %8413 = vmatpush.bf16.msra.mxu0 %v7718
        %8414 = vmatpush.bf16.msra.mxu0 %v7716
        %8415 = vmatpush.bf16.msra.mxu0 %v7714
        %8416 = vmatpush.bf16.msra.mxu0 %v7712
        %8417 = vmatpush.bf16.msra.mxu0 %v7710
        %8418 = vmatpush.bf16.msra.mxu0 %v7708
        %8419 = vmatpush.bf16.msra.mxu0 %v7706
        %8420 = vmatpush.bf16.msra.mxu0 %v7704
        %8421 = vmatmul.bf16.gmra.mxu0 %v6462
        %v8422 = vpop.f32.mrf.mxu0
        %v8423 = vadd.f32 %v8409, %v8422
        %v8424 = vpop.f32.mrf.mxu0
        %v8425 = vadd.f32 %v8411, %v8424
        %8426 = vdwg.mxu0
        %8427 = vmatpush.bf16.msra.mxu0 %v7734
        %8428 = vmatpush.bf16.msra.mxu0 %v7732
        %8429 = vmatpush.bf16.msra.mxu0 %v7730
        %8430 = vmatpush.bf16.msra.mxu0 %v7728
        %8431 = vmatpush.bf16.msra.mxu0 %v7726
        %8432 = vmatpush.bf16.msra.mxu0 %v7724
        %8433 = vmatpush.bf16.msra.mxu0 %v7722
        %8434 = vmatpush.bf16.msra.mxu0 %v7720
        %8435 = vmatmul.bf16.gmra.mxu0 %v6463
        %v8436 = vpop.f32.mrf.mxu0
        %v8437 = vadd.f32 %v8423, %v8436
        %v8438 = vpop.f32.mrf.mxu0
        %v8439 = vadd.f32 %v8425, %v8438
        %8440 = vdwg.mxu0
        %8441 = vmatpush.bf16.msra.mxu0 %v7750
        %8442 = vmatpush.bf16.msra.mxu0 %v7748
        %8443 = vmatpush.bf16.msra.mxu0 %v7746
        %8444 = vmatpush.bf16.msra.mxu0 %v7744
        %8445 = vmatpush.bf16.msra.mxu0 %v7742
        %8446 = vmatpush.bf16.msra.mxu0 %v7740
        %8447 = vmatpush.bf16.msra.mxu0 %v7738
        %8448 = vmatpush.bf16.msra.mxu0 %v7736
        %8449 = vmatmul.bf16.gmra.mxu0 %v6464
        %v8450 = vpop.f32.mrf.mxu0
        %v8451 = vadd.f32 %v8437, %v8450
        %v8452 = vpop.f32.mrf.mxu0
        %v8453 = vadd.f32 %v8439, %v8452
        %8454 = vdwg.mxu0
        %v8455 = vadd.f32 %v3015, %v8227
        %v8456 = vadd.f32 %v3016, %v8451
        %v8457 = vadd.f32 %v3017, %v8229
        %v8458 = vadd.f32 %v3018, %v8453
        %v8459 = vld [vmem:[%s13] sm:$0x3]
        %v8460 = vld [vmem:[%s14] sm:$0x3]
        %v8461 = vadd.f32 %v8455, %v8456
        %8462 = vadd.xlane.f32.xlu0 %v8461
        %v8463 = vpop.xlane.xlu0 %8462
        %v8464 = vadd.f32 %v8457, %v8458
        %8465 = vadd.xlane.f32.xlu0 %v8464
        %v8466 = vpop.xlane.xlu0 %8465
        %v8467 = vmul.f32 %v8463, 0.004
        %v8468 = vmul.f32 %v8466, 0.004
        %v8469 = vmul.f32 %v8455, %v8455
        %v8470 = vmul.f32 %v8456, %v8456
        %v8471 = vmul.f32 %v8457, %v8457
        %v8472 = vmul.f32 %v8458, %v8458
        %v8473 = vadd.f32 %v8469, %v8470
        %8474 = vadd.xlane.f32.xlu0 %v8473
        %v8475 = vpop.xlane.xlu0 %8474
        %v8476 = vadd.f32 %v8471, %v8472
        %8477 = vadd.xlane.f32.xlu0 %v8476
        %v8478 = vpop.xlane.xlu0 %8477
        %v8479 = vmul.f32 %v8475, 0.004
        %v8480 = vmul.f32 %v8478, 0.004
        %v8481 = vmul.f32 %v8467, %v8467
        %v8482 = vmul.f32 %v8468, %v8468
        %v8483 = vsub.f32 %v8479, %v8481
        %v8484 = vsub.f32 %v8480, %v8482
        %v8485 = vsub.f32 %v8455, %v8467
        %v8486 = vsub.f32 %v8456, %v8467
        %v8487 = vsub.f32 %v8457, %v8468
        %v8488 = vsub.f32 %v8458, %v8468
        %v8489 = vadd.f32 %v8483, 1e-05
        %v8490 = vadd.f32 %v8484, 1e-05
        %v8491 = vrsqrt.pop %v8489
        %v8492 = vmul.f32 %v8491, %v8489
        %v8493 = vmul.f32 %v8492, %v8491
        %v8494 = vmul.f32 0.5, %v8493
        %v8495 = vsub.f32 1.5, %v8494
        %v8496 = vmul.f32 %v8491, %v8495
        %vm8497 = vweird.f32 %v8489
        %vm8498 = vweird.f32 %v8491
        %vm8499 = vmor %vm8497, %vm8498
        %v8500 = vsel %vm8499, %v8491, %v8496
        %v8501 = vrsqrt.pop %v8490
        %v8502 = vmul.f32 %v8501, %v8490
        %v8503 = vmul.f32 %v8502, %v8501
        %v8504 = vmul.f32 0.5, %v8503
        %v8505 = vsub.f32 1.5, %v8504
        %v8506 = vmul.f32 %v8501, %v8505
        %vm8507 = vweird.f32 %v8490
        %vm8508 = vweird.f32 %v8501
        %vm8509 = vmor %vm8507, %vm8508
        %v8510 = vsel %vm8509, %v8501, %v8506
        %v8511 = vmul.f32 %v8485, %v8500
        %v8512 = vmul.f32 %v8486, %v8500
        %v8513 = vmul.f32 %v8487, %v8510
        %v8514 = vmul.f32 %v8488, %v8510
        %v8516 = vperm.slane %v8459, 0
        %v8517 = vperm.slane %v8459, 1
        %v8520 = vmul.f32 %v8511, %v8516
        %v8521 = vmul.f32 %v8512, %v8517
        %v8522 = vmul.f32 %v8513, %v8516
        %v8523 = vmul.f32 %v8514, %v8517
        %v8525 = vperm.slane %v8460, 0
        %v8526 = vperm.slane %v8460, 1
        %v8529 = vadd.f32 %v8520, %v8525
        %v8530 = vadd.f32 %v8521, %v8526
        %v8531 = vadd.f32 %v8522, %v8525
        %v8532 = vadd.f32 %v8523, %v8526
        %v8533 = vld [vmem:[%s15] sm:$0x3]
        %v8535 = vperm.slane %v8533, 0
        %v8536 = vperm.slane %v8533, 1
        %v8539 = vmul.f32 %v8529, %v8535
        %v8540 = vmul.f32 %v8530, %v8536
        %v8541 = vmul.f32 %v8531, %v8535
        %v8542 = vmul.f32 %v8532, %v8536
        %v8543 = vadd.f32 %v8539, %v8540
        %8544 = vadd.xlane.f32.xlu0 %v8543
        %v8545 = vpop.xlane.xlu0 %8544
        %v8546 = vadd.f32 %v8541, %v8542
        %8547 = vadd.xlane.f32.xlu0 %v8546
        %v8548 = vpop.xlane.xlu0 %8547
        %v8549 = vld [vmem:[#allocation2] sm:$0x1]
        %v8551 = vperm.slane %v8549, 0
        %v8553 = vadd.f32 %v8545, %v8551
        %v8554 = vadd.f32 %v8548, %v8551
        %v8555 = vxor.u32 %v8553, 2147483648
        %v8556 = vxor.u32 %v8554, 2147483648
        %v8557 = vmul.f32 %v8555, 1.442695
        %v8558 = vpow.pop %v8557
        %v8559 = vmul.f32 %v8556, 1.442695
        %v8560 = vpow.pop %v8559
        %v8561 = vadd.f32 %v8558, 1.0
        %v8562 = vadd.f32 %v8560, 1.0
        %v8563 = vrcp.pop %v8561
        %v8564 = vmul.f32 %v8561, %v8563
        %v8565 = vsub.f32 1.0, %v8564
        %v8566 = vmul.f32 %v8563, %v8565
        %v8567 = vadd.f32 %v8563, %v8566
        %vm8568 = vweird.f32 %v8561
        %vm8569 = vweird.f32 %v8563
        %vm8570 = vmor %vm8568, %vm8569
        %v8571 = vsel %vm8570, %v8563, %v8567
        %v8572 = vand.u32 2147483647, %v8561
        %vm8573 = vcmp.eq.f32.partialorder %v8572, 8.507059e+37
        %v8574 = vand.u32 %v8561, 2147483648
        %v8575 = vor.u32 1.1754944e-38, %v8574
        %v8576 = vsel %vm8573, %v8575, %v8571
        %v8577 = vmul.f32 1.0, %v8576
        %v8578 = vrcp.pop %v8562
        %v8579 = vmul.f32 %v8562, %v8578
        %v8580 = vsub.f32 1.0, %v8579
        %v8581 = vmul.f32 %v8578, %v8580
        %v8582 = vadd.f32 %v8578, %v8581
        %vm8583 = vweird.f32 %v8562
        %vm8584 = vweird.f32 %v8578
        %vm8585 = vmor %vm8583, %vm8584
        %v8586 = vsel %vm8585, %v8578, %v8582
        %v8587 = vand.u32 2147483647, %v8562
        %vm8588 = vcmp.eq.f32.partialorder %v8587, 8.507059e+37
        %v8589 = vand.u32 %v8562, 2147483648
        %v8590 = vor.u32 1.1754944e-38, %v8589
        %v8591 = vsel %vm8588, %v8590, %v8586
        %v8592 = vmul.f32 1.0, %v8591
        %vm8593 = vcmask 7168
        %8594 = vst.msk [vmem:[%s604] sm:$0xff] %vm8593, %v8577
        %8595 = vst.msk [vmem:[%s604 + $0x8] sm:$0xff] %vm8593, %v8592
        %p8596 = scmp.lt.s32.totalorder %s32, 1
        %s8597 = scalar_select %p8596, %s32, 1
        %s8598 = smul.addr %s8597, 2
        %s8599 = smul.addr %s8598, 8
        %s8600 = scalar_lea.vmem %s17, %s8599
        // Predicated region
        $region97: #{transformer_forward.1} parent=87 // pred_check
          %p8601 = pneg %p417
        $region98: #{transformer_forward.1} parent=87 // pred_check_branch
          %8603 = sbr.rel (%p8601) target = $region100
        $region99: #{transformer_forward.1} parent=87 // pred_region
          _
        $region100: #{transformer_forward.1} parent=87 // pred_fallthru
          _
      $region88: #{transformer_forward.1} parent=5 // pred_fallthru
        _
      %p8604 = scmp.le.s32.totalorder 2, %s27
      // Predicated region
      $region101: #{transformer_forward.1} parent=5 // pred_check
        %p8605 = pneg %p8604
      $region102: #{transformer_forward.1} parent=5 // pred_check_branch
        %8607 = sbr.rel (%p8605) target = $region104
      $region103: #{transformer_forward.1} parent=5 // pred_region
        %s8608 = ssub.s32 %s27, 2
        // Predicated region
        $region105: #{transformer_forward.1} parent=103 // pred_check
          %p8609 = pneg %p423
        $region106: #{transformer_forward.1} parent=103 // pred_check_branch
          %8611 = sbr.rel (%p8609) target = $region108
        $region107: #{transformer_forward.1} parent=103 // pred_region
          %p8612 = scmp.lt.s32.totalorder %s33, 1
          %s8613 = scalar_select %p8612, %s33, 1
          %s8614 = smul.addr %s8613, 2
          %s8615 = smul.addr %s8614, 8
          %s8616 = scalar_lea.vmem %s17, %s8615
        $region108: #{transformer_forward.1} parent=103 // pred_fallthru
          _
      $region104: #{transformer_forward.1} parent=5 // pred_fallthru
        _
    $region6: #{transformer_forward.1} parent=1 // loop_footer
      %s31 = sadd.s32 1, %s27
    $region7: #{transformer_forward.1} parent=1 // loop_footer_branch
      %26 = sbr.rel target = $region3
    $region8: #{transformer_forward.1} parent=1 // loop_exit
      _
    %8617 = vsyncpa [#allocation4], 1
    %s8618 = scalar_lea.sflag [#allocation4], 1
    %8619 = vsyncpa %s8618, 1
    %8620 = vsyncpa [#allocation6], 1

</llo_original>
